<compile_context>
chip_gen: v5e
topology: v5e:2x2
jax: 0.10.0
libtpu: 0.0.40
codegen_flags: <defaults>
</compile_context>

<pallas_src>
import functools

import jax
import jax.numpy as jnp
from jax.experimental import pallas as pl
from jax.experimental.pallas import tpu as pltpu


def _kagu_kernel(H, step, teacher,
                 x_ref, hx0_ref, cx0_ref, p0_ref,
                 w1w_ref, w25_ref, w12b_ref,
                 vw_ref, vb_ref,
                 w3wa_ref, w3wb_ref, w3b_ref,
                 w4w_ref, w4b_ref,
                 wih_ref, blstm_ref,
                 preds_ref, attns_ref, hxo_ref, cxo_ref, po_ref,
                 hx_s, cx_s, p_s, init_sem):
    i = pl.program_id(0)
    nsteps = pl.num_programs(0)
    bf16 = jnp.bfloat16

    # Pull the initial recurrent state from HBM into persistent f32 VMEM
    # scratch exactly once (inputs are memory_space=pl.ANY -> no resident copy).
    @pl.when(i == 0)
    def _():
        cps = [pltpu.make_async_copy(hx0_ref, hx_s, init_sem.at[0]),
               pltpu.make_async_copy(cx0_ref, cx_s, init_sem.at[1]),
               pltpu.make_async_copy(p0_ref, p_s, init_sem.at[2])]
        for cp in cps:
            cp.start()
        for cp in cps:
            cp.wait()

    n_bf = x_ref[0]                       # [N, H] bf16, current snippet element
    hx = hx_s[...]                        # [N, H] f32
    cx = cx_s[...]                        # [N, H] f32
    hx_bf = hx.astype(bf16)

    # Fused hx matmul: [H, 5H] = [w2w | whh]. Columns 0:H -> attention path,
    # H:5H -> LSTM gates. Issued before the serial softmax chain.
    hx_mm = jnp.dot(hx_bf, w25_ref[...], preferred_element_type=jnp.float32)

    # attn = tanh(w1(n) + w2(hx)); w1.bias + w2.bias pre-folded into w12b.
    attn = jnp.tanh(
        jnp.dot(n_bf, w1w_ref[...], preferred_element_type=jnp.float32)
        + hx_mm[:, :H] + w12b_ref[...])

    # attn_SM = softmax(v(attn), dim=0) -> [N, 1], normalized over the N rows.
    # v projection on the VPU/XLU (vw stored [1, H]); divide replaced by an
    # EUP approx reciprocal.
    sv = jnp.sum(attn * vw_ref[...], axis=-1, keepdims=True) + vb_ref[...]
    m = jnp.max(sv, axis=0, keepdims=True)
    e = jnp.exp(sv - m)
    attn_sm = e * pl.reciprocal(jnp.sum(e, axis=0, keepdims=True), approx=True)

    # n_weighted = n * attn_SM; w3(cat([n_weighted, other], -1)) split as
    # n_weighted @ w3a + other @ w3b + b.
    n_weighted = (n_bf * attn_sm).astype(bf16)
    other = n_bf if teacher else p_s[...].astype(bf16)
    cv = (jnp.dot(n_weighted, w3wa_ref[...], preferred_element_type=jnp.float32)
          + jnp.dot(other, w3wb_ref[...], preferred_element_type=jnp.float32)
          + w3b_ref[...])

    # LSTMCell (dropout 0.0 -> identity on hx/cx); gate order i, f, g, o.
    gates = (jnp.dot(cv.astype(bf16), wih_ref[...],
                     preferred_element_type=jnp.float32)
             + hx_mm[:, H:] + blstm_ref[...])            # [N, 4H]
    i_g = jax.nn.sigmoid(gates[:, 0:H])
    f_g = jax.nn.sigmoid(gates[:, H:2 * H])
    g_g = jnp.tanh(gates[:, 2 * H:3 * H])
    o_g = jax.nn.sigmoid(gates[:, 3 * H:4 * H])
    cx_new = f_g * cx + i_g * g_g
    hx_new = o_g * jnp.tanh(cx_new)

    # carry recurrent state
    hx_s[...] = hx_new
    cx_s[...] = cx_new

    # attention output: only the first `step` snippets are consumed.
    @pl.when(i < step)
    def _():
        attns_ref[0] = attn_sm

    # p = w4(hx): needed whenever the prediction is kept (i < nsteps-1) or is
    # the hidden-snapshot prediction (i == step-1). The dead last-step tail is
    # skipped otherwise.
    @pl.when(jnp.logical_or(i < nsteps - 1, i == step - 1))
    def _():
        p_s[...] = (jnp.dot(hx_new.astype(bf16), w4w_ref[...],
                            preferred_element_type=jnp.float32) + w4b_ref[...])

    @pl.when(i < nsteps - 1)
    def _():
        preds_ref[0] = p_s[...]

    # hidden / p_out snapshot at i == step-1 (PyTorch .detach() is a value no-op)
    @pl.when(i == step - 1)
    def _():
        hxo_ref[...] = hx_new
        cxo_ref[...] = cx_new
        po_ref[...] = p_s[...]


def kagu_forward(x, hidden, p, params, *, step, teacher):
    snippet, N, H = x.shape
    assert snippet >= 2, "preds[:-1] requires snippet >= 2"
    assert 1 <= step <= snippet, "hx_out/cx_out/p_out require 1 <= step <= snippet"
    hx0, cx0 = hidden
    kernel = functools.partial(_kagu_kernel, H, step, teacher)
    bf16 = jnp.bfloat16
    f32 = jnp.float32

    # Pre-transposed [in, out] weights; MXU operands bf16, biases/state f32.
    x_bf = x.astype(bf16)
    w1w = params['w1w'].astype(bf16)
    w25 = jnp.concatenate([params['w2w'], params['whh']], axis=1).astype(bf16)
    w12b = (params['w1b'] + params['w2b']).astype(f32)      # folded bias
    vw = params['vw'].reshape(1, H).astype(f32)              # [1, H] VPU reduce
    vb = params['vb'].astype(f32)
    w3wa = params['w3w'][:H].astype(bf16)
    w3wb = params['w3w'][H:].astype(bf16)
    w3b = params['w3b'].astype(f32)
    w4w = params['w4w'].astype(bf16)
    w4b = params['w4b'].astype(f32)
    wih = params['wih'].astype(bf16)
    blstm = params['blstm'].astype(f32)

    def const_spec(shape):
        # Constant index_map + single buffer: copied into VMEM once and kept
        # resident across all grid steps (no wasted double-buffer).
        return pl.BlockSpec(shape, lambda i: (0,) * len(shape),
                            pipeline_mode=pl.Buffered(1))

    any_spec = pl.BlockSpec(memory_space=pl.ANY)   # stays in HBM, manual DMA

    in_specs = [
        pl.BlockSpec((1, N, H), lambda i: (i, 0, 0)),        # x (one snippet/step)
        any_spec, any_spec, any_spec,                        # hx0, cx0, p0 (HBM)
        const_spec((H, H)),                                  # w1w
        const_spec((H, 5 * H)),                              # w25 = [w2w | whh]
        const_spec((1, H)),                                  # w12b
        const_spec((1, H)), const_spec((1, 1)),              # vw, vb
        const_spec((H, H)), const_spec((H, H)), const_spec((1, H)),   # w3a, w3b, b3
        const_spec((H, H)), const_spec((1, H)),              # w4w, w4b
        const_spec((H, 4 * H)),                              # lstm wih.T
        const_spec((1, 4 * H)),                              # lstm bias_ih+bias_hh
    ]
    out_specs = [
        # preds: exactly snippet-1 blocks; index clamped so the skipped last
        # grid step revisits (and preserves) the last written block.
        pl.BlockSpec((1, N, H), lambda i: (jnp.minimum(i, snippet - 2), 0, 0)),
        # attns: exactly `step` blocks; write gated in-kernel with pl.when.
        pl.BlockSpec((1, N, 1), lambda i: (jnp.minimum(i, step - 1), 0, 0)),
        # snapshots: constant index, single-buffered.
        pl.BlockSpec((N, H), lambda i: (0, 0), pipeline_mode=pl.Buffered(1)),
        pl.BlockSpec((N, H), lambda i: (0, 0), pipeline_mode=pl.Buffered(1)),
        pl.BlockSpec((N, H), lambda i: (0, 0), pipeline_mode=pl.Buffered(1)),
    ]
    out_shape = [
        jax.ShapeDtypeStruct((snippet - 1, N, H), f32),
        jax.ShapeDtypeStruct((step, N, 1), f32),
        jax.ShapeDtypeStruct((N, H), f32),
        jax.ShapeDtypeStruct((N, H), f32),
        jax.ShapeDtypeStruct((N, H), f32),
    ]

    # Generation-aware VMEM budget: resident bf16 weights + state/IO tiles,
    # clamped below physical VMEM minus headroom for Mosaic internal scratch.
    try:
        vmem_capacity = getattr(pltpu.get_tpu_info(), 'vmem_capacity_bytes',
                                128 << 20)
    except Exception:  # not on a TPU / API unavailable
        vmem_capacity = 128 << 20
    weight_bytes = 13 * H * H * 2 + 16 * H * 4      # bf16 mats + f32 biases
    state_bytes = 36 * N * H                         # x(bf16 x2), preds(x2), scratch, snaps
    budget = max(vmem_capacity - (16 << 20), 32 << 20)
    vmem_limit = min(max(weight_bytes + state_bytes + (8 << 20), 32 << 20),
                     budget)

    preds, attns, hx_out, cx_out, p_out = pl.pallas_call(
        kernel,
        out_shape=out_shape,
        grid_spec=pltpu.PrefetchScalarGridSpec(
            num_scalar_prefetch=0,
            grid=(snippet,),
            in_specs=in_specs,
            out_specs=out_specs,
            scratch_shapes=[pltpu.VMEM((N, H), f32),        # hx_s
                            pltpu.VMEM((N, H), f32),        # cx_s
                            pltpu.VMEM((N, H), f32),        # p_s
                            pltpu.SemaphoreType.DMA((3,))]),  # init-state DMA
        compiler_params=pltpu.CompilerParams(
            dimension_semantics=("arbitrary",),             # serial recurrence
            vmem_limit_bytes=vmem_limit),
    )(x_bf, hx0, cx0, p,
      w1w, w25, w12b, vw, vb,
      w3wa, w3wb, w3b, w4w, w4b,
      wih, blstm)

    return preds, attns, (hx_out, cx_out), p_out


def kagu_ref(x, hidden, p, params, *, step, teacher):
    """Pure-JAX reference mirroring the kernel math (bf16 MXU operands with
    f32 accumulation, bf16 x, f32 state), same structure as the PyTorch forward."""
    bf16 = jnp.bfloat16
    hx, cx = hidden
    H = hx.shape[-1]
    xb = x.astype(bf16)
    w1w = params['w1w'].astype(bf16)
    w2w = params['w2w'].astype(bf16)
    w12b = params['w1b'] + params['w2b']
    vw = params['vw'].reshape(1, H)
    vb = params['vb']
    w3wa = params['w3w'][:H].astype(bf16)
    w3wb = params['w3w'][H:].astype(bf16)
    w3b = params['w3b']
    w4w = params['w4w'].astype(bf16)
    w4b = params['w4b']
    wih = params['wih'].astype(bf16)
    whh = params['whh'].astype(bf16)
    blstm = params['blstm']

    preds, attns = [], []
    hx_out = cx_out = p_out = None
    for i in range(x.shape[0]):
        n = xb[i]
        attn = jnp.tanh(
            jnp.dot(n, w1w, preferred_element_type=jnp.float32)
            + jnp.dot(hx.astype(bf16), w2w, preferred_element_type=jnp.float32)
            + w12b)
        sv = jnp.sum(attn * vw, axis=-1, keepdims=True) + vb
        m = jnp.max(sv, axis=0, keepdims=True)
        e = jnp.exp(sv - m)
        attn_sm = e / jnp.sum(e, axis=0, keepdims=True)
        n_weighted = (n * attn_sm).astype(bf16)
        other = n if teacher else p.astype(bf16)
        cv = (jnp.dot(n_weighted, w3wa, preferred_element_type=jnp.float32)
              + jnp.dot(other, w3wb, preferred_element_type=jnp.float32)
              + w3b)
        gates = (jnp.dot(cv.astype(bf16), wih, preferred_element_type=jnp.float32)
                 + jnp.dot(hx.astype(bf16), whh, preferred_element_type=jnp.float32)
                 + blstm)
        i_g = jax.nn.sigmoid(gates[:, :H])
        f_g = jax.nn.sigmoid(gates[:, H:2 * H])
        g_g = jnp.tanh(gates[:, 2 * H:3 * H])
        o_g = jax.nn.sigmoid(gates[:, 3 * H:])
        cx = f_g * cx + i_g * g_g
        hx = o_g * jnp.tanh(cx)
        p = jnp.dot(hx.astype(bf16), w4w, preferred_element_type=jnp.float32) + w4b
        preds.append(p)
        if i < step:
            attns.append(attn_sm)
        if i == step - 1:
            hx_out, cx_out, p_out = hx, cx, p
    return jnp.stack(preds[:-1]), jnp.stack(attns), (hx_out, cx_out), p_out


def _xavier(key, shape):
    fan_in, fan_out = shape
    a = (6.0 / (fan_in + fan_out)) ** 0.5
    return jax.random.uniform(key, shape, jnp.float32, -a, a)


if __name__ == "__main__":
    SNIPPET, N, H = 4, 64, 256     # small stand-in for [snippet, h*w, 2048]
    STEP, TEACHER = 2, False       # predictor='lstm', dropout=0.0

    key = jax.random.PRNGKey(0)
    ks = jax.random.split(key, 24)
    params = {
        'w1w': _xavier(ks[0], (H, H)),     'w1b': 0.01 * jax.random.normal(ks[1], (1, H)),
        'w2w': _xavier(ks[2], (H, H)),     'w2b': 0.01 * jax.random.normal(ks[3], (1, H)),
        'vw':  _xavier(ks[4], (H, 1)),     'vb':  0.01 * jax.random.normal(ks[5], (1, 1)),
        'w3w': _xavier(ks[6], (2 * H, H)), 'w3b': 0.01 * jax.random.normal(ks[7], (1, H)),
        'w4w': _xavier(ks[8], (H, H)),     'w4b': 0.01 * jax.random.normal(ks[9], (1, H)),
        'wih': _xavier(ks[10], (H, 4 * H)),
        'whh': _xavier(ks[11], (H, 4 * H)),
        'blstm': 0.01 * jax.random.normal(ks[12], (1, 4 * H)),
    }
    params = {k: v.astype(jnp.float32) for k, v in params.items()}

    x = jax.random.normal(ks[13], (SNIPPET, N, H), jnp.float32)
    hx0 = jax.random.normal(ks[14], (N, H), jnp.float32)
    cx0 = jax.random.normal(ks[15], (N, H), jnp.float32)
    p0 = jax.random.normal(ks[16], (N, H), jnp.float32)

    preds, attns, (hx_o, cx_o), p_out = kagu_forward(
        x, (hx0, cx0), p0, params, step=STEP, teacher=TEACHER)
    jax.block_until_ready((preds, attns, hx_o, cx_o, p_out))

    r_preds, r_attns, (r_hx, r_cx), r_p = kagu_ref(
        x, (hx0, cx0), p0, params, step=STEP, teacher=TEACHER)

    assert preds.shape == (SNIPPET - 1, N, H) and attns.shape == (STEP, N, 1)
    # 3e-3 tolerance: bf16 MXU operands + approx-reciprocal softmax denom.
    for got, want in [(preds, r_preds), (attns, r_attns),
                      (hx_o, r_hx), (cx_o, r_cx), (p_out, r_p)]:
        assert jnp.allclose(got, want, atol=3e-3, rtol=3e-3), \
            float(jnp.max(jnp.abs(got - want)))

    print("KERNEL_OK")
</pallas_src>

<mosaic_0001>
module attributes {stable_mosaic.version = 11 : i64} {
  func.func @_kagu_kernel(%arg0: i32, %arg1: memref<1x64x256xbf16, #tpu.memory_space<vmem>>, %arg2: memref<64x256xf32, #tpu.memory_space<any>>, %arg3: memref<64x256xf32, #tpu.memory_space<any>>, %arg4: memref<64x256xf32, #tpu.memory_space<any>>, %arg5: memref<256x256xbf16, #tpu.memory_space<vmem>>, %arg6: memref<256x1280xbf16, #tpu.memory_space<vmem>>, %arg7: memref<1x256xf32, #tpu.memory_space<vmem>>, %arg8: memref<1x256xf32, #tpu.memory_space<vmem>>, %arg9: memref<1x1xf32, #tpu.memory_space<vmem>>, %arg10: memref<256x256xbf16, #tpu.memory_space<vmem>>, %arg11: memref<256x256xbf16, #tpu.memory_space<vmem>>, %arg12: memref<1x256xf32, #tpu.memory_space<vmem>>, %arg13: memref<256x256xbf16, #tpu.memory_space<vmem>>, %arg14: memref<1x256xf32, #tpu.memory_space<vmem>>, %arg15: memref<256x1024xbf16, #tpu.memory_space<vmem>>, %arg16: memref<1x1024xf32, #tpu.memory_space<vmem>>, %arg17: memref<1x64x256xf32, #tpu.memory_space<vmem>>, %arg18: memref<1x64x1xf32, #tpu.memory_space<vmem>>, %arg19: memref<64x256xf32, #tpu.memory_space<vmem>>, %arg20: memref<64x256xf32, #tpu.memory_space<vmem>>, %arg21: memref<64x256xf32, #tpu.memory_space<vmem>>, %arg22: memref<64x256xf32, #tpu.memory_space<vmem>>, %arg23: memref<64x256xf32, #tpu.memory_space<vmem>>, %arg24: memref<64x256xf32, #tpu.memory_space<vmem>>, %arg25: memref<3x!tpu.dma_semaphore, #tpu.memory_space<semaphore_mem>>) attributes {dimension_semantics = [#tpu.dimension_semantics<arbitrary>], iteration_bounds = array<i64: 4>, scalar_prefetch = 0 : i64, scratch_operands = 4 : i64, tpu.core_type = #tpu.core_type<tc>, window_params = [{transform_indices = @transform_0, window_bounds = array<i64: 1, 64, 256>}, {}, {}, {}, {pipeline_mode = #tpu.pipeline_mode<synchronous>, transform_indices = @transform_4, window_bounds = array<i64: 256, 256>}, {pipeline_mode = #tpu.pipeline_mode<synchronous>, transform_indices = @transform_5, window_bounds = array<i64: 256, 1280>}, {pipeline_mode = #tpu.pipeline_mode<synchronous>, transform_indices = @transform_6, window_bounds = array<i64: 1, 256>}, {pipeline_mode = #tpu.pipeline_mode<synchronous>, transform_indices = @transform_7, window_bounds = array<i64: 1, 256>}, {pipeline_mode = #tpu.pipeline_mode<synchronous>, transform_indices = @transform_8, window_bounds = array<i64: 1, 1>}, {pipeline_mode = #tpu.pipeline_mode<synchronous>, transform_indices = @transform_9, window_bounds = array<i64: 256, 256>}, {pipeline_mode = #tpu.pipeline_mode<synchronous>, transform_indices = @transform_10, window_bounds = array<i64: 256, 256>}, {pipeline_mode = #tpu.pipeline_mode<synchronous>, transform_indices = @transform_11, window_bounds = array<i64: 1, 256>}, {pipeline_mode = #tpu.pipeline_mode<synchronous>, transform_indices = @transform_12, window_bounds = array<i64: 256, 256>}, {pipeline_mode = #tpu.pipeline_mode<synchronous>, transform_indices = @transform_13, window_bounds = array<i64: 1, 256>}, {pipeline_mode = #tpu.pipeline_mode<synchronous>, transform_indices = @transform_14, window_bounds = array<i64: 256, 1024>}, {pipeline_mode = #tpu.pipeline_mode<synchronous>, transform_indices = @transform_15, window_bounds = array<i64: 1, 1024>}, {transform_indices = @transform_16, window_bounds = array<i64: 1, 64, 256>}, {transform_indices = @transform_17, window_bounds = array<i64: 1, 64, 1>}, {pipeline_mode = #tpu.pipeline_mode<synchronous>, transform_indices = @transform_18, window_bounds = array<i64: 64, 256>}, {pipeline_mode = #tpu.pipeline_mode<synchronous>, transform_indices = @transform_19, window_bounds = array<i64: 64, 256>}, {pipeline_mode = #tpu.pipeline_mode<synchronous>, transform_indices = @transform_20, window_bounds = array<i64: 64, 256>}]} {
    %c0_i32 = arith.constant 0 : i32
    %0 = arith.cmpi eq, %arg0, %c0_i32 : i32
    %1 = arith.extui %0 : i1 to i32
    %c0_i32_0 = arith.constant 0 : i32
    %2 = arith.cmpi ne, %1, %c0_i32_0 : i32
    scf.if %2 {
      %c0_i32_49 = arith.constant 0 : i32
      %99 = tpu.memref_slice %arg25[%c0_i32_49] : memref<3x!tpu.dma_semaphore, #tpu.memory_space<semaphore_mem>> -> memref<1x!tpu.dma_semaphore, #tpu.memory_space<semaphore_mem>>
      %100 = tpu.memref_squeeze %99 : memref<1x!tpu.dma_semaphore, #tpu.memory_space<semaphore_mem>> -> memref<!tpu.dma_semaphore, #tpu.memory_space<semaphore_mem>>
      tpu.enqueue_dma source(%arg2 : memref<64x256xf32, #tpu.memory_space<any>>) target(%arg22 : memref<64x256xf32, #tpu.memory_space<vmem>>) target_semaphore(%100 : memref<!tpu.dma_semaphore, #tpu.memory_space<semaphore_mem>>)
      %c1_i32_50 = arith.constant 1 : i32
      %101 = tpu.memref_slice %arg25[%c1_i32_50] : memref<3x!tpu.dma_semaphore, #tpu.memory_space<semaphore_mem>> -> memref<1x!tpu.dma_semaphore, #tpu.memory_space<semaphore_mem>>
      %102 = tpu.memref_squeeze %101 : memref<1x!tpu.dma_semaphore, #tpu.memory_space<semaphore_mem>> -> memref<!tpu.dma_semaphore, #tpu.memory_space<semaphore_mem>>
      tpu.enqueue_dma source(%arg3 : memref<64x256xf32, #tpu.memory_space<any>>) target(%arg23 : memref<64x256xf32, #tpu.memory_space<vmem>>) target_semaphore(%102 : memref<!tpu.dma_semaphore, #tpu.memory_space<semaphore_mem>>)
      %c2_i32_51 = arith.constant 2 : i32
      %103 = tpu.memref_slice %arg25[%c2_i32_51] : memref<3x!tpu.dma_semaphore, #tpu.memory_space<semaphore_mem>> -> memref<1x!tpu.dma_semaphore, #tpu.memory_space<semaphore_mem>>
      %104 = tpu.memref_squeeze %103 : memref<1x!tpu.dma_semaphore, #tpu.memory_space<semaphore_mem>> -> memref<!tpu.dma_semaphore, #tpu.memory_space<semaphore_mem>>
      tpu.enqueue_dma source(%arg4 : memref<64x256xf32, #tpu.memory_space<any>>) target(%arg24 : memref<64x256xf32, #tpu.memory_space<vmem>>) target_semaphore(%104 : memref<!tpu.dma_semaphore, #tpu.memory_space<semaphore_mem>>)
      %c0_i32_52 = arith.constant 0 : i32
      %105 = tpu.memref_slice %arg25[%c0_i32_52] : memref<3x!tpu.dma_semaphore, #tpu.memory_space<semaphore_mem>> -> memref<1x!tpu.dma_semaphore, #tpu.memory_space<semaphore_mem>>
      %106 = tpu.memref_squeeze %105 : memref<1x!tpu.dma_semaphore, #tpu.memory_space<semaphore_mem>> -> memref<!tpu.dma_semaphore, #tpu.memory_space<semaphore_mem>>
      tpu.wait_dma2 semaphore(%106 : memref<!tpu.dma_semaphore, #tpu.memory_space<semaphore_mem>>) src(%arg2 : memref<64x256xf32, #tpu.memory_space<any>>) dst(%arg22 : memref<64x256xf32, #tpu.memory_space<vmem>>)
      %c1_i32_53 = arith.constant 1 : i32
      %107 = tpu.memref_slice %arg25[%c1_i32_53] : memref<3x!tpu.dma_semaphore, #tpu.memory_space<semaphore_mem>> -> memref<1x!tpu.dma_semaphore, #tpu.memory_space<semaphore_mem>>
      %108 = tpu.memref_squeeze %107 : memref<1x!tpu.dma_semaphore, #tpu.memory_space<semaphore_mem>> -> memref<!tpu.dma_semaphore, #tpu.memory_space<semaphore_mem>>
      tpu.wait_dma2 semaphore(%108 : memref<!tpu.dma_semaphore, #tpu.memory_space<semaphore_mem>>) src(%arg3 : memref<64x256xf32, #tpu.memory_space<any>>) dst(%arg23 : memref<64x256xf32, #tpu.memory_space<vmem>>)
      %c2_i32_54 = arith.constant 2 : i32
      %109 = tpu.memref_slice %arg25[%c2_i32_54] : memref<3x!tpu.dma_semaphore, #tpu.memory_space<semaphore_mem>> -> memref<1x!tpu.dma_semaphore, #tpu.memory_space<semaphore_mem>>
      %110 = tpu.memref_squeeze %109 : memref<1x!tpu.dma_semaphore, #tpu.memory_space<semaphore_mem>> -> memref<!tpu.dma_semaphore, #tpu.memory_space<semaphore_mem>>
      tpu.wait_dma2 semaphore(%110 : memref<!tpu.dma_semaphore, #tpu.memory_space<semaphore_mem>>) src(%arg4 : memref<64x256xf32, #tpu.memory_space<any>>) dst(%arg24 : memref<64x256xf32, #tpu.memory_space<vmem>>)
    } else {
    }
    %c0 = arith.constant 0 : index
    %c0_1 = arith.constant 0 : index
    %c0_2 = arith.constant 0 : index
    %3 = vector.load %arg1[%c0, %c0_1, %c0_2] : memref<1x64x256xbf16, #tpu.memory_space<vmem>>, vector<1x64x256xbf16>
    %4 = vector.shape_cast %3 : vector<1x64x256xbf16> to vector<64x256xbf16>
    %c0_3 = arith.constant 0 : index
    %c0_4 = arith.constant 0 : index
    %5 = vector.load %arg22[%c0_3, %c0_4] : memref<64x256xf32, #tpu.memory_space<vmem>>, vector<64x256xf32>
    %c0_5 = arith.constant 0 : index
    %c0_6 = arith.constant 0 : index
    %6 = vector.load %arg23[%c0_5, %c0_6] : memref<64x256xf32, #tpu.memory_space<vmem>>, vector<64x256xf32>
    %7 = arith.truncf %5 : vector<64x256xf32> to vector<64x256xbf16>
    %c0_7 = arith.constant 0 : index
    %c0_8 = arith.constant 0 : index
    %8 = vector.load %arg6[%c0_7, %c0_8] : memref<256x1280xbf16, #tpu.memory_space<vmem>>, vector<256x1280xbf16>
    %cst = arith.constant dense<0.000000e+00> : vector<64x1280xf32>
    %9 = tpu.matmul %7, %8, %cst {dimension_numbers = #tpu.dot_dimension_numbers<[1], [0], [0], [1], [0, 0, 1, 1], [], []>} : vector<64x256xbf16>, vector<256x1280xbf16>, vector<64x1280xf32> -> vector<64x1280xf32>
    %c0_9 = arith.constant 0 : index
    %c0_10 = arith.constant 0 : index
    %10 = vector.load %arg5[%c0_9, %c0_10] : memref<256x256xbf16, #tpu.memory_space<vmem>>, vector<256x256xbf16>
    %cst_11 = arith.constant dense<0.000000e+00> : vector<64x256xf32>
    %11 = tpu.matmul %4, %10, %cst_11 {dimension_numbers = #tpu.dot_dimension_numbers<[1], [0], [0], [1], [0, 0, 1, 1], [], []>} : vector<64x256xbf16>, vector<256x256xbf16>, vector<64x256xf32> -> vector<64x256xf32>
    %12 = vector.extract_strided_slice %9 {offsets = [0, 0], sizes = [64, 256], strides = [1, 1]} : vector<64x1280xf32> to vector<64x256xf32>
    %13 = arith.addf %11, %12 : vector<64x256xf32>
    %c0_12 = arith.constant 0 : index
    %c0_13 = arith.constant 0 : index
    %14 = vector.load %arg7[%c0_12, %c0_13] : memref<1x256xf32, #tpu.memory_space<vmem>>, vector<1x256xf32>
    %15 = vector.broadcast %14 : vector<1x256xf32> to vector<64x256xf32>
    %16 = arith.addf %13, %15 : vector<64x256xf32>
    %17 = math.tanh %16 : vector<64x256xf32>
    %c0_14 = arith.constant 0 : index
    %c0_15 = arith.constant 0 : index
    %18 = vector.load %arg8[%c0_14, %c0_15] : memref<1x256xf32, #tpu.memory_space<vmem>>, vector<1x256xf32>
    %19 = vector.broadcast %18 : vector<1x256xf32> to vector<64x256xf32>
    %20 = arith.mulf %17, %19 : vector<64x256xf32>
    %cst_16 = arith.constant dense<0.000000e+00> : vector<64xf32>
    %21 = vector.multi_reduction <add>, %20, %cst_16 [1] : vector<64x256xf32> to vector<64xf32>
    %22 = vector.shape_cast %21 : vector<64xf32> to vector<64x1xf32>
    %c0_17 = arith.constant 0 : index
    %c0_18 = arith.constant 0 : index
    %23 = vector.load %arg9[%c0_17, %c0_18] : memref<1x1xf32, #tpu.memory_space<vmem>>, vector<1x1xf32>
    %24 = vector.broadcast %23 : vector<1x1xf32> to vector<64x1xf32>
    %25 = arith.addf %22, %24 : vector<64x1xf32>
    %cst_19 = arith.constant dense<0xFF800000> : vector<1xf32>
    %26 = vector.multi_reduction <maximumf>, %25, %cst_19 [0] : vector<64x1xf32> to vector<1xf32>
    %27 = vector.shape_cast %26 : vector<1xf32> to vector<1x1xf32>
    %28 = vector.broadcast %27 : vector<1x1xf32> to vector<64x1xf32>
    %29 = arith.subf %25, %28 : vector<64x1xf32>
    %30 = math.exp %29 : vector<64x1xf32>
    %cst_20 = arith.constant dense<0.000000e+00> : vector<1xf32>
    %31 = vector.multi_reduction <add>, %30, %cst_20 [0] : vector<64x1xf32> to vector<1xf32>
    %32 = vector.shape_cast %31 : vector<1xf32> to vector<1x1xf32>
    %33 = tpu.reciprocal %32 {approx = true} : vector<1x1xf32> -> vector<1x1xf32>
    %34 = vector.broadcast %33 : vector<1x1xf32> to vector<64x1xf32>
    %35 = arith.mulf %30, %34 : vector<64x1xf32>
    %36 = arith.extf %4 : vector<64x256xbf16> to vector<64x256xf32>
    %37 = vector.broadcast %35 : vector<64x1xf32> to vector<64x256xf32>
    %38 = arith.mulf %36, %37 : vector<64x256xf32>
    %39 = arith.truncf %38 : vector<64x256xf32> to vector<64x256xbf16>
    %c0_21 = arith.constant 0 : index
    %c0_22 = arith.constant 0 : index
    %40 = vector.load %arg24[%c0_21, %c0_22] : memref<64x256xf32, #tpu.memory_space<vmem>>, vector<64x256xf32>
    %41 = arith.truncf %40 : vector<64x256xf32> to vector<64x256xbf16>
    %c0_23 = arith.constant 0 : index
    %c0_24 = arith.constant 0 : index
    %42 = vector.load %arg10[%c0_23, %c0_24] : memref<256x256xbf16, #tpu.memory_space<vmem>>, vector<256x256xbf16>
    %cst_25 = arith.constant dense<0.000000e+00> : vector<64x256xf32>
    %43 = tpu.matmul %39, %42, %cst_25 {dimension_numbers = #tpu.dot_dimension_numbers<[1], [0], [0], [1], [0, 0, 1, 1], [], []>} : vector<64x256xbf16>, vector<256x256xbf16>, vector<64x256xf32> -> vector<64x256xf32>
    %c0_26 = arith.constant 0 : index
    %c0_27 = arith.constant 0 : index
    %44 = vector.load %arg11[%c0_26, %c0_27] : memref<256x256xbf16, #tpu.memory_space<vmem>>, vector<256x256xbf16>
    %cst_28 = arith.constant dense<0.000000e+00> : vector<64x256xf32>
    %45 = tpu.matmul %41, %44, %cst_28 {dimension_numbers = #tpu.dot_dimension_numbers<[1], [0], [0], [1], [0, 0, 1, 1], [], []>} : vector<64x256xbf16>, vector<256x256xbf16>, vector<64x256xf32> -> vector<64x256xf32>
    %46 = arith.addf %43, %45 : vector<64x256xf32>
    %c0_29 = arith.constant 0 : index
    %c0_30 = arith.constant 0 : index
    %47 = vector.load %arg12[%c0_29, %c0_30] : memref<1x256xf32, #tpu.memory_space<vmem>>, vector<1x256xf32>
    %48 = vector.broadcast %47 : vector<1x256xf32> to vector<64x256xf32>
    %49 = arith.addf %46, %48 : vector<64x256xf32>
    %50 = arith.truncf %49 : vector<64x256xf32> to vector<64x256xbf16>
    %c0_31 = arith.constant 0 : index
    %c0_32 = arith.constant 0 : index
    %51 = vector.load %arg15[%c0_31, %c0_32] : memref<256x1024xbf16, #tpu.memory_space<vmem>>, vector<256x1024xbf16>
    %cst_33 = arith.constant dense<0.000000e+00> : vector<64x1024xf32>
    %52 = tpu.matmul %50, %51, %cst_33 {dimension_numbers = #tpu.dot_dimension_numbers<[1], [0], [0], [1], [0, 0, 1, 1], [], []>} : vector<64x256xbf16>, vector<256x1024xbf16>, vector<64x1024xf32> -> vector<64x1024xf32>
    %53 = vector.extract_strided_slice %9 {offsets = [0, 256], sizes = [64, 1024], strides = [1, 1]} : vector<64x1280xf32> to vector<64x1024xf32>
    %54 = arith.addf %52, %53 : vector<64x1024xf32>
    %c0_34 = arith.constant 0 : index
    %c0_35 = arith.constant 0 : index
    %55 = vector.load %arg16[%c0_34, %c0_35] : memref<1x1024xf32, #tpu.memory_space<vmem>>, vector<1x1024xf32>
    %56 = vector.broadcast %55 : vector<1x1024xf32> to vector<64x1024xf32>
    %57 = arith.addf %54, %56 : vector<64x1024xf32>
    %58 = vector.extract_strided_slice %57 {offsets = [0, 0], sizes = [64, 256], strides = [1, 1]} : vector<64x1024xf32> to vector<64x256xf32>
    %59 = arith.negf %58 : vector<64x256xf32>
    %60 = math.exp %59 : vector<64x256xf32>
    %cst_36 = arith.constant 1.000000e+00 : f32
    %61 = vector.broadcast %cst_36 : f32 to vector<64x256xf32>
    %62 = arith.addf %61, %60 : vector<64x256xf32>
    %63 = arith.divf %61, %62 : vector<64x256xf32>
    %64 = vector.extract_strided_slice %57 {offsets = [0, 256], sizes = [64, 256], strides = [1, 1]} : vector<64x1024xf32> to vector<64x256xf32>
    %65 = arith.negf %64 : vector<64x256xf32>
    %66 = math.exp %65 : vector<64x256xf32>
    %cst_37 = arith.constant 1.000000e+00 : f32
    %67 = vector.broadcast %cst_37 : f32 to vector<64x256xf32>
    %68 = arith.addf %67, %66 : vector<64x256xf32>
    %69 = arith.divf %67, %68 : vector<64x256xf32>
    %70 = vector.extract_strided_slice %57 {offsets = [0, 512], sizes = [64, 256], strides = [1, 1]} : vector<64x1024xf32> to vector<64x256xf32>
    %71 = math.tanh %70 : vector<64x256xf32>
    %72 = vector.extract_strided_slice %57 {offsets = [0, 768], sizes = [64, 256], strides = [1, 1]} : vector<64x1024xf32> to vector<64x256xf32>
    %73 = arith.negf %72 : vector<64x256xf32>
    %74 = math.exp %73 : vector<64x256xf32>
    %cst_38 = arith.constant 1.000000e+00 : f32
    %75 = vector.broadcast %cst_38 : f32 to vector<64x256xf32>
    %76 = arith.addf %75, %74 : vector<64x256xf32>
    %77 = arith.divf %75, %76 : vector<64x256xf32>
    %78 = arith.mulf %69, %6 : vector<64x256xf32>
    %79 = arith.mulf %63, %71 : vector<64x256xf32>
    %80 = arith.addf %78, %79 : vector<64x256xf32>
    %81 = math.tanh %80 : vector<64x256xf32>
    %82 = arith.mulf %77, %81 : vector<64x256xf32>
    %c0_39 = arith.constant 0 : index
    %c0_40 = arith.constant 0 : index
    %83 = vector.load %arg22[%c0_39, %c0_40] : memref<64x256xf32, #tpu.memory_space<vmem>>, vector<64x256xf32>
    tpu.vector_store %arg22[%c0_39, %c0_40], %82 {strides = array<i32>} : memref<64x256xf32, #tpu.memory_space<vmem>>, vector<64x256xf32>,
    %c0_41 = arith.constant 0 : index
    %c0_42 = arith.constant 0 : index
    %84 = vector.load %arg23[%c0_41, %c0_42] : memref<64x256xf32, #tpu.memory_space<vmem>>, vector<64x256xf32>
    tpu.vector_store %arg23[%c0_41, %c0_42], %80 {strides = array<i32>} : memref<64x256xf32, #tpu.memory_space<vmem>>, vector<64x256xf32>,
    %c2_i32 = arith.constant 2 : i32
    %85 = arith.cmpi slt, %arg0, %c2_i32 : i32
    %86 = arith.extui %85 : i1 to i32
    %c0_i32_43 = arith.constant 0 : i32
    %87 = arith.cmpi ne, %86, %c0_i32_43 : i32
    scf.if %87 {
      %c0_49 = arith.constant 0 : index
      %c0_50 = arith.constant 0 : index
      %c0_51 = arith.constant 0 : index
      %99 = vector.load %arg18[%c0_49, %c0_50, %c0_51] : memref<1x64x1xf32, #tpu.memory_space<vmem>>, vector<1x64x1xf32>
      %100 = vector.shape_cast %99 : vector<1x64x1xf32> to vector<64x1xf32>
      %101 = vector.shape_cast %35 : vector<64x1xf32> to vector<1x64x1xf32>
      tpu.vector_store %arg18[%c0_49, %c0_50, %c0_51], %101 {strides = array<i32>} : memref<1x64x1xf32, #tpu.memory_space<vmem>>, vector<1x64x1xf32>,
    } else {
    }
    %c3_i32 = arith.constant 3 : i32
    %88 = arith.cmpi slt, %arg0, %c3_i32 : i32
    %c1_i32 = arith.constant 1 : i32
    %89 = arith.cmpi eq, %arg0, %c1_i32 : i32
    %90 = arith.ori %88, %89 : i1
    %91 = arith.extui %90 : i1 to i32
    %c0_i32_44 = arith.constant 0 : i32
    %92 = arith.cmpi ne, %91, %c0_i32_44 : i32
    scf.if %92 {
      %99 = arith.truncf %82 : vector<64x256xf32> to vector<64x256xbf16>
      %c0_49 = arith.constant 0 : index
      %c0_50 = arith.constant 0 : index
      %100 = vector.load %arg13[%c0_49, %c0_50] : memref<256x256xbf16, #tpu.memory_space<vmem>>, vector<256x256xbf16>
      %cst_51 = arith.constant dense<0.000000e+00> : vector<64x256xf32>
      %101 = tpu.matmul %99, %100, %cst_51 {dimension_numbers = #tpu.dot_dimension_numbers<[1], [0], [0], [1], [0, 0, 1, 1], [], []>} : vector<64x256xbf16>, vector<256x256xbf16>, vector<64x256xf32> -> vector<64x256xf32>
      %c0_52 = arith.constant 0 : index
      %c0_53 = arith.constant 0 : index
      %102 = vector.load %arg14[%c0_52, %c0_53] : memref<1x256xf32, #tpu.memory_space<vmem>>, vector<1x256xf32>
      %103 = vector.broadcast %102 : vector<1x256xf32> to vector<64x256xf32>
      %104 = arith.addf %101, %103 : vector<64x256xf32>
      %c0_54 = arith.constant 0 : index
      %c0_55 = arith.constant 0 : index
      %105 = vector.load %arg24[%c0_54, %c0_55] : memref<64x256xf32, #tpu.memory_space<vmem>>, vector<64x256xf32>
      tpu.vector_store %arg24[%c0_54, %c0_55], %104 {strides = array<i32>} : memref<64x256xf32, #tpu.memory_space<vmem>>, vector<64x256xf32>,
    } else {
    }
    %c3_i32_45 = arith.constant 3 : i32
    %93 = arith.cmpi slt, %arg0, %c3_i32_45 : i32
    %94 = arith.extui %93 : i1 to i32
    %c0_i32_46 = arith.constant 0 : i32
    %95 = arith.cmpi ne, %94, %c0_i32_46 : i32
    scf.if %95 {
      %c0_49 = arith.constant 0 : index
      %c0_50 = arith.constant 0 : index
      %99 = vector.load %arg24[%c0_49, %c0_50] : memref<64x256xf32, #tpu.memory_space<vmem>>, vector<64x256xf32>
      %c0_51 = arith.constant 0 : index
      %c0_52 = arith.constant 0 : index
      %c0_53 = arith.constant 0 : index
      %100 = vector.load %arg17[%c0_51, %c0_52, %c0_53] : memref<1x64x256xf32, #tpu.memory_space<vmem>>, vector<1x64x256xf32>
      %101 = vector.shape_cast %100 : vector<1x64x256xf32> to vector<64x256xf32>
      %102 = vector.shape_cast %99 : vector<64x256xf32> to vector<1x64x256xf32>
      tpu.vector_store %arg17[%c0_51, %c0_52, %c0_53], %102 {strides = array<i32>} : memref<1x64x256xf32, #tpu.memory_space<vmem>>, vector<1x64x256xf32>,
    } else {
    }
    %c1_i32_47 = arith.constant 1 : i32
    %96 = arith.cmpi eq, %arg0, %c1_i32_47 : i32
    %97 = arith.extui %96 : i1 to i32
    %c0_i32_48 = arith.constant 0 : i32
    %98 = arith.cmpi ne, %97, %c0_i32_48 : i32
    scf.if %98 {
      %c0_49 = arith.constant 0 : index
      %c0_50 = arith.constant 0 : index
      %99 = vector.load %arg19[%c0_49, %c0_50] : memref<64x256xf32, #tpu.memory_space<vmem>>, vector<64x256xf32>
      tpu.vector_store %arg19[%c0_49, %c0_50], %82 {strides = array<i32>} : memref<64x256xf32, #tpu.memory_space<vmem>>, vector<64x256xf32>,
      %c0_51 = arith.constant 0 : index
      %c0_52 = arith.constant 0 : index
      %100 = vector.load %arg20[%c0_51, %c0_52] : memref<64x256xf32, #tpu.memory_space<vmem>>, vector<64x256xf32>
      tpu.vector_store %arg20[%c0_51, %c0_52], %80 {strides = array<i32>} : memref<64x256xf32, #tpu.memory_space<vmem>>, vector<64x256xf32>,
      %c0_53 = arith.constant 0 : index
      %c0_54 = arith.constant 0 : index
      %101 = vector.load %arg24[%c0_53, %c0_54] : memref<64x256xf32, #tpu.memory_space<vmem>>, vector<64x256xf32>
      %c0_55 = arith.constant 0 : index
      %c0_56 = arith.constant 0 : index
      %102 = vector.load %arg21[%c0_55, %c0_56] : memref<64x256xf32, #tpu.memory_space<vmem>>, vector<64x256xf32>
      tpu.vector_store %arg21[%c0_55, %c0_56], %101 {strides = array<i32>} : memref<64x256xf32, #tpu.memory_space<vmem>>, vector<64x256xf32>,
    } else {
    }
    return
  }
  func.func @transform_0(%arg0: i32) -> (i32, i32, i32) {
    %c0_i32 = arith.constant 0 : i32
    %c0_i32_0 = arith.constant 0 : i32
    %c0_i32_1 = arith.constant 0 : i32
    return %arg0, %c0_i32, %c0_i32_0 : i32, i32, i32
  }
  func.func @transform_4(%arg0: i32) -> (i32, i32) {
    %c0_i32 = arith.constant 0 : i32
    %c0_i32_0 = arith.constant 0 : i32
    %c0_i32_1 = arith.constant 0 : i32
    return %c0_i32, %c0_i32_0 : i32, i32
  }
  func.func @transform_5(%arg0: i32) -> (i32, i32) {
    %c0_i32 = arith.constant 0 : i32
    %c0_i32_0 = arith.constant 0 : i32
    %c0_i32_1 = arith.constant 0 : i32
    return %c0_i32, %c0_i32_0 : i32, i32
  }
  func.func @transform_6(%arg0: i32) -> (i32, i32) {
    %c0_i32 = arith.constant 0 : i32
    %c0_i32_0 = arith.constant 0 : i32
    %c0_i32_1 = arith.constant 0 : i32
    return %c0_i32, %c0_i32_0 : i32, i32
  }
  func.func @transform_7(%arg0: i32) -> (i32, i32) {
    %c0_i32 = arith.constant 0 : i32
    %c0_i32_0 = arith.constant 0 : i32
    %c0_i32_1 = arith.constant 0 : i32
    return %c0_i32, %c0_i32_0 : i32, i32
  }
  func.func @transform_8(%arg0: i32) -> (i32, i32) {
    %c0_i32 = arith.constant 0 : i32
    %c0_i32_0 = arith.constant 0 : i32
    %c0_i32_1 = arith.constant 0 : i32
    return %c0_i32, %c0_i32_0 : i32, i32
  }
  func.func @transform_9(%arg0: i32) -> (i32, i32) {
    %c0_i32 = arith.constant 0 : i32
    %c0_i32_0 = arith.constant 0 : i32
    %c0_i32_1 = arith.constant 0 : i32
    return %c0_i32, %c0_i32_0 : i32, i32
  }
  func.func @transform_10(%arg0: i32) -> (i32, i32) {
    %c0_i32 = arith.constant 0 : i32
    %c0_i32_0 = arith.constant 0 : i32
    %c0_i32_1 = arith.constant 0 : i32
    return %c0_i32, %c0_i32_0 : i32, i32
  }
  func.func @transform_11(%arg0: i32) -> (i32, i32) {
    %c0_i32 = arith.constant 0 : i32
    %c0_i32_0 = arith.constant 0 : i32
    %c0_i32_1 = arith.constant 0 : i32
    return %c0_i32, %c0_i32_0 : i32, i32
  }
  func.func @transform_12(%arg0: i32) -> (i32, i32) {
    %c0_i32 = arith.constant 0 : i32
    %c0_i32_0 = arith.constant 0 : i32
    %c0_i32_1 = arith.constant 0 : i32
    return %c0_i32, %c0_i32_0 : i32, i32
  }
  func.func @transform_13(%arg0: i32) -> (i32, i32) {
    %c0_i32 = arith.constant 0 : i32
    %c0_i32_0 = arith.constant 0 : i32
    %c0_i32_1 = arith.constant 0 : i32
    return %c0_i32, %c0_i32_0 : i32, i32
  }
  func.func @transform_14(%arg0: i32) -> (i32, i32) {
    %c0_i32 = arith.constant 0 : i32
    %c0_i32_0 = arith.constant 0 : i32
    %c0_i32_1 = arith.constant 0 : i32
    return %c0_i32, %c0_i32_0 : i32, i32
  }
  func.func @transform_15(%arg0: i32) -> (i32, i32) {
    %c0_i32 = arith.constant 0 : i32
    %c0_i32_0 = arith.constant 0 : i32
    %c0_i32_1 = arith.constant 0 : i32
    return %c0_i32, %c0_i32_0 : i32, i32
  }
  func.func @transform_16(%arg0: i32) -> (i32, i32, i32) {
    %c2_i32 = arith.constant 2 : i32
    %0 = arith.minsi %arg0, %c2_i32 : i32
    %c0_i32 = arith.constant 0 : i32
    %c0_i32_0 = arith.constant 0 : i32
    %c0_i32_1 = arith.constant 0 : i32
    return %0, %c0_i32, %c0_i32_0 : i32, i32, i32
  }
  func.func @transform_17(%arg0: i32) -> (i32, i32, i32) {
    %c1_i32 = arith.constant 1 : i32
    %0 = arith.minsi %arg0, %c1_i32 : i32
    %c0_i32 = arith.constant 0 : i32
    %c0_i32_0 = arith.constant 0 : i32
    %c0_i32_1 = arith.constant 0 : i32
    return %0, %c0_i32, %c0_i32_0 : i32, i32, i32
  }
  func.func @transform_18(%arg0: i32) -> (i32, i32) {
    %c0_i32 = arith.constant 0 : i32
    %c0_i32_0 = arith.constant 0 : i32
    %c0_i32_1 = arith.constant 0 : i32
    return %c0_i32, %c0_i32_0 : i32, i32
  }
  func.func @transform_19(%arg0: i32) -> (i32, i32) {
    %c0_i32 = arith.constant 0 : i32
    %c0_i32_0 = arith.constant 0 : i32
    %c0_i32_1 = arith.constant 0 : i32
    return %c0_i32, %c0_i32_0 : i32, i32
  }
  func.func @transform_20(%arg0: i32) -> (i32, i32) {
    %c0_i32 = arith.constant 0 : i32
    %c0_i32_0 = arith.constant 0 : i32
    %c0_i32_1 = arith.constant 0 : i32
    return %c0_i32, %c0_i32_0 : i32, i32
  }
}

</mosaic_0001>

<llo_original>
// kernel: tpu_custom_call.1
$region0: #{tpu_custom_call.1}
  #allocation0 [shape = 'u32[]', space=smem, size = 0x4, offset = 0x4, fixed_abs, tag = 'smem constant byte address 0x4 - core index']
  #allocation1 [shape = 'u32[72,128]{1,0:T(1,128)}', space=vmem, size = 0x9000, scoped, tag = 'internal scratch']
  #allocation2 [shape = 'f32[64,256]{1,0:T(8,128)}', space=vmem, size = 0x10000, scoped, tag = 'scratch operand']
  #allocation3 [shape = 'f32[64,256]{1,0:T(8,128)}', space=vmem, size = 0x10000, scoped, tag = 'scratch operand']
  #allocation4 [shape = 'f32[64,256]{1,0:T(8,128)}', space=vmem, size = 0x10000, scoped, tag = 'scratch operand']
  #allocation5 [shape = 's32[3]{0}', space=sflag, size = 0xc, scoped, tag = 'scratch operand']
  #allocation6 [shape = 'f32[1,1]{1,0:T(1,128)S(1)}', space=vmem, size = 0x200, scoped, tag = 'scoped memory for tpu_custom_call.1']
  #allocation27 [shape = 's32[]', space=sflag, size = 0x4, offset = 0, fixed_abs, tag = 'sflag constant byte address 0x0 - dummy sync flag']
  #allocation28 [shape = 's32[]', space=sflag, size = 0x4, offset = 0, fixed_abs, tag = 'sflag constant byte address 0x0 - dummy sync flag']
  #allocation29 [shape = 'u32[]', space=smem, size = 0x4, offset = 0x44, fixed_abs, tag = 'smem constant byte address 0x44 - assertion arg 0']
  #allocation30 [shape = 'u32[]', space=smem, size = 0x4, offset = 0x48, fixed_abs, tag = 'smem constant byte address 0x48 - assertion arg 1']
  #allocation31 [shape = 's32[]', space=sflag, size = 0x4, offset = 0, fixed_abs, tag = 'sflag constant byte address 0x0 - dummy sync flag']
  #allocation32 [shape = 's32[]', space=sflag, size = 0x4, offset = 0, fixed_abs, tag = 'sflag constant byte address 0x0 - dummy sync flag']
  #allocation33 [shape = 's32[]', space=sflag, size = 0x4, offset = 0, fixed_abs, tag = 'sflag constant byte address 0x0 - dummy sync flag']
  #allocation34 [shape = 's32[]', space=sflag, size = 0x4, offset = 0, fixed_abs, tag = 'sflag constant byte address 0x0 - dummy sync flag']
  %s0 = inlined_call_operand.hbm [shape: bf16[4,64,256], index: 0, kind: input, shape index: {}]
  %s1 = inlined_call_operand.hbm [shape: f32[64,256], index: 1, kind: input, shape index: {}]
  %s2 = inlined_call_operand.hbm [shape: f32[64,256], index: 2, kind: input, shape index: {}]
  %s3 = inlined_call_operand.hbm [shape: f32[64,256], index: 3, kind: input, shape index: {}]
  %s4 = inlined_call_operand.hbm [shape: bf16[256,256], index: 4, kind: input, shape index: {}]
  %s5 = inlined_call_operand.hbm [shape: bf16[256,1280], index: 5, kind: input, shape index: {}]
  %s6 = inlined_call_operand.vmem [shape: f32[1,256], index: 6, kind: input, shape index: {}]
  %s7 = inlined_call_operand.vmem [shape: f32[1,256], index: 7, kind: input, shape index: {}]
  %s8 = inlined_call_operand.<no memory space> [shape: f32[1,1], index: 8, kind: input, shape index: {}]
  %s9 = inlined_call_operand.hbm [shape: bf16[256,256], index: 9, kind: input, shape index: {}]
  %s10 = inlined_call_operand.hbm [shape: bf16[256,256], index: 10, kind: input, shape index: {}]
  %s11 = inlined_call_operand.vmem [shape: f32[1,256], index: 11, kind: input, shape index: {}]
  %s12 = inlined_call_operand.hbm [shape: bf16[256,256], index: 12, kind: input, shape index: {}]
  %s13 = inlined_call_operand.hbm [shape: f32[1,256], index: 13, kind: input, shape index: {}]
  %s14 = inlined_call_operand.hbm [shape: bf16[256,1024], index: 14, kind: input, shape index: {}]
  %s15 = inlined_call_operand.vmem [shape: f32[1,1024], index: 15, kind: input, shape index: {}]
  %s16 = inlined_call_operand.hbm [shape: f32[3,64,256], index: 16, kind: output, shape index: {0}]
  %s17 = inlined_call_operand.vmem [shape: f32[2,64,1], index: 17, kind: output, shape index: {1}]
  %s18 = inlined_call_operand.hbm [shape: f32[64,256], index: 18, kind: output, shape index: {2}]
  %s19 = inlined_call_operand.hbm [shape: f32[64,256], index: 19, kind: output, shape index: {3}]
  %s20 = inlined_call_operand.hbm [shape: f32[64,256], index: 20, kind: output, shape index: {4}]
  %21 = xla_tuple %s16, %s17, %s18, %s19, %s20
  %s22 = sld [smem:[#allocation0]]
  $region181: #{tpu_custom_call.1} parent=0
    _
  %s24 = ssub.s32 1, %s22
  %s25 = scalar_select 0, %s24, %s22
  %v26 = vstv %s8
  %27 = vst [vmem:[#allocation6] sm:$0x1] %v26
  $region1: #{tpu_custom_call.1} parent=0
    #allocation7 [shape = 'u8[65536]{0}', space=vmem, size = 0x10000, scoped, tag = 'input window, operand 0']
    #allocation8 [shape = 's32[2]{0}', space=sflag, size = 0x8, scoped, tag = 'scoped memory for tpu_custom_call.1']
    #allocation9 [shape = 's32[2]{0}', space=sflag, size = 0x8, scoped, tag = 'scoped memory for tpu_custom_call.1']
    #allocation10 [shape = 'u8[131072]{0}', space=vmem, size = 0x20000, scoped, tag = 'input window, operand 4, single buffered']
    #allocation11 [shape = 's32[1]{0}', space=sflag, size = 0x4, scoped, tag = 'scoped memory for tpu_custom_call.1']
    #allocation12 [shape = 'u8[655360]{0}', space=vmem, size = 0xa0000, scoped, tag = 'input window, operand 5, single buffered']
    #allocation13 [shape = 'u8[131072]{0}', space=vmem, size = 0x20000, scoped, tag = 'input window, operand 9, single buffered']
    #allocation14 [shape = 's32[1]{0}', space=sflag, size = 0x4, scoped, tag = 'scoped memory for tpu_custom_call.1']
    #allocation15 [shape = 'u8[131072]{0}', space=vmem, size = 0x20000, scoped, tag = 'input window, operand 10, single buffered']
    #allocation16 [shape = 'u8[131072]{0}', space=vmem, size = 0x20000, scoped, tag = 'input window, operand 12, single buffered']
    #allocation17 [shape = 's32[1]{0}', space=sflag, size = 0x4, scoped, tag = 'scoped memory for tpu_custom_call.1']
    #allocation18 [shape = 'u8[1024]{0}', space=vmem, size = 0x400, scoped, tag = 'input window, operand 13, single buffered']
    #allocation19 [shape = 'u8[524288]{0}', space=vmem, size = 0x80000, scoped, tag = 'input window, operand 14, single buffered']
    #allocation20 [shape = 's32[1]{0}', space=sflag, size = 0x4, scoped, tag = 'scoped memory for tpu_custom_call.1']
    #allocation21 [shape = 'u8[131072]{0}', space=vmem, size = 0x20000, scoped, tag = 'output window, operand 0']
    #allocation22 [shape = 'u8[65536]{0}', space=vmem, size = 0x10000, scoped, tag = 'output window, operand 2, single buffered']
    #allocation23 [shape = 's32[1]{0}', space=sflag, size = 0x4, scoped, tag = 'scoped memory for tpu_custom_call.1']
    #allocation24 [shape = 'u8[65536]{0}', space=vmem, size = 0x10000, scoped, tag = 'output window, operand 3, single buffered']
    #allocation25 [shape = 'u8[65536]{0}', space=vmem, size = 0x10000, scoped, tag = 'output window, operand 4, single buffered']
    #allocation26 [shape = 's32[1]{0}', space=sflag, size = 0x4, scoped, tag = 'scoped memory for tpu_custom_call.1']
    %28 = vsyncpa [#allocation8], 0
    %s29 = scalar_lea.sflag [#allocation8], 1
    %30 = vsyncpa %s29, 0
    %31 = vsyncpa [#allocation11], 0
    %32 = vsyncpa [#allocation14], 0
    %33 = vsyncpa [#allocation17], 0
    %34 = vsyncpa [#allocation20], 0
    %35 = vsyncpa [#allocation9], 0
    %s36 = scalar_lea.sflag [#allocation9], 1
    %37 = vsyncpa %s36, 0
    %38 = vsyncpa [#allocation23], 0
    %39 = vsyncpa [#allocation26], 0
    loop: start=0, step=1, limit=6
    $region2: #{tpu_custom_call.1} parent=1 // loop_pre_header
      _
    $region3: #{tpu_custom_call.1} parent=1 // loop_header
      %s41 = sphi 0, %s45
      %p42 = scmp.ge.s32.totalorder %s41, 6
      %s51 = sphi 0, %s53
      %s54 = sphi 0, %s51
      %s55 = sphi 0, %s54
      %s71 = sphi 0, %s55
      %s75 = sphi 0, %s75
      %s77 = sphi 0, %s75
      %s78 = sphi 0, %s77
      %s92 = sphi 0, %s78
      %s96 = sphi 0, %s96
      %s98 = sphi 0, %s96
      %s99 = sphi 0, %s98
      %s113 = sphi 0, %s99
      %s117 = sphi 0, %s117
      %s119 = sphi 0, %s117
      %s120 = sphi 0, %s119
      %s134 = sphi 0, %s120
      %s138 = sphi 0, %s138
      %s140 = sphi 0, %s138
      %s141 = sphi 0, %s140
      %s155 = sphi 0, %s141
      %s159 = sphi 0, %s159
      %s161 = sphi 0, %s159
      %s162 = sphi 0, %s161
      %s176 = sphi 0, %s162
      %s180 = sphi 0, %s180
      %s182 = sphi 0, %s180
      %s183 = sphi 0, %s182
      %s197 = sphi 0, %s183
      %s201 = sphi 0, %s201
      %s203 = sphi 0, %s201
      %s204 = sphi 0, %s203
      %s218 = sphi 0, %s204
      %s222 = sphi 0, %s222
      %s224 = sphi 0, %s222
      %s225 = sphi 0, %s224
      %s239 = sphi 0, %s225
      %s243 = sphi 0, %s243
      %s245 = sphi 0, %s243
      %s246 = sphi 0, %s245
      %s260 = sphi 0, %s246
      %s264 = sphi 0, %s264
      %s266 = sphi 0, %s264
      %s267 = sphi 0, %s266
      %s281 = sphi 0, %s267
      %s285 = sphi 0, %s285
      %s287 = sphi 0, %s285
      %s288 = sphi 0, %s287
      %s302 = sphi 0, %s288
      %s306 = sphi 0, %s306
      %s308 = sphi 0, %s306
      %s309 = sphi 0, %s308
      %s323 = sphi 0, %s309
      %s333 = sphi 0, %s335
      %s336 = sphi 0, %s333
      %s337 = sphi 0, %s336
      %s353 = sphi 0, %s337
      %s363 = sphi 0, %s365
      %s366 = sphi 0, %s363
      %s367 = sphi 0, %s366
      %s383 = sphi 0, %s367
      %s387 = sphi 0, %s387
      %s389 = sphi 0, %s387
      %s390 = sphi 0, %s389
      %s404 = sphi 0, %s390
      %s408 = sphi 0, %s408
      %s410 = sphi 0, %s408
      %s411 = sphi 0, %s410
      %s425 = sphi 0, %s411
      %s429 = sphi 0, %s429
      %s431 = sphi 0, %s429
      %s432 = sphi 0, %s431
      %s446 = sphi 0, %s432
    $region4: #{tpu_custom_call.1} parent=1 // loop_header_branch
      %44 = sbr.rel (%p42) target = $region8
    $region5: #{tpu_custom_call.1} parent=1 // loop_body
      %s46 = ssub.s32 %s41, 1
      %s47 = ssub.s32 %s41, 2
      %s48 = sadd.s32 %s41, 1
      %s49 = ssub.s32 %s41, %s48
      %p50 = scmp.eq.s32.totalorder %s49, 0
      %s52 = sadd.s32 %s51, 1
      %s53 = scalar_select %p50, %s51, %s52
      %p56 = pneg %p50
      %p57 = scmp.eq.s32.totalorder %s41, 3
      %p58 = por %p56, %p57
      %p59 = scmp.ne.s32.totalorder %s51, %s54
      %p60 = scmp.eq.s32.totalorder %s41, 0
      %p61 = por %p59, %p60
      %p62 = scmp.ne.s32.totalorder %s51, %s54
      %p63 = scmp.eq.s32.totalorder %s46, 3
      %p64 = por %p62, %p63
      %p65 = scmp.ne.s32.totalorder %s54, %s55
      %p66 = scmp.eq.s32.totalorder %s46, 0
      %p67 = por %p65, %p66
      %p68 = scmp.ne.s32.totalorder %s54, %s55
      %p69 = scmp.eq.s32.totalorder %s47, 3
      %p70 = por %p68, %p69
      %p72 = scmp.ne.s32.totalorder %s55, %s71
      %p73 = scmp.eq.s32.totalorder %s47, 0
      %p74 = por %p72, %p73
      %s76 = sadd.s32 %s75, 1
      %p79 = scmp.eq.s32.totalorder %s41, 3
      %p80 = scmp.ne.s32.totalorder %s75, %s77
      %p81 = scmp.eq.s32.totalorder %s41, 0
      %p82 = por %p80, %p81
      %p83 = scmp.ne.s32.totalorder %s75, %s77
      %p84 = scmp.eq.s32.totalorder %s46, 3
      %p85 = por %p83, %p84
      %p86 = scmp.ne.s32.totalorder %s77, %s78
      %p87 = scmp.eq.s32.totalorder %s46, 0
      %p88 = por %p86, %p87
      %p89 = scmp.ne.s32.totalorder %s77, %s78
      %p90 = scmp.eq.s32.totalorder %s47, 3
      %p91 = por %p89, %p90
      %p93 = scmp.ne.s32.totalorder %s78, %s92
      %p94 = scmp.eq.s32.totalorder %s47, 0
      %p95 = por %p93, %p94
      %s97 = sadd.s32 %s96, 1
      %p100 = scmp.eq.s32.totalorder %s41, 3
      %p101 = scmp.ne.s32.totalorder %s96, %s98
      %p102 = scmp.eq.s32.totalorder %s41, 0
      %p103 = por %p101, %p102
      %p104 = scmp.ne.s32.totalorder %s96, %s98
      %p105 = scmp.eq.s32.totalorder %s46, 3
      %p106 = por %p104, %p105
      %p107 = scmp.ne.s32.totalorder %s98, %s99
      %p108 = scmp.eq.s32.totalorder %s46, 0
      %p109 = por %p107, %p108
      %p110 = scmp.ne.s32.totalorder %s98, %s99
      %p111 = scmp.eq.s32.totalorder %s47, 3
      %p112 = por %p110, %p111
      %p114 = scmp.ne.s32.totalorder %s99, %s113
      %p115 = scmp.eq.s32.totalorder %s47, 0
      %p116 = por %p114, %p115
      %s118 = sadd.s32 %s117, 1
      %p121 = scmp.eq.s32.totalorder %s41, 3
      %p122 = scmp.ne.s32.totalorder %s117, %s119
      %p123 = scmp.eq.s32.totalorder %s41, 0
      %p124 = por %p122, %p123
      %p125 = scmp.ne.s32.totalorder %s117, %s119
      %p126 = scmp.eq.s32.totalorder %s46, 3
      %p127 = por %p125, %p126
      %p128 = scmp.ne.s32.totalorder %s119, %s120
      %p129 = scmp.eq.s32.totalorder %s46, 0
      %p130 = por %p128, %p129
      %p131 = scmp.ne.s32.totalorder %s119, %s120
      %p132 = scmp.eq.s32.totalorder %s47, 3
      %p133 = por %p131, %p132
      %p135 = scmp.ne.s32.totalorder %s120, %s134
      %p136 = scmp.eq.s32.totalorder %s47, 0
      %p137 = por %p135, %p136
      %s139 = sadd.s32 %s138, 1
      %p142 = scmp.eq.s32.totalorder %s41, 3
      %p143 = scmp.ne.s32.totalorder %s138, %s140
      %p144 = scmp.eq.s32.totalorder %s41, 0
      %p145 = por %p143, %p144
      %p146 = scmp.ne.s32.totalorder %s138, %s140
      %p147 = scmp.eq.s32.totalorder %s46, 3
      %p148 = por %p146, %p147
      %p149 = scmp.ne.s32.totalorder %s140, %s141
      %p150 = scmp.eq.s32.totalorder %s46, 0
      %p151 = por %p149, %p150
      %p152 = scmp.ne.s32.totalorder %s140, %s141
      %p153 = scmp.eq.s32.totalorder %s47, 3
      %p154 = por %p152, %p153
      %p156 = scmp.ne.s32.totalorder %s141, %s155
      %p157 = scmp.eq.s32.totalorder %s47, 0
      %p158 = por %p156, %p157
      %s160 = sadd.s32 %s159, 1
      %p163 = scmp.eq.s32.totalorder %s41, 3
      %p164 = scmp.ne.s32.totalorder %s159, %s161
      %p165 = scmp.eq.s32.totalorder %s41, 0
      %p166 = por %p164, %p165
      %p167 = scmp.ne.s32.totalorder %s159, %s161
      %p168 = scmp.eq.s32.totalorder %s46, 3
      %p169 = por %p167, %p168
      %p170 = scmp.ne.s32.totalorder %s161, %s162
      %p171 = scmp.eq.s32.totalorder %s46, 0
      %p172 = por %p170, %p171
      %p173 = scmp.ne.s32.totalorder %s161, %s162
      %p174 = scmp.eq.s32.totalorder %s47, 3
      %p175 = por %p173, %p174
      %p177 = scmp.ne.s32.totalorder %s162, %s176
      %p178 = scmp.eq.s32.totalorder %s47, 0
      %p179 = por %p177, %p178
      %s181 = sadd.s32 %s180, 1
      %p184 = scmp.eq.s32.totalorder %s41, 3
      %p185 = scmp.ne.s32.totalorder %s180, %s182
      %p186 = scmp.eq.s32.totalorder %s41, 0
      %p187 = por %p185, %p186
      %p188 = scmp.ne.s32.totalorder %s180, %s182
      %p189 = scmp.eq.s32.totalorder %s46, 3
      %p190 = por %p188, %p189
      %p191 = scmp.ne.s32.totalorder %s182, %s183
      %p192 = scmp.eq.s32.totalorder %s46, 0
      %p193 = por %p191, %p192
      %p194 = scmp.ne.s32.totalorder %s182, %s183
      %p195 = scmp.eq.s32.totalorder %s47, 3
      %p196 = por %p194, %p195
      %p198 = scmp.ne.s32.totalorder %s183, %s197
      %p199 = scmp.eq.s32.totalorder %s47, 0
      %p200 = por %p198, %p199
      %s202 = sadd.s32 %s201, 1
      %p205 = scmp.eq.s32.totalorder %s41, 3
      %p206 = scmp.ne.s32.totalorder %s201, %s203
      %p207 = scmp.eq.s32.totalorder %s41, 0
      %p208 = por %p206, %p207
      %p209 = scmp.ne.s32.totalorder %s201, %s203
      %p210 = scmp.eq.s32.totalorder %s46, 3
      %p211 = por %p209, %p210
      %p212 = scmp.ne.s32.totalorder %s203, %s204
      %p213 = scmp.eq.s32.totalorder %s46, 0
      %p214 = por %p212, %p213
      %p215 = scmp.ne.s32.totalorder %s203, %s204
      %p216 = scmp.eq.s32.totalorder %s47, 3
      %p217 = por %p215, %p216
      %p219 = scmp.ne.s32.totalorder %s204, %s218
      %p220 = scmp.eq.s32.totalorder %s47, 0
      %p221 = por %p219, %p220
      %s223 = sadd.s32 %s222, 1
      %p226 = scmp.eq.s32.totalorder %s41, 3
      %p227 = scmp.ne.s32.totalorder %s222, %s224
      %p228 = scmp.eq.s32.totalorder %s41, 0
      %p229 = por %p227, %p228
      %p230 = scmp.ne.s32.totalorder %s222, %s224
      %p231 = scmp.eq.s32.totalorder %s46, 3
      %p232 = por %p230, %p231
      %p233 = scmp.ne.s32.totalorder %s224, %s225
      %p234 = scmp.eq.s32.totalorder %s46, 0
      %p235 = por %p233, %p234
      %p236 = scmp.ne.s32.totalorder %s224, %s225
      %p237 = scmp.eq.s32.totalorder %s47, 3
      %p238 = por %p236, %p237
      %p240 = scmp.ne.s32.totalorder %s225, %s239
      %p241 = scmp.eq.s32.totalorder %s47, 0
      %p242 = por %p240, %p241
      %s244 = sadd.s32 %s243, 1
      %p247 = scmp.eq.s32.totalorder %s41, 3
      %p248 = scmp.ne.s32.totalorder %s243, %s245
      %p249 = scmp.eq.s32.totalorder %s41, 0
      %p250 = por %p248, %p249
      %p251 = scmp.ne.s32.totalorder %s243, %s245
      %p252 = scmp.eq.s32.totalorder %s46, 3
      %p253 = por %p251, %p252
      %p254 = scmp.ne.s32.totalorder %s245, %s246
      %p255 = scmp.eq.s32.totalorder %s46, 0
      %p256 = por %p254, %p255
      %p257 = scmp.ne.s32.totalorder %s245, %s246
      %p258 = scmp.eq.s32.totalorder %s47, 3
      %p259 = por %p257, %p258
      %p261 = scmp.ne.s32.totalorder %s246, %s260
      %p262 = scmp.eq.s32.totalorder %s47, 0
      %p263 = por %p261, %p262
      %s265 = sadd.s32 %s264, 1
      %p268 = scmp.eq.s32.totalorder %s41, 3
      %p269 = scmp.ne.s32.totalorder %s264, %s266
      %p270 = scmp.eq.s32.totalorder %s41, 0
      %p271 = por %p269, %p270
      %p272 = scmp.ne.s32.totalorder %s264, %s266
      %p273 = scmp.eq.s32.totalorder %s46, 3
      %p274 = por %p272, %p273
      %p275 = scmp.ne.s32.totalorder %s266, %s267
      %p276 = scmp.eq.s32.totalorder %s46, 0
      %p277 = por %p275, %p276
      %p278 = scmp.ne.s32.totalorder %s266, %s267
      %p279 = scmp.eq.s32.totalorder %s47, 3
      %p280 = por %p278, %p279
      %p282 = scmp.ne.s32.totalorder %s267, %s281
      %p283 = scmp.eq.s32.totalorder %s47, 0
      %p284 = por %p282, %p283
      %s286 = sadd.s32 %s285, 1
      %p289 = scmp.eq.s32.totalorder %s41, 3
      %p290 = scmp.ne.s32.totalorder %s285, %s287
      %p291 = scmp.eq.s32.totalorder %s41, 0
      %p292 = por %p290, %p291
      %p293 = scmp.ne.s32.totalorder %s285, %s287
      %p294 = scmp.eq.s32.totalorder %s46, 3
      %p295 = por %p293, %p294
      %p296 = scmp.ne.s32.totalorder %s287, %s288
      %p297 = scmp.eq.s32.totalorder %s46, 0
      %p298 = por %p296, %p297
      %p299 = scmp.ne.s32.totalorder %s287, %s288
      %p300 = scmp.eq.s32.totalorder %s47, 3
      %p301 = por %p299, %p300
      %p303 = scmp.ne.s32.totalorder %s288, %s302
      %p304 = scmp.eq.s32.totalorder %s47, 0
      %p305 = por %p303, %p304
      %s307 = sadd.s32 %s306, 1
      %p310 = scmp.eq.s32.totalorder %s41, 3
      %p311 = scmp.ne.s32.totalorder %s306, %s308
      %p312 = scmp.eq.s32.totalorder %s41, 0
      %p313 = por %p311, %p312
      %p314 = scmp.ne.s32.totalorder %s306, %s308
      %p315 = scmp.eq.s32.totalorder %s46, 3
      %p316 = por %p314, %p315
      %p317 = scmp.ne.s32.totalorder %s308, %s309
      %p318 = scmp.eq.s32.totalorder %s46, 0
      %p319 = por %p317, %p318
      %p320 = scmp.ne.s32.totalorder %s308, %s309
      %p321 = scmp.eq.s32.totalorder %s47, 3
      %p322 = por %p320, %p321
      %p324 = scmp.ne.s32.totalorder %s309, %s323
      %p325 = scmp.eq.s32.totalorder %s47, 0
      %p326 = por %p324, %p325
      %p327 = scmp.lt.s32.totalorder %s41, 2
      %s328 = scalar_select %p327, %s41, 2
      %p329 = scmp.lt.s32.totalorder %s48, 2
      %s330 = scalar_select %p329, %s48, 2
      %s331 = ssub.s32 %s328, %s330
      %p332 = scmp.eq.s32.totalorder %s331, 0
      %s334 = sadd.s32 %s333, 1
      %s335 = scalar_select %p332, %s333, %s334
      %p338 = pneg %p332
      %p339 = scmp.eq.s32.totalorder %s41, 3
      %p340 = por %p338, %p339
      %p341 = scmp.ne.s32.totalorder %s333, %s336
      %p342 = scmp.eq.s32.totalorder %s41, 0
      %p343 = por %p341, %p342
      %p344 = scmp.ne.s32.totalorder %s333, %s336
      %p345 = scmp.eq.s32.totalorder %s46, 3
      %p346 = por %p344, %p345
      %p347 = scmp.ne.s32.totalorder %s336, %s337
      %p348 = scmp.eq.s32.totalorder %s46, 0
      %p349 = por %p347, %p348
      %p350 = scmp.ne.s32.totalorder %s336, %s337
      %p351 = scmp.eq.s32.totalorder %s47, 3
      %p352 = por %p350, %p351
      %p354 = scmp.ne.s32.totalorder %s337, %s353
      %p355 = scmp.eq.s32.totalorder %s47, 0
      %p356 = por %p354, %p355
      %p357 = scmp.lt.s32.totalorder %s41, 1
      %s358 = scalar_select %p357, %s41, 1
      %p359 = scmp.lt.s32.totalorder %s48, 1
      %s360 = scalar_select %p359, %s48, 1
      %s361 = ssub.s32 %s358, %s360
      %p362 = scmp.eq.s32.totalorder %s361, 0
      %s364 = sadd.s32 %s363, 1
      %s365 = scalar_select %p362, %s363, %s364
      %p368 = pneg %p362
      %p369 = scmp.eq.s32.totalorder %s41, 3
      %p370 = por %p368, %p369
      %p371 = scmp.ne.s32.totalorder %s363, %s366
      %p372 = scmp.eq.s32.totalorder %s41, 0
      %p373 = por %p371, %p372
      %p374 = scmp.ne.s32.totalorder %s363, %s366
      %p375 = scmp.eq.s32.totalorder %s46, 3
      %p376 = por %p374, %p375
      %p377 = scmp.ne.s32.totalorder %s366, %s367
      %p378 = scmp.eq.s32.totalorder %s46, 0
      %p379 = por %p377, %p378
      %p380 = scmp.ne.s32.totalorder %s366, %s367
      %p381 = scmp.eq.s32.totalorder %s47, 3
      %p382 = por %p380, %p381
      %p384 = scmp.ne.s32.totalorder %s367, %s383
      %p385 = scmp.eq.s32.totalorder %s47, 0
      %p386 = por %p384, %p385
      %s388 = sadd.s32 %s387, 1
      %p391 = scmp.eq.s32.totalorder %s41, 3
      %p392 = scmp.ne.s32.totalorder %s387, %s389
      %p393 = scmp.eq.s32.totalorder %s41, 0
      %p394 = por %p392, %p393
      %p395 = scmp.ne.s32.totalorder %s387, %s389
      %p396 = scmp.eq.s32.totalorder %s46, 3
      %p397 = por %p395, %p396
      %p398 = scmp.ne.s32.totalorder %s389, %s390
      %p399 = scmp.eq.s32.totalorder %s46, 0
      %p400 = por %p398, %p399
      %p401 = scmp.ne.s32.totalorder %s389, %s390
      %p402 = scmp.eq.s32.totalorder %s47, 3
      %p403 = por %p401, %p402
      %p405 = scmp.ne.s32.totalorder %s390, %s404
      %p406 = scmp.eq.s32.totalorder %s47, 0
      %p407 = por %p405, %p406
      %s409 = sadd.s32 %s408, 1
      %p412 = scmp.eq.s32.totalorder %s41, 3
      %p413 = scmp.ne.s32.totalorder %s408, %s410
      %p414 = scmp.eq.s32.totalorder %s41, 0
      %p415 = por %p413, %p414
      %p416 = scmp.ne.s32.totalorder %s408, %s410
      %p417 = scmp.eq.s32.totalorder %s46, 3
      %p418 = por %p416, %p417
      %p419 = scmp.ne.s32.totalorder %s410, %s411
      %p420 = scmp.eq.s32.totalorder %s46, 0
      %p421 = por %p419, %p420
      %p422 = scmp.ne.s32.totalorder %s410, %s411
      %p423 = scmp.eq.s32.totalorder %s47, 3
      %p424 = por %p422, %p423
      %p426 = scmp.ne.s32.totalorder %s411, %s425
      %p427 = scmp.eq.s32.totalorder %s47, 0
      %p428 = por %p426, %p427
      %s430 = sadd.s32 %s429, 1
      %p433 = scmp.eq.s32.totalorder %s41, 3
      %p434 = scmp.ne.s32.totalorder %s429, %s431
      %p435 = scmp.eq.s32.totalorder %s41, 0
      %p436 = por %p434, %p435
      %p437 = scmp.ne.s32.totalorder %s429, %s431
      %p438 = scmp.eq.s32.totalorder %s46, 3
      %p439 = por %p437, %p438
      %p440 = scmp.ne.s32.totalorder %s431, %s432
      %p441 = scmp.eq.s32.totalorder %s46, 0
      %p442 = por %p440, %p441
      %p443 = scmp.ne.s32.totalorder %s431, %s432
      %p444 = scmp.eq.s32.totalorder %s47, 3
      %p445 = por %p443, %p444
      %p447 = scmp.ne.s32.totalorder %s432, %s446
      %p448 = scmp.eq.s32.totalorder %s47, 0
      %p449 = por %p447, %p448
      %p450 = scmp.le.s32.totalorder 1, %s41
      %p451 = scmp.lt.s32.totalorder %s41, 5
      %p452 = pnand %p450, %p451
      %p453 = pneg %p452
      // Predicated region
      $region9: #{tpu_custom_call.1} parent=5 // pred_check
        _
      $region10: #{tpu_custom_call.1} parent=5 // pred_check_branch
        %455 = sbr.rel (%p452) target = $region12
      $region11: #{tpu_custom_call.1} parent=5 // pred_region
        %s456 = ssub.s32 %s41, 1
        // Predicated region
        $region13: #{tpu_custom_call.1} parent=11 // pred_check
          %p457 = pneg %p88
        $region14: #{tpu_custom_call.1} parent=11 // pred_check_branch
          %459 = sbr.rel (%p457) target = $region16
        $region15: #{tpu_custom_call.1} parent=11 // pred_region
          %461 = vsyncadd [#allocation11], 0
          %s462 = sshll.u32 %s4, 4
          %s463 = int_to_ptr.hbm [resolvable:$true] %s462
          %s464 = sshll.u32 [#allocation10], 4
          %s465 = int_to_ptr.vmem [resolvable:$true] %s464
          %470 = dma.hbm_to_vmem [thread:$0]  %s463, 4096, %s465, [#allocation11], 128, 128, 8
        $region16: #{tpu_custom_call.1} parent=11 // pred_fallthru
          _
        // Predicated region
        $region17: #{tpu_custom_call.1} parent=11 // pred_check
          %p471 = pneg %p109
        $region18: #{tpu_custom_call.1} parent=11 // pred_check_branch
          %473 = sbr.rel (%p471) target = $region20
        $region19: #{tpu_custom_call.1} parent=11 // pred_region
          %475 = vsyncadd [#allocation11], 0
          %s476 = sshll.u32 %s5, 4
          %s477 = int_to_ptr.hbm [resolvable:$true] %s476
          %s478 = sshll.u32 [#allocation12], 4
          %s479 = int_to_ptr.vmem [resolvable:$true] %s478
          %484 = dma.hbm_to_vmem [thread:$0]  %s477, 20480, %s479, [#allocation11], 640, 640, 40
        $region20: #{tpu_custom_call.1} parent=11 // pred_fallthru
          _
        // Predicated region
        $region21: #{tpu_custom_call.1} parent=11 // pred_check
          %p485 = pneg %p130
        $region22: #{tpu_custom_call.1} parent=11 // pred_check_branch
          %487 = sbr.rel (%p485) target = $region24
        $region23: #{tpu_custom_call.1} parent=11 // pred_region
          _
        $region24: #{tpu_custom_call.1} parent=11 // pred_fallthru
          _
        // Predicated region
        $region25: #{tpu_custom_call.1} parent=11 // pred_check
          %p488 = pneg %p151
        $region26: #{tpu_custom_call.1} parent=11 // pred_check_branch
          %490 = sbr.rel (%p488) target = $region28
        $region27: #{tpu_custom_call.1} parent=11 // pred_region
          _
        $region28: #{tpu_custom_call.1} parent=11 // pred_fallthru
          _
        // Predicated region
        $region29: #{tpu_custom_call.1} parent=11 // pred_check
          %p491 = pneg %p172
        $region30: #{tpu_custom_call.1} parent=11 // pred_check_branch
          %493 = sbr.rel (%p491) target = $region32
        $region31: #{tpu_custom_call.1} parent=11 // pred_region
          _
        $region32: #{tpu_custom_call.1} parent=11 // pred_fallthru
          _
        // Predicated region
        $region33: #{tpu_custom_call.1} parent=11 // pred_check
          %p494 = pneg %p193
        $region34: #{tpu_custom_call.1} parent=11 // pred_check_branch
          %496 = sbr.rel (%p494) target = $region36
        $region35: #{tpu_custom_call.1} parent=11 // pred_region
          %498 = vsyncadd [#allocation14], 0
          %s499 = sshll.u32 %s9, 4
          %s500 = int_to_ptr.hbm [resolvable:$true] %s499
          %s501 = sshll.u32 [#allocation13], 4
          %s502 = int_to_ptr.vmem [resolvable:$true] %s501
          %507 = dma.hbm_to_vmem [thread:$0]  %s500, 4096, %s502, [#allocation14], 128, 128, 8
        $region36: #{tpu_custom_call.1} parent=11 // pred_fallthru
          _
        // Predicated region
        $region37: #{tpu_custom_call.1} parent=11 // pred_check
          %p508 = pneg %p214
        $region38: #{tpu_custom_call.1} parent=11 // pred_check_branch
          %510 = sbr.rel (%p508) target = $region40
        $region39: #{tpu_custom_call.1} parent=11 // pred_region
          %512 = vsyncadd [#allocation14], 0
          %s513 = sshll.u32 %s10, 4
          %s514 = int_to_ptr.hbm [resolvable:$true] %s513
          %s515 = sshll.u32 [#allocation15], 4
          %s516 = int_to_ptr.vmem [resolvable:$true] %s515
          %521 = dma.hbm_to_vmem [thread:$0]  %s514, 4096, %s516, [#allocation14], 128, 128, 8
        $region40: #{tpu_custom_call.1} parent=11 // pred_fallthru
          _
        // Predicated region
        $region41: #{tpu_custom_call.1} parent=11 // pred_check
          %p522 = pneg %p235
        $region42: #{tpu_custom_call.1} parent=11 // pred_check_branch
          %524 = sbr.rel (%p522) target = $region44
        $region43: #{tpu_custom_call.1} parent=11 // pred_region
          _
        $region44: #{tpu_custom_call.1} parent=11 // pred_fallthru
          _
        // Predicated region
        $region45: #{tpu_custom_call.1} parent=11 // pred_check
          %p525 = pneg %p256
        $region46: #{tpu_custom_call.1} parent=11 // pred_check_branch
          %527 = sbr.rel (%p525) target = $region48
        $region47: #{tpu_custom_call.1} parent=11 // pred_region
          %529 = vsyncadd [#allocation17], 0
          %s530 = sshll.u32 %s12, 4
          %s531 = int_to_ptr.hbm [resolvable:$true] %s530
          %s532 = sshll.u32 [#allocation16], 4
          %s533 = int_to_ptr.vmem [resolvable:$true] %s532
          %538 = dma.hbm_to_vmem [thread:$0]  %s531, 4096, %s533, [#allocation17], 128, 128, 8
        $region48: #{tpu_custom_call.1} parent=11 // pred_fallthru
          _
        // Predicated region
        $region49: #{tpu_custom_call.1} parent=11 // pred_check
          %p539 = pneg %p277
        $region50: #{tpu_custom_call.1} parent=11 // pred_check_branch
          %541 = sbr.rel (%p539) target = $region52
        $region51: #{tpu_custom_call.1} parent=11 // pred_region
          %543 = vsyncadd [#allocation17], 0
          %s545 = sshll.u32 %s13, 4
          %s546 = int_to_ptr.hbm [resolvable:$true] %s545
          %s547 = sshll.u32 [#allocation18], 4
          %s548 = int_to_ptr.vmem [resolvable:$true] %s547
          %550 = dma.hbm_to_vmem [thread:$0]  %s546, 32, %s548, [#allocation17]
        $region52: #{tpu_custom_call.1} parent=11 // pred_fallthru
          _
        // Predicated region
        $region53: #{tpu_custom_call.1} parent=11 // pred_check
          %p551 = pneg %p298
        $region54: #{tpu_custom_call.1} parent=11 // pred_check_branch
          %553 = sbr.rel (%p551) target = $region56
        $region55: #{tpu_custom_call.1} parent=11 // pred_region
          %555 = vsyncadd [#allocation20], 0
          %s556 = sshll.u32 %s14, 4
          %s557 = int_to_ptr.hbm [resolvable:$true] %s556
          %s558 = sshll.u32 [#allocation19], 4
          %s559 = int_to_ptr.vmem [resolvable:$true] %s558
          %564 = dma.hbm_to_vmem [thread:$0]  %s557, 16384, %s559, [#allocation20], 512, 512, 32
        $region56: #{tpu_custom_call.1} parent=11 // pred_fallthru
          _
        // Predicated region
        $region57: #{tpu_custom_call.1} parent=11 // pred_check
          %p565 = pneg %p319
        $region58: #{tpu_custom_call.1} parent=11 // pred_check_branch
          %567 = sbr.rel (%p565) target = $region60
        $region59: #{tpu_custom_call.1} parent=11 // pred_region
          _
        $region60: #{tpu_custom_call.1} parent=11 // pred_fallthru
          _
      $region12: #{tpu_custom_call.1} parent=5 // pred_fallthru
        _
      %p568 = scmp.lt.s32.totalorder %s41, 4
      // Predicated region
      $region61: #{tpu_custom_call.1} parent=5 // pred_check
        %p569 = pneg %p568
      $region62: #{tpu_custom_call.1} parent=5 // pred_check_branch
        %571 = sbr.rel (%p569) target = $region64
      $region63: #{tpu_custom_call.1} parent=5 // pred_region
        // Predicated region
        $region65: #{tpu_custom_call.1} parent=63 // pred_check
          %p572 = pneg %p61
        $region66: #{tpu_custom_call.1} parent=63 // pred_check_branch
          %574 = sbr.rel (%p572) target = $region68
        $region67: #{tpu_custom_call.1} parent=63 // pred_region
          %s575 = sand.u32 %s51, 1
          %s576 = scalar_lea.sflag [#allocation8], %s575
          %s577 = sand.u32 %s51, 1
          %s578 = smul.addr %s577, 64
          %s579 = scalar_lea.vmem [#allocation7], %s578
          %581 = vsyncadd %s576, 0
          %s582 = smul.addr %s41, 16
          %s583 = smul.addr %s582, 4
          %s584 = scalar_lea.hbm %s0, %s583
          %s585 = sshll.u32 %s584, 4
          %s586 = int_to_ptr.hbm [resolvable:$true] %s585
          %s587 = sshll.u32 %s579, 4
          %s588 = int_to_ptr.vmem [resolvable:$true] %s587
          %593 = dma.hbm_to_vmem [thread:$0]  %s586, 1024, %s588, %s576, 128, 128, 8
        $region68: #{tpu_custom_call.1} parent=63 // pred_fallthru
          _
      $region64: #{tpu_custom_call.1} parent=5 // pred_fallthru
        _
      %p594 = scmp.le.s32.totalorder 1, %s41
      %p595 = scmp.lt.s32.totalorder %s41, 5
      %p596 = pnand %p594, %p595
      %p597 = pneg %p596
      // Predicated region
      $region69: #{tpu_custom_call.1} parent=5 // pred_check
        _
      $region70: #{tpu_custom_call.1} parent=5 // pred_check_branch
        %599 = sbr.rel (%p596) target = $region72
      $region71: #{tpu_custom_call.1} parent=5 // pred_region
        %s600 = ssub.s32 %s41, 1
        %s601 = sand.u32 %s54, 1
        %s602 = scalar_lea.sflag [#allocation8], %s601
        %s603 = sand.u32 %s54, 1
        %s604 = smul.addr %s603, 64
        %s605 = scalar_lea.vmem [#allocation7], %s604
        // Predicated region
        $region73: #{tpu_custom_call.1} parent=71 // pred_check
          %p606 = pneg %p67
        $region74: #{tpu_custom_call.1} parent=71 // pred_check_branch
          %608 = sbr.rel (%p606) target = $region76
        $region75: #{tpu_custom_call.1} parent=71 // pred_region
          %610 = dma.done %s602, 1024
        $region76: #{tpu_custom_call.1} parent=71 // pred_fallthru
          _
        // Predicated region
        $region77: #{tpu_custom_call.1} parent=71 // pred_check
          %p611 = pneg %p88
        $region78: #{tpu_custom_call.1} parent=71 // pred_check_branch
          %613 = sbr.rel (%p611) target = $region80
        $region79: #{tpu_custom_call.1} parent=71 // pred_region
          %615 = dma.done [#allocation11], 4096
        $region80: #{tpu_custom_call.1} parent=71 // pred_fallthru
          _
        // Predicated region
        $region81: #{tpu_custom_call.1} parent=71 // pred_check
          %p616 = pneg %p109
        $region82: #{tpu_custom_call.1} parent=71 // pred_check_branch
          %618 = sbr.rel (%p616) target = $region84
        $region83: #{tpu_custom_call.1} parent=71 // pred_region
          %620 = dma.done [#allocation11], 20480
        $region84: #{tpu_custom_call.1} parent=71 // pred_fallthru
          _
        // Predicated region
        $region85: #{tpu_custom_call.1} parent=71 // pred_check
          %p621 = pneg %p193
        $region86: #{tpu_custom_call.1} parent=71 // pred_check_branch
          %623 = sbr.rel (%p621) target = $region88
        $region87: #{tpu_custom_call.1} parent=71 // pred_region
          %625 = dma.done [#allocation14], 4096
        $region88: #{tpu_custom_call.1} parent=71 // pred_fallthru
          _
        // Predicated region
        $region89: #{tpu_custom_call.1} parent=71 // pred_check
          %p626 = pneg %p214
        $region90: #{tpu_custom_call.1} parent=71 // pred_check_branch
          %628 = sbr.rel (%p626) target = $region92
        $region91: #{tpu_custom_call.1} parent=71 // pred_region
          %630 = dma.done [#allocation14], 4096
        $region92: #{tpu_custom_call.1} parent=71 // pred_fallthru
          _
        // Predicated region
        $region93: #{tpu_custom_call.1} parent=71 // pred_check
          %p631 = pneg %p256
        $region94: #{tpu_custom_call.1} parent=71 // pred_check_branch
          %633 = sbr.rel (%p631) target = $region96
        $region95: #{tpu_custom_call.1} parent=71 // pred_region
          %635 = dma.done [#allocation17], 4096
        $region96: #{tpu_custom_call.1} parent=71 // pred_fallthru
          _
        // Predicated region
        $region97: #{tpu_custom_call.1} parent=71 // pred_check
          %p636 = pneg %p277
        $region98: #{tpu_custom_call.1} parent=71 // pred_check_branch
          %638 = sbr.rel (%p636) target = $region100
        $region99: #{tpu_custom_call.1} parent=71 // pred_region
          %640 = dma.done [#allocation17], 32
        $region100: #{tpu_custom_call.1} parent=71 // pred_fallthru
          _
        // Predicated region
        $region101: #{tpu_custom_call.1} parent=71 // pred_check
          %p641 = pneg %p298
        $region102: #{tpu_custom_call.1} parent=71 // pred_check_branch
          %643 = sbr.rel (%p641) target = $region104
        $region103: #{tpu_custom_call.1} parent=71 // pred_region
          %645 = dma.done [#allocation20], 16384
        $region104: #{tpu_custom_call.1} parent=71 // pred_fallthru
          _
        %s646 = sand.u32 %s54, 1
        %s647 = scalar_lea.sflag [#allocation8], %s646
        %s648 = sand.u32 %s54, 1
        %s649 = smul.addr %s648, 64
        %s650 = scalar_lea.vmem [#allocation7], %s649
        %p651 = pneg %p67
        %p652 = pneg %p64
        %p653 = pneg %p88
        %p654 = pneg %p85
        %p655 = pneg %p109
        %p656 = pneg %p106
        %p657 = pneg %p130
        %p658 = pneg %p127
        %p659 = pneg %p151
        %p660 = pneg %p148
        %p661 = pneg %p172
        %p662 = pneg %p169
        %p663 = pneg %p193
        %p664 = pneg %p190
        %p665 = pneg %p214
        %p666 = pneg %p211
        %p667 = pneg %p235
        %p668 = pneg %p232
        %p669 = pneg %p256
        %p670 = pneg %p253
        %p671 = pneg %p277
        %p672 = pneg %p274
        %p673 = pneg %p298
        %p674 = pneg %p295
        %p675 = pneg %p319
        %p676 = pneg %p316
        %p677 = pneg %p349
        %p678 = pneg %p346
        %s679 = sand.u32 %s336, 1
        %s680 = scalar_lea.sflag [#allocation9], %s679
        %s681 = sand.u32 %s336, 1
        %s682 = smul.addr %s681, 128
        %s683 = scalar_lea.vmem [#allocation21], %s682
        %p684 = pneg %p379
        %p685 = pneg %p376
        %p686 = scmp.lt.s32.totalorder %s46, 1
        %s687 = scalar_select %p686, %s46, 1
        %p688 = scmp.lt.s32.totalorder %s687, 1
        %s689 = scalar_select %p688, %s687, 1
        %s690 = smul.addr %s689, 8
        %s691 = smul.addr %s690, 8
        %s692 = scalar_lea.vmem %s17, %s691
        %p693 = pneg %p400
        %p694 = pneg %p397
        %p695 = pneg %p421
        %p696 = pneg %p418
        %p697 = pneg %p442
        %p698 = pneg %p439
        %p699 = scmp.lt.s32.totalorder %s46, 2
        %s700 = scalar_select %p699, %s46, 2
        %p701 = scmp.lt.s32.totalorder %s46, 1
        %s702 = scalar_select %p701, %s46, 1
        %p703 = scmp.lt.s32.totalorder %s702, 1
        %s704 = scalar_select %p703, %s702, 1
        %s705 = smul.addr %s704, 8
        %s706 = smul.addr %s705, 8
        %s707 = scalar_lea.vmem %s17, %s706
        %p708 = scmp.lt.s32.totalorder %s46, 1
        %s709 = scalar_select %p708, %s46, 1
        %p710 = scmp.eq.s32.totalorder %s46, 0
        // Predicated region
        $region105: #{tpu_custom_call.1} parent=71 // pred_check
          %p711 = pneg %p710
        $region106: #{tpu_custom_call.1} parent=71 // pred_check_branch
          %713 = sbr.rel (%p711) target = $region108
        $region107: #{tpu_custom_call.1} parent=71 // pred_region
          // Predicated region
          $region109: #{tpu_custom_call.1} parent=107 // pred_check
            _
          $region110: #{tpu_custom_call.1} parent=107 // pred_check_branch
            %715 = sbr.rel target = $region112
          $region111: #{tpu_custom_call.1} parent=107 // pred_region
            %716 = sst [smem:[#allocation29]] [#allocation28]
            %717 = sst [smem:[#allocation30]] [#allocation27]
          $region112: #{tpu_custom_call.1} parent=107 // pred_fallthru
            _
          %719 = shalt.err (0)
          %s721 = sshll.u32 %s1, 4
          %s722 = int_to_ptr.hbm [resolvable:$true] %s721
          %s723 = sshll.u32 [#allocation2], 4
          %s724 = int_to_ptr.vmem [resolvable:$true] %s723
          %726 = dma.hbm_to_vmem [thread:$0]  %s722, 2048, %s724, [#allocation5]
          %s727 = scalar_lea.sflag [#allocation5], 1
          // Predicated region
          $region113: #{tpu_custom_call.1} parent=107 // pred_check
            _
          $region114: #{tpu_custom_call.1} parent=107 // pred_check_branch
            %729 = sbr.rel target = $region116
          $region115: #{tpu_custom_call.1} parent=107 // pred_region
            %730 = sst [smem:[#allocation29]] [#allocation32]
            %731 = sst [smem:[#allocation30]] [#allocation31]
          $region116: #{tpu_custom_call.1} parent=107 // pred_fallthru
            _
          %733 = shalt.err (0)
          %s735 = sshll.u32 %s2, 4
          %s736 = int_to_ptr.hbm [resolvable:$true] %s735
          %s737 = sshll.u32 [#allocation3], 4
          %s738 = int_to_ptr.vmem [resolvable:$true] %s737
          %740 = dma.hbm_to_vmem [thread:$0]  %s736, 2048, %s738, %s727
          %s741 = scalar_lea.sflag [#allocation5], 2
          // Predicated region
          $region117: #{tpu_custom_call.1} parent=107 // pred_check
            _
          $region118: #{tpu_custom_call.1} parent=107 // pred_check_branch
            %743 = sbr.rel target = $region120
          $region119: #{tpu_custom_call.1} parent=107 // pred_region
            %744 = sst [smem:[#allocation29]] [#allocation34]
            %745 = sst [smem:[#allocation30]] [#allocation33]
          $region120: #{tpu_custom_call.1} parent=107 // pred_fallthru
            _
          %747 = shalt.err (0)
          %s749 = sshll.u32 %s3, 4
          %s750 = int_to_ptr.hbm [resolvable:$true] %s749
          %s751 = sshll.u32 [#allocation4], 4
          %s752 = int_to_ptr.vmem [resolvable:$true] %s751
          %754 = dma.hbm_to_vmem [thread:$0]  %s750, 2048, %s752, %s741
          %s755 = smul.u32 8, 8
          %s756 = smul.u32 %s755, 2
          %s757 = sshll.u32 %s756, 4
          %758 = dma.done [#allocation5], %s757
          %s759 = sshll.u32 %s756, 4
          %760 = dma.done %s727, %s759
          %s761 = sshll.u32 %s756, 4
          %762 = dma.done %s741, %s761
        $region108: #{tpu_custom_call.1} parent=71 // pred_fallthru
          _
        %v763 = vld [vmem:[%s605] sm:$0xff]
        %v764 = vld [vmem:[%s605 + $0x8] sm:$0xff]
        %v765 = vld [vmem:[%s605 + $0x10] sm:$0xff]
        %v766 = vld [vmem:[%s605 + $0x18] sm:$0xff]
        %v767 = vld [vmem:[%s605 + $0x20] sm:$0xff]
        %v768 = vld [vmem:[%s605 + $0x28] sm:$0xff]
        %v769 = vld [vmem:[%s605 + $0x30] sm:$0xff]
        %v770 = vld [vmem:[%s605 + $0x38] sm:$0xff]
        %v771 = vld [vmem:[#allocation2] sm:$0xff]
        %v772 = vld [vmem:[#allocation2 + $0x8] sm:$0xff]
        %v773 = vld [vmem:[#allocation2 + $0x10] sm:$0xff]
        %v774 = vld [vmem:[#allocation2 + $0x18] sm:$0xff]
        %v775 = vld [vmem:[#allocation2 + $0x20] sm:$0xff]
        %v776 = vld [vmem:[#allocation2 + $0x28] sm:$0xff]
        %v777 = vld [vmem:[#allocation2 + $0x30] sm:$0xff]
        %v778 = vld [vmem:[#allocation2 + $0x38] sm:$0xff]
        %v779 = vld [vmem:[#allocation2 + $0x40] sm:$0xff]
        %v780 = vld [vmem:[#allocation2 + $0x48] sm:$0xff]
        %v781 = vld [vmem:[#allocation2 + $0x50] sm:$0xff]
        %v782 = vld [vmem:[#allocation2 + $0x58] sm:$0xff]
        %v783 = vld [vmem:[#allocation2 + $0x60] sm:$0xff]
        %v784 = vld [vmem:[#allocation2 + $0x68] sm:$0xff]
        %v785 = vld [vmem:[#allocation2 + $0x70] sm:$0xff]
        %v786 = vld [vmem:[#allocation2 + $0x78] sm:$0xff]
        %v787 = vld [vmem:[#allocation3] sm:$0xff]
        %v788 = vld [vmem:[#allocation3 + $0x8] sm:$0xff]
        %v789 = vld [vmem:[#allocation3 + $0x10] sm:$0xff]
        %v790 = vld [vmem:[#allocation3 + $0x18] sm:$0xff]
        %v791 = vld [vmem:[#allocation3 + $0x20] sm:$0xff]
        %v792 = vld [vmem:[#allocation3 + $0x28] sm:$0xff]
        %v793 = vld [vmem:[#allocation3 + $0x30] sm:$0xff]
        %v794 = vld [vmem:[#allocation3 + $0x38] sm:$0xff]
        %v795 = vld [vmem:[#allocation3 + $0x40] sm:$0xff]
        %v796 = vld [vmem:[#allocation3 + $0x48] sm:$0xff]
        %v797 = vld [vmem:[#allocation3 + $0x50] sm:$0xff]
        %v798 = vld [vmem:[#allocation3 + $0x58] sm:$0xff]
        %v799 = vld [vmem:[#allocation3 + $0x60] sm:$0xff]
        %v800 = vld [vmem:[#allocation3 + $0x68] sm:$0xff]
        %v801 = vld [vmem:[#allocation3 + $0x70] sm:$0xff]
        %v802 = vld [vmem:[#allocation3 + $0x78] sm:$0xff]
        %v803 = vpack.c.bf16 %v773, %v771
        %v804 = vpack.c.bf16 %v774, %v772
        %v805 = vpack.c.bf16 %v777, %v775
        %v806 = vpack.c.bf16 %v778, %v776
        %v807 = vpack.c.bf16 %v781, %v779
        %v808 = vpack.c.bf16 %v782, %v780
        %v809 = vpack.c.bf16 %v785, %v783
        %v810 = vpack.c.bf16 %v786, %v784
        %v811 = vld [vmem:[#allocation12] sm:$0xff]
        %v812 = vld [vmem:[#allocation12 + $0x8] sm:$0xff]
        %v813 = vld [vmem:[#allocation12 + $0x10] sm:$0xff]
        %v814 = vld [vmem:[#allocation12 + $0x18] sm:$0xff]
        %v815 = vld [vmem:[#allocation12 + $0x20] sm:$0xff]
        %v816 = vld [vmem:[#allocation12 + $0x28] sm:$0xff]
        %v817 = vld [vmem:[#allocation12 + $0x30] sm:$0xff]
        %v818 = vld [vmem:[#allocation12 + $0x38] sm:$0xff]
        %v819 = vld [vmem:[#allocation12 + $0x40] sm:$0xff]
        %v820 = vld [vmem:[#allocation12 + $0x48] sm:$0xff]
        %v821 = vld [vmem:[#allocation12 + $0x50] sm:$0xff]
        %v822 = vld [vmem:[#allocation12 + $0x58] sm:$0xff]
        %v823 = vld [vmem:[#allocation12 + $0x60] sm:$0xff]
        %v824 = vld [vmem:[#allocation12 + $0x68] sm:$0xff]
        %v825 = vld [vmem:[#allocation12 + $0x70] sm:$0xff]
        %v826 = vld [vmem:[#allocation12 + $0x78] sm:$0xff]
        %v827 = vld [vmem:[#allocation12 + $0x80] sm:$0xff]
        %v828 = vld [vmem:[#allocation12 + $0x88] sm:$0xff]
        %v829 = vld [vmem:[#allocation12 + $0x90] sm:$0xff]
        %v830 = vld [vmem:[#allocation12 + $0x98] sm:$0xff]
        %v831 = vld [vmem:[#allocation12 + $0xa0] sm:$0xff]
        %v832 = vld [vmem:[#allocation12 + $0xa8] sm:$0xff]
        %v833 = vld [vmem:[#allocation12 + $0xb0] sm:$0xff]
        %v834 = vld [vmem:[#allocation12 + $0xb8] sm:$0xff]
        %v835 = vld [vmem:[#allocation12 + $0xc0] sm:$0xff]
        %v836 = vld [vmem:[#allocation12 + $0xc8] sm:$0xff]
        %v837 = vld [vmem:[#allocation12 + $0xd0] sm:$0xff]
        %v838 = vld [vmem:[#allocation12 + $0xd8] sm:$0xff]
        %v839 = vld [vmem:[#allocation12 + $0xe0] sm:$0xff]
        %v840 = vld [vmem:[#allocation12 + $0xe8] sm:$0xff]
        %v841 = vld [vmem:[#allocation12 + $0xf0] sm:$0xff]
        %v842 = vld [vmem:[#allocation12 + $0xf8] sm:$0xff]
        %v843 = vld [vmem:[#allocation12 + $0x100] sm:$0xff]
        %v844 = vld [vmem:[#allocation12 + $0x108] sm:$0xff]
        %v845 = vld [vmem:[#allocation12 + $0x110] sm:$0xff]
        %v846 = vld [vmem:[#allocation12 + $0x118] sm:$0xff]
        %v847 = vld [vmem:[#allocation12 + $0x120] sm:$0xff]
        %v848 = vld [vmem:[#allocation12 + $0x128] sm:$0xff]
        %v849 = vld [vmem:[#allocation12 + $0x130] sm:$0xff]
        %v850 = vld [vmem:[#allocation12 + $0x138] sm:$0xff]
        %v851 = vld [vmem:[#allocation12 + $0x140] sm:$0xff]
        %v852 = vld [vmem:[#allocation12 + $0x148] sm:$0xff]
        %v853 = vld [vmem:[#allocation12 + $0x150] sm:$0xff]
        %v854 = vld [vmem:[#allocation12 + $0x158] sm:$0xff]
        %v855 = vld [vmem:[#allocation12 + $0x160] sm:$0xff]
        %v856 = vld [vmem:[#allocation12 + $0x168] sm:$0xff]
        %v857 = vld [vmem:[#allocation12 + $0x170] sm:$0xff]
        %v858 = vld [vmem:[#allocation12 + $0x178] sm:$0xff]
        %v859 = vld [vmem:[#allocation12 + $0x180] sm:$0xff]
        %v860 = vld [vmem:[#allocation12 + $0x188] sm:$0xff]
        %v861 = vld [vmem:[#allocation12 + $0x190] sm:$0xff]
        %v862 = vld [vmem:[#allocation12 + $0x198] sm:$0xff]
        %v863 = vld [vmem:[#allocation12 + $0x1a0] sm:$0xff]
        %v864 = vld [vmem:[#allocation12 + $0x1a8] sm:$0xff]
        %v865 = vld [vmem:[#allocation12 + $0x1b0] sm:$0xff]
        %v866 = vld [vmem:[#allocation12 + $0x1b8] sm:$0xff]
        %v867 = vld [vmem:[#allocation12 + $0x1c0] sm:$0xff]
        %v868 = vld [vmem:[#allocation12 + $0x1c8] sm:$0xff]
        %v869 = vld [vmem:[#allocation12 + $0x1d0] sm:$0xff]
        %v870 = vld [vmem:[#allocation12 + $0x1d8] sm:$0xff]
        %v871 = vld [vmem:[#allocation12 + $0x1e0] sm:$0xff]
        %v872 = vld [vmem:[#allocation12 + $0x1e8] sm:$0xff]
        %v873 = vld [vmem:[#allocation12 + $0x1f0] sm:$0xff]
        %v874 = vld [vmem:[#allocation12 + $0x1f8] sm:$0xff]
        %v875 = vld [vmem:[#allocation12 + $0x200] sm:$0xff]
        %v876 = vld [vmem:[#allocation12 + $0x208] sm:$0xff]
        %v877 = vld [vmem:[#allocation12 + $0x210] sm:$0xff]
        %v878 = vld [vmem:[#allocation12 + $0x218] sm:$0xff]
        %v879 = vld [vmem:[#allocation12 + $0x220] sm:$0xff]
        %v880 = vld [vmem:[#allocation12 + $0x228] sm:$0xff]
        %v881 = vld [vmem:[#allocation12 + $0x230] sm:$0xff]
        %v882 = vld [vmem:[#allocation12 + $0x238] sm:$0xff]
        %v883 = vld [vmem:[#allocation12 + $0x240] sm:$0xff]
        %v884 = vld [vmem:[#allocation12 + $0x248] sm:$0xff]
        %v885 = vld [vmem:[#allocation12 + $0x250] sm:$0xff]
        %v886 = vld [vmem:[#allocation12 + $0x258] sm:$0xff]
        %v887 = vld [vmem:[#allocation12 + $0x260] sm:$0xff]
        %v888 = vld [vmem:[#allocation12 + $0x268] sm:$0xff]
        %v889 = vld [vmem:[#allocation12 + $0x270] sm:$0xff]
        %v890 = vld [vmem:[#allocation12 + $0x278] sm:$0xff]
        %v891 = vld [vmem:[#allocation12 + $0x280] sm:$0xff]
        %v892 = vld [vmem:[#allocation12 + $0x288] sm:$0xff]
        %v893 = vld [vmem:[#allocation12 + $0x290] sm:$0xff]
        %v894 = vld [vmem:[#allocation12 + $0x298] sm:$0xff]
        %v895 = vld [vmem:[#allocation12 + $0x2a0] sm:$0xff]
        %v896 = vld [vmem:[#allocation12 + $0x2a8] sm:$0xff]
        %v897 = vld [vmem:[#allocation12 + $0x2b0] sm:$0xff]
        %v898 = vld [vmem:[#allocation12 + $0x2b8] sm:$0xff]
        %v899 = vld [vmem:[#allocation12 + $0x2c0] sm:$0xff]
        %v900 = vld [vmem:[#allocation12 + $0x2c8] sm:$0xff]
        %v901 = vld [vmem:[#allocation12 + $0x2d0] sm:$0xff]
        %v902 = vld [vmem:[#allocation12 + $0x2d8] sm:$0xff]
        %v903 = vld [vmem:[#allocation12 + $0x2e0] sm:$0xff]
        %v904 = vld [vmem:[#allocation12 + $0x2e8] sm:$0xff]
        %v905 = vld [vmem:[#allocation12 + $0x2f0] sm:$0xff]
        %v906 = vld [vmem:[#allocation12 + $0x2f8] sm:$0xff]
        %v907 = vld [vmem:[#allocation12 + $0x300] sm:$0xff]
        %v908 = vld [vmem:[#allocation12 + $0x308] sm:$0xff]
        %v909 = vld [vmem:[#allocation12 + $0x310] sm:$0xff]
        %v910 = vld [vmem:[#allocation12 + $0x318] sm:$0xff]
        %v911 = vld [vmem:[#allocation12 + $0x320] sm:$0xff]
        %v912 = vld [vmem:[#allocation12 + $0x328] sm:$0xff]
        %v913 = vld [vmem:[#allocation12 + $0x330] sm:$0xff]
        %v914 = vld [vmem:[#allocation12 + $0x338] sm:$0xff]
        %v915 = vld [vmem:[#allocation12 + $0x340] sm:$0xff]
        %v916 = vld [vmem:[#allocation12 + $0x348] sm:$0xff]
        %v917 = vld [vmem:[#allocation12 + $0x350] sm:$0xff]
        %v918 = vld [vmem:[#allocation12 + $0x358] sm:$0xff]
        %v919 = vld [vmem:[#allocation12 + $0x360] sm:$0xff]
        %v920 = vld [vmem:[#allocation12 + $0x368] sm:$0xff]
        %v921 = vld [vmem:[#allocation12 + $0x370] sm:$0xff]
        %v922 = vld [vmem:[#allocation12 + $0x378] sm:$0xff]
        %v923 = vld [vmem:[#allocation12 + $0x380] sm:$0xff]
        %v924 = vld [vmem:[#allocation12 + $0x388] sm:$0xff]
        %v925 = vld [vmem:[#allocation12 + $0x390] sm:$0xff]
        %v926 = vld [vmem:[#allocation12 + $0x398] sm:$0xff]
        %v927 = vld [vmem:[#allocation12 + $0x3a0] sm:$0xff]
        %v928 = vld [vmem:[#allocation12 + $0x3a8] sm:$0xff]
        %v929 = vld [vmem:[#allocation12 + $0x3b0] sm:$0xff]
        %v930 = vld [vmem:[#allocation12 + $0x3b8] sm:$0xff]
        %v931 = vld [vmem:[#allocation12 + $0x3c0] sm:$0xff]
        %v932 = vld [vmem:[#allocation12 + $0x3c8] sm:$0xff]
        %v933 = vld [vmem:[#allocation12 + $0x3d0] sm:$0xff]
        %v934 = vld [vmem:[#allocation12 + $0x3d8] sm:$0xff]
        %v935 = vld [vmem:[#allocation12 + $0x3e0] sm:$0xff]
        %v936 = vld [vmem:[#allocation12 + $0x3e8] sm:$0xff]
        %v937 = vld [vmem:[#allocation12 + $0x3f0] sm:$0xff]
        %v938 = vld [vmem:[#allocation12 + $0x3f8] sm:$0xff]
        %v939 = vld [vmem:[#allocation12 + $0x400] sm:$0xff]
        %v940 = vld [vmem:[#allocation12 + $0x408] sm:$0xff]
        %v941 = vld [vmem:[#allocation12 + $0x410] sm:$0xff]
        %v942 = vld [vmem:[#allocation12 + $0x418] sm:$0xff]
        %v943 = vld [vmem:[#allocation12 + $0x420] sm:$0xff]
        %v944 = vld [vmem:[#allocation12 + $0x428] sm:$0xff]
        %v945 = vld [vmem:[#allocation12 + $0x430] sm:$0xff]
        %v946 = vld [vmem:[#allocation12 + $0x438] sm:$0xff]
        %v947 = vld [vmem:[#allocation12 + $0x440] sm:$0xff]
        %v948 = vld [vmem:[#allocation12 + $0x448] sm:$0xff]
        %v949 = vld [vmem:[#allocation12 + $0x450] sm:$0xff]
        %v950 = vld [vmem:[#allocation12 + $0x458] sm:$0xff]
        %v951 = vld [vmem:[#allocation12 + $0x460] sm:$0xff]
        %v952 = vld [vmem:[#allocation12 + $0x468] sm:$0xff]
        %v953 = vld [vmem:[#allocation12 + $0x470] sm:$0xff]
        %v954 = vld [vmem:[#allocation12 + $0x478] sm:$0xff]
        %v955 = vld [vmem:[#allocation12 + $0x480] sm:$0xff]
        %v956 = vld [vmem:[#allocation12 + $0x488] sm:$0xff]
        %v957 = vld [vmem:[#allocation12 + $0x490] sm:$0xff]
        %v958 = vld [vmem:[#allocation12 + $0x498] sm:$0xff]
        %v959 = vld [vmem:[#allocation12 + $0x4a0] sm:$0xff]
        %v960 = vld [vmem:[#allocation12 + $0x4a8] sm:$0xff]
        %v961 = vld [vmem:[#allocation12 + $0x4b0] sm:$0xff]
        %v962 = vld [vmem:[#allocation12 + $0x4b8] sm:$0xff]
        %v963 = vld [vmem:[#allocation12 + $0x4c0] sm:$0xff]
        %v964 = vld [vmem:[#allocation12 + $0x4c8] sm:$0xff]
        %v965 = vld [vmem:[#allocation12 + $0x4d0] sm:$0xff]
        %v966 = vld [vmem:[#allocation12 + $0x4d8] sm:$0xff]
        %v967 = vld [vmem:[#allocation12 + $0x4e0] sm:$0xff]
        %v968 = vld [vmem:[#allocation12 + $0x4e8] sm:$0xff]
        %v969 = vld [vmem:[#allocation12 + $0x4f0] sm:$0xff]
        %v970 = vld [vmem:[#allocation12 + $0x4f8] sm:$0xff]
        %v1131 = vunpack.c.l.b16 %v811
        %v1132 = vunpack.c.h.b16 %v811
        %v1133 = vunpack.c.l.b16 %v812
        %v1134 = vunpack.c.h.b16 %v812
        %v1135 = vunpack.c.l.b16 %v813
        %v1136 = vunpack.c.h.b16 %v813
        %v1137 = vunpack.c.l.b16 %v814
        %v1138 = vunpack.c.h.b16 %v814
        %v1139 = vunpack.c.l.b16 %v815
        %v1140 = vunpack.c.h.b16 %v815
        %v1141 = vunpack.c.l.b16 %v816
        %v1142 = vunpack.c.h.b16 %v816
        %v1143 = vunpack.c.l.b16 %v817
        %v1144 = vunpack.c.h.b16 %v817
        %v1145 = vunpack.c.l.b16 %v818
        %v1146 = vunpack.c.h.b16 %v818
        %v1147 = vunpack.c.l.b16 %v819
        %v1148 = vunpack.c.h.b16 %v819
        %v1149 = vunpack.c.l.b16 %v820
        %v1150 = vunpack.c.h.b16 %v820
        %v1151 = vunpack.c.l.b16 %v821
        %v1152 = vunpack.c.h.b16 %v821
        %v1153 = vunpack.c.l.b16 %v822
        %v1154 = vunpack.c.h.b16 %v822
        %v1155 = vunpack.c.l.b16 %v823
        %v1156 = vunpack.c.h.b16 %v823
        %v1157 = vunpack.c.l.b16 %v824
        %v1158 = vunpack.c.h.b16 %v824
        %v1159 = vunpack.c.l.b16 %v825
        %v1160 = vunpack.c.h.b16 %v825
        %v1161 = vunpack.c.l.b16 %v826
        %v1162 = vunpack.c.h.b16 %v826
        %v1163 = vunpack.c.l.b16 %v827
        %v1164 = vunpack.c.h.b16 %v827
        %v1165 = vunpack.c.l.b16 %v828
        %v1166 = vunpack.c.h.b16 %v828
        %v1167 = vunpack.c.l.b16 %v829
        %v1168 = vunpack.c.h.b16 %v829
        %v1169 = vunpack.c.l.b16 %v830
        %v1170 = vunpack.c.h.b16 %v830
        %v1171 = vunpack.c.l.b16 %v831
        %v1172 = vunpack.c.h.b16 %v831
        %v1173 = vunpack.c.l.b16 %v832
        %v1174 = vunpack.c.h.b16 %v832
        %v1175 = vunpack.c.l.b16 %v833
        %v1176 = vunpack.c.h.b16 %v833
        %v1177 = vunpack.c.l.b16 %v834
        %v1178 = vunpack.c.h.b16 %v834
        %v1179 = vunpack.c.l.b16 %v835
        %v1180 = vunpack.c.h.b16 %v835
        %v1181 = vunpack.c.l.b16 %v836
        %v1182 = vunpack.c.h.b16 %v836
        %v1183 = vunpack.c.l.b16 %v837
        %v1184 = vunpack.c.h.b16 %v837
        %v1185 = vunpack.c.l.b16 %v838
        %v1186 = vunpack.c.h.b16 %v838
        %v1187 = vunpack.c.l.b16 %v839
        %v1188 = vunpack.c.h.b16 %v839
        %v1189 = vunpack.c.l.b16 %v840
        %v1190 = vunpack.c.h.b16 %v840
        %v1191 = vunpack.c.l.b16 %v841
        %v1192 = vunpack.c.h.b16 %v841
        %v1193 = vunpack.c.l.b16 %v842
        %v1194 = vunpack.c.h.b16 %v842
        %v1195 = vunpack.c.l.b16 %v843
        %v1196 = vunpack.c.h.b16 %v843
        %v1197 = vunpack.c.l.b16 %v844
        %v1198 = vunpack.c.h.b16 %v844
        %v1199 = vunpack.c.l.b16 %v845
        %v1200 = vunpack.c.h.b16 %v845
        %v1201 = vunpack.c.l.b16 %v846
        %v1202 = vunpack.c.h.b16 %v846
        %v1203 = vunpack.c.l.b16 %v847
        %v1204 = vunpack.c.h.b16 %v847
        %v1205 = vunpack.c.l.b16 %v848
        %v1206 = vunpack.c.h.b16 %v848
        %v1207 = vunpack.c.l.b16 %v849
        %v1208 = vunpack.c.h.b16 %v849
        %v1209 = vunpack.c.l.b16 %v850
        %v1210 = vunpack.c.h.b16 %v850
        %v1211 = vunpack.c.l.b16 %v851
        %v1212 = vunpack.c.h.b16 %v851
        %v1213 = vunpack.c.l.b16 %v852
        %v1214 = vunpack.c.h.b16 %v852
        %v1215 = vunpack.c.l.b16 %v853
        %v1216 = vunpack.c.h.b16 %v853
        %v1217 = vunpack.c.l.b16 %v854
        %v1218 = vunpack.c.h.b16 %v854
        %v1219 = vunpack.c.l.b16 %v855
        %v1220 = vunpack.c.h.b16 %v855
        %v1221 = vunpack.c.l.b16 %v856
        %v1222 = vunpack.c.h.b16 %v856
        %v1223 = vunpack.c.l.b16 %v857
        %v1224 = vunpack.c.h.b16 %v857
        %v1225 = vunpack.c.l.b16 %v858
        %v1226 = vunpack.c.h.b16 %v858
        %v1227 = vunpack.c.l.b16 %v859
        %v1228 = vunpack.c.h.b16 %v859
        %v1229 = vunpack.c.l.b16 %v860
        %v1230 = vunpack.c.h.b16 %v860
        %v1231 = vunpack.c.l.b16 %v861
        %v1232 = vunpack.c.h.b16 %v861
        %v1233 = vunpack.c.l.b16 %v862
        %v1234 = vunpack.c.h.b16 %v862
        %v1235 = vunpack.c.l.b16 %v863
        %v1236 = vunpack.c.h.b16 %v863
        %v1237 = vunpack.c.l.b16 %v864
        %v1238 = vunpack.c.h.b16 %v864
        %v1239 = vunpack.c.l.b16 %v865
        %v1240 = vunpack.c.h.b16 %v865
        %v1241 = vunpack.c.l.b16 %v866
        %v1242 = vunpack.c.h.b16 %v866
        %v1243 = vunpack.c.l.b16 %v867
        %v1244 = vunpack.c.h.b16 %v867
        %v1245 = vunpack.c.l.b16 %v868
        %v1246 = vunpack.c.h.b16 %v868
        %v1247 = vunpack.c.l.b16 %v869
        %v1248 = vunpack.c.h.b16 %v869
        %v1249 = vunpack.c.l.b16 %v870
        %v1250 = vunpack.c.h.b16 %v870
        %v1251 = vunpack.c.l.b16 %v871
        %v1252 = vunpack.c.h.b16 %v871
        %v1253 = vunpack.c.l.b16 %v872
        %v1254 = vunpack.c.h.b16 %v872
        %v1255 = vunpack.c.l.b16 %v873
        %v1256 = vunpack.c.h.b16 %v873
        %v1257 = vunpack.c.l.b16 %v874
        %v1258 = vunpack.c.h.b16 %v874
        %v1259 = vunpack.c.l.b16 %v875
        %v1260 = vunpack.c.h.b16 %v875
        %v1261 = vunpack.c.l.b16 %v876
        %v1262 = vunpack.c.h.b16 %v876
        %v1263 = vunpack.c.l.b16 %v877
        %v1264 = vunpack.c.h.b16 %v877
        %v1265 = vunpack.c.l.b16 %v878
        %v1266 = vunpack.c.h.b16 %v878
        %v1267 = vunpack.c.l.b16 %v879
        %v1268 = vunpack.c.h.b16 %v879
        %v1269 = vunpack.c.l.b16 %v880
        %v1270 = vunpack.c.h.b16 %v880
        %v1271 = vunpack.c.l.b16 %v881
        %v1272 = vunpack.c.h.b16 %v881
        %v1273 = vunpack.c.l.b16 %v882
        %v1274 = vunpack.c.h.b16 %v882
        %v1275 = vunpack.c.l.b16 %v883
        %v1276 = vunpack.c.h.b16 %v883
        %v1277 = vunpack.c.l.b16 %v884
        %v1278 = vunpack.c.h.b16 %v884
        %v1279 = vunpack.c.l.b16 %v885
        %v1280 = vunpack.c.h.b16 %v885
        %v1281 = vunpack.c.l.b16 %v886
        %v1282 = vunpack.c.h.b16 %v886
        %v1283 = vunpack.c.l.b16 %v887
        %v1284 = vunpack.c.h.b16 %v887
        %v1285 = vunpack.c.l.b16 %v888
        %v1286 = vunpack.c.h.b16 %v888
        %v1287 = vunpack.c.l.b16 %v889
        %v1288 = vunpack.c.h.b16 %v889
        %v1289 = vunpack.c.l.b16 %v890
        %v1290 = vunpack.c.h.b16 %v890
        %v1291 = vunpack.c.l.b16 %v891
        %v1292 = vunpack.c.h.b16 %v891
        %v1293 = vunpack.c.l.b16 %v892
        %v1294 = vunpack.c.h.b16 %v892
        %v1295 = vunpack.c.l.b16 %v893
        %v1296 = vunpack.c.h.b16 %v893
        %v1297 = vunpack.c.l.b16 %v894
        %v1298 = vunpack.c.h.b16 %v894
        %v1299 = vunpack.c.l.b16 %v895
        %v1300 = vunpack.c.h.b16 %v895
        %v1301 = vunpack.c.l.b16 %v896
        %v1302 = vunpack.c.h.b16 %v896
        %v1303 = vunpack.c.l.b16 %v897
        %v1304 = vunpack.c.h.b16 %v897
        %v1305 = vunpack.c.l.b16 %v898
        %v1306 = vunpack.c.h.b16 %v898
        %v1307 = vunpack.c.l.b16 %v899
        %v1308 = vunpack.c.h.b16 %v899
        %v1309 = vunpack.c.l.b16 %v900
        %v1310 = vunpack.c.h.b16 %v900
        %v1311 = vunpack.c.l.b16 %v901
        %v1312 = vunpack.c.h.b16 %v901
        %v1313 = vunpack.c.l.b16 %v902
        %v1314 = vunpack.c.h.b16 %v902
        %v1315 = vunpack.c.l.b16 %v903
        %v1316 = vunpack.c.h.b16 %v903
        %v1317 = vunpack.c.l.b16 %v904
        %v1318 = vunpack.c.h.b16 %v904
        %v1319 = vunpack.c.l.b16 %v905
        %v1320 = vunpack.c.h.b16 %v905
        %v1321 = vunpack.c.l.b16 %v906
        %v1322 = vunpack.c.h.b16 %v906
        %v1323 = vunpack.c.l.b16 %v907
        %v1324 = vunpack.c.h.b16 %v907
        %v1325 = vunpack.c.l.b16 %v908
        %v1326 = vunpack.c.h.b16 %v908
        %v1327 = vunpack.c.l.b16 %v909
        %v1328 = vunpack.c.h.b16 %v909
        %v1329 = vunpack.c.l.b16 %v910
        %v1330 = vunpack.c.h.b16 %v910
        %v1331 = vunpack.c.l.b16 %v911
        %v1332 = vunpack.c.h.b16 %v911
        %v1333 = vunpack.c.l.b16 %v912
        %v1334 = vunpack.c.h.b16 %v912
        %v1335 = vunpack.c.l.b16 %v913
        %v1336 = vunpack.c.h.b16 %v913
        %v1337 = vunpack.c.l.b16 %v914
        %v1338 = vunpack.c.h.b16 %v914
        %v1339 = vunpack.c.l.b16 %v915
        %v1340 = vunpack.c.h.b16 %v915
        %v1341 = vunpack.c.l.b16 %v916
        %v1342 = vunpack.c.h.b16 %v916
        %v1343 = vunpack.c.l.b16 %v917
        %v1344 = vunpack.c.h.b16 %v917
        %v1345 = vunpack.c.l.b16 %v918
        %v1346 = vunpack.c.h.b16 %v918
        %v1347 = vunpack.c.l.b16 %v919
        %v1348 = vunpack.c.h.b16 %v919
        %v1349 = vunpack.c.l.b16 %v920
        %v1350 = vunpack.c.h.b16 %v920
        %v1351 = vunpack.c.l.b16 %v921
        %v1352 = vunpack.c.h.b16 %v921
        %v1353 = vunpack.c.l.b16 %v922
        %v1354 = vunpack.c.h.b16 %v922
        %v1355 = vunpack.c.l.b16 %v923
        %v1356 = vunpack.c.h.b16 %v923
        %v1357 = vunpack.c.l.b16 %v924
        %v1358 = vunpack.c.h.b16 %v924
        %v1359 = vunpack.c.l.b16 %v925
        %v1360 = vunpack.c.h.b16 %v925
        %v1361 = vunpack.c.l.b16 %v926
        %v1362 = vunpack.c.h.b16 %v926
        %v1363 = vunpack.c.l.b16 %v927
        %v1364 = vunpack.c.h.b16 %v927
        %v1365 = vunpack.c.l.b16 %v928
        %v1366 = vunpack.c.h.b16 %v928
        %v1367 = vunpack.c.l.b16 %v929
        %v1368 = vunpack.c.h.b16 %v929
        %v1369 = vunpack.c.l.b16 %v930
        %v1370 = vunpack.c.h.b16 %v930
        %v1371 = vunpack.c.l.b16 %v931
        %v1372 = vunpack.c.h.b16 %v931
        %v1373 = vunpack.c.l.b16 %v932
        %v1374 = vunpack.c.h.b16 %v932
        %v1375 = vunpack.c.l.b16 %v933
        %v1376 = vunpack.c.h.b16 %v933
        %v1377 = vunpack.c.l.b16 %v934
        %v1378 = vunpack.c.h.b16 %v934
        %v1379 = vunpack.c.l.b16 %v935
        %v1380 = vunpack.c.h.b16 %v935
        %v1381 = vunpack.c.l.b16 %v936
        %v1382 = vunpack.c.h.b16 %v936
        %v1383 = vunpack.c.l.b16 %v937
        %v1384 = vunpack.c.h.b16 %v937
        %v1385 = vunpack.c.l.b16 %v938
        %v1386 = vunpack.c.h.b16 %v938
        %v1387 = vunpack.c.l.b16 %v939
        %v1388 = vunpack.c.h.b16 %v939
        %v1389 = vunpack.c.l.b16 %v940
        %v1390 = vunpack.c.h.b16 %v940
        %v1391 = vunpack.c.l.b16 %v941
        %v1392 = vunpack.c.h.b16 %v941
        %v1393 = vunpack.c.l.b16 %v942
        %v1394 = vunpack.c.h.b16 %v942
        %v1395 = vunpack.c.l.b16 %v943
        %v1396 = vunpack.c.h.b16 %v943
        %v1397 = vunpack.c.l.b16 %v944
        %v1398 = vunpack.c.h.b16 %v944
        %v1399 = vunpack.c.l.b16 %v945
        %v1400 = vunpack.c.h.b16 %v945
        %v1401 = vunpack.c.l.b16 %v946
        %v1402 = vunpack.c.h.b16 %v946
        %v1403 = vunpack.c.l.b16 %v947
        %v1404 = vunpack.c.h.b16 %v947
        %v1405 = vunpack.c.l.b16 %v948
        %v1406 = vunpack.c.h.b16 %v948
        %v1407 = vunpack.c.l.b16 %v949
        %v1408 = vunpack.c.h.b16 %v949
        %v1409 = vunpack.c.l.b16 %v950
        %v1410 = vunpack.c.h.b16 %v950
        %v1411 = vunpack.c.l.b16 %v951
        %v1412 = vunpack.c.h.b16 %v951
        %v1413 = vunpack.c.l.b16 %v952
        %v1414 = vunpack.c.h.b16 %v952
        %v1415 = vunpack.c.l.b16 %v953
        %v1416 = vunpack.c.h.b16 %v953
        %v1417 = vunpack.c.l.b16 %v954
        %v1418 = vunpack.c.h.b16 %v954
        %v1419 = vunpack.c.l.b16 %v955
        %v1420 = vunpack.c.h.b16 %v955
        %v1421 = vunpack.c.l.b16 %v956
        %v1422 = vunpack.c.h.b16 %v956
        %v1423 = vunpack.c.l.b16 %v957
        %v1424 = vunpack.c.h.b16 %v957
        %v1425 = vunpack.c.l.b16 %v958
        %v1426 = vunpack.c.h.b16 %v958
        %v1427 = vunpack.c.l.b16 %v959
        %v1428 = vunpack.c.h.b16 %v959
        %v1429 = vunpack.c.l.b16 %v960
        %v1430 = vunpack.c.h.b16 %v960
        %v1431 = vunpack.c.l.b16 %v961
        %v1432 = vunpack.c.h.b16 %v961
        %v1433 = vunpack.c.l.b16 %v962
        %v1434 = vunpack.c.h.b16 %v962
        %v1435 = vunpack.c.l.b16 %v963
        %v1436 = vunpack.c.h.b16 %v963
        %v1437 = vunpack.c.l.b16 %v964
        %v1438 = vunpack.c.h.b16 %v964
        %v1439 = vunpack.c.l.b16 %v965
        %v1440 = vunpack.c.h.b16 %v965
        %v1441 = vunpack.c.l.b16 %v966
        %v1442 = vunpack.c.h.b16 %v966
        %v1443 = vunpack.c.l.b16 %v967
        %v1444 = vunpack.c.h.b16 %v967
        %v1445 = vunpack.c.l.b16 %v968
        %v1446 = vunpack.c.h.b16 %v968
        %v1447 = vunpack.c.l.b16 %v969
        %v1448 = vunpack.c.h.b16 %v969
        %v1449 = vunpack.c.l.b16 %v970
        %v1450 = vunpack.c.h.b16 %v970
        %v1451 = vpack.c.b16 %v1141, %v1131
        %v1452 = vpack.c.b16 %v1142, %v1132
        %v1453 = vpack.c.b16 %v1143, %v1133
        %v1454 = vpack.c.b16 %v1144, %v1134
        %v1455 = vpack.c.b16 %v1145, %v1135
        %v1456 = vpack.c.b16 %v1146, %v1136
        %v1457 = vpack.c.b16 %v1147, %v1137
        %v1458 = vpack.c.b16 %v1148, %v1138
        %v1459 = vpack.c.b16 %v1149, %v1139
        %v1460 = vpack.c.b16 %v1150, %v1140
        %v1461 = vpack.c.b16 %v1161, %v1151
        %v1462 = vpack.c.b16 %v1162, %v1152
        %v1463 = vpack.c.b16 %v1163, %v1153
        %v1464 = vpack.c.b16 %v1164, %v1154
        %v1465 = vpack.c.b16 %v1165, %v1155
        %v1466 = vpack.c.b16 %v1166, %v1156
        %v1467 = vpack.c.b16 %v1167, %v1157
        %v1468 = vpack.c.b16 %v1168, %v1158
        %v1469 = vpack.c.b16 %v1169, %v1159
        %v1470 = vpack.c.b16 %v1170, %v1160
        %v1471 = vpack.c.b16 %v1181, %v1171
        %v1472 = vpack.c.b16 %v1182, %v1172
        %v1473 = vpack.c.b16 %v1183, %v1173
        %v1474 = vpack.c.b16 %v1184, %v1174
        %v1475 = vpack.c.b16 %v1185, %v1175
        %v1476 = vpack.c.b16 %v1186, %v1176
        %v1477 = vpack.c.b16 %v1187, %v1177
        %v1478 = vpack.c.b16 %v1188, %v1178
        %v1479 = vpack.c.b16 %v1189, %v1179
        %v1480 = vpack.c.b16 %v1190, %v1180
        %v1481 = vpack.c.b16 %v1201, %v1191
        %v1482 = vpack.c.b16 %v1202, %v1192
        %v1483 = vpack.c.b16 %v1203, %v1193
        %v1484 = vpack.c.b16 %v1204, %v1194
        %v1485 = vpack.c.b16 %v1205, %v1195
        %v1486 = vpack.c.b16 %v1206, %v1196
        %v1487 = vpack.c.b16 %v1207, %v1197
        %v1488 = vpack.c.b16 %v1208, %v1198
        %v1489 = vpack.c.b16 %v1209, %v1199
        %v1490 = vpack.c.b16 %v1210, %v1200
        %v1491 = vpack.c.b16 %v1221, %v1211
        %v1492 = vpack.c.b16 %v1222, %v1212
        %v1493 = vpack.c.b16 %v1223, %v1213
        %v1494 = vpack.c.b16 %v1224, %v1214
        %v1495 = vpack.c.b16 %v1225, %v1215
        %v1496 = vpack.c.b16 %v1226, %v1216
        %v1497 = vpack.c.b16 %v1227, %v1217
        %v1498 = vpack.c.b16 %v1228, %v1218
        %v1499 = vpack.c.b16 %v1229, %v1219
        %v1500 = vpack.c.b16 %v1230, %v1220
        %v1501 = vpack.c.b16 %v1241, %v1231
        %v1502 = vpack.c.b16 %v1242, %v1232
        %v1503 = vpack.c.b16 %v1243, %v1233
        %v1504 = vpack.c.b16 %v1244, %v1234
        %v1505 = vpack.c.b16 %v1245, %v1235
        %v1506 = vpack.c.b16 %v1246, %v1236
        %v1507 = vpack.c.b16 %v1247, %v1237
        %v1508 = vpack.c.b16 %v1248, %v1238
        %v1509 = vpack.c.b16 %v1249, %v1239
        %v1510 = vpack.c.b16 %v1250, %v1240
        %v1511 = vpack.c.b16 %v1261, %v1251
        %v1512 = vpack.c.b16 %v1262, %v1252
        %v1513 = vpack.c.b16 %v1263, %v1253
        %v1514 = vpack.c.b16 %v1264, %v1254
        %v1515 = vpack.c.b16 %v1265, %v1255
        %v1516 = vpack.c.b16 %v1266, %v1256
        %v1517 = vpack.c.b16 %v1267, %v1257
        %v1518 = vpack.c.b16 %v1268, %v1258
        %v1519 = vpack.c.b16 %v1269, %v1259
        %v1520 = vpack.c.b16 %v1270, %v1260
        %v1521 = vpack.c.b16 %v1281, %v1271
        %v1522 = vpack.c.b16 %v1282, %v1272
        %v1523 = vpack.c.b16 %v1283, %v1273
        %v1524 = vpack.c.b16 %v1284, %v1274
        %v1525 = vpack.c.b16 %v1285, %v1275
        %v1526 = vpack.c.b16 %v1286, %v1276
        %v1527 = vpack.c.b16 %v1287, %v1277
        %v1528 = vpack.c.b16 %v1288, %v1278
        %v1529 = vpack.c.b16 %v1289, %v1279
        %v1530 = vpack.c.b16 %v1290, %v1280
        %v1531 = vpack.c.b16 %v1301, %v1291
        %v1532 = vpack.c.b16 %v1302, %v1292
        %v1533 = vpack.c.b16 %v1303, %v1293
        %v1534 = vpack.c.b16 %v1304, %v1294
        %v1535 = vpack.c.b16 %v1305, %v1295
        %v1536 = vpack.c.b16 %v1306, %v1296
        %v1537 = vpack.c.b16 %v1307, %v1297
        %v1538 = vpack.c.b16 %v1308, %v1298
        %v1539 = vpack.c.b16 %v1309, %v1299
        %v1540 = vpack.c.b16 %v1310, %v1300
        %v1541 = vpack.c.b16 %v1321, %v1311
        %v1542 = vpack.c.b16 %v1322, %v1312
        %v1543 = vpack.c.b16 %v1323, %v1313
        %v1544 = vpack.c.b16 %v1324, %v1314
        %v1545 = vpack.c.b16 %v1325, %v1315
        %v1546 = vpack.c.b16 %v1326, %v1316
        %v1547 = vpack.c.b16 %v1327, %v1317
        %v1548 = vpack.c.b16 %v1328, %v1318
        %v1549 = vpack.c.b16 %v1329, %v1319
        %v1550 = vpack.c.b16 %v1330, %v1320
        %v1551 = vpack.c.b16 %v1341, %v1331
        %v1552 = vpack.c.b16 %v1342, %v1332
        %v1553 = vpack.c.b16 %v1343, %v1333
        %v1554 = vpack.c.b16 %v1344, %v1334
        %v1555 = vpack.c.b16 %v1345, %v1335
        %v1556 = vpack.c.b16 %v1346, %v1336
        %v1557 = vpack.c.b16 %v1347, %v1337
        %v1558 = vpack.c.b16 %v1348, %v1338
        %v1559 = vpack.c.b16 %v1349, %v1339
        %v1560 = vpack.c.b16 %v1350, %v1340
        %v1561 = vpack.c.b16 %v1361, %v1351
        %v1562 = vpack.c.b16 %v1362, %v1352
        %v1563 = vpack.c.b16 %v1363, %v1353
        %v1564 = vpack.c.b16 %v1364, %v1354
        %v1565 = vpack.c.b16 %v1365, %v1355
        %v1566 = vpack.c.b16 %v1366, %v1356
        %v1567 = vpack.c.b16 %v1367, %v1357
        %v1568 = vpack.c.b16 %v1368, %v1358
        %v1569 = vpack.c.b16 %v1369, %v1359
        %v1570 = vpack.c.b16 %v1370, %v1360
        %v1571 = vpack.c.b16 %v1381, %v1371
        %v1572 = vpack.c.b16 %v1382, %v1372
        %v1573 = vpack.c.b16 %v1383, %v1373
        %v1574 = vpack.c.b16 %v1384, %v1374
        %v1575 = vpack.c.b16 %v1385, %v1375
        %v1576 = vpack.c.b16 %v1386, %v1376
        %v1577 = vpack.c.b16 %v1387, %v1377
        %v1578 = vpack.c.b16 %v1388, %v1378
        %v1579 = vpack.c.b16 %v1389, %v1379
        %v1580 = vpack.c.b16 %v1390, %v1380
        %v1581 = vpack.c.b16 %v1401, %v1391
        %v1582 = vpack.c.b16 %v1402, %v1392
        %v1583 = vpack.c.b16 %v1403, %v1393
        %v1584 = vpack.c.b16 %v1404, %v1394
        %v1585 = vpack.c.b16 %v1405, %v1395
        %v1586 = vpack.c.b16 %v1406, %v1396
        %v1587 = vpack.c.b16 %v1407, %v1397
        %v1588 = vpack.c.b16 %v1408, %v1398
        %v1589 = vpack.c.b16 %v1409, %v1399
        %v1590 = vpack.c.b16 %v1410, %v1400
        %v1591 = vpack.c.b16 %v1421, %v1411
        %v1592 = vpack.c.b16 %v1422, %v1412
        %v1593 = vpack.c.b16 %v1423, %v1413
        %v1594 = vpack.c.b16 %v1424, %v1414
        %v1595 = vpack.c.b16 %v1425, %v1415
        %v1596 = vpack.c.b16 %v1426, %v1416
        %v1597 = vpack.c.b16 %v1427, %v1417
        %v1598 = vpack.c.b16 %v1428, %v1418
        %v1599 = vpack.c.b16 %v1429, %v1419
        %v1600 = vpack.c.b16 %v1430, %v1420
        %v1601 = vpack.c.b16 %v1441, %v1431
        %v1602 = vpack.c.b16 %v1442, %v1432
        %v1603 = vpack.c.b16 %v1443, %v1433
        %v1604 = vpack.c.b16 %v1444, %v1434
        %v1605 = vpack.c.b16 %v1445, %v1435
        %v1606 = vpack.c.b16 %v1446, %v1436
        %v1607 = vpack.c.b16 %v1447, %v1437
        %v1608 = vpack.c.b16 %v1448, %v1438
        %v1609 = vpack.c.b16 %v1449, %v1439
        %v1610 = vpack.c.b16 %v1450, %v1440
        %1771 = vmatpush.bf16.msra.mxu0 %v1521
        %1772 = vmatpush.bf16.msra.mxu0 %v1511
        %1773 = vmatpush.bf16.msra.mxu0 %v1501
        %1774 = vmatpush.bf16.msra.mxu0 %v1491
        %1775 = vmatpush.bf16.msra.mxu0 %v1481
        %1776 = vmatpush.bf16.msra.mxu0 %v1471
        %1777 = vmatpush.bf16.msra.mxu0 %v1461
        %1778 = vmatpush.bf16.msra.mxu0 %v1451
        %1779 = vmatmul.bf16.gmra.mxu0 %v803
        %v1780 = vpop.f32.mrf.mxu0
        %v1781 = vadd.f32 0.0, %v1780
        %v1782 = vpop.f32.mrf.mxu0
        %v1783 = vadd.f32 0.0, %v1782
        %1784 = vmatmul.bf16.gmra.mxu0 %v805
        %v1785 = vpop.f32.mrf.mxu0
        %v1786 = vadd.f32 0.0, %v1785
        %v1787 = vpop.f32.mrf.mxu0
        %v1788 = vadd.f32 0.0, %v1787
        %1789 = vmatmul.bf16.gmra.mxu0 %v807
        %v1790 = vpop.f32.mrf.mxu0
        %v1791 = vadd.f32 0.0, %v1790
        %v1792 = vpop.f32.mrf.mxu0
        %v1793 = vadd.f32 0.0, %v1792
        %1794 = vmatmul.bf16.gmra.mxu0 %v809
        %v1795 = vpop.f32.mrf.mxu0
        %v1796 = vadd.f32 0.0, %v1795
        %v1797 = vpop.f32.mrf.mxu0
        %v1798 = vadd.f32 0.0, %v1797
        %1799 = vdwg.mxu0
        %1800 = vmatpush.bf16.msra.mxu0 %v1601
        %1801 = vmatpush.bf16.msra.mxu0 %v1591
        %1802 = vmatpush.bf16.msra.mxu0 %v1581
        %1803 = vmatpush.bf16.msra.mxu0 %v1571
        %1804 = vmatpush.bf16.msra.mxu0 %v1561
        %1805 = vmatpush.bf16.msra.mxu0 %v1551
        %1806 = vmatpush.bf16.msra.mxu0 %v1541
        %1807 = vmatpush.bf16.msra.mxu0 %v1531
        %1808 = vmatmul.bf16.gmra.mxu0 %v804
        %v1809 = vpop.f32.mrf.mxu0
        %v1810 = vadd.f32 %v1781, %v1809
        %v1811 = vpop.f32.mrf.mxu0
        %v1812 = vadd.f32 %v1783, %v1811
        %1813 = vmatmul.bf16.gmra.mxu0 %v806
        %v1814 = vpop.f32.mrf.mxu0
        %v1815 = vadd.f32 %v1786, %v1814
        %v1816 = vpop.f32.mrf.mxu0
        %v1817 = vadd.f32 %v1788, %v1816
        %1818 = vmatmul.bf16.gmra.mxu0 %v808
        %v1819 = vpop.f32.mrf.mxu0
        %v1820 = vadd.f32 %v1791, %v1819
        %v1821 = vpop.f32.mrf.mxu0
        %v1822 = vadd.f32 %v1793, %v1821
        %1823 = vmatmul.bf16.gmra.mxu0 %v810
        %v1824 = vpop.f32.mrf.mxu0
        %v1825 = vadd.f32 %v1796, %v1824
        %v1826 = vpop.f32.mrf.mxu0
        %v1827 = vadd.f32 %v1798, %v1826
        %1828 = vdwg.mxu0
        %1829 = vmatpush.bf16.msra.mxu0 %v1522
        %1830 = vmatpush.bf16.msra.mxu0 %v1512
        %1831 = vmatpush.bf16.msra.mxu0 %v1502
        %1832 = vmatpush.bf16.msra.mxu0 %v1492
        %1833 = vmatpush.bf16.msra.mxu0 %v1482
        %1834 = vmatpush.bf16.msra.mxu0 %v1472
        %1835 = vmatpush.bf16.msra.mxu0 %v1462
        %1836 = vmatpush.bf16.msra.mxu0 %v1452
        %1837 = vmatmul.bf16.gmra.mxu0 %v803
        %v1838 = vpop.f32.mrf.mxu0
        %v1839 = vadd.f32 0.0, %v1838
        %v1840 = vpop.f32.mrf.mxu0
        %v1841 = vadd.f32 0.0, %v1840
        %1842 = vmatmul.bf16.gmra.mxu0 %v805
        %v1843 = vpop.f32.mrf.mxu0
        %v1844 = vadd.f32 0.0, %v1843
        %v1845 = vpop.f32.mrf.mxu0
        %v1846 = vadd.f32 0.0, %v1845
        %1847 = vmatmul.bf16.gmra.mxu0 %v807
        %v1848 = vpop.f32.mrf.mxu0
        %v1849 = vadd.f32 0.0, %v1848
        %v1850 = vpop.f32.mrf.mxu0
        %v1851 = vadd.f32 0.0, %v1850
        %1852 = vmatmul.bf16.gmra.mxu0 %v809
        %v1853 = vpop.f32.mrf.mxu0
        %v1854 = vadd.f32 0.0, %v1853
        %v1855 = vpop.f32.mrf.mxu0
        %v1856 = vadd.f32 0.0, %v1855
        %1857 = vdwg.mxu0
        %1858 = vmatpush.bf16.msra.mxu0 %v1602
        %1859 = vmatpush.bf16.msra.mxu0 %v1592
        %1860 = vmatpush.bf16.msra.mxu0 %v1582
        %1861 = vmatpush.bf16.msra.mxu0 %v1572
        %1862 = vmatpush.bf16.msra.mxu0 %v1562
        %1863 = vmatpush.bf16.msra.mxu0 %v1552
        %1864 = vmatpush.bf16.msra.mxu0 %v1542
        %1865 = vmatpush.bf16.msra.mxu0 %v1532
        %1866 = vmatmul.bf16.gmra.mxu0 %v804
        %v1867 = vpop.f32.mrf.mxu0
        %v1868 = vadd.f32 %v1839, %v1867
        %v1869 = vpop.f32.mrf.mxu0
        %v1870 = vadd.f32 %v1841, %v1869
        %1871 = vmatmul.bf16.gmra.mxu0 %v806
        %v1872 = vpop.f32.mrf.mxu0
        %v1873 = vadd.f32 %v1844, %v1872
        %v1874 = vpop.f32.mrf.mxu0
        %v1875 = vadd.f32 %v1846, %v1874
        %1876 = vmatmul.bf16.gmra.mxu0 %v808
        %v1877 = vpop.f32.mrf.mxu0
        %v1878 = vadd.f32 %v1849, %v1877
        %v1879 = vpop.f32.mrf.mxu0
        %v1880 = vadd.f32 %v1851, %v1879
        %1881 = vmatmul.bf16.gmra.mxu0 %v810
        %v1882 = vpop.f32.mrf.mxu0
        %v1883 = vadd.f32 %v1854, %v1882
        %v1884 = vpop.f32.mrf.mxu0
        %v1885 = vadd.f32 %v1856, %v1884
        %1886 = vdwg.mxu0
        %1887 = vmatpush.bf16.msra.mxu0 %v1523
        %1888 = vmatpush.bf16.msra.mxu0 %v1513
        %1889 = vmatpush.bf16.msra.mxu0 %v1503
        %1890 = vmatpush.bf16.msra.mxu0 %v1493
        %1891 = vmatpush.bf16.msra.mxu0 %v1483
        %1892 = vmatpush.bf16.msra.mxu0 %v1473
        %1893 = vmatpush.bf16.msra.mxu0 %v1463
        %1894 = vmatpush.bf16.msra.mxu0 %v1453
        %1895 = vmatmul.bf16.gmra.mxu0 %v803
        %v1896 = vpop.f32.mrf.mxu0
        %v1897 = vadd.f32 0.0, %v1896
        %v1898 = vpop.f32.mrf.mxu0
        %v1899 = vadd.f32 0.0, %v1898
        %1900 = vmatmul.bf16.gmra.mxu0 %v805
        %v1901 = vpop.f32.mrf.mxu0
        %v1902 = vadd.f32 0.0, %v1901
        %v1903 = vpop.f32.mrf.mxu0
        %v1904 = vadd.f32 0.0, %v1903
        %1905 = vmatmul.bf16.gmra.mxu0 %v807
        %v1906 = vpop.f32.mrf.mxu0
        %v1907 = vadd.f32 0.0, %v1906
        %v1908 = vpop.f32.mrf.mxu0
        %v1909 = vadd.f32 0.0, %v1908
        %1910 = vmatmul.bf16.gmra.mxu0 %v809
        %v1911 = vpop.f32.mrf.mxu0
        %v1912 = vadd.f32 0.0, %v1911
        %v1913 = vpop.f32.mrf.mxu0
        %v1914 = vadd.f32 0.0, %v1913
        %1915 = vdwg.mxu0
        %1916 = vmatpush.bf16.msra.mxu0 %v1603
        %1917 = vmatpush.bf16.msra.mxu0 %v1593
        %1918 = vmatpush.bf16.msra.mxu0 %v1583
        %1919 = vmatpush.bf16.msra.mxu0 %v1573
        %1920 = vmatpush.bf16.msra.mxu0 %v1563
        %1921 = vmatpush.bf16.msra.mxu0 %v1553
        %1922 = vmatpush.bf16.msra.mxu0 %v1543
        %1923 = vmatpush.bf16.msra.mxu0 %v1533
        %1924 = vmatmul.bf16.gmra.mxu0 %v804
        %v1925 = vpop.f32.mrf.mxu0
        %v1926 = vadd.f32 %v1897, %v1925
        %v1927 = vpop.f32.mrf.mxu0
        %v1928 = vadd.f32 %v1899, %v1927
        %1929 = vmatmul.bf16.gmra.mxu0 %v806
        %v1930 = vpop.f32.mrf.mxu0
        %v1931 = vadd.f32 %v1902, %v1930
        %v1932 = vpop.f32.mrf.mxu0
        %v1933 = vadd.f32 %v1904, %v1932
        %1934 = vmatmul.bf16.gmra.mxu0 %v808
        %v1935 = vpop.f32.mrf.mxu0
        %v1936 = vadd.f32 %v1907, %v1935
        %v1937 = vpop.f32.mrf.mxu0
        %v1938 = vadd.f32 %v1909, %v1937
        %1939 = vmatmul.bf16.gmra.mxu0 %v810
        %v1940 = vpop.f32.mrf.mxu0
        %v1941 = vadd.f32 %v1912, %v1940
        %v1942 = vpop.f32.mrf.mxu0
        %v1943 = vadd.f32 %v1914, %v1942
        %1944 = vdwg.mxu0
        %1945 = vmatpush.bf16.msra.mxu0 %v1524
        %1946 = vmatpush.bf16.msra.mxu0 %v1514
        %1947 = vmatpush.bf16.msra.mxu0 %v1504
        %1948 = vmatpush.bf16.msra.mxu0 %v1494
        %1949 = vmatpush.bf16.msra.mxu0 %v1484
        %1950 = vmatpush.bf16.msra.mxu0 %v1474
        %1951 = vmatpush.bf16.msra.mxu0 %v1464
        %1952 = vmatpush.bf16.msra.mxu0 %v1454
        %1953 = vmatmul.bf16.gmra.mxu0 %v803
        %v1954 = vpop.f32.mrf.mxu0
        %v1955 = vadd.f32 0.0, %v1954
        %v1956 = vpop.f32.mrf.mxu0
        %v1957 = vadd.f32 0.0, %v1956
        %1958 = vmatmul.bf16.gmra.mxu0 %v805
        %v1959 = vpop.f32.mrf.mxu0
        %v1960 = vadd.f32 0.0, %v1959
        %v1961 = vpop.f32.mrf.mxu0
        %v1962 = vadd.f32 0.0, %v1961
        %1963 = vmatmul.bf16.gmra.mxu0 %v807
        %v1964 = vpop.f32.mrf.mxu0
        %v1965 = vadd.f32 0.0, %v1964
        %v1966 = vpop.f32.mrf.mxu0
        %v1967 = vadd.f32 0.0, %v1966
        %1968 = vmatmul.bf16.gmra.mxu0 %v809
        %v1969 = vpop.f32.mrf.mxu0
        %v1970 = vadd.f32 0.0, %v1969
        %v1971 = vpop.f32.mrf.mxu0
        %v1972 = vadd.f32 0.0, %v1971
        %1973 = vdwg.mxu0
        %1974 = vmatpush.bf16.msra.mxu0 %v1604
        %1975 = vmatpush.bf16.msra.mxu0 %v1594
        %1976 = vmatpush.bf16.msra.mxu0 %v1584
        %1977 = vmatpush.bf16.msra.mxu0 %v1574
        %1978 = vmatpush.bf16.msra.mxu0 %v1564
        %1979 = vmatpush.bf16.msra.mxu0 %v1554
        %1980 = vmatpush.bf16.msra.mxu0 %v1544
        %1981 = vmatpush.bf16.msra.mxu0 %v1534
        %1982 = vmatmul.bf16.gmra.mxu0 %v804
        %v1983 = vpop.f32.mrf.mxu0
        %v1984 = vadd.f32 %v1955, %v1983
        %v1985 = vpop.f32.mrf.mxu0
        %v1986 = vadd.f32 %v1957, %v1985
        %1987 = vmatmul.bf16.gmra.mxu0 %v806
        %v1988 = vpop.f32.mrf.mxu0
        %v1989 = vadd.f32 %v1960, %v1988
        %v1990 = vpop.f32.mrf.mxu0
        %v1991 = vadd.f32 %v1962, %v1990
        %1992 = vmatmul.bf16.gmra.mxu0 %v808
        %v1993 = vpop.f32.mrf.mxu0
        %v1994 = vadd.f32 %v1965, %v1993
        %v1995 = vpop.f32.mrf.mxu0
        %v1996 = vadd.f32 %v1967, %v1995
        %1997 = vmatmul.bf16.gmra.mxu0 %v810
        %v1998 = vpop.f32.mrf.mxu0
        %v1999 = vadd.f32 %v1970, %v1998
        %v2000 = vpop.f32.mrf.mxu0
        %v2001 = vadd.f32 %v1972, %v2000
        %2002 = vdwg.mxu0
        %2003 = vmatpush.bf16.msra.mxu0 %v1525
        %2004 = vmatpush.bf16.msra.mxu0 %v1515
        %2005 = vmatpush.bf16.msra.mxu0 %v1505
        %2006 = vmatpush.bf16.msra.mxu0 %v1495
        %2007 = vmatpush.bf16.msra.mxu0 %v1485
        %2008 = vmatpush.bf16.msra.mxu0 %v1475
        %2009 = vmatpush.bf16.msra.mxu0 %v1465
        %2010 = vmatpush.bf16.msra.mxu0 %v1455
        %2011 = vmatmul.bf16.gmra.mxu0 %v803
        %v2012 = vpop.f32.mrf.mxu0
        %v2013 = vadd.f32 0.0, %v2012
        %v2014 = vpop.f32.mrf.mxu0
        %v2015 = vadd.f32 0.0, %v2014
        %2016 = vmatmul.bf16.gmra.mxu0 %v805
        %v2017 = vpop.f32.mrf.mxu0
        %v2018 = vadd.f32 0.0, %v2017
        %v2019 = vpop.f32.mrf.mxu0
        %v2020 = vadd.f32 0.0, %v2019
        %2021 = vmatmul.bf16.gmra.mxu0 %v807
        %v2022 = vpop.f32.mrf.mxu0
        %v2023 = vadd.f32 0.0, %v2022
        %v2024 = vpop.f32.mrf.mxu0
        %v2025 = vadd.f32 0.0, %v2024
        %2026 = vmatmul.bf16.gmra.mxu0 %v809
        %v2027 = vpop.f32.mrf.mxu0
        %v2028 = vadd.f32 0.0, %v2027
        %v2029 = vpop.f32.mrf.mxu0
        %v2030 = vadd.f32 0.0, %v2029
        %2031 = vdwg.mxu0
        %2032 = vmatpush.bf16.msra.mxu0 %v1605
        %2033 = vmatpush.bf16.msra.mxu0 %v1595
        %2034 = vmatpush.bf16.msra.mxu0 %v1585
        %2035 = vmatpush.bf16.msra.mxu0 %v1575
        %2036 = vmatpush.bf16.msra.mxu0 %v1565
        %2037 = vmatpush.bf16.msra.mxu0 %v1555
        %2038 = vmatpush.bf16.msra.mxu0 %v1545
        %2039 = vmatpush.bf16.msra.mxu0 %v1535
        %2040 = vmatmul.bf16.gmra.mxu0 %v804
        %v2041 = vpop.f32.mrf.mxu0
        %v2042 = vadd.f32 %v2013, %v2041
        %v2043 = vpop.f32.mrf.mxu0
        %v2044 = vadd.f32 %v2015, %v2043
        %2045 = vmatmul.bf16.gmra.mxu0 %v806
        %v2046 = vpop.f32.mrf.mxu0
        %v2047 = vadd.f32 %v2018, %v2046
        %v2048 = vpop.f32.mrf.mxu0
        %v2049 = vadd.f32 %v2020, %v2048
        %2050 = vmatmul.bf16.gmra.mxu0 %v808
        %v2051 = vpop.f32.mrf.mxu0
        %v2052 = vadd.f32 %v2023, %v2051
        %v2053 = vpop.f32.mrf.mxu0
        %v2054 = vadd.f32 %v2025, %v2053
        %2055 = vmatmul.bf16.gmra.mxu0 %v810
        %v2056 = vpop.f32.mrf.mxu0
        %v2057 = vadd.f32 %v2028, %v2056
        %v2058 = vpop.f32.mrf.mxu0
        %v2059 = vadd.f32 %v2030, %v2058
        %2060 = vdwg.mxu0
        %2061 = vmatpush.bf16.msra.mxu0 %v1526
        %2062 = vmatpush.bf16.msra.mxu0 %v1516
        %2063 = vmatpush.bf16.msra.mxu0 %v1506
        %2064 = vmatpush.bf16.msra.mxu0 %v1496
        %2065 = vmatpush.bf16.msra.mxu0 %v1486
        %2066 = vmatpush.bf16.msra.mxu0 %v1476
        %2067 = vmatpush.bf16.msra.mxu0 %v1466
        %2068 = vmatpush.bf16.msra.mxu0 %v1456
        %2069 = vmatmul.bf16.gmra.mxu0 %v803
        %v2070 = vpop.f32.mrf.mxu0
        %v2071 = vadd.f32 0.0, %v2070
        %v2072 = vpop.f32.mrf.mxu0
        %v2073 = vadd.f32 0.0, %v2072
        %2074 = vmatmul.bf16.gmra.mxu0 %v805
        %v2075 = vpop.f32.mrf.mxu0
        %v2076 = vadd.f32 0.0, %v2075
        %v2077 = vpop.f32.mrf.mxu0
        %v2078 = vadd.f32 0.0, %v2077
        %2079 = vmatmul.bf16.gmra.mxu0 %v807
        %v2080 = vpop.f32.mrf.mxu0
        %v2081 = vadd.f32 0.0, %v2080
        %v2082 = vpop.f32.mrf.mxu0
        %v2083 = vadd.f32 0.0, %v2082
        %2084 = vmatmul.bf16.gmra.mxu0 %v809
        %v2085 = vpop.f32.mrf.mxu0
        %v2086 = vadd.f32 0.0, %v2085
        %v2087 = vpop.f32.mrf.mxu0
        %v2088 = vadd.f32 0.0, %v2087
        %2089 = vdwg.mxu0
        %2090 = vmatpush.bf16.msra.mxu0 %v1606
        %2091 = vmatpush.bf16.msra.mxu0 %v1596
        %2092 = vmatpush.bf16.msra.mxu0 %v1586
        %2093 = vmatpush.bf16.msra.mxu0 %v1576
        %2094 = vmatpush.bf16.msra.mxu0 %v1566
        %2095 = vmatpush.bf16.msra.mxu0 %v1556
        %2096 = vmatpush.bf16.msra.mxu0 %v1546
        %2097 = vmatpush.bf16.msra.mxu0 %v1536
        %2098 = vmatmul.bf16.gmra.mxu0 %v804
        %v2099 = vpop.f32.mrf.mxu0
        %v2100 = vadd.f32 %v2071, %v2099
        %v2101 = vpop.f32.mrf.mxu0
        %v2102 = vadd.f32 %v2073, %v2101
        %2103 = vmatmul.bf16.gmra.mxu0 %v806
        %v2104 = vpop.f32.mrf.mxu0
        %v2105 = vadd.f32 %v2076, %v2104
        %v2106 = vpop.f32.mrf.mxu0
        %v2107 = vadd.f32 %v2078, %v2106
        %2108 = vmatmul.bf16.gmra.mxu0 %v808
        %v2109 = vpop.f32.mrf.mxu0
        %v2110 = vadd.f32 %v2081, %v2109
        %v2111 = vpop.f32.mrf.mxu0
        %v2112 = vadd.f32 %v2083, %v2111
        %2113 = vmatmul.bf16.gmra.mxu0 %v810
        %v2114 = vpop.f32.mrf.mxu0
        %v2115 = vadd.f32 %v2086, %v2114
        %v2116 = vpop.f32.mrf.mxu0
        %v2117 = vadd.f32 %v2088, %v2116
        %2118 = vdwg.mxu0
        %2119 = vmatpush.bf16.msra.mxu0 %v1527
        %2120 = vmatpush.bf16.msra.mxu0 %v1517
        %2121 = vmatpush.bf16.msra.mxu0 %v1507
        %2122 = vmatpush.bf16.msra.mxu0 %v1497
        %2123 = vmatpush.bf16.msra.mxu0 %v1487
        %2124 = vmatpush.bf16.msra.mxu0 %v1477
        %2125 = vmatpush.bf16.msra.mxu0 %v1467
        %2126 = vmatpush.bf16.msra.mxu0 %v1457
        %2127 = vmatmul.bf16.gmra.mxu0 %v803
        %v2128 = vpop.f32.mrf.mxu0
        %v2129 = vadd.f32 0.0, %v2128
        %v2130 = vpop.f32.mrf.mxu0
        %v2131 = vadd.f32 0.0, %v2130
        %2132 = vmatmul.bf16.gmra.mxu0 %v805
        %v2133 = vpop.f32.mrf.mxu0
        %v2134 = vadd.f32 0.0, %v2133
        %v2135 = vpop.f32.mrf.mxu0
        %v2136 = vadd.f32 0.0, %v2135
        %2137 = vmatmul.bf16.gmra.mxu0 %v807
        %v2138 = vpop.f32.mrf.mxu0
        %v2139 = vadd.f32 0.0, %v2138
        %v2140 = vpop.f32.mrf.mxu0
        %v2141 = vadd.f32 0.0, %v2140
        %2142 = vmatmul.bf16.gmra.mxu0 %v809
        %v2143 = vpop.f32.mrf.mxu0
        %v2144 = vadd.f32 0.0, %v2143
        %v2145 = vpop.f32.mrf.mxu0
        %v2146 = vadd.f32 0.0, %v2145
        %2147 = vdwg.mxu0
        %2148 = vmatpush.bf16.msra.mxu0 %v1607
        %2149 = vmatpush.bf16.msra.mxu0 %v1597
        %2150 = vmatpush.bf16.msra.mxu0 %v1587
        %2151 = vmatpush.bf16.msra.mxu0 %v1577
        %2152 = vmatpush.bf16.msra.mxu0 %v1567
        %2153 = vmatpush.bf16.msra.mxu0 %v1557
        %2154 = vmatpush.bf16.msra.mxu0 %v1547
        %2155 = vmatpush.bf16.msra.mxu0 %v1537
        %2156 = vmatmul.bf16.gmra.mxu0 %v804
        %v2157 = vpop.f32.mrf.mxu0
        %v2158 = vadd.f32 %v2129, %v2157
        %v2159 = vpop.f32.mrf.mxu0
        %v2160 = vadd.f32 %v2131, %v2159
        %2161 = vmatmul.bf16.gmra.mxu0 %v806
        %v2162 = vpop.f32.mrf.mxu0
        %v2163 = vadd.f32 %v2134, %v2162
        %v2164 = vpop.f32.mrf.mxu0
        %v2165 = vadd.f32 %v2136, %v2164
        %2166 = vmatmul.bf16.gmra.mxu0 %v808
        %v2167 = vpop.f32.mrf.mxu0
        %v2168 = vadd.f32 %v2139, %v2167
        %v2169 = vpop.f32.mrf.mxu0
        %v2170 = vadd.f32 %v2141, %v2169
        %2171 = vmatmul.bf16.gmra.mxu0 %v810
        %v2172 = vpop.f32.mrf.mxu0
        %v2173 = vadd.f32 %v2144, %v2172
        %v2174 = vpop.f32.mrf.mxu0
        %v2175 = vadd.f32 %v2146, %v2174
        %2176 = vdwg.mxu0
        %2177 = vmatpush.bf16.msra.mxu0 %v1528
        %2178 = vmatpush.bf16.msra.mxu0 %v1518
        %2179 = vmatpush.bf16.msra.mxu0 %v1508
        %2180 = vmatpush.bf16.msra.mxu0 %v1498
        %2181 = vmatpush.bf16.msra.mxu0 %v1488
        %2182 = vmatpush.bf16.msra.mxu0 %v1478
        %2183 = vmatpush.bf16.msra.mxu0 %v1468
        %2184 = vmatpush.bf16.msra.mxu0 %v1458
        %2185 = vmatmul.bf16.gmra.mxu0 %v803
        %v2186 = vpop.f32.mrf.mxu0
        %v2187 = vadd.f32 0.0, %v2186
        %v2188 = vpop.f32.mrf.mxu0
        %v2189 = vadd.f32 0.0, %v2188
        %2190 = vmatmul.bf16.gmra.mxu0 %v805
        %v2191 = vpop.f32.mrf.mxu0
        %v2192 = vadd.f32 0.0, %v2191
        %v2193 = vpop.f32.mrf.mxu0
        %v2194 = vadd.f32 0.0, %v2193
        %2195 = vmatmul.bf16.gmra.mxu0 %v807
        %v2196 = vpop.f32.mrf.mxu0
        %v2197 = vadd.f32 0.0, %v2196
        %v2198 = vpop.f32.mrf.mxu0
        %v2199 = vadd.f32 0.0, %v2198
        %2200 = vmatmul.bf16.gmra.mxu0 %v809
        %v2201 = vpop.f32.mrf.mxu0
        %v2202 = vadd.f32 0.0, %v2201
        %v2203 = vpop.f32.mrf.mxu0
        %v2204 = vadd.f32 0.0, %v2203
        %2205 = vdwg.mxu0
        %2206 = vmatpush.bf16.msra.mxu0 %v1608
        %2207 = vmatpush.bf16.msra.mxu0 %v1598
        %2208 = vmatpush.bf16.msra.mxu0 %v1588
        %2209 = vmatpush.bf16.msra.mxu0 %v1578
        %2210 = vmatpush.bf16.msra.mxu0 %v1568
        %2211 = vmatpush.bf16.msra.mxu0 %v1558
        %2212 = vmatpush.bf16.msra.mxu0 %v1548
        %2213 = vmatpush.bf16.msra.mxu0 %v1538
        %2214 = vmatmul.bf16.gmra.mxu0 %v804
        %v2215 = vpop.f32.mrf.mxu0
        %v2216 = vadd.f32 %v2187, %v2215
        %v2217 = vpop.f32.mrf.mxu0
        %v2218 = vadd.f32 %v2189, %v2217
        %2219 = vmatmul.bf16.gmra.mxu0 %v806
        %v2220 = vpop.f32.mrf.mxu0
        %v2221 = vadd.f32 %v2192, %v2220
        %v2222 = vpop.f32.mrf.mxu0
        %v2223 = vadd.f32 %v2194, %v2222
        %2224 = vmatmul.bf16.gmra.mxu0 %v808
        %v2225 = vpop.f32.mrf.mxu0
        %v2226 = vadd.f32 %v2197, %v2225
        %v2227 = vpop.f32.mrf.mxu0
        %v2228 = vadd.f32 %v2199, %v2227
        %2229 = vmatmul.bf16.gmra.mxu0 %v810
        %v2230 = vpop.f32.mrf.mxu0
        %v2231 = vadd.f32 %v2202, %v2230
        %v2232 = vpop.f32.mrf.mxu0
        %v2233 = vadd.f32 %v2204, %v2232
        %2234 = vdwg.mxu0
        %2235 = vmatpush.bf16.msra.mxu0 %v1529
        %2236 = vmatpush.bf16.msra.mxu0 %v1519
        %2237 = vmatpush.bf16.msra.mxu0 %v1509
        %2238 = vmatpush.bf16.msra.mxu0 %v1499
        %2239 = vmatpush.bf16.msra.mxu0 %v1489
        %2240 = vmatpush.bf16.msra.mxu0 %v1479
        %2241 = vmatpush.bf16.msra.mxu0 %v1469
        %2242 = vmatpush.bf16.msra.mxu0 %v1459
        %2243 = vmatmul.bf16.gmra.mxu0 %v803
        %v2244 = vpop.f32.mrf.mxu0
        %v2245 = vadd.f32 0.0, %v2244
        %v2246 = vpop.f32.mrf.mxu0
        %v2247 = vadd.f32 0.0, %v2246
        %2248 = vmatmul.bf16.gmra.mxu0 %v805
        %v2249 = vpop.f32.mrf.mxu0
        %v2250 = vadd.f32 0.0, %v2249
        %v2251 = vpop.f32.mrf.mxu0
        %v2252 = vadd.f32 0.0, %v2251
        %2253 = vmatmul.bf16.gmra.mxu0 %v807
        %v2254 = vpop.f32.mrf.mxu0
        %v2255 = vadd.f32 0.0, %v2254
        %v2256 = vpop.f32.mrf.mxu0
        %v2257 = vadd.f32 0.0, %v2256
        %2258 = vmatmul.bf16.gmra.mxu0 %v809
        %v2259 = vpop.f32.mrf.mxu0
        %v2260 = vadd.f32 0.0, %v2259
        %v2261 = vpop.f32.mrf.mxu0
        %v2262 = vadd.f32 0.0, %v2261
        %2263 = vdwg.mxu0
        %2264 = vmatpush.bf16.msra.mxu0 %v1609
        %2265 = vmatpush.bf16.msra.mxu0 %v1599
        %2266 = vmatpush.bf16.msra.mxu0 %v1589
        %2267 = vmatpush.bf16.msra.mxu0 %v1579
        %2268 = vmatpush.bf16.msra.mxu0 %v1569
        %2269 = vmatpush.bf16.msra.mxu0 %v1559
        %2270 = vmatpush.bf16.msra.mxu0 %v1549
        %2271 = vmatpush.bf16.msra.mxu0 %v1539
        %2272 = vmatmul.bf16.gmra.mxu0 %v804
        %v2273 = vpop.f32.mrf.mxu0
        %v2274 = vadd.f32 %v2245, %v2273
        %v2275 = vpop.f32.mrf.mxu0
        %v2276 = vadd.f32 %v2247, %v2275
        %2277 = vmatmul.bf16.gmra.mxu0 %v806
        %v2278 = vpop.f32.mrf.mxu0
        %v2279 = vadd.f32 %v2250, %v2278
        %v2280 = vpop.f32.mrf.mxu0
        %v2281 = vadd.f32 %v2252, %v2280
        %2282 = vmatmul.bf16.gmra.mxu0 %v808
        %v2283 = vpop.f32.mrf.mxu0
        %v2284 = vadd.f32 %v2255, %v2283
        %v2285 = vpop.f32.mrf.mxu0
        %v2286 = vadd.f32 %v2257, %v2285
        %2287 = vmatmul.bf16.gmra.mxu0 %v810
        %v2288 = vpop.f32.mrf.mxu0
        %v2289 = vadd.f32 %v2260, %v2288
        %v2290 = vpop.f32.mrf.mxu0
        %v2291 = vadd.f32 %v2262, %v2290
        %2292 = vdwg.mxu0
        %2293 = vmatpush.bf16.msra.mxu0 %v1530
        %2294 = vmatpush.bf16.msra.mxu0 %v1520
        %2295 = vmatpush.bf16.msra.mxu0 %v1510
        %2296 = vmatpush.bf16.msra.mxu0 %v1500
        %2297 = vmatpush.bf16.msra.mxu0 %v1490
        %2298 = vmatpush.bf16.msra.mxu0 %v1480
        %2299 = vmatpush.bf16.msra.mxu0 %v1470
        %2300 = vmatpush.bf16.msra.mxu0 %v1460
        %2301 = vmatmul.bf16.gmra.mxu0 %v803
        %v2302 = vpop.f32.mrf.mxu0
        %v2303 = vadd.f32 0.0, %v2302
        %v2304 = vpop.f32.mrf.mxu0
        %v2305 = vadd.f32 0.0, %v2304
        %2306 = vmatmul.bf16.gmra.mxu0 %v805
        %v2307 = vpop.f32.mrf.mxu0
        %v2308 = vadd.f32 0.0, %v2307
        %v2309 = vpop.f32.mrf.mxu0
        %v2310 = vadd.f32 0.0, %v2309
        %2311 = vmatmul.bf16.gmra.mxu0 %v807
        %v2312 = vpop.f32.mrf.mxu0
        %v2313 = vadd.f32 0.0, %v2312
        %v2314 = vpop.f32.mrf.mxu0
        %v2315 = vadd.f32 0.0, %v2314
        %2316 = vmatmul.bf16.gmra.mxu0 %v809
        %v2317 = vpop.f32.mrf.mxu0
        %v2318 = vadd.f32 0.0, %v2317
        %v2319 = vpop.f32.mrf.mxu0
        %v2320 = vadd.f32 0.0, %v2319
        %2321 = vdwg.mxu0
        %2322 = vmatpush.bf16.msra.mxu0 %v1610
        %2323 = vmatpush.bf16.msra.mxu0 %v1600
        %2324 = vmatpush.bf16.msra.mxu0 %v1590
        %2325 = vmatpush.bf16.msra.mxu0 %v1580
        %2326 = vmatpush.bf16.msra.mxu0 %v1570
        %2327 = vmatpush.bf16.msra.mxu0 %v1560
        %2328 = vmatpush.bf16.msra.mxu0 %v1550
        %2329 = vmatpush.bf16.msra.mxu0 %v1540
        %2330 = vmatmul.bf16.gmra.mxu0 %v804
        %v2331 = vpop.f32.mrf.mxu0
        %v2332 = vadd.f32 %v2303, %v2331
        %v2333 = vpop.f32.mrf.mxu0
        %v2334 = vadd.f32 %v2305, %v2333
        %2335 = vmatmul.bf16.gmra.mxu0 %v806
        %v2336 = vpop.f32.mrf.mxu0
        %v2337 = vadd.f32 %v2308, %v2336
        %v2338 = vpop.f32.mrf.mxu0
        %v2339 = vadd.f32 %v2310, %v2338
        %2340 = vmatmul.bf16.gmra.mxu0 %v808
        %v2341 = vpop.f32.mrf.mxu0
        %v2342 = vadd.f32 %v2313, %v2341
        %v2343 = vpop.f32.mrf.mxu0
        %v2344 = vadd.f32 %v2315, %v2343
        %2345 = vmatmul.bf16.gmra.mxu0 %v810
        %v2346 = vpop.f32.mrf.mxu0
        %v2347 = vadd.f32 %v2318, %v2346
        %v2348 = vpop.f32.mrf.mxu0
        %v2349 = vadd.f32 %v2320, %v2348
        %2350 = vdwg.mxu0
        %v2351 = vld [vmem:[#allocation10] sm:$0xff]
        %v2352 = vld [vmem:[#allocation10 + $0x8] sm:$0xff]
        %v2353 = vld [vmem:[#allocation10 + $0x10] sm:$0xff]
        %v2354 = vld [vmem:[#allocation10 + $0x18] sm:$0xff]
        %v2355 = vld [vmem:[#allocation10 + $0x20] sm:$0xff]
        %v2356 = vld [vmem:[#allocation10 + $0x28] sm:$0xff]
        %v2357 = vld [vmem:[#allocation10 + $0x30] sm:$0xff]
        %v2358 = vld [vmem:[#allocation10 + $0x38] sm:$0xff]
        %v2359 = vld [vmem:[#allocation10 + $0x40] sm:$0xff]
        %v2360 = vld [vmem:[#allocation10 + $0x48] sm:$0xff]
        %v2361 = vld [vmem:[#allocation10 + $0x50] sm:$0xff]
        %v2362 = vld [vmem:[#allocation10 + $0x58] sm:$0xff]
        %v2363 = vld [vmem:[#allocation10 + $0x60] sm:$0xff]
        %v2364 = vld [vmem:[#allocation10 + $0x68] sm:$0xff]
        %v2365 = vld [vmem:[#allocation10 + $0x70] sm:$0xff]
        %v2366 = vld [vmem:[#allocation10 + $0x78] sm:$0xff]
        %v2367 = vld [vmem:[#allocation10 + $0x80] sm:$0xff]
        %v2368 = vld [vmem:[#allocation10 + $0x88] sm:$0xff]
        %v2369 = vld [vmem:[#allocation10 + $0x90] sm:$0xff]
        %v2370 = vld [vmem:[#allocation10 + $0x98] sm:$0xff]
        %v2371 = vld [vmem:[#allocation10 + $0xa0] sm:$0xff]
        %v2372 = vld [vmem:[#allocation10 + $0xa8] sm:$0xff]
        %v2373 = vld [vmem:[#allocation10 + $0xb0] sm:$0xff]
        %v2374 = vld [vmem:[#allocation10 + $0xb8] sm:$0xff]
        %v2375 = vld [vmem:[#allocation10 + $0xc0] sm:$0xff]
        %v2376 = vld [vmem:[#allocation10 + $0xc8] sm:$0xff]
        %v2377 = vld [vmem:[#allocation10 + $0xd0] sm:$0xff]
        %v2378 = vld [vmem:[#allocation10 + $0xd8] sm:$0xff]
        %v2379 = vld [vmem:[#allocation10 + $0xe0] sm:$0xff]
        %v2380 = vld [vmem:[#allocation10 + $0xe8] sm:$0xff]
        %v2381 = vld [vmem:[#allocation10 + $0xf0] sm:$0xff]
        %v2382 = vld [vmem:[#allocation10 + $0xf8] sm:$0xff]
        %v2391 = vunpack.c.l.b16 %v763
        %v2392 = vunpack.c.h.b16 %v763
        %v2393 = vunpack.c.l.b16 %v764
        %v2394 = vunpack.c.h.b16 %v764
        %v2395 = vunpack.c.l.b16 %v765
        %v2396 = vunpack.c.h.b16 %v765
        %v2397 = vunpack.c.l.b16 %v766
        %v2398 = vunpack.c.h.b16 %v766
        %v2399 = vunpack.c.l.b16 %v767
        %v2400 = vunpack.c.h.b16 %v767
        %v2401 = vunpack.c.l.b16 %v768
        %v2402 = vunpack.c.h.b16 %v768
        %v2403 = vunpack.c.l.b16 %v769
        %v2404 = vunpack.c.h.b16 %v769
        %v2405 = vunpack.c.l.b16 %v770
        %v2406 = vunpack.c.h.b16 %v770
        %v2407 = vpack.c.b16 %v2393, %v2391
        %v2408 = vpack.c.b16 %v2394, %v2392
        %v2409 = vpack.c.b16 %v2397, %v2395
        %v2410 = vpack.c.b16 %v2398, %v2396
        %v2411 = vpack.c.b16 %v2401, %v2399
        %v2412 = vpack.c.b16 %v2402, %v2400
        %v2413 = vpack.c.b16 %v2405, %v2403
        %v2414 = vpack.c.b16 %v2406, %v2404
        %v2455 = vunpack.c.l.b16 %v2351
        %v2456 = vunpack.c.h.b16 %v2351
        %v2457 = vunpack.c.l.b16 %v2352
        %v2458 = vunpack.c.h.b16 %v2352
        %v2459 = vunpack.c.l.b16 %v2353
        %v2460 = vunpack.c.h.b16 %v2353
        %v2461 = vunpack.c.l.b16 %v2354
        %v2462 = vunpack.c.h.b16 %v2354
        %v2463 = vunpack.c.l.b16 %v2355
        %v2464 = vunpack.c.h.b16 %v2355
        %v2465 = vunpack.c.l.b16 %v2356
        %v2466 = vunpack.c.h.b16 %v2356
        %v2467 = vunpack.c.l.b16 %v2357
        %v2468 = vunpack.c.h.b16 %v2357
        %v2469 = vunpack.c.l.b16 %v2358
        %v2470 = vunpack.c.h.b16 %v2358
        %v2471 = vunpack.c.l.b16 %v2359
        %v2472 = vunpack.c.h.b16 %v2359
        %v2473 = vunpack.c.l.b16 %v2360
        %v2474 = vunpack.c.h.b16 %v2360
        %v2475 = vunpack.c.l.b16 %v2361
        %v2476 = vunpack.c.h.b16 %v2361
        %v2477 = vunpack.c.l.b16 %v2362
        %v2478 = vunpack.c.h.b16 %v2362
        %v2479 = vunpack.c.l.b16 %v2363
        %v2480 = vunpack.c.h.b16 %v2363
        %v2481 = vunpack.c.l.b16 %v2364
        %v2482 = vunpack.c.h.b16 %v2364
        %v2483 = vunpack.c.l.b16 %v2365
        %v2484 = vunpack.c.h.b16 %v2365
        %v2485 = vunpack.c.l.b16 %v2366
        %v2486 = vunpack.c.h.b16 %v2366
        %v2487 = vunpack.c.l.b16 %v2367
        %v2488 = vunpack.c.h.b16 %v2367
        %v2489 = vunpack.c.l.b16 %v2368
        %v2490 = vunpack.c.h.b16 %v2368
        %v2491 = vunpack.c.l.b16 %v2369
        %v2492 = vunpack.c.h.b16 %v2369
        %v2493 = vunpack.c.l.b16 %v2370
        %v2494 = vunpack.c.h.b16 %v2370
        %v2495 = vunpack.c.l.b16 %v2371
        %v2496 = vunpack.c.h.b16 %v2371
        %v2497 = vunpack.c.l.b16 %v2372
        %v2498 = vunpack.c.h.b16 %v2372
        %v2499 = vunpack.c.l.b16 %v2373
        %v2500 = vunpack.c.h.b16 %v2373
        %v2501 = vunpack.c.l.b16 %v2374
        %v2502 = vunpack.c.h.b16 %v2374
        %v2503 = vunpack.c.l.b16 %v2375
        %v2504 = vunpack.c.h.b16 %v2375
        %v2505 = vunpack.c.l.b16 %v2376
        %v2506 = vunpack.c.h.b16 %v2376
        %v2507 = vunpack.c.l.b16 %v2377
        %v2508 = vunpack.c.h.b16 %v2377
        %v2509 = vunpack.c.l.b16 %v2378
        %v2510 = vunpack.c.h.b16 %v2378
        %v2511 = vunpack.c.l.b16 %v2379
        %v2512 = vunpack.c.h.b16 %v2379
        %v2513 = vunpack.c.l.b16 %v2380
        %v2514 = vunpack.c.h.b16 %v2380
        %v2515 = vunpack.c.l.b16 %v2381
        %v2516 = vunpack.c.h.b16 %v2381
        %v2517 = vunpack.c.l.b16 %v2382
        %v2518 = vunpack.c.h.b16 %v2382
        %v2519 = vpack.c.b16 %v2457, %v2455
        %v2520 = vpack.c.b16 %v2458, %v2456
        %v2521 = vpack.c.b16 %v2461, %v2459
        %v2522 = vpack.c.b16 %v2462, %v2460
        %v2523 = vpack.c.b16 %v2465, %v2463
        %v2524 = vpack.c.b16 %v2466, %v2464
        %v2525 = vpack.c.b16 %v2469, %v2467
        %v2526 = vpack.c.b16 %v2470, %v2468
        %v2527 = vpack.c.b16 %v2473, %v2471
        %v2528 = vpack.c.b16 %v2474, %v2472
        %v2529 = vpack.c.b16 %v2477, %v2475
        %v2530 = vpack.c.b16 %v2478, %v2476
        %v2531 = vpack.c.b16 %v2481, %v2479
        %v2532 = vpack.c.b16 %v2482, %v2480
        %v2533 = vpack.c.b16 %v2485, %v2483
        %v2534 = vpack.c.b16 %v2486, %v2484
        %v2535 = vpack.c.b16 %v2489, %v2487
        %v2536 = vpack.c.b16 %v2490, %v2488
        %v2537 = vpack.c.b16 %v2493, %v2491
        %v2538 = vpack.c.b16 %v2494, %v2492
        %v2539 = vpack.c.b16 %v2497, %v2495
        %v2540 = vpack.c.b16 %v2498, %v2496
        %v2541 = vpack.c.b16 %v2501, %v2499
        %v2542 = vpack.c.b16 %v2502, %v2500
        %v2543 = vpack.c.b16 %v2505, %v2503
        %v2544 = vpack.c.b16 %v2506, %v2504
        %v2545 = vpack.c.b16 %v2509, %v2507
        %v2546 = vpack.c.b16 %v2510, %v2508
        %v2547 = vpack.c.b16 %v2513, %v2511
        %v2548 = vpack.c.b16 %v2514, %v2512
        %v2549 = vpack.c.b16 %v2517, %v2515
        %v2550 = vpack.c.b16 %v2518, %v2516
        %2583 = vmatpush.bf16.msra.mxu0 %v2533
        %2584 = vmatpush.bf16.msra.mxu0 %v2531
        %2585 = vmatpush.bf16.msra.mxu0 %v2529
        %2586 = vmatpush.bf16.msra.mxu0 %v2527
        %2587 = vmatpush.bf16.msra.mxu0 %v2525
        %2588 = vmatpush.bf16.msra.mxu0 %v2523
        %2589 = vmatpush.bf16.msra.mxu0 %v2521
        %2590 = vmatpush.bf16.msra.mxu0 %v2519
        %2591 = vmatmul.bf16.gmra.mxu0 %v2407
        %v2592 = vpop.f32.mrf.mxu0
        %v2593 = vadd.f32 %v1810, %v2592
        %v2594 = vpop.f32.mrf.mxu0
        %v2595 = vadd.f32 %v1812, %v2594
        %2596 = vmatmul.bf16.gmra.mxu0 %v2409
        %v2597 = vpop.f32.mrf.mxu0
        %v2598 = vadd.f32 %v1815, %v2597
        %v2599 = vpop.f32.mrf.mxu0
        %v2600 = vadd.f32 %v1817, %v2599
        %2601 = vmatmul.bf16.gmra.mxu0 %v2411
        %v2602 = vpop.f32.mrf.mxu0
        %v2603 = vadd.f32 %v1820, %v2602
        %v2604 = vpop.f32.mrf.mxu0
        %v2605 = vadd.f32 %v1822, %v2604
        %2606 = vmatmul.bf16.gmra.mxu0 %v2413
        %v2607 = vpop.f32.mrf.mxu0
        %v2608 = vadd.f32 %v1825, %v2607
        %v2609 = vpop.f32.mrf.mxu0
        %v2610 = vadd.f32 %v1827, %v2609
        %2611 = vdwg.mxu0
        %2612 = vmatpush.bf16.msra.mxu0 %v2549
        %2613 = vmatpush.bf16.msra.mxu0 %v2547
        %2614 = vmatpush.bf16.msra.mxu0 %v2545
        %2615 = vmatpush.bf16.msra.mxu0 %v2543
        %2616 = vmatpush.bf16.msra.mxu0 %v2541
        %2617 = vmatpush.bf16.msra.mxu0 %v2539
        %2618 = vmatpush.bf16.msra.mxu0 %v2537
        %2619 = vmatpush.bf16.msra.mxu0 %v2535
        %2620 = vmatmul.bf16.gmra.mxu0 %v2408
        %v2621 = vpop.f32.mrf.mxu0
        %v2622 = vadd.f32 %v2593, %v2621
        %v2623 = vpop.f32.mrf.mxu0
        %v2624 = vadd.f32 %v2595, %v2623
        %2625 = vmatmul.bf16.gmra.mxu0 %v2410
        %v2626 = vpop.f32.mrf.mxu0
        %v2627 = vadd.f32 %v2598, %v2626
        %v2628 = vpop.f32.mrf.mxu0
        %v2629 = vadd.f32 %v2600, %v2628
        %2630 = vmatmul.bf16.gmra.mxu0 %v2412
        %v2631 = vpop.f32.mrf.mxu0
        %v2632 = vadd.f32 %v2603, %v2631
        %v2633 = vpop.f32.mrf.mxu0
        %v2634 = vadd.f32 %v2605, %v2633
        %2635 = vmatmul.bf16.gmra.mxu0 %v2414
        %v2636 = vpop.f32.mrf.mxu0
        %v2637 = vadd.f32 %v2608, %v2636
        %v2638 = vpop.f32.mrf.mxu0
        %v2639 = vadd.f32 %v2610, %v2638
        %2640 = vdwg.mxu0
        %2641 = vmatpush.bf16.msra.mxu0 %v2534
        %2642 = vmatpush.bf16.msra.mxu0 %v2532
        %2643 = vmatpush.bf16.msra.mxu0 %v2530
        %2644 = vmatpush.bf16.msra.mxu0 %v2528
        %2645 = vmatpush.bf16.msra.mxu0 %v2526
        %2646 = vmatpush.bf16.msra.mxu0 %v2524
        %2647 = vmatpush.bf16.msra.mxu0 %v2522
        %2648 = vmatpush.bf16.msra.mxu0 %v2520
        %2649 = vmatmul.bf16.gmra.mxu0 %v2407
        %v2650 = vpop.f32.mrf.mxu0
        %v2651 = vadd.f32 %v1868, %v2650
        %v2652 = vpop.f32.mrf.mxu0
        %v2653 = vadd.f32 %v1870, %v2652
        %2654 = vmatmul.bf16.gmra.mxu0 %v2409
        %v2655 = vpop.f32.mrf.mxu0
        %v2656 = vadd.f32 %v1873, %v2655
        %v2657 = vpop.f32.mrf.mxu0
        %v2658 = vadd.f32 %v1875, %v2657
        %2659 = vmatmul.bf16.gmra.mxu0 %v2411
        %v2660 = vpop.f32.mrf.mxu0
        %v2661 = vadd.f32 %v1878, %v2660
        %v2662 = vpop.f32.mrf.mxu0
        %v2663 = vadd.f32 %v1880, %v2662
        %2664 = vmatmul.bf16.gmra.mxu0 %v2413
        %v2665 = vpop.f32.mrf.mxu0
        %v2666 = vadd.f32 %v1883, %v2665
        %v2667 = vpop.f32.mrf.mxu0
        %v2668 = vadd.f32 %v1885, %v2667
        %2669 = vdwg.mxu0
        %2670 = vmatpush.bf16.msra.mxu0 %v2550
        %2671 = vmatpush.bf16.msra.mxu0 %v2548
        %2672 = vmatpush.bf16.msra.mxu0 %v2546
        %2673 = vmatpush.bf16.msra.mxu0 %v2544
        %2674 = vmatpush.bf16.msra.mxu0 %v2542
        %2675 = vmatpush.bf16.msra.mxu0 %v2540
        %2676 = vmatpush.bf16.msra.mxu0 %v2538
        %2677 = vmatpush.bf16.msra.mxu0 %v2536
        %2678 = vmatmul.bf16.gmra.mxu0 %v2408
        %v2679 = vpop.f32.mrf.mxu0
        %v2680 = vadd.f32 %v2651, %v2679
        %v2681 = vpop.f32.mrf.mxu0
        %v2682 = vadd.f32 %v2653, %v2681
        %2683 = vmatmul.bf16.gmra.mxu0 %v2410
        %v2684 = vpop.f32.mrf.mxu0
        %v2685 = vadd.f32 %v2656, %v2684
        %v2686 = vpop.f32.mrf.mxu0
        %v2687 = vadd.f32 %v2658, %v2686
        %2688 = vmatmul.bf16.gmra.mxu0 %v2412
        %v2689 = vpop.f32.mrf.mxu0
        %v2690 = vadd.f32 %v2661, %v2689
        %v2691 = vpop.f32.mrf.mxu0
        %v2692 = vadd.f32 %v2663, %v2691
        %2693 = vmatmul.bf16.gmra.mxu0 %v2414
        %v2694 = vpop.f32.mrf.mxu0
        %v2695 = vadd.f32 %v2666, %v2694
        %v2696 = vpop.f32.mrf.mxu0
        %v2697 = vadd.f32 %v2668, %v2696
        %2698 = vdwg.mxu0
        %v2699 = vld [vmem:[%s6] sm:$0x3]
        %v2701 = vperm.slane %v2699, 0
        %v2702 = vperm.slane %v2699, 1
        %v2705 = vadd.f32 %v2622, %v2701
        %v2706 = vadd.f32 %v2680, %v2702
        %v2707 = vadd.f32 %v2624, %v2701
        %v2708 = vadd.f32 %v2682, %v2702
        %v2709 = vadd.f32 %v2627, %v2701
        %v2710 = vadd.f32 %v2685, %v2702
        %v2711 = vadd.f32 %v2629, %v2701
        %v2712 = vadd.f32 %v2687, %v2702
        %v2713 = vadd.f32 %v2632, %v2701
        %v2714 = vadd.f32 %v2690, %v2702
        %v2715 = vadd.f32 %v2634, %v2701
        %v2716 = vadd.f32 %v2692, %v2702
        %v2717 = vadd.f32 %v2637, %v2701
        %v2718 = vadd.f32 %v2695, %v2702
        %v2719 = vadd.f32 %v2639, %v2701
        %v2720 = vadd.f32 %v2697, %v2702
        %v2721 = vtanh.pop %v2705
        %v2722 = vtanh.pop %v2706
        %v2723 = vtanh.pop %v2707
        %v2724 = vtanh.pop %v2708
        %v2725 = vtanh.pop %v2709
        %v2726 = vtanh.pop %v2710
        %v2727 = vtanh.pop %v2711
        %v2728 = vtanh.pop %v2712
        %v2729 = vtanh.pop %v2713
        %v2730 = vtanh.pop %v2714
        %v2731 = vtanh.pop %v2715
        %v2732 = vtanh.pop %v2716
        %v2733 = vtanh.pop %v2717
        %v2734 = vtanh.pop %v2718
        %v2735 = vtanh.pop %v2719
        %v2736 = vtanh.pop %v2720
        %v2737 = vld [vmem:[%s7] sm:$0x3]
        %v2739 = vperm.slane %v2737, 0
        %v2740 = vperm.slane %v2737, 1
        %v2743 = vmul.f32 %v2721, %v2739
        %v2744 = vmul.f32 %v2722, %v2740
        %v2745 = vmul.f32 %v2723, %v2739
        %v2746 = vmul.f32 %v2724, %v2740
        %v2747 = vmul.f32 %v2725, %v2739
        %v2748 = vmul.f32 %v2726, %v2740
        %v2749 = vmul.f32 %v2727, %v2739
        %v2750 = vmul.f32 %v2728, %v2740
        %v2751 = vmul.f32 %v2729, %v2739
        %v2752 = vmul.f32 %v2730, %v2740
        %v2753 = vmul.f32 %v2731, %v2739
        %v2754 = vmul.f32 %v2732, %v2740
        %v2755 = vmul.f32 %v2733, %v2739
        %v2756 = vmul.f32 %v2734, %v2740
        %v2757 = vmul.f32 %v2735, %v2739
        %v2758 = vmul.f32 %v2736, %v2740
        %v2759 = vadd.f32 %v2743, %v2744
        %2760 = vadd.xlane.f32.xlu0 %v2759
        %v2761 = vpop.xlane.xlu0 %2760
        %v2762 = vadd.f32 %v2745, %v2746
        %2763 = vadd.xlane.f32.xlu0 %v2762
        %v2764 = vpop.xlane.xlu0 %2763
        %v2765 = vadd.f32 %v2747, %v2748
        %2766 = vadd.xlane.f32.xlu0 %v2765
        %v2767 = vpop.xlane.xlu0 %2766
        %v2768 = vadd.f32 %v2749, %v2750
        %2769 = vadd.xlane.f32.xlu0 %v2768
        %v2770 = vpop.xlane.xlu0 %2769
        %v2771 = vadd.f32 %v2751, %v2752
        %2772 = vadd.xlane.f32.xlu0 %v2771
        %v2773 = vpop.xlane.xlu0 %2772
        %v2774 = vadd.f32 %v2753, %v2754
        %2775 = vadd.xlane.f32.xlu0 %v2774
        %v2776 = vpop.xlane.xlu0 %2775
        %v2777 = vadd.f32 %v2755, %v2756
        %2778 = vadd.xlane.f32.xlu0 %v2777
        %v2779 = vpop.xlane.xlu0 %2778
        %v2780 = vadd.f32 %v2757, %v2758
        %2781 = vadd.xlane.f32.xlu0 %v2780
        %v2782 = vpop.xlane.xlu0 %2781
        %v2783 = vld [vmem:[#allocation6] sm:$0x1]
        %v2785 = vperm.slane %v2783, 0
        %v2787 = vadd.f32 %v2761, %v2785
        %v2788 = vadd.f32 %v2764, %v2785
        %v2789 = vadd.f32 %v2767, %v2785
        %v2790 = vadd.f32 %v2770, %v2785
        %v2791 = vadd.f32 %v2773, %v2785
        %v2792 = vadd.f32 %v2776, %v2785
        %v2793 = vadd.f32 %v2779, %v2785
        %v2794 = vadd.f32 %v2782, %v2785
        %vm2795 = vcmask 7168
        %v2796 = vsel %vm2795, %v2787, -inf
        %v2797 = vsel %vm2795, %v2788, -inf
        %v2798 = vsel %vm2795, %v2789, -inf
        %v2799 = vsel %vm2795, %v2790, -inf
        %v2800 = vsel %vm2795, %v2791, -inf
        %v2801 = vmax.f32 %v2796, %v2800
        %v2802 = vsel %vm2795, %v2792, -inf
        %v2803 = vmax.f32 %v2797, %v2802
        %v2804 = vsel %vm2795, %v2793, -inf
        %v2805 = vmax.f32 %v2798, %v2804
        %v2806 = vsel %vm2795, %v2794, -inf
        %v2807 = vmax.f32 %v2799, %v2806
        %v2808 = vmax.f32 %v2801, %v2803
        %v2809 = vmax.f32 %v2805, %v2807
        %v2810 = vmax.f32 %v2808, %v2809
        %v2811 = vrot.slane %v2810, 4
        %v2812 = vmax.f32 %v2810, %v2811
        %v2813 = vrot.slane %v2812, 2
        %v2814 = vmax.f32 %v2812, %v2813
        %v2815 = vrot.slane %v2814, 1
        %v2816 = vmax.f32 %v2814, %v2815
        %v2817 = vsub.f32 %v2787, %v2816
        %v2818 = vsub.f32 %v2788, %v2816
        %v2819 = vsub.f32 %v2789, %v2816
        %v2820 = vsub.f32 %v2790, %v2816
        %v2821 = vsub.f32 %v2791, %v2816
        %v2822 = vsub.f32 %v2792, %v2816
        %v2823 = vsub.f32 %v2793, %v2816
        %v2824 = vsub.f32 %v2794, %v2816
        %v2825 = vmul.f32 %v2817, 1.442695
        %v2826 = vpow.pop %v2825
        %v2827 = vmul.f32 %v2818, 1.442695
        %v2828 = vpow.pop %v2827
        %v2829 = vmul.f32 %v2819, 1.442695
        %v2830 = vpow.pop %v2829
        %v2831 = vmul.f32 %v2820, 1.442695
        %v2832 = vpow.pop %v2831
        %v2833 = vmul.f32 %v2821, 1.442695
        %v2834 = vpow.pop %v2833
        %v2835 = vmul.f32 %v2822, 1.442695
        %v2836 = vpow.pop %v2835
        %v2837 = vmul.f32 %v2823, 1.442695
        %v2838 = vpow.pop %v2837
        %v2839 = vmul.f32 %v2824, 1.442695
        %v2840 = vpow.pop %v2839
        %v2841 = vsel %vm2795, %v2826, 0.0
        %v2842 = vsel %vm2795, %v2828, 0.0
        %v2843 = vadd.f32 %v2841, %v2842
        %v2844 = vsel %vm2795, %v2830, 0.0
        %v2845 = vadd.f32 %v2843, %v2844
        %v2846 = vsel %vm2795, %v2832, 0.0
        %v2847 = vadd.f32 %v2845, %v2846
        %v2848 = vsel %vm2795, %v2834, 0.0
        %v2849 = vadd.f32 %v2847, %v2848
        %v2850 = vsel %vm2795, %v2836, 0.0
        %v2851 = vadd.f32 %v2849, %v2850
        %v2852 = vsel %vm2795, %v2838, 0.0
        %v2853 = vadd.f32 %v2851, %v2852
        %v2854 = vsel %vm2795, %v2840, 0.0
        %v2855 = vadd.f32 %v2853, %v2854
        %v2856 = vrot.slane %v2855, 4
        %v2857 = vadd.f32 %v2855, %v2856
        %v2858 = vrot.slane %v2857, 2
        %v2859 = vadd.f32 %v2857, %v2858
        %v2860 = vrot.slane %v2859, 1
        %v2861 = vadd.f32 %v2859, %v2860
        %v2862 = vrcp.pop %v2861
        %v2863 = vmul.f32 %v2826, %v2862
        %v2864 = vmul.f32 %v2828, %v2862
        %v2865 = vmul.f32 %v2830, %v2862
        %v2866 = vmul.f32 %v2832, %v2862
        %v2867 = vmul.f32 %v2834, %v2862
        %v2868 = vmul.f32 %v2836, %v2862
        %v2869 = vmul.f32 %v2838, %v2862
        %v2870 = vmul.f32 %v2840, %v2862
        %v2871 = vunpack.c.l.bf16 %v763
        %v2872 = vunpack.c.h.bf16 %v763
        %v2873 = vunpack.c.l.bf16 %v764
        %v2874 = vunpack.c.h.bf16 %v764
        %v2875 = vunpack.c.l.bf16 %v765
        %v2876 = vunpack.c.h.bf16 %v765
        %v2877 = vunpack.c.l.bf16 %v766
        %v2878 = vunpack.c.h.bf16 %v766
        %v2879 = vunpack.c.l.bf16 %v767
        %v2880 = vunpack.c.h.bf16 %v767
        %v2881 = vunpack.c.l.bf16 %v768
        %v2882 = vunpack.c.h.bf16 %v768
        %v2883 = vunpack.c.l.bf16 %v769
        %v2884 = vunpack.c.h.bf16 %v769
        %v2885 = vunpack.c.l.bf16 %v770
        %v2886 = vunpack.c.h.bf16 %v770
        %2888 = vset.pattern.permute.xlu0 0
        %2889 = vperm.xlu0 %2888, %v2863
        %v2890 = vpop.permute.xlu0 %2889
        %2893 = vset.pattern.permute.xlu0 0
        %2894 = vperm.xlu0 %2893, %v2864
        %v2895 = vpop.permute.xlu0 %2894
        %2898 = vset.pattern.permute.xlu0 0
        %2899 = vperm.xlu0 %2898, %v2865
        %v2900 = vpop.permute.xlu0 %2899
        %2903 = vset.pattern.permute.xlu0 0
        %2904 = vperm.xlu0 %2903, %v2866
        %v2905 = vpop.permute.xlu0 %2904
        %2908 = vset.pattern.permute.xlu0 0
        %2909 = vperm.xlu0 %2908, %v2867
        %v2910 = vpop.permute.xlu0 %2909
        %2913 = vset.pattern.permute.xlu0 0
        %2914 = vperm.xlu0 %2913, %v2868
        %v2915 = vpop.permute.xlu0 %2914
        %2918 = vset.pattern.permute.xlu0 0
        %2919 = vperm.xlu0 %2918, %v2869
        %v2920 = vpop.permute.xlu0 %2919
        %2923 = vset.pattern.permute.xlu0 0
        %2924 = vperm.xlu0 %2923, %v2870
        %v2925 = vpop.permute.xlu0 %2924
        %v2927 = vmul.f32 %v2871, %v2890
        %v2928 = vmul.f32 %v2872, %v2890
        %v2929 = vmul.f32 %v2873, %v2895
        %v2930 = vmul.f32 %v2874, %v2895
        %v2931 = vmul.f32 %v2875, %v2900
        %v2932 = vmul.f32 %v2876, %v2900
        %v2933 = vmul.f32 %v2877, %v2905
        %v2934 = vmul.f32 %v2878, %v2905
        %v2935 = vmul.f32 %v2879, %v2910
        %v2936 = vmul.f32 %v2880, %v2910
        %v2937 = vmul.f32 %v2881, %v2915
        %v2938 = vmul.f32 %v2882, %v2915
        %v2939 = vmul.f32 %v2883, %v2920
        %v2940 = vmul.f32 %v2884, %v2920
        %v2941 = vmul.f32 %v2885, %v2925
        %v2942 = vmul.f32 %v2886, %v2925
        %v2943 = vpack.c.bf16 %v2929, %v2927
        %v2944 = vpack.c.bf16 %v2930, %v2928
        %v2945 = vpack.c.bf16 %v2933, %v2931
        %v2946 = vpack.c.bf16 %v2934, %v2932
        %v2947 = vpack.c.bf16 %v2937, %v2935
        %v2948 = vpack.c.bf16 %v2938, %v2936
        %v2949 = vpack.c.bf16 %v2941, %v2939
        %v2950 = vpack.c.bf16 %v2942, %v2940
        %v2951 = vld [vmem:[#allocation4] sm:$0xff]
        %v2952 = vld [vmem:[#allocation4 + $0x8] sm:$0xff]
        %v2953 = vld [vmem:[#allocation4 + $0x10] sm:$0xff]
        %v2954 = vld [vmem:[#allocation4 + $0x18] sm:$0xff]
        %v2955 = vld [vmem:[#allocation4 + $0x20] sm:$0xff]
        %v2956 = vld [vmem:[#allocation4 + $0x28] sm:$0xff]
        %v2957 = vld [vmem:[#allocation4 + $0x30] sm:$0xff]
        %v2958 = vld [vmem:[#allocation4 + $0x38] sm:$0xff]
        %v2959 = vld [vmem:[#allocation4 + $0x40] sm:$0xff]
        %v2960 = vld [vmem:[#allocation4 + $0x48] sm:$0xff]
        %v2961 = vld [vmem:[#allocation4 + $0x50] sm:$0xff]
        %v2962 = vld [vmem:[#allocation4 + $0x58] sm:$0xff]
        %v2963 = vld [vmem:[#allocation4 + $0x60] sm:$0xff]
        %v2964 = vld [vmem:[#allocation4 + $0x68] sm:$0xff]
        %v2965 = vld [vmem:[#allocation4 + $0x70] sm:$0xff]
        %v2966 = vld [vmem:[#allocation4 + $0x78] sm:$0xff]
        %v2967 = vpack.c.bf16 %v2953, %v2951
        %v2968 = vpack.c.bf16 %v2954, %v2952
        %v2969 = vpack.c.bf16 %v2957, %v2955
        %v2970 = vpack.c.bf16 %v2958, %v2956
        %v2971 = vpack.c.bf16 %v2961, %v2959
        %v2972 = vpack.c.bf16 %v2962, %v2960
        %v2973 = vpack.c.bf16 %v2965, %v2963
        %v2974 = vpack.c.bf16 %v2966, %v2964
        %v2975 = vld [vmem:[#allocation13] sm:$0xff]
        %v2976 = vld [vmem:[#allocation13 + $0x8] sm:$0xff]
        %v2977 = vld [vmem:[#allocation13 + $0x10] sm:$0xff]
        %v2978 = vld [vmem:[#allocation13 + $0x18] sm:$0xff]
        %v2979 = vld [vmem:[#allocation13 + $0x20] sm:$0xff]
        %v2980 = vld [vmem:[#allocation13 + $0x28] sm:$0xff]
        %v2981 = vld [vmem:[#allocation13 + $0x30] sm:$0xff]
        %v2982 = vld [vmem:[#allocation13 + $0x38] sm:$0xff]
        %v2983 = vld [vmem:[#allocation13 + $0x40] sm:$0xff]
        %v2984 = vld [vmem:[#allocation13 + $0x48] sm:$0xff]
        %v2985 = vld [vmem:[#allocation13 + $0x50] sm:$0xff]
        %v2986 = vld [vmem:[#allocation13 + $0x58] sm:$0xff]
        %v2987 = vld [vmem:[#allocation13 + $0x60] sm:$0xff]
        %v2988 = vld [vmem:[#allocation13 + $0x68] sm:$0xff]
        %v2989 = vld [vmem:[#allocation13 + $0x70] sm:$0xff]
        %v2990 = vld [vmem:[#allocation13 + $0x78] sm:$0xff]
        %v2991 = vld [vmem:[#allocation13 + $0x80] sm:$0xff]
        %v2992 = vld [vmem:[#allocation13 + $0x88] sm:$0xff]
        %v2993 = vld [vmem:[#allocation13 + $0x90] sm:$0xff]
        %v2994 = vld [vmem:[#allocation13 + $0x98] sm:$0xff]
        %v2995 = vld [vmem:[#allocation13 + $0xa0] sm:$0xff]
        %v2996 = vld [vmem:[#allocation13 + $0xa8] sm:$0xff]
        %v2997 = vld [vmem:[#allocation13 + $0xb0] sm:$0xff]
        %v2998 = vld [vmem:[#allocation13 + $0xb8] sm:$0xff]
        %v2999 = vld [vmem:[#allocation13 + $0xc0] sm:$0xff]
        %v3000 = vld [vmem:[#allocation13 + $0xc8] sm:$0xff]
        %v3001 = vld [vmem:[#allocation13 + $0xd0] sm:$0xff]
        %v3002 = vld [vmem:[#allocation13 + $0xd8] sm:$0xff]
        %v3003 = vld [vmem:[#allocation13 + $0xe0] sm:$0xff]
        %v3004 = vld [vmem:[#allocation13 + $0xe8] sm:$0xff]
        %v3005 = vld [vmem:[#allocation13 + $0xf0] sm:$0xff]
        %v3006 = vld [vmem:[#allocation13 + $0xf8] sm:$0xff]
        %v3007 = vld [vmem:[#allocation15] sm:$0xff]
        %v3008 = vld [vmem:[#allocation15 + $0x8] sm:$0xff]
        %v3009 = vld [vmem:[#allocation15 + $0x10] sm:$0xff]
        %v3010 = vld [vmem:[#allocation15 + $0x18] sm:$0xff]
        %v3011 = vld [vmem:[#allocation15 + $0x20] sm:$0xff]
        %v3012 = vld [vmem:[#allocation15 + $0x28] sm:$0xff]
        %v3013 = vld [vmem:[#allocation15 + $0x30] sm:$0xff]
        %v3014 = vld [vmem:[#allocation15 + $0x38] sm:$0xff]
        %v3015 = vld [vmem:[#allocation15 + $0x40] sm:$0xff]
        %v3016 = vld [vmem:[#allocation15 + $0x48] sm:$0xff]
        %v3017 = vld [vmem:[#allocation15 + $0x50] sm:$0xff]
        %v3018 = vld [vmem:[#allocation15 + $0x58] sm:$0xff]
        %v3019 = vld [vmem:[#allocation15 + $0x60] sm:$0xff]
        %v3020 = vld [vmem:[#allocation15 + $0x68] sm:$0xff]
        %v3021 = vld [vmem:[#allocation15 + $0x70] sm:$0xff]
        %v3022 = vld [vmem:[#allocation15 + $0x78] sm:$0xff]
        %v3023 = vld [vmem:[#allocation15 + $0x80] sm:$0xff]
        %v3024 = vld [vmem:[#allocation15 + $0x88] sm:$0xff]
        %v3025 = vld [vmem:[#allocation15 + $0x90] sm:$0xff]
        %v3026 = vld [vmem:[#allocation15 + $0x98] sm:$0xff]
        %v3027 = vld [vmem:[#allocation15 + $0xa0] sm:$0xff]
        %v3028 = vld [vmem:[#allocation15 + $0xa8] sm:$0xff]
        %v3029 = vld [vmem:[#allocation15 + $0xb0] sm:$0xff]
        %v3030 = vld [vmem:[#allocation15 + $0xb8] sm:$0xff]
        %v3031 = vld [vmem:[#allocation15 + $0xc0] sm:$0xff]
        %v3032 = vld [vmem:[#allocation15 + $0xc8] sm:$0xff]
        %v3033 = vld [vmem:[#allocation15 + $0xd0] sm:$0xff]
        %v3034 = vld [vmem:[#allocation15 + $0xd8] sm:$0xff]
        %v3035 = vld [vmem:[#allocation15 + $0xe0] sm:$0xff]
        %v3036 = vld [vmem:[#allocation15 + $0xe8] sm:$0xff]
        %v3037 = vld [vmem:[#allocation15 + $0xf0] sm:$0xff]
        %v3038 = vld [vmem:[#allocation15 + $0xf8] sm:$0xff]
        %v3071 = vunpack.c.l.b16 %v3007
        %v3072 = vunpack.c.h.b16 %v3007
        %v3073 = vunpack.c.l.b16 %v3008
        %v3074 = vunpack.c.h.b16 %v3008
        %v3075 = vunpack.c.l.b16 %v3009
        %v3076 = vunpack.c.h.b16 %v3009
        %v3077 = vunpack.c.l.b16 %v3010
        %v3078 = vunpack.c.h.b16 %v3010
        %v3079 = vunpack.c.l.b16 %v3011
        %v3080 = vunpack.c.h.b16 %v3011
        %v3081 = vunpack.c.l.b16 %v3012
        %v3082 = vunpack.c.h.b16 %v3012
        %v3083 = vunpack.c.l.b16 %v3013
        %v3084 = vunpack.c.h.b16 %v3013
        %v3085 = vunpack.c.l.b16 %v3014
        %v3086 = vunpack.c.h.b16 %v3014
        %v3087 = vunpack.c.l.b16 %v3015
        %v3088 = vunpack.c.h.b16 %v3015
        %v3089 = vunpack.c.l.b16 %v3016
        %v3090 = vunpack.c.h.b16 %v3016
        %v3091 = vunpack.c.l.b16 %v3017
        %v3092 = vunpack.c.h.b16 %v3017
        %v3093 = vunpack.c.l.b16 %v3018
        %v3094 = vunpack.c.h.b16 %v3018
        %v3095 = vunpack.c.l.b16 %v3019
        %v3096 = vunpack.c.h.b16 %v3019
        %v3097 = vunpack.c.l.b16 %v3020
        %v3098 = vunpack.c.h.b16 %v3020
        %v3099 = vunpack.c.l.b16 %v3021
        %v3100 = vunpack.c.h.b16 %v3021
        %v3101 = vunpack.c.l.b16 %v3022
        %v3102 = vunpack.c.h.b16 %v3022
        %v3103 = vunpack.c.l.b16 %v3023
        %v3104 = vunpack.c.h.b16 %v3023
        %v3105 = vunpack.c.l.b16 %v3024
        %v3106 = vunpack.c.h.b16 %v3024
        %v3107 = vunpack.c.l.b16 %v3025
        %v3108 = vunpack.c.h.b16 %v3025
        %v3109 = vunpack.c.l.b16 %v3026
        %v3110 = vunpack.c.h.b16 %v3026
        %v3111 = vunpack.c.l.b16 %v3027
        %v3112 = vunpack.c.h.b16 %v3027
        %v3113 = vunpack.c.l.b16 %v3028
        %v3114 = vunpack.c.h.b16 %v3028
        %v3115 = vunpack.c.l.b16 %v3029
        %v3116 = vunpack.c.h.b16 %v3029
        %v3117 = vunpack.c.l.b16 %v3030
        %v3118 = vunpack.c.h.b16 %v3030
        %v3119 = vunpack.c.l.b16 %v3031
        %v3120 = vunpack.c.h.b16 %v3031
        %v3121 = vunpack.c.l.b16 %v3032
        %v3122 = vunpack.c.h.b16 %v3032
        %v3123 = vunpack.c.l.b16 %v3033
        %v3124 = vunpack.c.h.b16 %v3033
        %v3125 = vunpack.c.l.b16 %v3034
        %v3126 = vunpack.c.h.b16 %v3034
        %v3127 = vunpack.c.l.b16 %v3035
        %v3128 = vunpack.c.h.b16 %v3035
        %v3129 = vunpack.c.l.b16 %v3036
        %v3130 = vunpack.c.h.b16 %v3036
        %v3131 = vunpack.c.l.b16 %v3037
        %v3132 = vunpack.c.h.b16 %v3037
        %v3133 = vunpack.c.l.b16 %v3038
        %v3134 = vunpack.c.h.b16 %v3038
        %v3135 = vpack.c.b16 %v3073, %v3071
        %v3136 = vpack.c.b16 %v3074, %v3072
        %v3137 = vpack.c.b16 %v3077, %v3075
        %v3138 = vpack.c.b16 %v3078, %v3076
        %v3139 = vpack.c.b16 %v3081, %v3079
        %v3140 = vpack.c.b16 %v3082, %v3080
        %v3141 = vpack.c.b16 %v3085, %v3083
        %v3142 = vpack.c.b16 %v3086, %v3084
        %v3143 = vpack.c.b16 %v3089, %v3087
        %v3144 = vpack.c.b16 %v3090, %v3088
        %v3145 = vpack.c.b16 %v3093, %v3091
        %v3146 = vpack.c.b16 %v3094, %v3092
        %v3147 = vpack.c.b16 %v3097, %v3095
        %v3148 = vpack.c.b16 %v3098, %v3096
        %v3149 = vpack.c.b16 %v3101, %v3099
        %v3150 = vpack.c.b16 %v3102, %v3100
        %v3151 = vpack.c.b16 %v3105, %v3103
        %v3152 = vpack.c.b16 %v3106, %v3104
        %v3153 = vpack.c.b16 %v3109, %v3107
        %v3154 = vpack.c.b16 %v3110, %v3108
        %v3155 = vpack.c.b16 %v3113, %v3111
        %v3156 = vpack.c.b16 %v3114, %v3112
        %v3157 = vpack.c.b16 %v3117, %v3115
        %v3158 = vpack.c.b16 %v3118, %v3116
        %v3159 = vpack.c.b16 %v3121, %v3119
        %v3160 = vpack.c.b16 %v3122, %v3120
        %v3161 = vpack.c.b16 %v3125, %v3123
        %v3162 = vpack.c.b16 %v3126, %v3124
        %v3163 = vpack.c.b16 %v3129, %v3127
        %v3164 = vpack.c.b16 %v3130, %v3128
        %v3165 = vpack.c.b16 %v3133, %v3131
        %v3166 = vpack.c.b16 %v3134, %v3132
        %3199 = vmatpush.bf16.msra.mxu0 %v3149
        %3200 = vmatpush.bf16.msra.mxu0 %v3147
        %3201 = vmatpush.bf16.msra.mxu0 %v3145
        %3202 = vmatpush.bf16.msra.mxu0 %v3143
        %3203 = vmatpush.bf16.msra.mxu0 %v3141
        %3204 = vmatpush.bf16.msra.mxu0 %v3139
        %3205 = vmatpush.bf16.msra.mxu0 %v3137
        %3206 = vmatpush.bf16.msra.mxu0 %v3135
        %3207 = vmatmul.bf16.gmra.mxu0 %v2967
        %v3208 = vpop.f32.mrf.mxu0
        %v3209 = vadd.f32 0.0, %v3208
        %v3210 = vpop.f32.mrf.mxu0
        %v3211 = vadd.f32 0.0, %v3210
        %3212 = vmatmul.bf16.gmra.mxu0 %v2969
        %v3213 = vpop.f32.mrf.mxu0
        %v3214 = vadd.f32 0.0, %v3213
        %v3215 = vpop.f32.mrf.mxu0
        %v3216 = vadd.f32 0.0, %v3215
        %3217 = vmatmul.bf16.gmra.mxu0 %v2971
        %v3218 = vpop.f32.mrf.mxu0
        %v3219 = vadd.f32 0.0, %v3218
        %v3220 = vpop.f32.mrf.mxu0
        %v3221 = vadd.f32 0.0, %v3220
        %3222 = vmatmul.bf16.gmra.mxu0 %v2973
        %v3223 = vpop.f32.mrf.mxu0
        %v3224 = vadd.f32 0.0, %v3223
        %v3225 = vpop.f32.mrf.mxu0
        %v3226 = vadd.f32 0.0, %v3225
        %3227 = vdwg.mxu0
        %3228 = vmatpush.bf16.msra.mxu0 %v3165
        %3229 = vmatpush.bf16.msra.mxu0 %v3163
        %3230 = vmatpush.bf16.msra.mxu0 %v3161
        %3231 = vmatpush.bf16.msra.mxu0 %v3159
        %3232 = vmatpush.bf16.msra.mxu0 %v3157
        %3233 = vmatpush.bf16.msra.mxu0 %v3155
        %3234 = vmatpush.bf16.msra.mxu0 %v3153
        %3235 = vmatpush.bf16.msra.mxu0 %v3151
        %3236 = vmatmul.bf16.gmra.mxu0 %v2968
        %v3237 = vpop.f32.mrf.mxu0
        %v3238 = vadd.f32 %v3209, %v3237
        %v3239 = vpop.f32.mrf.mxu0
        %v3240 = vadd.f32 %v3211, %v3239
        %3241 = vmatmul.bf16.gmra.mxu0 %v2970
        %v3242 = vpop.f32.mrf.mxu0
        %v3243 = vadd.f32 %v3214, %v3242
        %v3244 = vpop.f32.mrf.mxu0
        %v3245 = vadd.f32 %v3216, %v3244
        %3246 = vmatmul.bf16.gmra.mxu0 %v2972
        %v3247 = vpop.f32.mrf.mxu0
        %v3248 = vadd.f32 %v3219, %v3247
        %v3249 = vpop.f32.mrf.mxu0
        %v3250 = vadd.f32 %v3221, %v3249
        %3251 = vmatmul.bf16.gmra.mxu0 %v2974
        %v3252 = vpop.f32.mrf.mxu0
        %v3253 = vadd.f32 %v3224, %v3252
        %v3254 = vpop.f32.mrf.mxu0
        %v3255 = vadd.f32 %v3226, %v3254
        %3256 = vdwg.mxu0
        %3257 = vmatpush.bf16.msra.mxu0 %v3150
        %3258 = vmatpush.bf16.msra.mxu0 %v3148
        %3259 = vmatpush.bf16.msra.mxu0 %v3146
        %3260 = vmatpush.bf16.msra.mxu0 %v3144
        %3261 = vmatpush.bf16.msra.mxu0 %v3142
        %3262 = vmatpush.bf16.msra.mxu0 %v3140
        %3263 = vmatpush.bf16.msra.mxu0 %v3138
        %3264 = vmatpush.bf16.msra.mxu0 %v3136
        %3265 = vmatmul.bf16.gmra.mxu0 %v2967
        %v3266 = vpop.f32.mrf.mxu0
        %v3267 = vadd.f32 0.0, %v3266
        %v3268 = vpop.f32.mrf.mxu0
        %v3269 = vadd.f32 0.0, %v3268
        %3270 = vmatmul.bf16.gmra.mxu0 %v2969
        %v3271 = vpop.f32.mrf.mxu0
        %v3272 = vadd.f32 0.0, %v3271
        %v3273 = vpop.f32.mrf.mxu0
        %v3274 = vadd.f32 0.0, %v3273
        %3275 = vmatmul.bf16.gmra.mxu0 %v2971
        %v3276 = vpop.f32.mrf.mxu0
        %v3277 = vadd.f32 0.0, %v3276
        %v3278 = vpop.f32.mrf.mxu0
        %v3279 = vadd.f32 0.0, %v3278
        %3280 = vmatmul.bf16.gmra.mxu0 %v2973
        %v3281 = vpop.f32.mrf.mxu0
        %v3282 = vadd.f32 0.0, %v3281
        %v3283 = vpop.f32.mrf.mxu0
        %v3284 = vadd.f32 0.0, %v3283
        %3285 = vdwg.mxu0
        %3286 = vmatpush.bf16.msra.mxu0 %v3166
        %3287 = vmatpush.bf16.msra.mxu0 %v3164
        %3288 = vmatpush.bf16.msra.mxu0 %v3162
        %3289 = vmatpush.bf16.msra.mxu0 %v3160
        %3290 = vmatpush.bf16.msra.mxu0 %v3158
        %3291 = vmatpush.bf16.msra.mxu0 %v3156
        %3292 = vmatpush.bf16.msra.mxu0 %v3154
        %3293 = vmatpush.bf16.msra.mxu0 %v3152
        %3294 = vmatmul.bf16.gmra.mxu0 %v2968
        %v3295 = vpop.f32.mrf.mxu0
        %v3296 = vadd.f32 %v3267, %v3295
        %v3297 = vpop.f32.mrf.mxu0
        %v3298 = vadd.f32 %v3269, %v3297
        %3299 = vmatmul.bf16.gmra.mxu0 %v2970
        %v3300 = vpop.f32.mrf.mxu0
        %v3301 = vadd.f32 %v3272, %v3300
        %v3302 = vpop.f32.mrf.mxu0
        %v3303 = vadd.f32 %v3274, %v3302
        %3304 = vmatmul.bf16.gmra.mxu0 %v2972
        %v3305 = vpop.f32.mrf.mxu0
        %v3306 = vadd.f32 %v3277, %v3305
        %v3307 = vpop.f32.mrf.mxu0
        %v3308 = vadd.f32 %v3279, %v3307
        %3309 = vmatmul.bf16.gmra.mxu0 %v2974
        %v3310 = vpop.f32.mrf.mxu0
        %v3311 = vadd.f32 %v3282, %v3310
        %v3312 = vpop.f32.mrf.mxu0
        %v3313 = vadd.f32 %v3284, %v3312
        %3314 = vdwg.mxu0
        %v3347 = vunpack.c.l.b16 %v2975
        %v3348 = vunpack.c.h.b16 %v2975
        %v3349 = vunpack.c.l.b16 %v2976
        %v3350 = vunpack.c.h.b16 %v2976
        %v3351 = vunpack.c.l.b16 %v2977
        %v3352 = vunpack.c.h.b16 %v2977
        %v3353 = vunpack.c.l.b16 %v2978
        %v3354 = vunpack.c.h.b16 %v2978
        %v3355 = vunpack.c.l.b16 %v2979
        %v3356 = vunpack.c.h.b16 %v2979
        %v3357 = vunpack.c.l.b16 %v2980
        %v3358 = vunpack.c.h.b16 %v2980
        %v3359 = vunpack.c.l.b16 %v2981
        %v3360 = vunpack.c.h.b16 %v2981
        %v3361 = vunpack.c.l.b16 %v2982
        %v3362 = vunpack.c.h.b16 %v2982
        %v3363 = vunpack.c.l.b16 %v2983
        %v3364 = vunpack.c.h.b16 %v2983
        %v3365 = vunpack.c.l.b16 %v2984
        %v3366 = vunpack.c.h.b16 %v2984
        %v3367 = vunpack.c.l.b16 %v2985
        %v3368 = vunpack.c.h.b16 %v2985
        %v3369 = vunpack.c.l.b16 %v2986
        %v3370 = vunpack.c.h.b16 %v2986
        %v3371 = vunpack.c.l.b16 %v2987
        %v3372 = vunpack.c.h.b16 %v2987
        %v3373 = vunpack.c.l.b16 %v2988
        %v3374 = vunpack.c.h.b16 %v2988
        %v3375 = vunpack.c.l.b16 %v2989
        %v3376 = vunpack.c.h.b16 %v2989
        %v3377 = vunpack.c.l.b16 %v2990
        %v3378 = vunpack.c.h.b16 %v2990
        %v3379 = vunpack.c.l.b16 %v2991
        %v3380 = vunpack.c.h.b16 %v2991
        %v3381 = vunpack.c.l.b16 %v2992
        %v3382 = vunpack.c.h.b16 %v2992
        %v3383 = vunpack.c.l.b16 %v2993
        %v3384 = vunpack.c.h.b16 %v2993
        %v3385 = vunpack.c.l.b16 %v2994
        %v3386 = vunpack.c.h.b16 %v2994
        %v3387 = vunpack.c.l.b16 %v2995
        %v3388 = vunpack.c.h.b16 %v2995
        %v3389 = vunpack.c.l.b16 %v2996
        %v3390 = vunpack.c.h.b16 %v2996
        %v3391 = vunpack.c.l.b16 %v2997
        %v3392 = vunpack.c.h.b16 %v2997
        %v3393 = vunpack.c.l.b16 %v2998
        %v3394 = vunpack.c.h.b16 %v2998
        %v3395 = vunpack.c.l.b16 %v2999
        %v3396 = vunpack.c.h.b16 %v2999
        %v3397 = vunpack.c.l.b16 %v3000
        %v3398 = vunpack.c.h.b16 %v3000
        %v3399 = vunpack.c.l.b16 %v3001
        %v3400 = vunpack.c.h.b16 %v3001
        %v3401 = vunpack.c.l.b16 %v3002
        %v3402 = vunpack.c.h.b16 %v3002
        %v3403 = vunpack.c.l.b16 %v3003
        %v3404 = vunpack.c.h.b16 %v3003
        %v3405 = vunpack.c.l.b16 %v3004
        %v3406 = vunpack.c.h.b16 %v3004
        %v3407 = vunpack.c.l.b16 %v3005
        %v3408 = vunpack.c.h.b16 %v3005
        %v3409 = vunpack.c.l.b16 %v3006
        %v3410 = vunpack.c.h.b16 %v3006
        %v3411 = vpack.c.b16 %v3349, %v3347
        %v3412 = vpack.c.b16 %v3350, %v3348
        %v3413 = vpack.c.b16 %v3353, %v3351
        %v3414 = vpack.c.b16 %v3354, %v3352
        %v3415 = vpack.c.b16 %v3357, %v3355
        %v3416 = vpack.c.b16 %v3358, %v3356
        %v3417 = vpack.c.b16 %v3361, %v3359
        %v3418 = vpack.c.b16 %v3362, %v3360
        %v3419 = vpack.c.b16 %v3365, %v3363
        %v3420 = vpack.c.b16 %v3366, %v3364
        %v3421 = vpack.c.b16 %v3369, %v3367
        %v3422 = vpack.c.b16 %v3370, %v3368
        %v3423 = vpack.c.b16 %v3373, %v3371
        %v3424 = vpack.c.b16 %v3374, %v3372
        %v3425 = vpack.c.b16 %v3377, %v3375
        %v3426 = vpack.c.b16 %v3378, %v3376
        %v3427 = vpack.c.b16 %v3381, %v3379
        %v3428 = vpack.c.b16 %v3382, %v3380
        %v3429 = vpack.c.b16 %v3385, %v3383
        %v3430 = vpack.c.b16 %v3386, %v3384
        %v3431 = vpack.c.b16 %v3389, %v3387
        %v3432 = vpack.c.b16 %v3390, %v3388
        %v3433 = vpack.c.b16 %v3393, %v3391
        %v3434 = vpack.c.b16 %v3394, %v3392
        %v3435 = vpack.c.b16 %v3397, %v3395
        %v3436 = vpack.c.b16 %v3398, %v3396
        %v3437 = vpack.c.b16 %v3401, %v3399
        %v3438 = vpack.c.b16 %v3402, %v3400
        %v3439 = vpack.c.b16 %v3405, %v3403
        %v3440 = vpack.c.b16 %v3406, %v3404
        %v3441 = vpack.c.b16 %v3409, %v3407
        %v3442 = vpack.c.b16 %v3410, %v3408
        %3475 = vmatpush.bf16.msra.mxu0 %v3425
        %3476 = vmatpush.bf16.msra.mxu0 %v3423
        %3477 = vmatpush.bf16.msra.mxu0 %v3421
        %3478 = vmatpush.bf16.msra.mxu0 %v3419
        %3479 = vmatpush.bf16.msra.mxu0 %v3417
        %3480 = vmatpush.bf16.msra.mxu0 %v3415
        %3481 = vmatpush.bf16.msra.mxu0 %v3413
        %3482 = vmatpush.bf16.msra.mxu0 %v3411
        %3483 = vmatmul.bf16.gmra.mxu0 %v2943
        %v3484 = vpop.f32.mrf.mxu0
        %v3485 = vadd.f32 %v3238, %v3484
        %v3486 = vpop.f32.mrf.mxu0
        %v3487 = vadd.f32 %v3240, %v3486
        %3488 = vmatmul.bf16.gmra.mxu0 %v2945
        %v3489 = vpop.f32.mrf.mxu0
        %v3490 = vadd.f32 %v3243, %v3489
        %v3491 = vpop.f32.mrf.mxu0
        %v3492 = vadd.f32 %v3245, %v3491
        %3493 = vmatmul.bf16.gmra.mxu0 %v2947
        %v3494 = vpop.f32.mrf.mxu0
        %v3495 = vadd.f32 %v3248, %v3494
        %v3496 = vpop.f32.mrf.mxu0
        %v3497 = vadd.f32 %v3250, %v3496
        %3498 = vmatmul.bf16.gmra.mxu0 %v2949
        %v3499 = vpop.f32.mrf.mxu0
        %v3500 = vadd.f32 %v3253, %v3499
        %v3501 = vpop.f32.mrf.mxu0
        %v3502 = vadd.f32 %v3255, %v3501
        %3503 = vdwg.mxu0
        %3504 = vmatpush.bf16.msra.mxu0 %v3441
        %3505 = vmatpush.bf16.msra.mxu0 %v3439
        %3506 = vmatpush.bf16.msra.mxu0 %v3437
        %3507 = vmatpush.bf16.msra.mxu0 %v3435
        %3508 = vmatpush.bf16.msra.mxu0 %v3433
        %3509 = vmatpush.bf16.msra.mxu0 %v3431
        %3510 = vmatpush.bf16.msra.mxu0 %v3429
        %3511 = vmatpush.bf16.msra.mxu0 %v3427
        %3512 = vmatmul.bf16.gmra.mxu0 %v2944
        %v3513 = vpop.f32.mrf.mxu0
        %v3514 = vadd.f32 %v3485, %v3513
        %v3515 = vpop.f32.mrf.mxu0
        %v3516 = vadd.f32 %v3487, %v3515
        %3517 = vmatmul.bf16.gmra.mxu0 %v2946
        %v3518 = vpop.f32.mrf.mxu0
        %v3519 = vadd.f32 %v3490, %v3518
        %v3520 = vpop.f32.mrf.mxu0
        %v3521 = vadd.f32 %v3492, %v3520
        %3522 = vmatmul.bf16.gmra.mxu0 %v2948
        %v3523 = vpop.f32.mrf.mxu0
        %v3524 = vadd.f32 %v3495, %v3523
        %v3525 = vpop.f32.mrf.mxu0
        %v3526 = vadd.f32 %v3497, %v3525
        %3527 = vmatmul.bf16.gmra.mxu0 %v2950
        %v3528 = vpop.f32.mrf.mxu0
        %v3529 = vadd.f32 %v3500, %v3528
        %v3530 = vpop.f32.mrf.mxu0
        %v3531 = vadd.f32 %v3502, %v3530
        %3532 = vdwg.mxu0
        %3533 = vmatpush.bf16.msra.mxu0 %v3426
        %3534 = vmatpush.bf16.msra.mxu0 %v3424
        %3535 = vmatpush.bf16.msra.mxu0 %v3422
        %3536 = vmatpush.bf16.msra.mxu0 %v3420
        %3537 = vmatpush.bf16.msra.mxu0 %v3418
        %3538 = vmatpush.bf16.msra.mxu0 %v3416
        %3539 = vmatpush.bf16.msra.mxu0 %v3414
        %3540 = vmatpush.bf16.msra.mxu0 %v3412
        %3541 = vmatmul.bf16.gmra.mxu0 %v2943
        %v3542 = vpop.f32.mrf.mxu0
        %v3543 = vadd.f32 %v3296, %v3542
        %v3544 = vpop.f32.mrf.mxu0
        %v3545 = vadd.f32 %v3298, %v3544
        %3546 = vmatmul.bf16.gmra.mxu0 %v2945
        %v3547 = vpop.f32.mrf.mxu0
        %v3548 = vadd.f32 %v3301, %v3547
        %v3549 = vpop.f32.mrf.mxu0
        %v3550 = vadd.f32 %v3303, %v3549
        %3551 = vmatmul.bf16.gmra.mxu0 %v2947
        %v3552 = vpop.f32.mrf.mxu0
        %v3553 = vadd.f32 %v3306, %v3552
        %v3554 = vpop.f32.mrf.mxu0
        %v3555 = vadd.f32 %v3308, %v3554
        %3556 = vmatmul.bf16.gmra.mxu0 %v2949
        %v3557 = vpop.f32.mrf.mxu0
        %v3558 = vadd.f32 %v3311, %v3557
        %v3559 = vpop.f32.mrf.mxu0
        %v3560 = vadd.f32 %v3313, %v3559
        %3561 = vdwg.mxu0
        %3562 = vmatpush.bf16.msra.mxu0 %v3442
        %3563 = vmatpush.bf16.msra.mxu0 %v3440
        %3564 = vmatpush.bf16.msra.mxu0 %v3438
        %3565 = vmatpush.bf16.msra.mxu0 %v3436
        %3566 = vmatpush.bf16.msra.mxu0 %v3434
        %3567 = vmatpush.bf16.msra.mxu0 %v3432
        %3568 = vmatpush.bf16.msra.mxu0 %v3430
        %3569 = vmatpush.bf16.msra.mxu0 %v3428
        %3570 = vmatmul.bf16.gmra.mxu0 %v2944
        %v3571 = vpop.f32.mrf.mxu0
        %v3572 = vadd.f32 %v3543, %v3571
        %v3573 = vpop.f32.mrf.mxu0
        %v3574 = vadd.f32 %v3545, %v3573
        %3575 = vmatmul.bf16.gmra.mxu0 %v2946
        %v3576 = vpop.f32.mrf.mxu0
        %v3577 = vadd.f32 %v3548, %v3576
        %v3578 = vpop.f32.mrf.mxu0
        %v3579 = vadd.f32 %v3550, %v3578
        %3580 = vmatmul.bf16.gmra.mxu0 %v2948
        %v3581 = vpop.f32.mrf.mxu0
        %v3582 = vadd.f32 %v3553, %v3581
        %v3583 = vpop.f32.mrf.mxu0
        %v3584 = vadd.f32 %v3555, %v3583
        %3585 = vmatmul.bf16.gmra.mxu0 %v2950
        %v3586 = vpop.f32.mrf.mxu0
        %v3587 = vadd.f32 %v3558, %v3586
        %v3588 = vpop.f32.mrf.mxu0
        %v3589 = vadd.f32 %v3560, %v3588
        %3590 = vdwg.mxu0
        %v3591 = vld [vmem:[%s11] sm:$0x3]
        %v3593 = vperm.slane %v3591, 0
        %v3594 = vperm.slane %v3591, 1
        %v3597 = vadd.f32 %v3514, %v3593
        %v3598 = vadd.f32 %v3572, %v3594
        %v3599 = vadd.f32 %v3516, %v3593
        %v3600 = vadd.f32 %v3574, %v3594
        %v3601 = vadd.f32 %v3519, %v3593
        %v3602 = vadd.f32 %v3577, %v3594
        %v3603 = vadd.f32 %v3521, %v3593
        %v3604 = vadd.f32 %v3579, %v3594
        %v3605 = vadd.f32 %v3524, %v3593
        %v3606 = vadd.f32 %v3582, %v3594
        %v3607 = vadd.f32 %v3526, %v3593
        %v3608 = vadd.f32 %v3584, %v3594
        %v3609 = vadd.f32 %v3529, %v3593
        %v3610 = vadd.f32 %v3587, %v3594
        %v3611 = vadd.f32 %v3531, %v3593
        %v3612 = vadd.f32 %v3589, %v3594
        %v3613 = vpack.c.bf16 %v3599, %v3597
        %v3614 = vpack.c.bf16 %v3600, %v3598
        %v3615 = vpack.c.bf16 %v3603, %v3601
        %v3616 = vpack.c.bf16 %v3604, %v3602
        %v3617 = vpack.c.bf16 %v3607, %v3605
        %v3618 = vpack.c.bf16 %v3608, %v3606
        %v3619 = vpack.c.bf16 %v3611, %v3609
        %v3620 = vpack.c.bf16 %v3612, %v3610
        %v3621 = vld [vmem:[#allocation19] sm:$0xff]
        %v3622 = vld [vmem:[#allocation19 + $0x8] sm:$0xff]
        %v3623 = vld [vmem:[#allocation19 + $0x10] sm:$0xff]
        %v3624 = vld [vmem:[#allocation19 + $0x18] sm:$0xff]
        %v3625 = vld [vmem:[#allocation19 + $0x20] sm:$0xff]
        %v3626 = vld [vmem:[#allocation19 + $0x28] sm:$0xff]
        %v3627 = vld [vmem:[#allocation19 + $0x30] sm:$0xff]
        %v3628 = vld [vmem:[#allocation19 + $0x38] sm:$0xff]
        %v3629 = vld [vmem:[#allocation19 + $0x40] sm:$0xff]
        %v3630 = vld [vmem:[#allocation19 + $0x48] sm:$0xff]
        %v3631 = vld [vmem:[#allocation19 + $0x50] sm:$0xff]
        %v3632 = vld [vmem:[#allocation19 + $0x58] sm:$0xff]
        %v3633 = vld [vmem:[#allocation19 + $0x60] sm:$0xff]
        %v3634 = vld [vmem:[#allocation19 + $0x68] sm:$0xff]
        %v3635 = vld [vmem:[#allocation19 + $0x70] sm:$0xff]
        %v3636 = vld [vmem:[#allocation19 + $0x78] sm:$0xff]
        %v3637 = vld [vmem:[#allocation19 + $0x80] sm:$0xff]
        %v3638 = vld [vmem:[#allocation19 + $0x88] sm:$0xff]
        %v3639 = vld [vmem:[#allocation19 + $0x90] sm:$0xff]
        %v3640 = vld [vmem:[#allocation19 + $0x98] sm:$0xff]
        %v3641 = vld [vmem:[#allocation19 + $0xa0] sm:$0xff]
        %v3642 = vld [vmem:[#allocation19 + $0xa8] sm:$0xff]
        %v3643 = vld [vmem:[#allocation19 + $0xb0] sm:$0xff]
        %v3644 = vld [vmem:[#allocation19 + $0xb8] sm:$0xff]
        %v3645 = vld [vmem:[#allocation19 + $0xc0] sm:$0xff]
        %v3646 = vld [vmem:[#allocation19 + $0xc8] sm:$0xff]
        %v3647 = vld [vmem:[#allocation19 + $0xd0] sm:$0xff]
        %v3648 = vld [vmem:[#allocation19 + $0xd8] sm:$0xff]
        %v3649 = vld [vmem:[#allocation19 + $0xe0] sm:$0xff]
        %v3650 = vld [vmem:[#allocation19 + $0xe8] sm:$0xff]
        %v3651 = vld [vmem:[#allocation19 + $0xf0] sm:$0xff]
        %v3652 = vld [vmem:[#allocation19 + $0xf8] sm:$0xff]
        %v3653 = vld [vmem:[#allocation19 + $0x100] sm:$0xff]
        %v3654 = vld [vmem:[#allocation19 + $0x108] sm:$0xff]
        %v3655 = vld [vmem:[#allocation19 + $0x110] sm:$0xff]
        %v3656 = vld [vmem:[#allocation19 + $0x118] sm:$0xff]
        %v3657 = vld [vmem:[#allocation19 + $0x120] sm:$0xff]
        %v3658 = vld [vmem:[#allocation19 + $0x128] sm:$0xff]
        %v3659 = vld [vmem:[#allocation19 + $0x130] sm:$0xff]
        %v3660 = vld [vmem:[#allocation19 + $0x138] sm:$0xff]
        %v3661 = vld [vmem:[#allocation19 + $0x140] sm:$0xff]
        %v3662 = vld [vmem:[#allocation19 + $0x148] sm:$0xff]
        %v3663 = vld [vmem:[#allocation19 + $0x150] sm:$0xff]
        %v3664 = vld [vmem:[#allocation19 + $0x158] sm:$0xff]
        %v3665 = vld [vmem:[#allocation19 + $0x160] sm:$0xff]
        %v3666 = vld [vmem:[#allocation19 + $0x168] sm:$0xff]
        %v3667 = vld [vmem:[#allocation19 + $0x170] sm:$0xff]
        %v3668 = vld [vmem:[#allocation19 + $0x178] sm:$0xff]
        %v3669 = vld [vmem:[#allocation19 + $0x180] sm:$0xff]
        %v3670 = vld [vmem:[#allocation19 + $0x188] sm:$0xff]
        %v3671 = vld [vmem:[#allocation19 + $0x190] sm:$0xff]
        %v3672 = vld [vmem:[#allocation19 + $0x198] sm:$0xff]
        %v3673 = vld [vmem:[#allocation19 + $0x1a0] sm:$0xff]
        %v3674 = vld [vmem:[#allocation19 + $0x1a8] sm:$0xff]
        %v3675 = vld [vmem:[#allocation19 + $0x1b0] sm:$0xff]
        %v3676 = vld [vmem:[#allocation19 + $0x1b8] sm:$0xff]
        %v3677 = vld [vmem:[#allocation19 + $0x1c0] sm:$0xff]
        %v3678 = vld [vmem:[#allocation19 + $0x1c8] sm:$0xff]
        %v3679 = vld [vmem:[#allocation19 + $0x1d0] sm:$0xff]
        %v3680 = vld [vmem:[#allocation19 + $0x1d8] sm:$0xff]
        %v3681 = vld [vmem:[#allocation19 + $0x1e0] sm:$0xff]
        %v3682 = vld [vmem:[#allocation19 + $0x1e8] sm:$0xff]
        %v3683 = vld [vmem:[#allocation19 + $0x1f0] sm:$0xff]
        %v3684 = vld [vmem:[#allocation19 + $0x1f8] sm:$0xff]
        %v3685 = vld [vmem:[#allocation19 + $0x200] sm:$0xff]
        %v3686 = vld [vmem:[#allocation19 + $0x208] sm:$0xff]
        %v3687 = vld [vmem:[#allocation19 + $0x210] sm:$0xff]
        %v3688 = vld [vmem:[#allocation19 + $0x218] sm:$0xff]
        %v3689 = vld [vmem:[#allocation19 + $0x220] sm:$0xff]
        %v3690 = vld [vmem:[#allocation19 + $0x228] sm:$0xff]
        %v3691 = vld [vmem:[#allocation19 + $0x230] sm:$0xff]
        %v3692 = vld [vmem:[#allocation19 + $0x238] sm:$0xff]
        %v3693 = vld [vmem:[#allocation19 + $0x240] sm:$0xff]
        %v3694 = vld [vmem:[#allocation19 + $0x248] sm:$0xff]
        %v3695 = vld [vmem:[#allocation19 + $0x250] sm:$0xff]
        %v3696 = vld [vmem:[#allocation19 + $0x258] sm:$0xff]
        %v3697 = vld [vmem:[#allocation19 + $0x260] sm:$0xff]
        %v3698 = vld [vmem:[#allocation19 + $0x268] sm:$0xff]
        %v3699 = vld [vmem:[#allocation19 + $0x270] sm:$0xff]
        %v3700 = vld [vmem:[#allocation19 + $0x278] sm:$0xff]
        %v3701 = vld [vmem:[#allocation19 + $0x280] sm:$0xff]
        %v3702 = vld [vmem:[#allocation19 + $0x288] sm:$0xff]
        %v3703 = vld [vmem:[#allocation19 + $0x290] sm:$0xff]
        %v3704 = vld [vmem:[#allocation19 + $0x298] sm:$0xff]
        %v3705 = vld [vmem:[#allocation19 + $0x2a0] sm:$0xff]
        %v3706 = vld [vmem:[#allocation19 + $0x2a8] sm:$0xff]
        %v3707 = vld [vmem:[#allocation19 + $0x2b0] sm:$0xff]
        %v3708 = vld [vmem:[#allocation19 + $0x2b8] sm:$0xff]
        %v3709 = vld [vmem:[#allocation19 + $0x2c0] sm:$0xff]
        %v3710 = vld [vmem:[#allocation19 + $0x2c8] sm:$0xff]
        %v3711 = vld [vmem:[#allocation19 + $0x2d0] sm:$0xff]
        %v3712 = vld [vmem:[#allocation19 + $0x2d8] sm:$0xff]
        %v3713 = vld [vmem:[#allocation19 + $0x2e0] sm:$0xff]
        %v3714 = vld [vmem:[#allocation19 + $0x2e8] sm:$0xff]
        %v3715 = vld [vmem:[#allocation19 + $0x2f0] sm:$0xff]
        %v3716 = vld [vmem:[#allocation19 + $0x2f8] sm:$0xff]
        %v3717 = vld [vmem:[#allocation19 + $0x300] sm:$0xff]
        %v3718 = vld [vmem:[#allocation19 + $0x308] sm:$0xff]
        %v3719 = vld [vmem:[#allocation19 + $0x310] sm:$0xff]
        %v3720 = vld [vmem:[#allocation19 + $0x318] sm:$0xff]
        %v3721 = vld [vmem:[#allocation19 + $0x320] sm:$0xff]
        %v3722 = vld [vmem:[#allocation19 + $0x328] sm:$0xff]
        %v3723 = vld [vmem:[#allocation19 + $0x330] sm:$0xff]
        %v3724 = vld [vmem:[#allocation19 + $0x338] sm:$0xff]
        %v3725 = vld [vmem:[#allocation19 + $0x340] sm:$0xff]
        %v3726 = vld [vmem:[#allocation19 + $0x348] sm:$0xff]
        %v3727 = vld [vmem:[#allocation19 + $0x350] sm:$0xff]
        %v3728 = vld [vmem:[#allocation19 + $0x358] sm:$0xff]
        %v3729 = vld [vmem:[#allocation19 + $0x360] sm:$0xff]
        %v3730 = vld [vmem:[#allocation19 + $0x368] sm:$0xff]
        %v3731 = vld [vmem:[#allocation19 + $0x370] sm:$0xff]
        %v3732 = vld [vmem:[#allocation19 + $0x378] sm:$0xff]
        %v3733 = vld [vmem:[#allocation19 + $0x380] sm:$0xff]
        %v3734 = vld [vmem:[#allocation19 + $0x388] sm:$0xff]
        %v3735 = vld [vmem:[#allocation19 + $0x390] sm:$0xff]
        %v3736 = vld [vmem:[#allocation19 + $0x398] sm:$0xff]
        %v3737 = vld [vmem:[#allocation19 + $0x3a0] sm:$0xff]
        %v3738 = vld [vmem:[#allocation19 + $0x3a8] sm:$0xff]
        %v3739 = vld [vmem:[#allocation19 + $0x3b0] sm:$0xff]
        %v3740 = vld [vmem:[#allocation19 + $0x3b8] sm:$0xff]
        %v3741 = vld [vmem:[#allocation19 + $0x3c0] sm:$0xff]
        %v3742 = vld [vmem:[#allocation19 + $0x3c8] sm:$0xff]
        %v3743 = vld [vmem:[#allocation19 + $0x3d0] sm:$0xff]
        %v3744 = vld [vmem:[#allocation19 + $0x3d8] sm:$0xff]
        %v3745 = vld [vmem:[#allocation19 + $0x3e0] sm:$0xff]
        %v3746 = vld [vmem:[#allocation19 + $0x3e8] sm:$0xff]
        %v3747 = vld [vmem:[#allocation19 + $0x3f0] sm:$0xff]
        %v3748 = vld [vmem:[#allocation19 + $0x3f8] sm:$0xff]
        %v3877 = vunpack.c.l.b16 %v3621
        %v3878 = vunpack.c.h.b16 %v3621
        %v3879 = vunpack.c.l.b16 %v3622
        %v3880 = vunpack.c.h.b16 %v3622
        %v3881 = vunpack.c.l.b16 %v3623
        %v3882 = vunpack.c.h.b16 %v3623
        %v3883 = vunpack.c.l.b16 %v3624
        %v3884 = vunpack.c.h.b16 %v3624
        %v3885 = vunpack.c.l.b16 %v3625
        %v3886 = vunpack.c.h.b16 %v3625
        %v3887 = vunpack.c.l.b16 %v3626
        %v3888 = vunpack.c.h.b16 %v3626
        %v3889 = vunpack.c.l.b16 %v3627
        %v3890 = vunpack.c.h.b16 %v3627
        %v3891 = vunpack.c.l.b16 %v3628
        %v3892 = vunpack.c.h.b16 %v3628
        %v3893 = vunpack.c.l.b16 %v3629
        %v3894 = vunpack.c.h.b16 %v3629
        %v3895 = vunpack.c.l.b16 %v3630
        %v3896 = vunpack.c.h.b16 %v3630
        %v3897 = vunpack.c.l.b16 %v3631
        %v3898 = vunpack.c.h.b16 %v3631
        %v3899 = vunpack.c.l.b16 %v3632
        %v3900 = vunpack.c.h.b16 %v3632
        %v3901 = vunpack.c.l.b16 %v3633
        %v3902 = vunpack.c.h.b16 %v3633
        %v3903 = vunpack.c.l.b16 %v3634
        %v3904 = vunpack.c.h.b16 %v3634
        %v3905 = vunpack.c.l.b16 %v3635
        %v3906 = vunpack.c.h.b16 %v3635
        %v3907 = vunpack.c.l.b16 %v3636
        %v3908 = vunpack.c.h.b16 %v3636
        %v3909 = vunpack.c.l.b16 %v3637
        %v3910 = vunpack.c.h.b16 %v3637
        %v3911 = vunpack.c.l.b16 %v3638
        %v3912 = vunpack.c.h.b16 %v3638
        %v3913 = vunpack.c.l.b16 %v3639
        %v3914 = vunpack.c.h.b16 %v3639
        %v3915 = vunpack.c.l.b16 %v3640
        %v3916 = vunpack.c.h.b16 %v3640
        %v3917 = vunpack.c.l.b16 %v3641
        %v3918 = vunpack.c.h.b16 %v3641
        %v3919 = vunpack.c.l.b16 %v3642
        %v3920 = vunpack.c.h.b16 %v3642
        %v3921 = vunpack.c.l.b16 %v3643
        %v3922 = vunpack.c.h.b16 %v3643
        %v3923 = vunpack.c.l.b16 %v3644
        %v3924 = vunpack.c.h.b16 %v3644
        %v3925 = vunpack.c.l.b16 %v3645
        %v3926 = vunpack.c.h.b16 %v3645
        %v3927 = vunpack.c.l.b16 %v3646
        %v3928 = vunpack.c.h.b16 %v3646
        %v3929 = vunpack.c.l.b16 %v3647
        %v3930 = vunpack.c.h.b16 %v3647
        %v3931 = vunpack.c.l.b16 %v3648
        %v3932 = vunpack.c.h.b16 %v3648
        %v3933 = vunpack.c.l.b16 %v3649
        %v3934 = vunpack.c.h.b16 %v3649
        %v3935 = vunpack.c.l.b16 %v3650
        %v3936 = vunpack.c.h.b16 %v3650
        %v3937 = vunpack.c.l.b16 %v3651
        %v3938 = vunpack.c.h.b16 %v3651
        %v3939 = vunpack.c.l.b16 %v3652
        %v3940 = vunpack.c.h.b16 %v3652
        %v3941 = vunpack.c.l.b16 %v3653
        %v3942 = vunpack.c.h.b16 %v3653
        %v3943 = vunpack.c.l.b16 %v3654
        %v3944 = vunpack.c.h.b16 %v3654
        %v3945 = vunpack.c.l.b16 %v3655
        %v3946 = vunpack.c.h.b16 %v3655
        %v3947 = vunpack.c.l.b16 %v3656
        %v3948 = vunpack.c.h.b16 %v3656
        %v3949 = vunpack.c.l.b16 %v3657
        %v3950 = vunpack.c.h.b16 %v3657
        %v3951 = vunpack.c.l.b16 %v3658
        %v3952 = vunpack.c.h.b16 %v3658
        %v3953 = vunpack.c.l.b16 %v3659
        %v3954 = vunpack.c.h.b16 %v3659
        %v3955 = vunpack.c.l.b16 %v3660
        %v3956 = vunpack.c.h.b16 %v3660
        %v3957 = vunpack.c.l.b16 %v3661
        %v3958 = vunpack.c.h.b16 %v3661
        %v3959 = vunpack.c.l.b16 %v3662
        %v3960 = vunpack.c.h.b16 %v3662
        %v3961 = vunpack.c.l.b16 %v3663
        %v3962 = vunpack.c.h.b16 %v3663
        %v3963 = vunpack.c.l.b16 %v3664
        %v3964 = vunpack.c.h.b16 %v3664
        %v3965 = vunpack.c.l.b16 %v3665
        %v3966 = vunpack.c.h.b16 %v3665
        %v3967 = vunpack.c.l.b16 %v3666
        %v3968 = vunpack.c.h.b16 %v3666
        %v3969 = vunpack.c.l.b16 %v3667
        %v3970 = vunpack.c.h.b16 %v3667
        %v3971 = vunpack.c.l.b16 %v3668
        %v3972 = vunpack.c.h.b16 %v3668
        %v3973 = vunpack.c.l.b16 %v3669
        %v3974 = vunpack.c.h.b16 %v3669
        %v3975 = vunpack.c.l.b16 %v3670
        %v3976 = vunpack.c.h.b16 %v3670
        %v3977 = vunpack.c.l.b16 %v3671
        %v3978 = vunpack.c.h.b16 %v3671
        %v3979 = vunpack.c.l.b16 %v3672
        %v3980 = vunpack.c.h.b16 %v3672
        %v3981 = vunpack.c.l.b16 %v3673
        %v3982 = vunpack.c.h.b16 %v3673
        %v3983 = vunpack.c.l.b16 %v3674
        %v3984 = vunpack.c.h.b16 %v3674
        %v3985 = vunpack.c.l.b16 %v3675
        %v3986 = vunpack.c.h.b16 %v3675
        %v3987 = vunpack.c.l.b16 %v3676
        %v3988 = vunpack.c.h.b16 %v3676
        %v3989 = vunpack.c.l.b16 %v3677
        %v3990 = vunpack.c.h.b16 %v3677
        %v3991 = vunpack.c.l.b16 %v3678
        %v3992 = vunpack.c.h.b16 %v3678
        %v3993 = vunpack.c.l.b16 %v3679
        %v3994 = vunpack.c.h.b16 %v3679
        %v3995 = vunpack.c.l.b16 %v3680
        %v3996 = vunpack.c.h.b16 %v3680
        %v3997 = vunpack.c.l.b16 %v3681
        %v3998 = vunpack.c.h.b16 %v3681
        %v3999 = vunpack.c.l.b16 %v3682
        %v4000 = vunpack.c.h.b16 %v3682
        %v4001 = vunpack.c.l.b16 %v3683
        %v4002 = vunpack.c.h.b16 %v3683
        %v4003 = vunpack.c.l.b16 %v3684
        %v4004 = vunpack.c.h.b16 %v3684
        %v4005 = vunpack.c.l.b16 %v3685
        %v4006 = vunpack.c.h.b16 %v3685
        %v4007 = vunpack.c.l.b16 %v3686
        %v4008 = vunpack.c.h.b16 %v3686
        %v4009 = vunpack.c.l.b16 %v3687
        %v4010 = vunpack.c.h.b16 %v3687
        %v4011 = vunpack.c.l.b16 %v3688
        %v4012 = vunpack.c.h.b16 %v3688
        %v4013 = vunpack.c.l.b16 %v3689
        %v4014 = vunpack.c.h.b16 %v3689
        %v4015 = vunpack.c.l.b16 %v3690
        %v4016 = vunpack.c.h.b16 %v3690
        %v4017 = vunpack.c.l.b16 %v3691
        %v4018 = vunpack.c.h.b16 %v3691
        %v4019 = vunpack.c.l.b16 %v3692
        %v4020 = vunpack.c.h.b16 %v3692
        %v4021 = vunpack.c.l.b16 %v3693
        %v4022 = vunpack.c.h.b16 %v3693
        %v4023 = vunpack.c.l.b16 %v3694
        %v4024 = vunpack.c.h.b16 %v3694
        %v4025 = vunpack.c.l.b16 %v3695
        %v4026 = vunpack.c.h.b16 %v3695
        %v4027 = vunpack.c.l.b16 %v3696
        %v4028 = vunpack.c.h.b16 %v3696
        %v4029 = vunpack.c.l.b16 %v3697
        %v4030 = vunpack.c.h.b16 %v3697
        %v4031 = vunpack.c.l.b16 %v3698
        %v4032 = vunpack.c.h.b16 %v3698
        %v4033 = vunpack.c.l.b16 %v3699
        %v4034 = vunpack.c.h.b16 %v3699
        %v4035 = vunpack.c.l.b16 %v3700
        %v4036 = vunpack.c.h.b16 %v3700
        %v4037 = vunpack.c.l.b16 %v3701
        %v4038 = vunpack.c.h.b16 %v3701
        %v4039 = vunpack.c.l.b16 %v3702
        %v4040 = vunpack.c.h.b16 %v3702
        %v4041 = vunpack.c.l.b16 %v3703
        %v4042 = vunpack.c.h.b16 %v3703
        %v4043 = vunpack.c.l.b16 %v3704
        %v4044 = vunpack.c.h.b16 %v3704
        %v4045 = vunpack.c.l.b16 %v3705
        %v4046 = vunpack.c.h.b16 %v3705
        %v4047 = vunpack.c.l.b16 %v3706
        %v4048 = vunpack.c.h.b16 %v3706
        %v4049 = vunpack.c.l.b16 %v3707
        %v4050 = vunpack.c.h.b16 %v3707
        %v4051 = vunpack.c.l.b16 %v3708
        %v4052 = vunpack.c.h.b16 %v3708
        %v4053 = vunpack.c.l.b16 %v3709
        %v4054 = vunpack.c.h.b16 %v3709
        %v4055 = vunpack.c.l.b16 %v3710
        %v4056 = vunpack.c.h.b16 %v3710
        %v4057 = vunpack.c.l.b16 %v3711
        %v4058 = vunpack.c.h.b16 %v3711
        %v4059 = vunpack.c.l.b16 %v3712
        %v4060 = vunpack.c.h.b16 %v3712
        %v4061 = vunpack.c.l.b16 %v3713
        %v4062 = vunpack.c.h.b16 %v3713
        %v4063 = vunpack.c.l.b16 %v3714
        %v4064 = vunpack.c.h.b16 %v3714
        %v4065 = vunpack.c.l.b16 %v3715
        %v4066 = vunpack.c.h.b16 %v3715
        %v4067 = vunpack.c.l.b16 %v3716
        %v4068 = vunpack.c.h.b16 %v3716
        %v4069 = vunpack.c.l.b16 %v3717
        %v4070 = vunpack.c.h.b16 %v3717
        %v4071 = vunpack.c.l.b16 %v3718
        %v4072 = vunpack.c.h.b16 %v3718
        %v4073 = vunpack.c.l.b16 %v3719
        %v4074 = vunpack.c.h.b16 %v3719
        %v4075 = vunpack.c.l.b16 %v3720
        %v4076 = vunpack.c.h.b16 %v3720
        %v4077 = vunpack.c.l.b16 %v3721
        %v4078 = vunpack.c.h.b16 %v3721
        %v4079 = vunpack.c.l.b16 %v3722
        %v4080 = vunpack.c.h.b16 %v3722
        %v4081 = vunpack.c.l.b16 %v3723
        %v4082 = vunpack.c.h.b16 %v3723
        %v4083 = vunpack.c.l.b16 %v3724
        %v4084 = vunpack.c.h.b16 %v3724
        %v4085 = vunpack.c.l.b16 %v3725
        %v4086 = vunpack.c.h.b16 %v3725
        %v4087 = vunpack.c.l.b16 %v3726
        %v4088 = vunpack.c.h.b16 %v3726
        %v4089 = vunpack.c.l.b16 %v3727
        %v4090 = vunpack.c.h.b16 %v3727
        %v4091 = vunpack.c.l.b16 %v3728
        %v4092 = vunpack.c.h.b16 %v3728
        %v4093 = vunpack.c.l.b16 %v3729
        %v4094 = vunpack.c.h.b16 %v3729
        %v4095 = vunpack.c.l.b16 %v3730
        %v4096 = vunpack.c.h.b16 %v3730
        %v4097 = vunpack.c.l.b16 %v3731
        %v4098 = vunpack.c.h.b16 %v3731
        %v4099 = vunpack.c.l.b16 %v3732
        %v4100 = vunpack.c.h.b16 %v3732
        %v4101 = vunpack.c.l.b16 %v3733
        %v4102 = vunpack.c.h.b16 %v3733
        %v4103 = vunpack.c.l.b16 %v3734
        %v4104 = vunpack.c.h.b16 %v3734
        %v4105 = vunpack.c.l.b16 %v3735
        %v4106 = vunpack.c.h.b16 %v3735
        %v4107 = vunpack.c.l.b16 %v3736
        %v4108 = vunpack.c.h.b16 %v3736
        %v4109 = vunpack.c.l.b16 %v3737
        %v4110 = vunpack.c.h.b16 %v3737
        %v4111 = vunpack.c.l.b16 %v3738
        %v4112 = vunpack.c.h.b16 %v3738
        %v4113 = vunpack.c.l.b16 %v3739
        %v4114 = vunpack.c.h.b16 %v3739
        %v4115 = vunpack.c.l.b16 %v3740
        %v4116 = vunpack.c.h.b16 %v3740
        %v4117 = vunpack.c.l.b16 %v3741
        %v4118 = vunpack.c.h.b16 %v3741
        %v4119 = vunpack.c.l.b16 %v3742
        %v4120 = vunpack.c.h.b16 %v3742
        %v4121 = vunpack.c.l.b16 %v3743
        %v4122 = vunpack.c.h.b16 %v3743
        %v4123 = vunpack.c.l.b16 %v3744
        %v4124 = vunpack.c.h.b16 %v3744
        %v4125 = vunpack.c.l.b16 %v3745
        %v4126 = vunpack.c.h.b16 %v3745
        %v4127 = vunpack.c.l.b16 %v3746
        %v4128 = vunpack.c.h.b16 %v3746
        %v4129 = vunpack.c.l.b16 %v3747
        %v4130 = vunpack.c.h.b16 %v3747
        %v4131 = vunpack.c.l.b16 %v3748
        %v4132 = vunpack.c.h.b16 %v3748
        %v4133 = vpack.c.b16 %v3885, %v3877
        %v4134 = vpack.c.b16 %v3886, %v3878
        %v4135 = vpack.c.b16 %v3887, %v3879
        %v4136 = vpack.c.b16 %v3888, %v3880
        %v4137 = vpack.c.b16 %v3889, %v3881
        %v4138 = vpack.c.b16 %v3890, %v3882
        %v4139 = vpack.c.b16 %v3891, %v3883
        %v4140 = vpack.c.b16 %v3892, %v3884
        %v4141 = vpack.c.b16 %v3901, %v3893
        %v4142 = vpack.c.b16 %v3902, %v3894
        %v4143 = vpack.c.b16 %v3903, %v3895
        %v4144 = vpack.c.b16 %v3904, %v3896
        %v4145 = vpack.c.b16 %v3905, %v3897
        %v4146 = vpack.c.b16 %v3906, %v3898
        %v4147 = vpack.c.b16 %v3907, %v3899
        %v4148 = vpack.c.b16 %v3908, %v3900
        %v4149 = vpack.c.b16 %v3917, %v3909
        %v4150 = vpack.c.b16 %v3918, %v3910
        %v4151 = vpack.c.b16 %v3919, %v3911
        %v4152 = vpack.c.b16 %v3920, %v3912
        %v4153 = vpack.c.b16 %v3921, %v3913
        %v4154 = vpack.c.b16 %v3922, %v3914
        %v4155 = vpack.c.b16 %v3923, %v3915
        %v4156 = vpack.c.b16 %v3924, %v3916
        %v4157 = vpack.c.b16 %v3933, %v3925
        %v4158 = vpack.c.b16 %v3934, %v3926
        %v4159 = vpack.c.b16 %v3935, %v3927
        %v4160 = vpack.c.b16 %v3936, %v3928
        %v4161 = vpack.c.b16 %v3937, %v3929
        %v4162 = vpack.c.b16 %v3938, %v3930
        %v4163 = vpack.c.b16 %v3939, %v3931
        %v4164 = vpack.c.b16 %v3940, %v3932
        %v4165 = vpack.c.b16 %v3949, %v3941
        %v4166 = vpack.c.b16 %v3950, %v3942
        %v4167 = vpack.c.b16 %v3951, %v3943
        %v4168 = vpack.c.b16 %v3952, %v3944
        %v4169 = vpack.c.b16 %v3953, %v3945
        %v4170 = vpack.c.b16 %v3954, %v3946
        %v4171 = vpack.c.b16 %v3955, %v3947
        %v4172 = vpack.c.b16 %v3956, %v3948
        %v4173 = vpack.c.b16 %v3965, %v3957
        %v4174 = vpack.c.b16 %v3966, %v3958
        %v4175 = vpack.c.b16 %v3967, %v3959
        %v4176 = vpack.c.b16 %v3968, %v3960
        %v4177 = vpack.c.b16 %v3969, %v3961
        %v4178 = vpack.c.b16 %v3970, %v3962
        %v4179 = vpack.c.b16 %v3971, %v3963
        %v4180 = vpack.c.b16 %v3972, %v3964
        %v4181 = vpack.c.b16 %v3981, %v3973
        %v4182 = vpack.c.b16 %v3982, %v3974
        %v4183 = vpack.c.b16 %v3983, %v3975
        %v4184 = vpack.c.b16 %v3984, %v3976
        %v4185 = vpack.c.b16 %v3985, %v3977
        %v4186 = vpack.c.b16 %v3986, %v3978
        %v4187 = vpack.c.b16 %v3987, %v3979
        %v4188 = vpack.c.b16 %v3988, %v3980
        %v4189 = vpack.c.b16 %v3997, %v3989
        %v4190 = vpack.c.b16 %v3998, %v3990
        %v4191 = vpack.c.b16 %v3999, %v3991
        %v4192 = vpack.c.b16 %v4000, %v3992
        %v4193 = vpack.c.b16 %v4001, %v3993
        %v4194 = vpack.c.b16 %v4002, %v3994
        %v4195 = vpack.c.b16 %v4003, %v3995
        %v4196 = vpack.c.b16 %v4004, %v3996
        %v4197 = vpack.c.b16 %v4013, %v4005
        %v4198 = vpack.c.b16 %v4014, %v4006
        %v4199 = vpack.c.b16 %v4015, %v4007
        %v4200 = vpack.c.b16 %v4016, %v4008
        %v4201 = vpack.c.b16 %v4017, %v4009
        %v4202 = vpack.c.b16 %v4018, %v4010
        %v4203 = vpack.c.b16 %v4019, %v4011
        %v4204 = vpack.c.b16 %v4020, %v4012
        %v4205 = vpack.c.b16 %v4029, %v4021
        %v4206 = vpack.c.b16 %v4030, %v4022
        %v4207 = vpack.c.b16 %v4031, %v4023
        %v4208 = vpack.c.b16 %v4032, %v4024
        %v4209 = vpack.c.b16 %v4033, %v4025
        %v4210 = vpack.c.b16 %v4034, %v4026
        %v4211 = vpack.c.b16 %v4035, %v4027
        %v4212 = vpack.c.b16 %v4036, %v4028
        %v4213 = vpack.c.b16 %v4045, %v4037
        %v4214 = vpack.c.b16 %v4046, %v4038
        %v4215 = vpack.c.b16 %v4047, %v4039
        %v4216 = vpack.c.b16 %v4048, %v4040
        %v4217 = vpack.c.b16 %v4049, %v4041
        %v4218 = vpack.c.b16 %v4050, %v4042
        %v4219 = vpack.c.b16 %v4051, %v4043
        %v4220 = vpack.c.b16 %v4052, %v4044
        %v4221 = vpack.c.b16 %v4061, %v4053
        %v4222 = vpack.c.b16 %v4062, %v4054
        %v4223 = vpack.c.b16 %v4063, %v4055
        %v4224 = vpack.c.b16 %v4064, %v4056
        %v4225 = vpack.c.b16 %v4065, %v4057
        %v4226 = vpack.c.b16 %v4066, %v4058
        %v4227 = vpack.c.b16 %v4067, %v4059
        %v4228 = vpack.c.b16 %v4068, %v4060
        %v4229 = vpack.c.b16 %v4077, %v4069
        %v4230 = vpack.c.b16 %v4078, %v4070
        %v4231 = vpack.c.b16 %v4079, %v4071
        %v4232 = vpack.c.b16 %v4080, %v4072
        %v4233 = vpack.c.b16 %v4081, %v4073
        %v4234 = vpack.c.b16 %v4082, %v4074
        %v4235 = vpack.c.b16 %v4083, %v4075
        %v4236 = vpack.c.b16 %v4084, %v4076
        %v4237 = vpack.c.b16 %v4093, %v4085
        %v4238 = vpack.c.b16 %v4094, %v4086
        %v4239 = vpack.c.b16 %v4095, %v4087
        %v4240 = vpack.c.b16 %v4096, %v4088
        %v4241 = vpack.c.b16 %v4097, %v4089
        %v4242 = vpack.c.b16 %v4098, %v4090
        %v4243 = vpack.c.b16 %v4099, %v4091
        %v4244 = vpack.c.b16 %v4100, %v4092
        %v4245 = vpack.c.b16 %v4109, %v4101
        %v4246 = vpack.c.b16 %v4110, %v4102
        %v4247 = vpack.c.b16 %v4111, %v4103
        %v4248 = vpack.c.b16 %v4112, %v4104
        %v4249 = vpack.c.b16 %v4113, %v4105
        %v4250 = vpack.c.b16 %v4114, %v4106
        %v4251 = vpack.c.b16 %v4115, %v4107
        %v4252 = vpack.c.b16 %v4116, %v4108
        %v4253 = vpack.c.b16 %v4125, %v4117
        %v4254 = vpack.c.b16 %v4126, %v4118
        %v4255 = vpack.c.b16 %v4127, %v4119
        %v4256 = vpack.c.b16 %v4128, %v4120
        %v4257 = vpack.c.b16 %v4129, %v4121
        %v4258 = vpack.c.b16 %v4130, %v4122
        %v4259 = vpack.c.b16 %v4131, %v4123
        %v4260 = vpack.c.b16 %v4132, %v4124
        %4389 = vmatpush.bf16.msra.mxu0 %v4189
        %4390 = vmatpush.bf16.msra.mxu0 %v4181
        %4391 = vmatpush.bf16.msra.mxu0 %v4173
        %4392 = vmatpush.bf16.msra.mxu0 %v4165
        %4393 = vmatpush.bf16.msra.mxu0 %v4157
        %4394 = vmatpush.bf16.msra.mxu0 %v4149
        %4395 = vmatpush.bf16.msra.mxu0 %v4141
        %4396 = vmatpush.bf16.msra.mxu0 %v4133
        %4397 = vmatmul.bf16.gmra.mxu0 %v3613
        %v4398 = vpop.f32.mrf.mxu0
        %v4399 = vadd.f32 %v1926, %v4398
        %v4400 = vpop.f32.mrf.mxu0
        %v4401 = vadd.f32 %v1928, %v4400
        %4402 = vmatmul.bf16.gmra.mxu0 %v3615
        %v4403 = vpop.f32.mrf.mxu0
        %v4404 = vadd.f32 %v1931, %v4403
        %v4405 = vpop.f32.mrf.mxu0
        %v4406 = vadd.f32 %v1933, %v4405
        %4407 = vmatmul.bf16.gmra.mxu0 %v3617
        %v4408 = vpop.f32.mrf.mxu0
        %v4409 = vadd.f32 %v1936, %v4408
        %v4410 = vpop.f32.mrf.mxu0
        %v4411 = vadd.f32 %v1938, %v4410
        %4412 = vmatmul.bf16.gmra.mxu0 %v3619
        %v4413 = vpop.f32.mrf.mxu0
        %v4414 = vadd.f32 %v1941, %v4413
        %v4415 = vpop.f32.mrf.mxu0
        %v4416 = vadd.f32 %v1943, %v4415
        %4417 = vdwg.mxu0
        %4418 = vmatpush.bf16.msra.mxu0 %v4253
        %4419 = vmatpush.bf16.msra.mxu0 %v4245
        %4420 = vmatpush.bf16.msra.mxu0 %v4237
        %4421 = vmatpush.bf16.msra.mxu0 %v4229
        %4422 = vmatpush.bf16.msra.mxu0 %v4221
        %4423 = vmatpush.bf16.msra.mxu0 %v4213
        %4424 = vmatpush.bf16.msra.mxu0 %v4205
        %4425 = vmatpush.bf16.msra.mxu0 %v4197
        %4426 = vmatmul.bf16.gmra.mxu0 %v3614
        %v4427 = vpop.f32.mrf.mxu0
        %v4428 = vadd.f32 %v4399, %v4427
        %v4429 = vpop.f32.mrf.mxu0
        %v4430 = vadd.f32 %v4401, %v4429
        %4431 = vmatmul.bf16.gmra.mxu0 %v3616
        %v4432 = vpop.f32.mrf.mxu0
        %v4433 = vadd.f32 %v4404, %v4432
        %v4434 = vpop.f32.mrf.mxu0
        %v4435 = vadd.f32 %v4406, %v4434
        %4436 = vmatmul.bf16.gmra.mxu0 %v3618
        %v4437 = vpop.f32.mrf.mxu0
        %v4438 = vadd.f32 %v4409, %v4437
        %v4439 = vpop.f32.mrf.mxu0
        %v4440 = vadd.f32 %v4411, %v4439
        %4441 = vmatmul.bf16.gmra.mxu0 %v3620
        %v4442 = vpop.f32.mrf.mxu0
        %v4443 = vadd.f32 %v4414, %v4442
        %v4444 = vpop.f32.mrf.mxu0
        %v4445 = vadd.f32 %v4416, %v4444
        %4446 = vdwg.mxu0
        %4447 = vmatpush.bf16.msra.mxu0 %v4190
        %4448 = vmatpush.bf16.msra.mxu0 %v4182
        %4449 = vmatpush.bf16.msra.mxu0 %v4174
        %4450 = vmatpush.bf16.msra.mxu0 %v4166
        %4451 = vmatpush.bf16.msra.mxu0 %v4158
        %4452 = vmatpush.bf16.msra.mxu0 %v4150
        %4453 = vmatpush.bf16.msra.mxu0 %v4142
        %4454 = vmatpush.bf16.msra.mxu0 %v4134
        %4455 = vmatmul.bf16.gmra.mxu0 %v3613
        %v4456 = vpop.f32.mrf.mxu0
        %v4457 = vadd.f32 %v1984, %v4456
        %v4458 = vpop.f32.mrf.mxu0
        %v4459 = vadd.f32 %v1986, %v4458
        %4460 = vmatmul.bf16.gmra.mxu0 %v3615
        %v4461 = vpop.f32.mrf.mxu0
        %v4462 = vadd.f32 %v1989, %v4461
        %v4463 = vpop.f32.mrf.mxu0
        %v4464 = vadd.f32 %v1991, %v4463
        %4465 = vmatmul.bf16.gmra.mxu0 %v3617
        %v4466 = vpop.f32.mrf.mxu0
        %v4467 = vadd.f32 %v1994, %v4466
        %v4468 = vpop.f32.mrf.mxu0
        %v4469 = vadd.f32 %v1996, %v4468
        %4470 = vmatmul.bf16.gmra.mxu0 %v3619
        %v4471 = vpop.f32.mrf.mxu0
        %v4472 = vadd.f32 %v1999, %v4471
        %v4473 = vpop.f32.mrf.mxu0
        %v4474 = vadd.f32 %v2001, %v4473
        %4475 = vdwg.mxu0
        %4476 = vmatpush.bf16.msra.mxu0 %v4254
        %4477 = vmatpush.bf16.msra.mxu0 %v4246
        %4478 = vmatpush.bf16.msra.mxu0 %v4238
        %4479 = vmatpush.bf16.msra.mxu0 %v4230
        %4480 = vmatpush.bf16.msra.mxu0 %v4222
        %4481 = vmatpush.bf16.msra.mxu0 %v4214
        %4482 = vmatpush.bf16.msra.mxu0 %v4206
        %4483 = vmatpush.bf16.msra.mxu0 %v4198
        %4484 = vmatmul.bf16.gmra.mxu0 %v3614
        %v4485 = vpop.f32.mrf.mxu0
        %v4486 = vadd.f32 %v4457, %v4485
        %v4487 = vpop.f32.mrf.mxu0
        %v4488 = vadd.f32 %v4459, %v4487
        %4489 = vmatmul.bf16.gmra.mxu0 %v3616
        %v4490 = vpop.f32.mrf.mxu0
        %v4491 = vadd.f32 %v4462, %v4490
        %v4492 = vpop.f32.mrf.mxu0
        %v4493 = vadd.f32 %v4464, %v4492
        %4494 = vmatmul.bf16.gmra.mxu0 %v3618
        %v4495 = vpop.f32.mrf.mxu0
        %v4496 = vadd.f32 %v4467, %v4495
        %v4497 = vpop.f32.mrf.mxu0
        %v4498 = vadd.f32 %v4469, %v4497
        %4499 = vmatmul.bf16.gmra.mxu0 %v3620
        %v4500 = vpop.f32.mrf.mxu0
        %v4501 = vadd.f32 %v4472, %v4500
        %v4502 = vpop.f32.mrf.mxu0
        %v4503 = vadd.f32 %v4474, %v4502
        %4504 = vdwg.mxu0
        %4505 = vmatpush.bf16.msra.mxu0 %v4191
        %4506 = vmatpush.bf16.msra.mxu0 %v4183
        %4507 = vmatpush.bf16.msra.mxu0 %v4175
        %4508 = vmatpush.bf16.msra.mxu0 %v4167
        %4509 = vmatpush.bf16.msra.mxu0 %v4159
        %4510 = vmatpush.bf16.msra.mxu0 %v4151
        %4511 = vmatpush.bf16.msra.mxu0 %v4143
        %4512 = vmatpush.bf16.msra.mxu0 %v4135
        %4513 = vmatmul.bf16.gmra.mxu0 %v3613
        %v4514 = vpop.f32.mrf.mxu0
        %v4515 = vadd.f32 %v2042, %v4514
        %v4516 = vpop.f32.mrf.mxu0
        %v4517 = vadd.f32 %v2044, %v4516
        %4518 = vmatmul.bf16.gmra.mxu0 %v3615
        %v4519 = vpop.f32.mrf.mxu0
        %v4520 = vadd.f32 %v2047, %v4519
        %v4521 = vpop.f32.mrf.mxu0
        %v4522 = vadd.f32 %v2049, %v4521
        %4523 = vmatmul.bf16.gmra.mxu0 %v3617
        %v4524 = vpop.f32.mrf.mxu0
        %v4525 = vadd.f32 %v2052, %v4524
        %v4526 = vpop.f32.mrf.mxu0
        %v4527 = vadd.f32 %v2054, %v4526
        %4528 = vmatmul.bf16.gmra.mxu0 %v3619
        %v4529 = vpop.f32.mrf.mxu0
        %v4530 = vadd.f32 %v2057, %v4529
        %v4531 = vpop.f32.mrf.mxu0
        %v4532 = vadd.f32 %v2059, %v4531
        %4533 = vdwg.mxu0
        %4534 = vmatpush.bf16.msra.mxu0 %v4255
        %4535 = vmatpush.bf16.msra.mxu0 %v4247
        %4536 = vmatpush.bf16.msra.mxu0 %v4239
        %4537 = vmatpush.bf16.msra.mxu0 %v4231
        %4538 = vmatpush.bf16.msra.mxu0 %v4223
        %4539 = vmatpush.bf16.msra.mxu0 %v4215
        %4540 = vmatpush.bf16.msra.mxu0 %v4207
        %4541 = vmatpush.bf16.msra.mxu0 %v4199
        %4542 = vmatmul.bf16.gmra.mxu0 %v3614
        %v4543 = vpop.f32.mrf.mxu0
        %v4544 = vadd.f32 %v4515, %v4543
        %v4545 = vpop.f32.mrf.mxu0
        %v4546 = vadd.f32 %v4517, %v4545
        %4547 = vmatmul.bf16.gmra.mxu0 %v3616
        %v4548 = vpop.f32.mrf.mxu0
        %v4549 = vadd.f32 %v4520, %v4548
        %v4550 = vpop.f32.mrf.mxu0
        %v4551 = vadd.f32 %v4522, %v4550
        %4552 = vmatmul.bf16.gmra.mxu0 %v3618
        %v4553 = vpop.f32.mrf.mxu0
        %v4554 = vadd.f32 %v4525, %v4553
        %v4555 = vpop.f32.mrf.mxu0
        %v4556 = vadd.f32 %v4527, %v4555
        %4557 = vmatmul.bf16.gmra.mxu0 %v3620
        %v4558 = vpop.f32.mrf.mxu0
        %v4559 = vadd.f32 %v4530, %v4558
        %v4560 = vpop.f32.mrf.mxu0
        %v4561 = vadd.f32 %v4532, %v4560
        %4562 = vdwg.mxu0
        %4563 = vmatpush.bf16.msra.mxu0 %v4192
        %4564 = vmatpush.bf16.msra.mxu0 %v4184
        %4565 = vmatpush.bf16.msra.mxu0 %v4176
        %4566 = vmatpush.bf16.msra.mxu0 %v4168
        %4567 = vmatpush.bf16.msra.mxu0 %v4160
        %4568 = vmatpush.bf16.msra.mxu0 %v4152
        %4569 = vmatpush.bf16.msra.mxu0 %v4144
        %4570 = vmatpush.bf16.msra.mxu0 %v4136
        %4571 = vmatmul.bf16.gmra.mxu0 %v3613
        %v4572 = vpop.f32.mrf.mxu0
        %v4573 = vadd.f32 %v2100, %v4572
        %v4574 = vpop.f32.mrf.mxu0
        %v4575 = vadd.f32 %v2102, %v4574
        %4576 = vmatmul.bf16.gmra.mxu0 %v3615
        %v4577 = vpop.f32.mrf.mxu0
        %v4578 = vadd.f32 %v2105, %v4577
        %v4579 = vpop.f32.mrf.mxu0
        %v4580 = vadd.f32 %v2107, %v4579
        %4581 = vmatmul.bf16.gmra.mxu0 %v3617
        %v4582 = vpop.f32.mrf.mxu0
        %v4583 = vadd.f32 %v2110, %v4582
        %v4584 = vpop.f32.mrf.mxu0
        %v4585 = vadd.f32 %v2112, %v4584
        %4586 = vmatmul.bf16.gmra.mxu0 %v3619
        %v4587 = vpop.f32.mrf.mxu0
        %v4588 = vadd.f32 %v2115, %v4587
        %v4589 = vpop.f32.mrf.mxu0
        %v4590 = vadd.f32 %v2117, %v4589
        %4591 = vdwg.mxu0
        %4592 = vmatpush.bf16.msra.mxu0 %v4256
        %4593 = vmatpush.bf16.msra.mxu0 %v4248
        %4594 = vmatpush.bf16.msra.mxu0 %v4240
        %4595 = vmatpush.bf16.msra.mxu0 %v4232
        %4596 = vmatpush.bf16.msra.mxu0 %v4224
        %4597 = vmatpush.bf16.msra.mxu0 %v4216
        %4598 = vmatpush.bf16.msra.mxu0 %v4208
        %4599 = vmatpush.bf16.msra.mxu0 %v4200
        %4600 = vmatmul.bf16.gmra.mxu0 %v3614
        %v4601 = vpop.f32.mrf.mxu0
        %v4602 = vadd.f32 %v4573, %v4601
        %v4603 = vpop.f32.mrf.mxu0
        %v4604 = vadd.f32 %v4575, %v4603
        %4605 = vmatmul.bf16.gmra.mxu0 %v3616
        %v4606 = vpop.f32.mrf.mxu0
        %v4607 = vadd.f32 %v4578, %v4606
        %v4608 = vpop.f32.mrf.mxu0
        %v4609 = vadd.f32 %v4580, %v4608
        %4610 = vmatmul.bf16.gmra.mxu0 %v3618
        %v4611 = vpop.f32.mrf.mxu0
        %v4612 = vadd.f32 %v4583, %v4611
        %v4613 = vpop.f32.mrf.mxu0
        %v4614 = vadd.f32 %v4585, %v4613
        %4615 = vmatmul.bf16.gmra.mxu0 %v3620
        %v4616 = vpop.f32.mrf.mxu0
        %v4617 = vadd.f32 %v4588, %v4616
        %v4618 = vpop.f32.mrf.mxu0
        %v4619 = vadd.f32 %v4590, %v4618
        %4620 = vdwg.mxu0
        %4621 = vmatpush.bf16.msra.mxu0 %v4193
        %4622 = vmatpush.bf16.msra.mxu0 %v4185
        %4623 = vmatpush.bf16.msra.mxu0 %v4177
        %4624 = vmatpush.bf16.msra.mxu0 %v4169
        %4625 = vmatpush.bf16.msra.mxu0 %v4161
        %4626 = vmatpush.bf16.msra.mxu0 %v4153
        %4627 = vmatpush.bf16.msra.mxu0 %v4145
        %4628 = vmatpush.bf16.msra.mxu0 %v4137
        %4629 = vmatmul.bf16.gmra.mxu0 %v3613
        %v4630 = vpop.f32.mrf.mxu0
        %v4631 = vadd.f32 %v2158, %v4630
        %v4632 = vpop.f32.mrf.mxu0
        %v4633 = vadd.f32 %v2160, %v4632
        %4634 = vmatmul.bf16.gmra.mxu0 %v3615
        %v4635 = vpop.f32.mrf.mxu0
        %v4636 = vadd.f32 %v2163, %v4635
        %v4637 = vpop.f32.mrf.mxu0
        %v4638 = vadd.f32 %v2165, %v4637
        %4639 = vmatmul.bf16.gmra.mxu0 %v3617
        %v4640 = vpop.f32.mrf.mxu0
        %v4641 = vadd.f32 %v2168, %v4640
        %v4642 = vpop.f32.mrf.mxu0
        %v4643 = vadd.f32 %v2170, %v4642
        %4644 = vmatmul.bf16.gmra.mxu0 %v3619
        %v4645 = vpop.f32.mrf.mxu0
        %v4646 = vadd.f32 %v2173, %v4645
        %v4647 = vpop.f32.mrf.mxu0
        %v4648 = vadd.f32 %v2175, %v4647
        %4649 = vdwg.mxu0
        %4650 = vmatpush.bf16.msra.mxu0 %v4257
        %4651 = vmatpush.bf16.msra.mxu0 %v4249
        %4652 = vmatpush.bf16.msra.mxu0 %v4241
        %4653 = vmatpush.bf16.msra.mxu0 %v4233
        %4654 = vmatpush.bf16.msra.mxu0 %v4225
        %4655 = vmatpush.bf16.msra.mxu0 %v4217
        %4656 = vmatpush.bf16.msra.mxu0 %v4209
        %4657 = vmatpush.bf16.msra.mxu0 %v4201
        %4658 = vmatmul.bf16.gmra.mxu0 %v3614
        %v4659 = vpop.f32.mrf.mxu0
        %v4660 = vadd.f32 %v4631, %v4659
        %v4661 = vpop.f32.mrf.mxu0
        %v4662 = vadd.f32 %v4633, %v4661
        %4663 = vmatmul.bf16.gmra.mxu0 %v3616
        %v4664 = vpop.f32.mrf.mxu0
        %v4665 = vadd.f32 %v4636, %v4664
        %v4666 = vpop.f32.mrf.mxu0
        %v4667 = vadd.f32 %v4638, %v4666
        %4668 = vmatmul.bf16.gmra.mxu0 %v3618
        %v4669 = vpop.f32.mrf.mxu0
        %v4670 = vadd.f32 %v4641, %v4669
        %v4671 = vpop.f32.mrf.mxu0
        %v4672 = vadd.f32 %v4643, %v4671
        %4673 = vmatmul.bf16.gmra.mxu0 %v3620
        %v4674 = vpop.f32.mrf.mxu0
        %v4675 = vadd.f32 %v4646, %v4674
        %v4676 = vpop.f32.mrf.mxu0
        %v4677 = vadd.f32 %v4648, %v4676
        %4678 = vdwg.mxu0
        %4679 = vmatpush.bf16.msra.mxu0 %v4194
        %4680 = vmatpush.bf16.msra.mxu0 %v4186
        %4681 = vmatpush.bf16.msra.mxu0 %v4178
        %4682 = vmatpush.bf16.msra.mxu0 %v4170
        %4683 = vmatpush.bf16.msra.mxu0 %v4162
        %4684 = vmatpush.bf16.msra.mxu0 %v4154
        %4685 = vmatpush.bf16.msra.mxu0 %v4146
        %4686 = vmatpush.bf16.msra.mxu0 %v4138
        %4687 = vmatmul.bf16.gmra.mxu0 %v3613
        %v4688 = vpop.f32.mrf.mxu0
        %v4689 = vadd.f32 %v2216, %v4688
        %v4690 = vpop.f32.mrf.mxu0
        %v4691 = vadd.f32 %v2218, %v4690
        %4692 = vmatmul.bf16.gmra.mxu0 %v3615
        %v4693 = vpop.f32.mrf.mxu0
        %v4694 = vadd.f32 %v2221, %v4693
        %v4695 = vpop.f32.mrf.mxu0
        %v4696 = vadd.f32 %v2223, %v4695
        %4697 = vmatmul.bf16.gmra.mxu0 %v3617
        %v4698 = vpop.f32.mrf.mxu0
        %v4699 = vadd.f32 %v2226, %v4698
        %v4700 = vpop.f32.mrf.mxu0
        %v4701 = vadd.f32 %v2228, %v4700
        %4702 = vmatmul.bf16.gmra.mxu0 %v3619
        %v4703 = vpop.f32.mrf.mxu0
        %v4704 = vadd.f32 %v2231, %v4703
        %v4705 = vpop.f32.mrf.mxu0
        %v4706 = vadd.f32 %v2233, %v4705
        %4707 = vdwg.mxu0
        %4708 = vmatpush.bf16.msra.mxu0 %v4258
        %4709 = vmatpush.bf16.msra.mxu0 %v4250
        %4710 = vmatpush.bf16.msra.mxu0 %v4242
        %4711 = vmatpush.bf16.msra.mxu0 %v4234
        %4712 = vmatpush.bf16.msra.mxu0 %v4226
        %4713 = vmatpush.bf16.msra.mxu0 %v4218
        %4714 = vmatpush.bf16.msra.mxu0 %v4210
        %4715 = vmatpush.bf16.msra.mxu0 %v4202
        %4716 = vmatmul.bf16.gmra.mxu0 %v3614
        %v4717 = vpop.f32.mrf.mxu0
        %v4718 = vadd.f32 %v4689, %v4717
        %v4719 = vpop.f32.mrf.mxu0
        %v4720 = vadd.f32 %v4691, %v4719
        %4721 = vmatmul.bf16.gmra.mxu0 %v3616
        %v4722 = vpop.f32.mrf.mxu0
        %v4723 = vadd.f32 %v4694, %v4722
        %v4724 = vpop.f32.mrf.mxu0
        %v4725 = vadd.f32 %v4696, %v4724
        %4726 = vmatmul.bf16.gmra.mxu0 %v3618
        %v4727 = vpop.f32.mrf.mxu0
        %v4728 = vadd.f32 %v4699, %v4727
        %v4729 = vpop.f32.mrf.mxu0
        %v4730 = vadd.f32 %v4701, %v4729
        %4731 = vmatmul.bf16.gmra.mxu0 %v3620
        %v4732 = vpop.f32.mrf.mxu0
        %v4733 = vadd.f32 %v4704, %v4732
        %v4734 = vpop.f32.mrf.mxu0
        %v4735 = vadd.f32 %v4706, %v4734
        %4736 = vdwg.mxu0
        %4737 = vmatpush.bf16.msra.mxu0 %v4195
        %4738 = vmatpush.bf16.msra.mxu0 %v4187
        %4739 = vmatpush.bf16.msra.mxu0 %v4179
        %4740 = vmatpush.bf16.msra.mxu0 %v4171
        %4741 = vmatpush.bf16.msra.mxu0 %v4163
        %4742 = vmatpush.bf16.msra.mxu0 %v4155
        %4743 = vmatpush.bf16.msra.mxu0 %v4147
        %4744 = vmatpush.bf16.msra.mxu0 %v4139
        %4745 = vmatmul.bf16.gmra.mxu0 %v3613
        %v4746 = vpop.f32.mrf.mxu0
        %v4747 = vadd.f32 %v2274, %v4746
        %v4748 = vpop.f32.mrf.mxu0
        %v4749 = vadd.f32 %v2276, %v4748
        %4750 = vmatmul.bf16.gmra.mxu0 %v3615
        %v4751 = vpop.f32.mrf.mxu0
        %v4752 = vadd.f32 %v2279, %v4751
        %v4753 = vpop.f32.mrf.mxu0
        %v4754 = vadd.f32 %v2281, %v4753
        %4755 = vmatmul.bf16.gmra.mxu0 %v3617
        %v4756 = vpop.f32.mrf.mxu0
        %v4757 = vadd.f32 %v2284, %v4756
        %v4758 = vpop.f32.mrf.mxu0
        %v4759 = vadd.f32 %v2286, %v4758
        %4760 = vmatmul.bf16.gmra.mxu0 %v3619
        %v4761 = vpop.f32.mrf.mxu0
        %v4762 = vadd.f32 %v2289, %v4761
        %v4763 = vpop.f32.mrf.mxu0
        %v4764 = vadd.f32 %v2291, %v4763
        %4765 = vdwg.mxu0
        %4766 = vmatpush.bf16.msra.mxu0 %v4259
        %4767 = vmatpush.bf16.msra.mxu0 %v4251
        %4768 = vmatpush.bf16.msra.mxu0 %v4243
        %4769 = vmatpush.bf16.msra.mxu0 %v4235
        %4770 = vmatpush.bf16.msra.mxu0 %v4227
        %4771 = vmatpush.bf16.msra.mxu0 %v4219
        %4772 = vmatpush.bf16.msra.mxu0 %v4211
        %4773 = vmatpush.bf16.msra.mxu0 %v4203
        %4774 = vmatmul.bf16.gmra.mxu0 %v3614
        %v4775 = vpop.f32.mrf.mxu0
        %v4776 = vadd.f32 %v4747, %v4775
        %v4777 = vpop.f32.mrf.mxu0
        %v4778 = vadd.f32 %v4749, %v4777
        %4779 = vmatmul.bf16.gmra.mxu0 %v3616
        %v4780 = vpop.f32.mrf.mxu0
        %v4781 = vadd.f32 %v4752, %v4780
        %v4782 = vpop.f32.mrf.mxu0
        %v4783 = vadd.f32 %v4754, %v4782
        %4784 = vmatmul.bf16.gmra.mxu0 %v3618
        %v4785 = vpop.f32.mrf.mxu0
        %v4786 = vadd.f32 %v4757, %v4785
        %v4787 = vpop.f32.mrf.mxu0
        %v4788 = vadd.f32 %v4759, %v4787
        %4789 = vmatmul.bf16.gmra.mxu0 %v3620
        %v4790 = vpop.f32.mrf.mxu0
        %v4791 = vadd.f32 %v4762, %v4790
        %v4792 = vpop.f32.mrf.mxu0
        %v4793 = vadd.f32 %v4764, %v4792
        %4794 = vdwg.mxu0
        %4795 = vmatpush.bf16.msra.mxu0 %v4196
        %4796 = vmatpush.bf16.msra.mxu0 %v4188
        %4797 = vmatpush.bf16.msra.mxu0 %v4180
        %4798 = vmatpush.bf16.msra.mxu0 %v4172
        %4799 = vmatpush.bf16.msra.mxu0 %v4164
        %4800 = vmatpush.bf16.msra.mxu0 %v4156
        %4801 = vmatpush.bf16.msra.mxu0 %v4148
        %4802 = vmatpush.bf16.msra.mxu0 %v4140
        %4803 = vmatmul.bf16.gmra.mxu0 %v3613
        %v4804 = vpop.f32.mrf.mxu0
        %v4805 = vadd.f32 %v2332, %v4804
        %v4806 = vpop.f32.mrf.mxu0
        %v4807 = vadd.f32 %v2334, %v4806
        %4808 = vmatmul.bf16.gmra.mxu0 %v3615
        %v4809 = vpop.f32.mrf.mxu0
        %v4810 = vadd.f32 %v2337, %v4809
        %v4811 = vpop.f32.mrf.mxu0
        %v4812 = vadd.f32 %v2339, %v4811
        %4813 = vmatmul.bf16.gmra.mxu0 %v3617
        %v4814 = vpop.f32.mrf.mxu0
        %v4815 = vadd.f32 %v2342, %v4814
        %v4816 = vpop.f32.mrf.mxu0
        %v4817 = vadd.f32 %v2344, %v4816
        %4818 = vmatmul.bf16.gmra.mxu0 %v3619
        %v4819 = vpop.f32.mrf.mxu0
        %v4820 = vadd.f32 %v2347, %v4819
        %v4821 = vpop.f32.mrf.mxu0
        %v4822 = vadd.f32 %v2349, %v4821
        %4823 = vdwg.mxu0
        %4824 = vmatpush.bf16.msra.mxu0 %v4260
        %4825 = vmatpush.bf16.msra.mxu0 %v4252
        %4826 = vmatpush.bf16.msra.mxu0 %v4244
        %4827 = vmatpush.bf16.msra.mxu0 %v4236
        %4828 = vmatpush.bf16.msra.mxu0 %v4228
        %4829 = vmatpush.bf16.msra.mxu0 %v4220
        %4830 = vmatpush.bf16.msra.mxu0 %v4212
        %4831 = vmatpush.bf16.msra.mxu0 %v4204
        %4832 = vmatmul.bf16.gmra.mxu0 %v3614
        %v4833 = vpop.f32.mrf.mxu0
        %v4834 = vadd.f32 %v4805, %v4833
        %v4835 = vpop.f32.mrf.mxu0
        %v4836 = vadd.f32 %v4807, %v4835
        %4837 = vmatmul.bf16.gmra.mxu0 %v3616
        %v4838 = vpop.f32.mrf.mxu0
        %v4839 = vadd.f32 %v4810, %v4838
        %v4840 = vpop.f32.mrf.mxu0
        %v4841 = vadd.f32 %v4812, %v4840
        %4842 = vmatmul.bf16.gmra.mxu0 %v3618
        %v4843 = vpop.f32.mrf.mxu0
        %v4844 = vadd.f32 %v4815, %v4843
        %v4845 = vpop.f32.mrf.mxu0
        %v4846 = vadd.f32 %v4817, %v4845
        %4847 = vmatmul.bf16.gmra.mxu0 %v3620
        %v4848 = vpop.f32.mrf.mxu0
        %v4849 = vadd.f32 %v4820, %v4848
        %v4850 = vpop.f32.mrf.mxu0
        %v4851 = vadd.f32 %v4822, %v4850
        %4852 = vdwg.mxu0
        %v4853 = vld [vmem:[%s15] sm:$0xff]
        %v4855 = vperm.slane %v4853, 0
        %v4856 = vperm.slane %v4853, 1
        %v4857 = vperm.slane %v4853, 2
        %v4858 = vperm.slane %v4853, 3
        %v4859 = vperm.slane %v4853, 4
        %v4860 = vperm.slane %v4853, 5
        %v4861 = vperm.slane %v4853, 6
        %v4862 = vperm.slane %v4853, 7
        %v4871 = vadd.f32 %v4428, %v4855
        %v4872 = vadd.f32 %v4486, %v4856
        %v4873 = vadd.f32 %v4544, %v4857
        %v4874 = vadd.f32 %v4602, %v4858
        %v4875 = vadd.f32 %v4660, %v4859
        %v4876 = vadd.f32 %v4718, %v4860
        %v4877 = vadd.f32 %v4776, %v4861
        %v4878 = vadd.f32 %v4834, %v4862
        %v4879 = vadd.f32 %v4430, %v4855
        %v4880 = vadd.f32 %v4488, %v4856
        %v4881 = vadd.f32 %v4546, %v4857
        %v4882 = vadd.f32 %v4604, %v4858
        %v4883 = vadd.f32 %v4662, %v4859
        %v4884 = vadd.f32 %v4720, %v4860
        %v4885 = vadd.f32 %v4778, %v4861
        %v4886 = vadd.f32 %v4836, %v4862
        %v4887 = vadd.f32 %v4433, %v4855
        %v4888 = vadd.f32 %v4491, %v4856
        %v4889 = vadd.f32 %v4549, %v4857
        %v4890 = vadd.f32 %v4607, %v4858
        %v4891 = vadd.f32 %v4665, %v4859
        %v4892 = vadd.f32 %v4723, %v4860
        %v4893 = vadd.f32 %v4781, %v4861
        %v4894 = vadd.f32 %v4839, %v4862
        %v4895 = vadd.f32 %v4435, %v4855
        %v4896 = vadd.f32 %v4493, %v4856
        %v4897 = vadd.f32 %v4551, %v4857
        %v4898 = vadd.f32 %v4609, %v4858
        %v4899 = vadd.f32 %v4667, %v4859
        %v4900 = vadd.f32 %v4725, %v4860
        %v4901 = vadd.f32 %v4783, %v4861
        %v4902 = vadd.f32 %v4841, %v4862
        %v4903 = vadd.f32 %v4438, %v4855
        %v4904 = vadd.f32 %v4496, %v4856
        %v4905 = vadd.f32 %v4554, %v4857
        %v4906 = vadd.f32 %v4612, %v4858
        %v4907 = vadd.f32 %v4670, %v4859
        %v4908 = vadd.f32 %v4728, %v4860
        %v4909 = vadd.f32 %v4786, %v4861
        %v4910 = vadd.f32 %v4844, %v4862
        %v4911 = vadd.f32 %v4440, %v4855
        %v4912 = vadd.f32 %v4498, %v4856
        %v4913 = vadd.f32 %v4556, %v4857
        %v4914 = vadd.f32 %v4614, %v4858
        %v4915 = vadd.f32 %v4672, %v4859
        %v4916 = vadd.f32 %v4730, %v4860
        %v4917 = vadd.f32 %v4788, %v4861
        %v4918 = vadd.f32 %v4846, %v4862
        %v4919 = vadd.f32 %v4443, %v4855
        %v4920 = vadd.f32 %v4501, %v4856
        %v4921 = vadd.f32 %v4559, %v4857
        %v4922 = vadd.f32 %v4617, %v4858
        %v4923 = vadd.f32 %v4675, %v4859
        %v4924 = vadd.f32 %v4733, %v4860
        %v4925 = vadd.f32 %v4791, %v4861
        %v4926 = vadd.f32 %v4849, %v4862
        %v4927 = vadd.f32 %v4445, %v4855
        %v4928 = vadd.f32 %v4503, %v4856
        %v4929 = vadd.f32 %v4561, %v4857
        %v4930 = vadd.f32 %v4619, %v4858
        %v4931 = vadd.f32 %v4677, %v4859
        %v4932 = vadd.f32 %v4735, %v4860
        %v4933 = vadd.f32 %v4793, %v4861
        %v4934 = vadd.f32 %v4851, %v4862
        %v4935 = vxor.u32 %v4871, 2147483648
        %v4936 = vxor.u32 %v4872, 2147483648
        %v4937 = vxor.u32 %v4879, 2147483648
        %v4938 = vxor.u32 %v4880, 2147483648
        %v4939 = vxor.u32 %v4887, 2147483648
        %v4940 = vxor.u32 %v4888, 2147483648
        %v4941 = vxor.u32 %v4895, 2147483648
        %v4942 = vxor.u32 %v4896, 2147483648
        %v4943 = vxor.u32 %v4903, 2147483648
        %v4944 = vxor.u32 %v4904, 2147483648
        %v4945 = vxor.u32 %v4911, 2147483648
        %v4946 = vxor.u32 %v4912, 2147483648
        %v4947 = vxor.u32 %v4919, 2147483648
        %v4948 = vxor.u32 %v4920, 2147483648
        %v4949 = vxor.u32 %v4927, 2147483648
        %v4950 = vxor.u32 %v4928, 2147483648
        %v4951 = vmul.f32 %v4935, 1.442695
        %v4952 = vpow.pop %v4951
        %v4953 = vmul.f32 %v4936, 1.442695
        %v4954 = vpow.pop %v4953
        %v4955 = vmul.f32 %v4937, 1.442695
        %v4956 = vpow.pop %v4955
        %v4957 = vmul.f32 %v4938, 1.442695
        %v4958 = vpow.pop %v4957
        %v4959 = vmul.f32 %v4939, 1.442695
        %v4960 = vpow.pop %v4959
        %v4961 = vmul.f32 %v4940, 1.442695
        %v4962 = vpow.pop %v4961
        %v4963 = vmul.f32 %v4941, 1.442695
        %v4964 = vpow.pop %v4963
        %v4965 = vmul.f32 %v4942, 1.442695
        %v4966 = vpow.pop %v4965
        %v4967 = vmul.f32 %v4943, 1.442695
        %v4968 = vpow.pop %v4967
        %v4969 = vmul.f32 %v4944, 1.442695
        %v4970 = vpow.pop %v4969
        %v4971 = vmul.f32 %v4945, 1.442695
        %v4972 = vpow.pop %v4971
        %v4973 = vmul.f32 %v4946, 1.442695
        %v4974 = vpow.pop %v4973
        %v4975 = vmul.f32 %v4947, 1.442695
        %v4976 = vpow.pop %v4975
        %v4977 = vmul.f32 %v4948, 1.442695
        %v4978 = vpow.pop %v4977
        %v4979 = vmul.f32 %v4949, 1.442695
        %v4980 = vpow.pop %v4979
        %v4981 = vmul.f32 %v4950, 1.442695
        %v4982 = vpow.pop %v4981
        %v4983 = vadd.f32 %v4952, 1.0
        %v4984 = vadd.f32 %v4954, 1.0
        %v4985 = vadd.f32 %v4956, 1.0
        %v4986 = vadd.f32 %v4958, 1.0
        %v4987 = vadd.f32 %v4960, 1.0
        %v4988 = vadd.f32 %v4962, 1.0
        %v4989 = vadd.f32 %v4964, 1.0
        %v4990 = vadd.f32 %v4966, 1.0
        %v4991 = vadd.f32 %v4968, 1.0
        %v4992 = vadd.f32 %v4970, 1.0
        %v4993 = vadd.f32 %v4972, 1.0
        %v4994 = vadd.f32 %v4974, 1.0
        %v4995 = vadd.f32 %v4976, 1.0
        %v4996 = vadd.f32 %v4978, 1.0
        %v4997 = vadd.f32 %v4980, 1.0
        %v4998 = vadd.f32 %v4982, 1.0
        %v4999 = vrcp.pop %v4983
        %v5000 = vmul.f32 %v4983, %v4999
        %v5001 = vsub.f32 1.0, %v5000
        %v5002 = vmul.f32 %v4999, %v5001
        %v5003 = vadd.f32 %v4999, %v5002
        %vm5004 = vweird.f32 %v4983
        %vm5005 = vweird.f32 %v4999
        %vm5006 = vmor %vm5004, %vm5005
        %v5007 = vsel %vm5006, %v4999, %v5003
        %v5008 = vand.u32 2147483647, %v4983
        %vm5009 = vcmp.eq.f32.partialorder %v5008, 8.507059e+37
        %v5010 = vand.u32 %v4983, 2147483648
        %v5011 = vor.u32 1.1754944e-38, %v5010
        %v5012 = vsel %vm5009, %v5011, %v5007
        %v5013 = vmul.f32 1.0, %v5012
        %v5014 = vrcp.pop %v4984
        %v5015 = vmul.f32 %v4984, %v5014
        %v5016 = vsub.f32 1.0, %v5015
        %v5017 = vmul.f32 %v5014, %v5016
        %v5018 = vadd.f32 %v5014, %v5017
        %vm5019 = vweird.f32 %v4984
        %vm5020 = vweird.f32 %v5014
        %vm5021 = vmor %vm5019, %vm5020
        %v5022 = vsel %vm5021, %v5014, %v5018
        %v5023 = vand.u32 2147483647, %v4984
        %vm5024 = vcmp.eq.f32.partialorder %v5023, 8.507059e+37
        %v5025 = vand.u32 %v4984, 2147483648
        %v5026 = vor.u32 1.1754944e-38, %v5025
        %v5027 = vsel %vm5024, %v5026, %v5022
        %v5028 = vmul.f32 1.0, %v5027
        %v5029 = vrcp.pop %v4985
        %v5030 = vmul.f32 %v4985, %v5029
        %v5031 = vsub.f32 1.0, %v5030
        %v5032 = vmul.f32 %v5029, %v5031
        %v5033 = vadd.f32 %v5029, %v5032
        %vm5034 = vweird.f32 %v4985
        %vm5035 = vweird.f32 %v5029
        %vm5036 = vmor %vm5034, %vm5035
        %v5037 = vsel %vm5036, %v5029, %v5033
        %v5038 = vand.u32 2147483647, %v4985
        %vm5039 = vcmp.eq.f32.partialorder %v5038, 8.507059e+37
        %v5040 = vand.u32 %v4985, 2147483648
        %v5041 = vor.u32 1.1754944e-38, %v5040
        %v5042 = vsel %vm5039, %v5041, %v5037
        %v5043 = vmul.f32 1.0, %v5042
        %v5044 = vrcp.pop %v4986
        %v5045 = vmul.f32 %v4986, %v5044
        %v5046 = vsub.f32 1.0, %v5045
        %v5047 = vmul.f32 %v5044, %v5046
        %v5048 = vadd.f32 %v5044, %v5047
        %vm5049 = vweird.f32 %v4986
        %vm5050 = vweird.f32 %v5044
        %vm5051 = vmor %vm5049, %vm5050
        %v5052 = vsel %vm5051, %v5044, %v5048
        %v5053 = vand.u32 2147483647, %v4986
        %vm5054 = vcmp.eq.f32.partialorder %v5053, 8.507059e+37
        %v5055 = vand.u32 %v4986, 2147483648
        %v5056 = vor.u32 1.1754944e-38, %v5055
        %v5057 = vsel %vm5054, %v5056, %v5052
        %v5058 = vmul.f32 1.0, %v5057
        %v5059 = vrcp.pop %v4987
        %v5060 = vmul.f32 %v4987, %v5059
        %v5061 = vsub.f32 1.0, %v5060
        %v5062 = vmul.f32 %v5059, %v5061
        %v5063 = vadd.f32 %v5059, %v5062
        %vm5064 = vweird.f32 %v4987
        %vm5065 = vweird.f32 %v5059
        %vm5066 = vmor %vm5064, %vm5065
        %v5067 = vsel %vm5066, %v5059, %v5063
        %v5068 = vand.u32 2147483647, %v4987
        %vm5069 = vcmp.eq.f32.partialorder %v5068, 8.507059e+37
        %v5070 = vand.u32 %v4987, 2147483648
        %v5071 = vor.u32 1.1754944e-38, %v5070
        %v5072 = vsel %vm5069, %v5071, %v5067
        %v5073 = vmul.f32 1.0, %v5072
        %v5074 = vrcp.pop %v4988
        %v5075 = vmul.f32 %v4988, %v5074
        %v5076 = vsub.f32 1.0, %v5075
        %v5077 = vmul.f32 %v5074, %v5076
        %v5078 = vadd.f32 %v5074, %v5077
        %vm5079 = vweird.f32 %v4988
        %vm5080 = vweird.f32 %v5074
        %vm5081 = vmor %vm5079, %vm5080
        %v5082 = vsel %vm5081, %v5074, %v5078
        %v5083 = vand.u32 2147483647, %v4988
        %vm5084 = vcmp.eq.f32.partialorder %v5083, 8.507059e+37
        %v5085 = vand.u32 %v4988, 2147483648
        %v5086 = vor.u32 1.1754944e-38, %v5085
        %v5087 = vsel %vm5084, %v5086, %v5082
        %v5088 = vmul.f32 1.0, %v5087
        %v5089 = vrcp.pop %v4989
        %v5090 = vmul.f32 %v4989, %v5089
        %v5091 = vsub.f32 1.0, %v5090
        %v5092 = vmul.f32 %v5089, %v5091
        %v5093 = vadd.f32 %v5089, %v5092
        %vm5094 = vweird.f32 %v4989
        %vm5095 = vweird.f32 %v5089
        %vm5096 = vmor %vm5094, %vm5095
        %v5097 = vsel %vm5096, %v5089, %v5093
        %v5098 = vand.u32 2147483647, %v4989
        %vm5099 = vcmp.eq.f32.partialorder %v5098, 8.507059e+37
        %v5100 = vand.u32 %v4989, 2147483648
        %v5101 = vor.u32 1.1754944e-38, %v5100
        %v5102 = vsel %vm5099, %v5101, %v5097
        %v5103 = vmul.f32 1.0, %v5102
        %v5104 = vrcp.pop %v4990
        %v5105 = vmul.f32 %v4990, %v5104
        %v5106 = vsub.f32 1.0, %v5105
        %v5107 = vmul.f32 %v5104, %v5106
        %v5108 = vadd.f32 %v5104, %v5107
        %vm5109 = vweird.f32 %v4990
        %vm5110 = vweird.f32 %v5104
        %vm5111 = vmor %vm5109, %vm5110
        %v5112 = vsel %vm5111, %v5104, %v5108
        %v5113 = vand.u32 2147483647, %v4990
        %vm5114 = vcmp.eq.f32.partialorder %v5113, 8.507059e+37
        %v5115 = vand.u32 %v4990, 2147483648
        %v5116 = vor.u32 1.1754944e-38, %v5115
        %v5117 = vsel %vm5114, %v5116, %v5112
        %v5118 = vmul.f32 1.0, %v5117
        %v5119 = vrcp.pop %v4991
        %v5120 = vmul.f32 %v4991, %v5119
        %v5121 = vsub.f32 1.0, %v5120
        %v5122 = vmul.f32 %v5119, %v5121
        %v5123 = vadd.f32 %v5119, %v5122
        %vm5124 = vweird.f32 %v4991
        %vm5125 = vweird.f32 %v5119
        %vm5126 = vmor %vm5124, %vm5125
        %v5127 = vsel %vm5126, %v5119, %v5123
        %v5128 = vand.u32 2147483647, %v4991
        %vm5129 = vcmp.eq.f32.partialorder %v5128, 8.507059e+37
        %v5130 = vand.u32 %v4991, 2147483648
        %v5131 = vor.u32 1.1754944e-38, %v5130
        %v5132 = vsel %vm5129, %v5131, %v5127
        %v5133 = vmul.f32 1.0, %v5132
        %v5134 = vrcp.pop %v4992
        %v5135 = vmul.f32 %v4992, %v5134
        %v5136 = vsub.f32 1.0, %v5135
        %v5137 = vmul.f32 %v5134, %v5136
        %v5138 = vadd.f32 %v5134, %v5137
        %vm5139 = vweird.f32 %v4992
        %vm5140 = vweird.f32 %v5134
        %vm5141 = vmor %vm5139, %vm5140
        %v5142 = vsel %vm5141, %v5134, %v5138
        %v5143 = vand.u32 2147483647, %v4992
        %vm5144 = vcmp.eq.f32.partialorder %v5143, 8.507059e+37
        %v5145 = vand.u32 %v4992, 2147483648
        %v5146 = vor.u32 1.1754944e-38, %v5145
        %v5147 = vsel %vm5144, %v5146, %v5142
        %v5148 = vmul.f32 1.0, %v5147
        %v5149 = vrcp.pop %v4993
        %v5150 = vmul.f32 %v4993, %v5149
        %v5151 = vsub.f32 1.0, %v5150
        %v5152 = vmul.f32 %v5149, %v5151
        %v5153 = vadd.f32 %v5149, %v5152
        %vm5154 = vweird.f32 %v4993
        %vm5155 = vweird.f32 %v5149
        %vm5156 = vmor %vm5154, %vm5155
        %v5157 = vsel %vm5156, %v5149, %v5153
        %v5158 = vand.u32 2147483647, %v4993
        %vm5159 = vcmp.eq.f32.partialorder %v5158, 8.507059e+37
        %v5160 = vand.u32 %v4993, 2147483648
        %v5161 = vor.u32 1.1754944e-38, %v5160
        %v5162 = vsel %vm5159, %v5161, %v5157
        %v5163 = vmul.f32 1.0, %v5162
        %v5164 = vrcp.pop %v4994
        %v5165 = vmul.f32 %v4994, %v5164
        %v5166 = vsub.f32 1.0, %v5165
        %v5167 = vmul.f32 %v5164, %v5166
        %v5168 = vadd.f32 %v5164, %v5167
        %vm5169 = vweird.f32 %v4994
        %vm5170 = vweird.f32 %v5164
        %vm5171 = vmor %vm5169, %vm5170
        %v5172 = vsel %vm5171, %v5164, %v5168
        %v5173 = vand.u32 2147483647, %v4994
        %vm5174 = vcmp.eq.f32.partialorder %v5173, 8.507059e+37
        %v5175 = vand.u32 %v4994, 2147483648
        %v5176 = vor.u32 1.1754944e-38, %v5175
        %v5177 = vsel %vm5174, %v5176, %v5172
        %v5178 = vmul.f32 1.0, %v5177
        %v5179 = vrcp.pop %v4995
        %v5180 = vmul.f32 %v4995, %v5179
        %v5181 = vsub.f32 1.0, %v5180
        %v5182 = vmul.f32 %v5179, %v5181
        %v5183 = vadd.f32 %v5179, %v5182
        %vm5184 = vweird.f32 %v4995
        %vm5185 = vweird.f32 %v5179
        %vm5186 = vmor %vm5184, %vm5185
        %v5187 = vsel %vm5186, %v5179, %v5183
        %v5188 = vand.u32 2147483647, %v4995
        %vm5189 = vcmp.eq.f32.partialorder %v5188, 8.507059e+37
        %v5190 = vand.u32 %v4995, 2147483648
        %v5191 = vor.u32 1.1754944e-38, %v5190
        %v5192 = vsel %vm5189, %v5191, %v5187
        %v5193 = vmul.f32 1.0, %v5192
        %v5194 = vrcp.pop %v4996
        %v5195 = vmul.f32 %v4996, %v5194
        %v5196 = vsub.f32 1.0, %v5195
        %v5197 = vmul.f32 %v5194, %v5196
        %v5198 = vadd.f32 %v5194, %v5197
        %vm5199 = vweird.f32 %v4996
        %vm5200 = vweird.f32 %v5194
        %vm5201 = vmor %vm5199, %vm5200
        %v5202 = vsel %vm5201, %v5194, %v5198
        %v5203 = vand.u32 2147483647, %v4996
        %vm5204 = vcmp.eq.f32.partialorder %v5203, 8.507059e+37
        %v5205 = vand.u32 %v4996, 2147483648
        %v5206 = vor.u32 1.1754944e-38, %v5205
        %v5207 = vsel %vm5204, %v5206, %v5202
        %v5208 = vmul.f32 1.0, %v5207
        %v5209 = vrcp.pop %v4997
        %v5210 = vmul.f32 %v4997, %v5209
        %v5211 = vsub.f32 1.0, %v5210
        %v5212 = vmul.f32 %v5209, %v5211
        %v5213 = vadd.f32 %v5209, %v5212
        %vm5214 = vweird.f32 %v4997
        %vm5215 = vweird.f32 %v5209
        %vm5216 = vmor %vm5214, %vm5215
        %v5217 = vsel %vm5216, %v5209, %v5213
        %v5218 = vand.u32 2147483647, %v4997
        %vm5219 = vcmp.eq.f32.partialorder %v5218, 8.507059e+37
        %v5220 = vand.u32 %v4997, 2147483648
        %v5221 = vor.u32 1.1754944e-38, %v5220
        %v5222 = vsel %vm5219, %v5221, %v5217
        %v5223 = vmul.f32 1.0, %v5222
        %v5224 = vrcp.pop %v4998
        %v5225 = vmul.f32 %v4998, %v5224
        %v5226 = vsub.f32 1.0, %v5225
        %v5227 = vmul.f32 %v5224, %v5226
        %v5228 = vadd.f32 %v5224, %v5227
        %vm5229 = vweird.f32 %v4998
        %vm5230 = vweird.f32 %v5224
        %vm5231 = vmor %vm5229, %vm5230
        %v5232 = vsel %vm5231, %v5224, %v5228
        %v5233 = vand.u32 2147483647, %v4998
        %vm5234 = vcmp.eq.f32.partialorder %v5233, 8.507059e+37
        %v5235 = vand.u32 %v4998, 2147483648
        %v5236 = vor.u32 1.1754944e-38, %v5235
        %v5237 = vsel %vm5234, %v5236, %v5232
        %v5238 = vmul.f32 1.0, %v5237
        %v5239 = vxor.u32 %v4873, 2147483648
        %v5240 = vxor.u32 %v4874, 2147483648
        %v5241 = vxor.u32 %v4881, 2147483648
        %v5242 = vxor.u32 %v4882, 2147483648
        %v5243 = vxor.u32 %v4889, 2147483648
        %v5244 = vxor.u32 %v4890, 2147483648
        %v5245 = vxor.u32 %v4897, 2147483648
        %v5246 = vxor.u32 %v4898, 2147483648
        %v5247 = vxor.u32 %v4905, 2147483648
        %v5248 = vxor.u32 %v4906, 2147483648
        %v5249 = vxor.u32 %v4913, 2147483648
        %v5250 = vxor.u32 %v4914, 2147483648
        %v5251 = vxor.u32 %v4921, 2147483648
        %v5252 = vxor.u32 %v4922, 2147483648
        %v5253 = vxor.u32 %v4929, 2147483648
        %v5254 = vxor.u32 %v4930, 2147483648
        %v5255 = vmul.f32 %v5239, 1.442695
        %v5256 = vpow.pop %v5255
        %v5257 = vmul.f32 %v5240, 1.442695
        %v5258 = vpow.pop %v5257
        %v5259 = vmul.f32 %v5241, 1.442695
        %v5260 = vpow.pop %v5259
        %v5261 = vmul.f32 %v5242, 1.442695
        %v5262 = vpow.pop %v5261
        %v5263 = vmul.f32 %v5243, 1.442695
        %v5264 = vpow.pop %v5263
        %v5265 = vmul.f32 %v5244, 1.442695
        %v5266 = vpow.pop %v5265
        %v5267 = vmul.f32 %v5245, 1.442695
        %v5268 = vpow.pop %v5267
        %v5269 = vmul.f32 %v5246, 1.442695
        %v5270 = vpow.pop %v5269
        %v5271 = vmul.f32 %v5247, 1.442695
        %v5272 = vpow.pop %v5271
        %v5273 = vmul.f32 %v5248, 1.442695
        %v5274 = vpow.pop %v5273
        %v5275 = vmul.f32 %v5249, 1.442695
        %v5276 = vpow.pop %v5275
        %v5277 = vmul.f32 %v5250, 1.442695
        %v5278 = vpow.pop %v5277
        %v5279 = vmul.f32 %v5251, 1.442695
        %v5280 = vpow.pop %v5279
        %v5281 = vmul.f32 %v5252, 1.442695
        %v5282 = vpow.pop %v5281
        %v5283 = vmul.f32 %v5253, 1.442695
        %v5284 = vpow.pop %v5283
        %v5285 = vmul.f32 %v5254, 1.442695
        %v5286 = vpow.pop %v5285
        %v5287 = vadd.f32 %v5256, 1.0
        %v5288 = vadd.f32 %v5258, 1.0
        %v5289 = vadd.f32 %v5260, 1.0
        %v5290 = vadd.f32 %v5262, 1.0
        %v5291 = vadd.f32 %v5264, 1.0
        %v5292 = vadd.f32 %v5266, 1.0
        %v5293 = vadd.f32 %v5268, 1.0
        %v5294 = vadd.f32 %v5270, 1.0
        %v5295 = vadd.f32 %v5272, 1.0
        %v5296 = vadd.f32 %v5274, 1.0
        %v5297 = vadd.f32 %v5276, 1.0
        %v5298 = vadd.f32 %v5278, 1.0
        %v5299 = vadd.f32 %v5280, 1.0
        %v5300 = vadd.f32 %v5282, 1.0
        %v5301 = vadd.f32 %v5284, 1.0
        %v5302 = vadd.f32 %v5286, 1.0
        %v5303 = vrcp.pop %v5287
        %v5304 = vmul.f32 %v5287, %v5303
        %v5305 = vsub.f32 1.0, %v5304
        %v5306 = vmul.f32 %v5303, %v5305
        %v5307 = vadd.f32 %v5303, %v5306
        %vm5308 = vweird.f32 %v5287
        %vm5309 = vweird.f32 %v5303
        %vm5310 = vmor %vm5308, %vm5309
        %v5311 = vsel %vm5310, %v5303, %v5307
        %v5312 = vand.u32 2147483647, %v5287
        %vm5313 = vcmp.eq.f32.partialorder %v5312, 8.507059e+37
        %v5314 = vand.u32 %v5287, 2147483648
        %v5315 = vor.u32 1.1754944e-38, %v5314
        %v5316 = vsel %vm5313, %v5315, %v5311
        %v5317 = vmul.f32 1.0, %v5316
        %v5318 = vrcp.pop %v5288
        %v5319 = vmul.f32 %v5288, %v5318
        %v5320 = vsub.f32 1.0, %v5319
        %v5321 = vmul.f32 %v5318, %v5320
        %v5322 = vadd.f32 %v5318, %v5321
        %vm5323 = vweird.f32 %v5288
        %vm5324 = vweird.f32 %v5318
        %vm5325 = vmor %vm5323, %vm5324
        %v5326 = vsel %vm5325, %v5318, %v5322
        %v5327 = vand.u32 2147483647, %v5288
        %vm5328 = vcmp.eq.f32.partialorder %v5327, 8.507059e+37
        %v5329 = vand.u32 %v5288, 2147483648
        %v5330 = vor.u32 1.1754944e-38, %v5329
        %v5331 = vsel %vm5328, %v5330, %v5326
        %v5332 = vmul.f32 1.0, %v5331
        %v5333 = vrcp.pop %v5289
        %v5334 = vmul.f32 %v5289, %v5333
        %v5335 = vsub.f32 1.0, %v5334
        %v5336 = vmul.f32 %v5333, %v5335
        %v5337 = vadd.f32 %v5333, %v5336
        %vm5338 = vweird.f32 %v5289
        %vm5339 = vweird.f32 %v5333
        %vm5340 = vmor %vm5338, %vm5339
        %v5341 = vsel %vm5340, %v5333, %v5337
        %v5342 = vand.u32 2147483647, %v5289
        %vm5343 = vcmp.eq.f32.partialorder %v5342, 8.507059e+37
        %v5344 = vand.u32 %v5289, 2147483648
        %v5345 = vor.u32 1.1754944e-38, %v5344
        %v5346 = vsel %vm5343, %v5345, %v5341
        %v5347 = vmul.f32 1.0, %v5346
        %v5348 = vrcp.pop %v5290
        %v5349 = vmul.f32 %v5290, %v5348
        %v5350 = vsub.f32 1.0, %v5349
        %v5351 = vmul.f32 %v5348, %v5350
        %v5352 = vadd.f32 %v5348, %v5351
        %vm5353 = vweird.f32 %v5290
        %vm5354 = vweird.f32 %v5348
        %vm5355 = vmor %vm5353, %vm5354
        %v5356 = vsel %vm5355, %v5348, %v5352
        %v5357 = vand.u32 2147483647, %v5290
        %vm5358 = vcmp.eq.f32.partialorder %v5357, 8.507059e+37
        %v5359 = vand.u32 %v5290, 2147483648
        %v5360 = vor.u32 1.1754944e-38, %v5359
        %v5361 = vsel %vm5358, %v5360, %v5356
        %v5362 = vmul.f32 1.0, %v5361
        %v5363 = vrcp.pop %v5291
        %v5364 = vmul.f32 %v5291, %v5363
        %v5365 = vsub.f32 1.0, %v5364
        %v5366 = vmul.f32 %v5363, %v5365
        %v5367 = vadd.f32 %v5363, %v5366
        %vm5368 = vweird.f32 %v5291
        %vm5369 = vweird.f32 %v5363
        %vm5370 = vmor %vm5368, %vm5369
        %v5371 = vsel %vm5370, %v5363, %v5367
        %v5372 = vand.u32 2147483647, %v5291
        %vm5373 = vcmp.eq.f32.partialorder %v5372, 8.507059e+37
        %v5374 = vand.u32 %v5291, 2147483648
        %v5375 = vor.u32 1.1754944e-38, %v5374
        %v5376 = vsel %vm5373, %v5375, %v5371
        %v5377 = vmul.f32 1.0, %v5376
        %v5378 = vrcp.pop %v5292
        %v5379 = vmul.f32 %v5292, %v5378
        %v5380 = vsub.f32 1.0, %v5379
        %v5381 = vmul.f32 %v5378, %v5380
        %v5382 = vadd.f32 %v5378, %v5381
        %vm5383 = vweird.f32 %v5292
        %vm5384 = vweird.f32 %v5378
        %vm5385 = vmor %vm5383, %vm5384
        %v5386 = vsel %vm5385, %v5378, %v5382
        %v5387 = vand.u32 2147483647, %v5292
        %vm5388 = vcmp.eq.f32.partialorder %v5387, 8.507059e+37
        %v5389 = vand.u32 %v5292, 2147483648
        %v5390 = vor.u32 1.1754944e-38, %v5389
        %v5391 = vsel %vm5388, %v5390, %v5386
        %v5392 = vmul.f32 1.0, %v5391
        %v5393 = vrcp.pop %v5293
        %v5394 = vmul.f32 %v5293, %v5393
        %v5395 = vsub.f32 1.0, %v5394
        %v5396 = vmul.f32 %v5393, %v5395
        %v5397 = vadd.f32 %v5393, %v5396
        %vm5398 = vweird.f32 %v5293
        %vm5399 = vweird.f32 %v5393
        %vm5400 = vmor %vm5398, %vm5399
        %v5401 = vsel %vm5400, %v5393, %v5397
        %v5402 = vand.u32 2147483647, %v5293
        %vm5403 = vcmp.eq.f32.partialorder %v5402, 8.507059e+37
        %v5404 = vand.u32 %v5293, 2147483648
        %v5405 = vor.u32 1.1754944e-38, %v5404
        %v5406 = vsel %vm5403, %v5405, %v5401
        %v5407 = vmul.f32 1.0, %v5406
        %v5408 = vrcp.pop %v5294
        %v5409 = vmul.f32 %v5294, %v5408
        %v5410 = vsub.f32 1.0, %v5409
        %v5411 = vmul.f32 %v5408, %v5410
        %v5412 = vadd.f32 %v5408, %v5411
        %vm5413 = vweird.f32 %v5294
        %vm5414 = vweird.f32 %v5408
        %vm5415 = vmor %vm5413, %vm5414
        %v5416 = vsel %vm5415, %v5408, %v5412
        %v5417 = vand.u32 2147483647, %v5294
        %vm5418 = vcmp.eq.f32.partialorder %v5417, 8.507059e+37
        %v5419 = vand.u32 %v5294, 2147483648
        %v5420 = vor.u32 1.1754944e-38, %v5419
        %v5421 = vsel %vm5418, %v5420, %v5416
        %v5422 = vmul.f32 1.0, %v5421
        %v5423 = vrcp.pop %v5295
        %v5424 = vmul.f32 %v5295, %v5423
        %v5425 = vsub.f32 1.0, %v5424
        %v5426 = vmul.f32 %v5423, %v5425
        %v5427 = vadd.f32 %v5423, %v5426
        %vm5428 = vweird.f32 %v5295
        %vm5429 = vweird.f32 %v5423
        %vm5430 = vmor %vm5428, %vm5429
        %v5431 = vsel %vm5430, %v5423, %v5427
        %v5432 = vand.u32 2147483647, %v5295
        %vm5433 = vcmp.eq.f32.partialorder %v5432, 8.507059e+37
        %v5434 = vand.u32 %v5295, 2147483648
        %v5435 = vor.u32 1.1754944e-38, %v5434
        %v5436 = vsel %vm5433, %v5435, %v5431
        %v5437 = vmul.f32 1.0, %v5436
        %v5438 = vrcp.pop %v5296
        %v5439 = vmul.f32 %v5296, %v5438
        %v5440 = vsub.f32 1.0, %v5439
        %v5441 = vmul.f32 %v5438, %v5440
        %v5442 = vadd.f32 %v5438, %v5441
        %vm5443 = vweird.f32 %v5296
        %vm5444 = vweird.f32 %v5438
        %vm5445 = vmor %vm5443, %vm5444
        %v5446 = vsel %vm5445, %v5438, %v5442
        %v5447 = vand.u32 2147483647, %v5296
        %vm5448 = vcmp.eq.f32.partialorder %v5447, 8.507059e+37
        %v5449 = vand.u32 %v5296, 2147483648
        %v5450 = vor.u32 1.1754944e-38, %v5449
        %v5451 = vsel %vm5448, %v5450, %v5446
        %v5452 = vmul.f32 1.0, %v5451
        %v5453 = vrcp.pop %v5297
        %v5454 = vmul.f32 %v5297, %v5453
        %v5455 = vsub.f32 1.0, %v5454
        %v5456 = vmul.f32 %v5453, %v5455
        %v5457 = vadd.f32 %v5453, %v5456
        %vm5458 = vweird.f32 %v5297
        %vm5459 = vweird.f32 %v5453
        %vm5460 = vmor %vm5458, %vm5459
        %v5461 = vsel %vm5460, %v5453, %v5457
        %v5462 = vand.u32 2147483647, %v5297
        %vm5463 = vcmp.eq.f32.partialorder %v5462, 8.507059e+37
        %v5464 = vand.u32 %v5297, 2147483648
        %v5465 = vor.u32 1.1754944e-38, %v5464
        %v5466 = vsel %vm5463, %v5465, %v5461
        %v5467 = vmul.f32 1.0, %v5466
        %v5468 = vrcp.pop %v5298
        %v5469 = vmul.f32 %v5298, %v5468
        %v5470 = vsub.f32 1.0, %v5469
        %v5471 = vmul.f32 %v5468, %v5470
        %v5472 = vadd.f32 %v5468, %v5471
        %vm5473 = vweird.f32 %v5298
        %vm5474 = vweird.f32 %v5468
        %vm5475 = vmor %vm5473, %vm5474
        %v5476 = vsel %vm5475, %v5468, %v5472
        %v5477 = vand.u32 2147483647, %v5298
        %vm5478 = vcmp.eq.f32.partialorder %v5477, 8.507059e+37
        %v5479 = vand.u32 %v5298, 2147483648
        %v5480 = vor.u32 1.1754944e-38, %v5479
        %v5481 = vsel %vm5478, %v5480, %v5476
        %v5482 = vmul.f32 1.0, %v5481
        %v5483 = vrcp.pop %v5299
        %v5484 = vmul.f32 %v5299, %v5483
        %v5485 = vsub.f32 1.0, %v5484
        %v5486 = vmul.f32 %v5483, %v5485
        %v5487 = vadd.f32 %v5483, %v5486
        %vm5488 = vweird.f32 %v5299
        %vm5489 = vweird.f32 %v5483
        %vm5490 = vmor %vm5488, %vm5489
        %v5491 = vsel %vm5490, %v5483, %v5487
        %v5492 = vand.u32 2147483647, %v5299
        %vm5493 = vcmp.eq.f32.partialorder %v5492, 8.507059e+37
        %v5494 = vand.u32 %v5299, 2147483648
        %v5495 = vor.u32 1.1754944e-38, %v5494
        %v5496 = vsel %vm5493, %v5495, %v5491
        %v5497 = vmul.f32 1.0, %v5496
        %v5498 = vrcp.pop %v5300
        %v5499 = vmul.f32 %v5300, %v5498
        %v5500 = vsub.f32 1.0, %v5499
        %v5501 = vmul.f32 %v5498, %v5500
        %v5502 = vadd.f32 %v5498, %v5501
        %vm5503 = vweird.f32 %v5300
        %vm5504 = vweird.f32 %v5498
        %vm5505 = vmor %vm5503, %vm5504
        %v5506 = vsel %vm5505, %v5498, %v5502
        %v5507 = vand.u32 2147483647, %v5300
        %vm5508 = vcmp.eq.f32.partialorder %v5507, 8.507059e+37
        %v5509 = vand.u32 %v5300, 2147483648
        %v5510 = vor.u32 1.1754944e-38, %v5509
        %v5511 = vsel %vm5508, %v5510, %v5506
        %v5512 = vmul.f32 1.0, %v5511
        %v5513 = vrcp.pop %v5301
        %v5514 = vmul.f32 %v5301, %v5513
        %v5515 = vsub.f32 1.0, %v5514
        %v5516 = vmul.f32 %v5513, %v5515
        %v5517 = vadd.f32 %v5513, %v5516
        %vm5518 = vweird.f32 %v5301
        %vm5519 = vweird.f32 %v5513
        %vm5520 = vmor %vm5518, %vm5519
        %v5521 = vsel %vm5520, %v5513, %v5517
        %v5522 = vand.u32 2147483647, %v5301
        %vm5523 = vcmp.eq.f32.partialorder %v5522, 8.507059e+37
        %v5524 = vand.u32 %v5301, 2147483648
        %v5525 = vor.u32 1.1754944e-38, %v5524
        %v5526 = vsel %vm5523, %v5525, %v5521
        %v5527 = vmul.f32 1.0, %v5526
        %v5528 = vrcp.pop %v5302
        %v5529 = vmul.f32 %v5302, %v5528
        %v5530 = vsub.f32 1.0, %v5529
        %v5531 = vmul.f32 %v5528, %v5530
        %v5532 = vadd.f32 %v5528, %v5531
        %vm5533 = vweird.f32 %v5302
        %vm5534 = vweird.f32 %v5528
        %vm5535 = vmor %vm5533, %vm5534
        %v5536 = vsel %vm5535, %v5528, %v5532
        %v5537 = vand.u32 2147483647, %v5302
        %vm5538 = vcmp.eq.f32.partialorder %v5537, 8.507059e+37
        %v5539 = vand.u32 %v5302, 2147483648
        %v5540 = vor.u32 1.1754944e-38, %v5539
        %v5541 = vsel %vm5538, %v5540, %v5536
        %v5542 = vmul.f32 1.0, %v5541
        %v5543 = vtanh.pop %v4875
        %v5544 = vtanh.pop %v4876
        %v5545 = vtanh.pop %v4883
        %v5546 = vtanh.pop %v4884
        %v5547 = vtanh.pop %v4891
        %v5548 = vtanh.pop %v4892
        %v5549 = vtanh.pop %v4899
        %v5550 = vtanh.pop %v4900
        %v5551 = vtanh.pop %v4907
        %v5552 = vtanh.pop %v4908
        %v5553 = vtanh.pop %v4915
        %v5554 = vtanh.pop %v4916
        %v5555 = vtanh.pop %v4923
        %v5556 = vtanh.pop %v4924
        %v5557 = vtanh.pop %v4931
        %v5558 = vtanh.pop %v4932
        %v5559 = vxor.u32 %v4877, 2147483648
        %v5560 = vxor.u32 %v4878, 2147483648
        %v5561 = vxor.u32 %v4885, 2147483648
        %v5562 = vxor.u32 %v4886, 2147483648
        %v5563 = vxor.u32 %v4893, 2147483648
        %v5564 = vxor.u32 %v4894, 2147483648
        %v5565 = vxor.u32 %v4901, 2147483648
        %v5566 = vxor.u32 %v4902, 2147483648
        %v5567 = vxor.u32 %v4909, 2147483648
        %v5568 = vxor.u32 %v4910, 2147483648
        %v5569 = vxor.u32 %v4917, 2147483648
        %v5570 = vxor.u32 %v4918, 2147483648
        %v5571 = vxor.u32 %v4925, 2147483648
        %v5572 = vxor.u32 %v4926, 2147483648
        %v5573 = vxor.u32 %v4933, 2147483648
        %v5574 = vxor.u32 %v4934, 2147483648
        %v5575 = vmul.f32 %v5559, 1.442695
        %v5576 = vpow.pop %v5575
        %v5577 = vmul.f32 %v5560, 1.442695
        %v5578 = vpow.pop %v5577
        %v5579 = vmul.f32 %v5561, 1.442695
        %v5580 = vpow.pop %v5579
        %v5581 = vmul.f32 %v5562, 1.442695
        %v5582 = vpow.pop %v5581
        %v5583 = vmul.f32 %v5563, 1.442695
        %v5584 = vpow.pop %v5583
        %v5585 = vmul.f32 %v5564, 1.442695
        %v5586 = vpow.pop %v5585
        %v5587 = vmul.f32 %v5565, 1.442695
        %v5588 = vpow.pop %v5587
        %v5589 = vmul.f32 %v5566, 1.442695
        %v5590 = vpow.pop %v5589
        %v5591 = vmul.f32 %v5567, 1.442695
        %v5592 = vpow.pop %v5591
        %v5593 = vmul.f32 %v5568, 1.442695
        %v5594 = vpow.pop %v5593
        %v5595 = vmul.f32 %v5569, 1.442695
        %v5596 = vpow.pop %v5595
        %v5597 = vmul.f32 %v5570, 1.442695
        %v5598 = vpow.pop %v5597
        %v5599 = vmul.f32 %v5571, 1.442695
        %v5600 = vpow.pop %v5599
        %v5601 = vmul.f32 %v5572, 1.442695
        %v5602 = vpow.pop %v5601
        %v5603 = vmul.f32 %v5573, 1.442695
        %v5604 = vpow.pop %v5603
        %v5605 = vmul.f32 %v5574, 1.442695
        %v5606 = vpow.pop %v5605
        %v5607 = vadd.f32 %v5576, 1.0
        %v5608 = vadd.f32 %v5578, 1.0
        %v5609 = vadd.f32 %v5580, 1.0
        %v5610 = vadd.f32 %v5582, 1.0
        %v5611 = vadd.f32 %v5584, 1.0
        %v5612 = vadd.f32 %v5586, 1.0
        %v5613 = vadd.f32 %v5588, 1.0
        %v5614 = vadd.f32 %v5590, 1.0
        %v5615 = vadd.f32 %v5592, 1.0
        %v5616 = vadd.f32 %v5594, 1.0
        %v5617 = vadd.f32 %v5596, 1.0
        %v5618 = vadd.f32 %v5598, 1.0
        %v5619 = vadd.f32 %v5600, 1.0
        %v5620 = vadd.f32 %v5602, 1.0
        %v5621 = vadd.f32 %v5604, 1.0
        %v5622 = vadd.f32 %v5606, 1.0
        %v5623 = vrcp.pop %v5607
        %v5624 = vmul.f32 %v5607, %v5623
        %v5625 = vsub.f32 1.0, %v5624
        %v5626 = vmul.f32 %v5623, %v5625
        %v5627 = vadd.f32 %v5623, %v5626
        %vm5628 = vweird.f32 %v5607
        %vm5629 = vweird.f32 %v5623
        %vm5630 = vmor %vm5628, %vm5629
        %v5631 = vsel %vm5630, %v5623, %v5627
        %v5632 = vand.u32 2147483647, %v5607
        %vm5633 = vcmp.eq.f32.partialorder %v5632, 8.507059e+37
        %v5634 = vand.u32 %v5607, 2147483648
        %v5635 = vor.u32 1.1754944e-38, %v5634
        %v5636 = vsel %vm5633, %v5635, %v5631
        %v5637 = vmul.f32 1.0, %v5636
        %v5638 = vrcp.pop %v5608
        %v5639 = vmul.f32 %v5608, %v5638
        %v5640 = vsub.f32 1.0, %v5639
        %v5641 = vmul.f32 %v5638, %v5640
        %v5642 = vadd.f32 %v5638, %v5641
        %vm5643 = vweird.f32 %v5608
        %vm5644 = vweird.f32 %v5638
        %vm5645 = vmor %vm5643, %vm5644
        %v5646 = vsel %vm5645, %v5638, %v5642
        %v5647 = vand.u32 2147483647, %v5608
        %vm5648 = vcmp.eq.f32.partialorder %v5647, 8.507059e+37
        %v5649 = vand.u32 %v5608, 2147483648
        %v5650 = vor.u32 1.1754944e-38, %v5649
        %v5651 = vsel %vm5648, %v5650, %v5646
        %v5652 = vmul.f32 1.0, %v5651
        %v5653 = vrcp.pop %v5609
        %v5654 = vmul.f32 %v5609, %v5653
        %v5655 = vsub.f32 1.0, %v5654
        %v5656 = vmul.f32 %v5653, %v5655
        %v5657 = vadd.f32 %v5653, %v5656
        %vm5658 = vweird.f32 %v5609
        %vm5659 = vweird.f32 %v5653
        %vm5660 = vmor %vm5658, %vm5659
        %v5661 = vsel %vm5660, %v5653, %v5657
        %v5662 = vand.u32 2147483647, %v5609
        %vm5663 = vcmp.eq.f32.partialorder %v5662, 8.507059e+37
        %v5664 = vand.u32 %v5609, 2147483648
        %v5665 = vor.u32 1.1754944e-38, %v5664
        %v5666 = vsel %vm5663, %v5665, %v5661
        %v5667 = vmul.f32 1.0, %v5666
        %v5668 = vrcp.pop %v5610
        %v5669 = vmul.f32 %v5610, %v5668
        %v5670 = vsub.f32 1.0, %v5669
        %v5671 = vmul.f32 %v5668, %v5670
        %v5672 = vadd.f32 %v5668, %v5671
        %vm5673 = vweird.f32 %v5610
        %vm5674 = vweird.f32 %v5668
        %vm5675 = vmor %vm5673, %vm5674
        %v5676 = vsel %vm5675, %v5668, %v5672
        %v5677 = vand.u32 2147483647, %v5610
        %vm5678 = vcmp.eq.f32.partialorder %v5677, 8.507059e+37
        %v5679 = vand.u32 %v5610, 2147483648
        %v5680 = vor.u32 1.1754944e-38, %v5679
        %v5681 = vsel %vm5678, %v5680, %v5676
        %v5682 = vmul.f32 1.0, %v5681
        %v5683 = vrcp.pop %v5611
        %v5684 = vmul.f32 %v5611, %v5683
        %v5685 = vsub.f32 1.0, %v5684
        %v5686 = vmul.f32 %v5683, %v5685
        %v5687 = vadd.f32 %v5683, %v5686
        %vm5688 = vweird.f32 %v5611
        %vm5689 = vweird.f32 %v5683
        %vm5690 = vmor %vm5688, %vm5689
        %v5691 = vsel %vm5690, %v5683, %v5687
        %v5692 = vand.u32 2147483647, %v5611
        %vm5693 = vcmp.eq.f32.partialorder %v5692, 8.507059e+37
        %v5694 = vand.u32 %v5611, 2147483648
        %v5695 = vor.u32 1.1754944e-38, %v5694
        %v5696 = vsel %vm5693, %v5695, %v5691
        %v5697 = vmul.f32 1.0, %v5696
        %v5698 = vrcp.pop %v5612
        %v5699 = vmul.f32 %v5612, %v5698
        %v5700 = vsub.f32 1.0, %v5699
        %v5701 = vmul.f32 %v5698, %v5700
        %v5702 = vadd.f32 %v5698, %v5701
        %vm5703 = vweird.f32 %v5612
        %vm5704 = vweird.f32 %v5698
        %vm5705 = vmor %vm5703, %vm5704
        %v5706 = vsel %vm5705, %v5698, %v5702
        %v5707 = vand.u32 2147483647, %v5612
        %vm5708 = vcmp.eq.f32.partialorder %v5707, 8.507059e+37
        %v5709 = vand.u32 %v5612, 2147483648
        %v5710 = vor.u32 1.1754944e-38, %v5709
        %v5711 = vsel %vm5708, %v5710, %v5706
        %v5712 = vmul.f32 1.0, %v5711
        %v5713 = vrcp.pop %v5613
        %v5714 = vmul.f32 %v5613, %v5713
        %v5715 = vsub.f32 1.0, %v5714
        %v5716 = vmul.f32 %v5713, %v5715
        %v5717 = vadd.f32 %v5713, %v5716
        %vm5718 = vweird.f32 %v5613
        %vm5719 = vweird.f32 %v5713
        %vm5720 = vmor %vm5718, %vm5719
        %v5721 = vsel %vm5720, %v5713, %v5717
        %v5722 = vand.u32 2147483647, %v5613
        %vm5723 = vcmp.eq.f32.partialorder %v5722, 8.507059e+37
        %v5724 = vand.u32 %v5613, 2147483648
        %v5725 = vor.u32 1.1754944e-38, %v5724
        %v5726 = vsel %vm5723, %v5725, %v5721
        %v5727 = vmul.f32 1.0, %v5726
        %v5728 = vrcp.pop %v5614
        %v5729 = vmul.f32 %v5614, %v5728
        %v5730 = vsub.f32 1.0, %v5729
        %v5731 = vmul.f32 %v5728, %v5730
        %v5732 = vadd.f32 %v5728, %v5731
        %vm5733 = vweird.f32 %v5614
        %vm5734 = vweird.f32 %v5728
        %vm5735 = vmor %vm5733, %vm5734
        %v5736 = vsel %vm5735, %v5728, %v5732
        %v5737 = vand.u32 2147483647, %v5614
        %vm5738 = vcmp.eq.f32.partialorder %v5737, 8.507059e+37
        %v5739 = vand.u32 %v5614, 2147483648
        %v5740 = vor.u32 1.1754944e-38, %v5739
        %v5741 = vsel %vm5738, %v5740, %v5736
        %v5742 = vmul.f32 1.0, %v5741
        %v5743 = vrcp.pop %v5615
        %v5744 = vmul.f32 %v5615, %v5743
        %v5745 = vsub.f32 1.0, %v5744
        %v5746 = vmul.f32 %v5743, %v5745
        %v5747 = vadd.f32 %v5743, %v5746
        %vm5748 = vweird.f32 %v5615
        %vm5749 = vweird.f32 %v5743
        %vm5750 = vmor %vm5748, %vm5749
        %v5751 = vsel %vm5750, %v5743, %v5747
        %v5752 = vand.u32 2147483647, %v5615
        %vm5753 = vcmp.eq.f32.partialorder %v5752, 8.507059e+37
        %v5754 = vand.u32 %v5615, 2147483648
        %v5755 = vor.u32 1.1754944e-38, %v5754
        %v5756 = vsel %vm5753, %v5755, %v5751
        %v5757 = vmul.f32 1.0, %v5756
        %v5758 = vrcp.pop %v5616
        %v5759 = vmul.f32 %v5616, %v5758
        %v5760 = vsub.f32 1.0, %v5759
        %v5761 = vmul.f32 %v5758, %v5760
        %v5762 = vadd.f32 %v5758, %v5761
        %vm5763 = vweird.f32 %v5616
        %vm5764 = vweird.f32 %v5758
        %vm5765 = vmor %vm5763, %vm5764
        %v5766 = vsel %vm5765, %v5758, %v5762
        %v5767 = vand.u32 2147483647, %v5616
        %vm5768 = vcmp.eq.f32.partialorder %v5767, 8.507059e+37
        %v5769 = vand.u32 %v5616, 2147483648
        %v5770 = vor.u32 1.1754944e-38, %v5769
        %v5771 = vsel %vm5768, %v5770, %v5766
        %v5772 = vmul.f32 1.0, %v5771
        %v5773 = vrcp.pop %v5617
        %v5774 = vmul.f32 %v5617, %v5773
        %v5775 = vsub.f32 1.0, %v5774
        %v5776 = vmul.f32 %v5773, %v5775
        %v5777 = vadd.f32 %v5773, %v5776
        %vm5778 = vweird.f32 %v5617
        %vm5779 = vweird.f32 %v5773
        %vm5780 = vmor %vm5778, %vm5779
        %v5781 = vsel %vm5780, %v5773, %v5777
        %v5782 = vand.u32 2147483647, %v5617
        %vm5783 = vcmp.eq.f32.partialorder %v5782, 8.507059e+37
        %v5784 = vand.u32 %v5617, 2147483648
        %v5785 = vor.u32 1.1754944e-38, %v5784
        %v5786 = vsel %vm5783, %v5785, %v5781
        %v5787 = vmul.f32 1.0, %v5786
        %v5788 = vrcp.pop %v5618
        %v5789 = vmul.f32 %v5618, %v5788
        %v5790 = vsub.f32 1.0, %v5789
        %v5791 = vmul.f32 %v5788, %v5790
        %v5792 = vadd.f32 %v5788, %v5791
        %vm5793 = vweird.f32 %v5618
        %vm5794 = vweird.f32 %v5788
        %vm5795 = vmor %vm5793, %vm5794
        %v5796 = vsel %vm5795, %v5788, %v5792
        %v5797 = vand.u32 2147483647, %v5618
        %vm5798 = vcmp.eq.f32.partialorder %v5797, 8.507059e+37
        %v5799 = vand.u32 %v5618, 2147483648
        %v5800 = vor.u32 1.1754944e-38, %v5799
        %v5801 = vsel %vm5798, %v5800, %v5796
        %v5802 = vmul.f32 1.0, %v5801
        %v5803 = vrcp.pop %v5619
        %v5804 = vmul.f32 %v5619, %v5803
        %v5805 = vsub.f32 1.0, %v5804
        %v5806 = vmul.f32 %v5803, %v5805
        %v5807 = vadd.f32 %v5803, %v5806
        %vm5808 = vweird.f32 %v5619
        %vm5809 = vweird.f32 %v5803
        %vm5810 = vmor %vm5808, %vm5809
        %v5811 = vsel %vm5810, %v5803, %v5807
        %v5812 = vand.u32 2147483647, %v5619
        %vm5813 = vcmp.eq.f32.partialorder %v5812, 8.507059e+37
        %v5814 = vand.u32 %v5619, 2147483648
        %v5815 = vor.u32 1.1754944e-38, %v5814
        %v5816 = vsel %vm5813, %v5815, %v5811
        %v5817 = vmul.f32 1.0, %v5816
        %v5818 = vrcp.pop %v5620
        %v5819 = vmul.f32 %v5620, %v5818
        %v5820 = vsub.f32 1.0, %v5819
        %v5821 = vmul.f32 %v5818, %v5820
        %v5822 = vadd.f32 %v5818, %v5821
        %vm5823 = vweird.f32 %v5620
        %vm5824 = vweird.f32 %v5818
        %vm5825 = vmor %vm5823, %vm5824
        %v5826 = vsel %vm5825, %v5818, %v5822
        %v5827 = vand.u32 2147483647, %v5620
        %vm5828 = vcmp.eq.f32.partialorder %v5827, 8.507059e+37
        %v5829 = vand.u32 %v5620, 2147483648
        %v5830 = vor.u32 1.1754944e-38, %v5829
        %v5831 = vsel %vm5828, %v5830, %v5826
        %v5832 = vmul.f32 1.0, %v5831
        %v5833 = vrcp.pop %v5621
        %v5834 = vmul.f32 %v5621, %v5833
        %v5835 = vsub.f32 1.0, %v5834
        %v5836 = vmul.f32 %v5833, %v5835
        %v5837 = vadd.f32 %v5833, %v5836
        %vm5838 = vweird.f32 %v5621
        %vm5839 = vweird.f32 %v5833
        %vm5840 = vmor %vm5838, %vm5839
        %v5841 = vsel %vm5840, %v5833, %v5837
        %v5842 = vand.u32 2147483647, %v5621
        %vm5843 = vcmp.eq.f32.partialorder %v5842, 8.507059e+37
        %v5844 = vand.u32 %v5621, 2147483648
        %v5845 = vor.u32 1.1754944e-38, %v5844
        %v5846 = vsel %vm5843, %v5845, %v5841
        %v5847 = vmul.f32 1.0, %v5846
        %v5848 = vrcp.pop %v5622
        %v5849 = vmul.f32 %v5622, %v5848
        %v5850 = vsub.f32 1.0, %v5849
        %v5851 = vmul.f32 %v5848, %v5850
        %v5852 = vadd.f32 %v5848, %v5851
        %vm5853 = vweird.f32 %v5622
        %vm5854 = vweird.f32 %v5848
        %vm5855 = vmor %vm5853, %vm5854
        %v5856 = vsel %vm5855, %v5848, %v5852
        %v5857 = vand.u32 2147483647, %v5622
        %vm5858 = vcmp.eq.f32.partialorder %v5857, 8.507059e+37
        %v5859 = vand.u32 %v5622, 2147483648
        %v5860 = vor.u32 1.1754944e-38, %v5859
        %v5861 = vsel %vm5858, %v5860, %v5856
        %v5862 = vmul.f32 1.0, %v5861
        %v5863 = vmul.f32 %v5317, %v787
        %v5864 = vmul.f32 %v5332, %v788
        %v5865 = vmul.f32 %v5347, %v789
        %v5866 = vmul.f32 %v5362, %v790
        %v5867 = vmul.f32 %v5377, %v791
        %v5868 = vmul.f32 %v5392, %v792
        %v5869 = vmul.f32 %v5407, %v793
        %v5870 = vmul.f32 %v5422, %v794
        %v5871 = vmul.f32 %v5437, %v795
        %v5872 = vmul.f32 %v5452, %v796
        %v5873 = vmul.f32 %v5467, %v797
        %v5874 = vmul.f32 %v5482, %v798
        %v5875 = vmul.f32 %v5497, %v799
        %v5876 = vmul.f32 %v5512, %v800
        %v5877 = vmul.f32 %v5527, %v801
        %v5878 = vmul.f32 %v5542, %v802
        %v5879 = vmul.f32 %v5013, %v5543
        %v5880 = vmul.f32 %v5028, %v5544
        %v5881 = vmul.f32 %v5043, %v5545
        %v5882 = vmul.f32 %v5058, %v5546
        %v5883 = vmul.f32 %v5073, %v5547
        %v5884 = vmul.f32 %v5088, %v5548
        %v5885 = vmul.f32 %v5103, %v5549
        %v5886 = vmul.f32 %v5118, %v5550
        %v5887 = vmul.f32 %v5133, %v5551
        %v5888 = vmul.f32 %v5148, %v5552
        %v5889 = vmul.f32 %v5163, %v5553
        %v5890 = vmul.f32 %v5178, %v5554
        %v5891 = vmul.f32 %v5193, %v5555
        %v5892 = vmul.f32 %v5208, %v5556
        %v5893 = vmul.f32 %v5223, %v5557
        %v5894 = vmul.f32 %v5238, %v5558
        %v5895 = vadd.f32 %v5863, %v5879
        %v5896 = vadd.f32 %v5864, %v5880
        %v5897 = vadd.f32 %v5865, %v5881
        %v5898 = vadd.f32 %v5866, %v5882
        %v5899 = vadd.f32 %v5867, %v5883
        %v5900 = vadd.f32 %v5868, %v5884
        %v5901 = vadd.f32 %v5869, %v5885
        %v5902 = vadd.f32 %v5870, %v5886
        %v5903 = vadd.f32 %v5871, %v5887
        %v5904 = vadd.f32 %v5872, %v5888
        %v5905 = vadd.f32 %v5873, %v5889
        %v5906 = vadd.f32 %v5874, %v5890
        %v5907 = vadd.f32 %v5875, %v5891
        %v5908 = vadd.f32 %v5876, %v5892
        %v5909 = vadd.f32 %v5877, %v5893
        %v5910 = vadd.f32 %v5878, %v5894
        %v5911 = vtanh.pop %v5895
        %v5912 = vtanh.pop %v5896
        %v5913 = vtanh.pop %v5897
        %v5914 = vtanh.pop %v5898
        %v5915 = vtanh.pop %v5899
        %v5916 = vtanh.pop %v5900
        %v5917 = vtanh.pop %v5901
        %v5918 = vtanh.pop %v5902
        %v5919 = vtanh.pop %v5903
        %v5920 = vtanh.pop %v5904
        %v5921 = vtanh.pop %v5905
        %v5922 = vtanh.pop %v5906
        %v5923 = vtanh.pop %v5907
        %v5924 = vtanh.pop %v5908
        %v5925 = vtanh.pop %v5909
        %v5926 = vtanh.pop %v5910
        %v5927 = vmul.f32 %v5637, %v5911
        %v5928 = vmul.f32 %v5652, %v5912
        %v5929 = vmul.f32 %v5667, %v5913
        %v5930 = vmul.f32 %v5682, %v5914
        %v5931 = vmul.f32 %v5697, %v5915
        %v5932 = vmul.f32 %v5712, %v5916
        %v5933 = vmul.f32 %v5727, %v5917
        %v5934 = vmul.f32 %v5742, %v5918
        %v5935 = vmul.f32 %v5757, %v5919
        %v5936 = vmul.f32 %v5772, %v5920
        %v5937 = vmul.f32 %v5787, %v5921
        %v5938 = vmul.f32 %v5802, %v5922
        %v5939 = vmul.f32 %v5817, %v5923
        %v5940 = vmul.f32 %v5832, %v5924
        %v5941 = vmul.f32 %v5847, %v5925
        %v5942 = vmul.f32 %v5862, %v5926
        %5943 = vst [vmem:[#allocation2] sm:$0xff] %v5927
        %5944 = vst [vmem:[#allocation2 + $0x8] sm:$0xff] %v5928
        %5945 = vst [vmem:[#allocation2 + $0x10] sm:$0xff] %v5929
        %5946 = vst [vmem:[#allocation2 + $0x18] sm:$0xff] %v5930
        %5947 = vst [vmem:[#allocation2 + $0x20] sm:$0xff] %v5931
        %5948 = vst [vmem:[#allocation2 + $0x28] sm:$0xff] %v5932
        %5949 = vst [vmem:[#allocation2 + $0x30] sm:$0xff] %v5933
        %5950 = vst [vmem:[#allocation2 + $0x38] sm:$0xff] %v5934
        %5951 = vst [vmem:[#allocation2 + $0x40] sm:$0xff] %v5935
        %5952 = vst [vmem:[#allocation2 + $0x48] sm:$0xff] %v5936
        %5953 = vst [vmem:[#allocation2 + $0x50] sm:$0xff] %v5937
        %5954 = vst [vmem:[#allocation2 + $0x58] sm:$0xff] %v5938
        %5955 = vst [vmem:[#allocation2 + $0x60] sm:$0xff] %v5939
        %5956 = vst [vmem:[#allocation2 + $0x68] sm:$0xff] %v5940
        %5957 = vst [vmem:[#allocation2 + $0x70] sm:$0xff] %v5941
        %5958 = vst [vmem:[#allocation2 + $0x78] sm:$0xff] %v5942
        %5959 = vst [vmem:[#allocation3] sm:$0xff] %v5895
        %5960 = vst [vmem:[#allocation3 + $0x8] sm:$0xff] %v5896
        %5961 = vst [vmem:[#allocation3 + $0x10] sm:$0xff] %v5897
        %5962 = vst [vmem:[#allocation3 + $0x18] sm:$0xff] %v5898
        %5963 = vst [vmem:[#allocation3 + $0x20] sm:$0xff] %v5899
        %5964 = vst [vmem:[#allocation3 + $0x28] sm:$0xff] %v5900
        %5965 = vst [vmem:[#allocation3 + $0x30] sm:$0xff] %v5901
        %5966 = vst [vmem:[#allocation3 + $0x38] sm:$0xff] %v5902
        %5967 = vst [vmem:[#allocation3 + $0x40] sm:$0xff] %v5903
        %5968 = vst [vmem:[#allocation3 + $0x48] sm:$0xff] %v5904
        %5969 = vst [vmem:[#allocation3 + $0x50] sm:$0xff] %v5905
        %5970 = vst [vmem:[#allocation3 + $0x58] sm:$0xff] %v5906
        %5971 = vst [vmem:[#allocation3 + $0x60] sm:$0xff] %v5907
        %5972 = vst [vmem:[#allocation3 + $0x68] sm:$0xff] %v5908
        %5973 = vst [vmem:[#allocation3 + $0x70] sm:$0xff] %v5909
        %5974 = vst [vmem:[#allocation3 + $0x78] sm:$0xff] %v5910
        %p5975 = scmp.lt.s32.totalorder %s46, 2
        // Predicated region
        $region121: #{tpu_custom_call.1} parent=71 // pred_check
          %p5976 = pneg %p5975
        $region122: #{tpu_custom_call.1} parent=71 // pred_check_branch
          %5978 = sbr.rel (%p5976) target = $region124
        $region123: #{tpu_custom_call.1} parent=71 // pred_region
          %5979 = vst.msk [vmem:[%s707] sm:$0xff] %vm2795, %v2863
          %5980 = vst.msk [vmem:[%s707 + $0x8] sm:$0xff] %vm2795, %v2864
          %5981 = vst.msk [vmem:[%s707 + $0x10] sm:$0xff] %vm2795, %v2865
          %5982 = vst.msk [vmem:[%s707 + $0x18] sm:$0xff] %vm2795, %v2866
          %5983 = vst.msk [vmem:[%s707 + $0x20] sm:$0xff] %vm2795, %v2867
          %5984 = vst.msk [vmem:[%s707 + $0x28] sm:$0xff] %vm2795, %v2868
          %5985 = vst.msk [vmem:[%s707 + $0x30] sm:$0xff] %vm2795, %v2869
          %5986 = vst.msk [vmem:[%s707 + $0x38] sm:$0xff] %vm2795, %v2870
        $region124: #{tpu_custom_call.1} parent=71 // pred_fallthru
          _
        %p5987 = scmp.lt.s32.totalorder %s46, 3
        %p5988 = scmp.eq.s32.totalorder %s46, 1
        %p5989 = por %p5987, %p5988
        // Predicated region
        $region125: #{tpu_custom_call.1} parent=71 // pred_check
          %p5990 = pneg %p5989
        $region126: #{tpu_custom_call.1} parent=71 // pred_check_branch
          %5992 = sbr.rel (%p5990) target = $region128
        $region127: #{tpu_custom_call.1} parent=71 // pred_region
          %v5993 = vpack.c.bf16 %v5929, %v5927
          %v5994 = vpack.c.bf16 %v5930, %v5928
          %v5995 = vpack.c.bf16 %v5933, %v5931
          %v5996 = vpack.c.bf16 %v5934, %v5932
          %v5997 = vpack.c.bf16 %v5937, %v5935
          %v5998 = vpack.c.bf16 %v5938, %v5936
          %v5999 = vpack.c.bf16 %v5941, %v5939
          %v6000 = vpack.c.bf16 %v5942, %v5940
          %v6001 = vld [vmem:[#allocation16] sm:$0xff]
          %v6002 = vld [vmem:[#allocation16 + $0x8] sm:$0xff]
          %v6003 = vld [vmem:[#allocation16 + $0x10] sm:$0xff]
          %v6004 = vld [vmem:[#allocation16 + $0x18] sm:$0xff]
          %v6005 = vld [vmem:[#allocation16 + $0x20] sm:$0xff]
          %v6006 = vld [vmem:[#allocation16 + $0x28] sm:$0xff]
          %v6007 = vld [vmem:[#allocation16 + $0x30] sm:$0xff]
          %v6008 = vld [vmem:[#allocation16 + $0x38] sm:$0xff]
          %v6009 = vld [vmem:[#allocation16 + $0x40] sm:$0xff]
          %v6010 = vld [vmem:[#allocation16 + $0x48] sm:$0xff]
          %v6011 = vld [vmem:[#allocation16 + $0x50] sm:$0xff]
          %v6012 = vld [vmem:[#allocation16 + $0x58] sm:$0xff]
          %v6013 = vld [vmem:[#allocation16 + $0x60] sm:$0xff]
          %v6014 = vld [vmem:[#allocation16 + $0x68] sm:$0xff]
          %v6015 = vld [vmem:[#allocation16 + $0x70] sm:$0xff]
          %v6016 = vld [vmem:[#allocation16 + $0x78] sm:$0xff]
          %v6017 = vld [vmem:[#allocation16 + $0x80] sm:$0xff]
          %v6018 = vld [vmem:[#allocation16 + $0x88] sm:$0xff]
          %v6019 = vld [vmem:[#allocation16 + $0x90] sm:$0xff]
          %v6020 = vld [vmem:[#allocation16 + $0x98] sm:$0xff]
          %v6021 = vld [vmem:[#allocation16 + $0xa0] sm:$0xff]
          %v6022 = vld [vmem:[#allocation16 + $0xa8] sm:$0xff]
          %v6023 = vld [vmem:[#allocation16 + $0xb0] sm:$0xff]
          %v6024 = vld [vmem:[#allocation16 + $0xb8] sm:$0xff]
          %v6025 = vld [vmem:[#allocation16 + $0xc0] sm:$0xff]
          %v6026 = vld [vmem:[#allocation16 + $0xc8] sm:$0xff]
          %v6027 = vld [vmem:[#allocation16 + $0xd0] sm:$0xff]
          %v6028 = vld [vmem:[#allocation16 + $0xd8] sm:$0xff]
          %v6029 = vld [vmem:[#allocation16 + $0xe0] sm:$0xff]
          %v6030 = vld [vmem:[#allocation16 + $0xe8] sm:$0xff]
          %v6031 = vld [vmem:[#allocation16 + $0xf0] sm:$0xff]
          %v6032 = vld [vmem:[#allocation16 + $0xf8] sm:$0xff]
          %v6033 = vld [vmem:[#allocation18] sm:$0x3]
          %v6035 = vperm.slane %v6033, 0
          %v6036 = vperm.slane %v6033, 1
          %v6071 = vunpack.c.l.b16 %v6001
          %v6072 = vunpack.c.h.b16 %v6001
          %v6073 = vunpack.c.l.b16 %v6002
          %v6074 = vunpack.c.h.b16 %v6002
          %v6075 = vunpack.c.l.b16 %v6003
          %v6076 = vunpack.c.h.b16 %v6003
          %v6077 = vunpack.c.l.b16 %v6004
          %v6078 = vunpack.c.h.b16 %v6004
          %v6079 = vunpack.c.l.b16 %v6005
          %v6080 = vunpack.c.h.b16 %v6005
          %v6081 = vunpack.c.l.b16 %v6006
          %v6082 = vunpack.c.h.b16 %v6006
          %v6083 = vunpack.c.l.b16 %v6007
          %v6084 = vunpack.c.h.b16 %v6007
          %v6085 = vunpack.c.l.b16 %v6008
          %v6086 = vunpack.c.h.b16 %v6008
          %v6087 = vunpack.c.l.b16 %v6009
          %v6088 = vunpack.c.h.b16 %v6009
          %v6089 = vunpack.c.l.b16 %v6010
          %v6090 = vunpack.c.h.b16 %v6010
          %v6091 = vunpack.c.l.b16 %v6011
          %v6092 = vunpack.c.h.b16 %v6011
          %v6093 = vunpack.c.l.b16 %v6012
          %v6094 = vunpack.c.h.b16 %v6012
          %v6095 = vunpack.c.l.b16 %v6013
          %v6096 = vunpack.c.h.b16 %v6013
          %v6097 = vunpack.c.l.b16 %v6014
          %v6098 = vunpack.c.h.b16 %v6014
          %v6099 = vunpack.c.l.b16 %v6015
          %v6100 = vunpack.c.h.b16 %v6015
          %v6101 = vunpack.c.l.b16 %v6016
          %v6102 = vunpack.c.h.b16 %v6016
          %v6103 = vunpack.c.l.b16 %v6017
          %v6104 = vunpack.c.h.b16 %v6017
          %v6105 = vunpack.c.l.b16 %v6018
          %v6106 = vunpack.c.h.b16 %v6018
          %v6107 = vunpack.c.l.b16 %v6019
          %v6108 = vunpack.c.h.b16 %v6019
          %v6109 = vunpack.c.l.b16 %v6020
          %v6110 = vunpack.c.h.b16 %v6020
          %v6111 = vunpack.c.l.b16 %v6021
          %v6112 = vunpack.c.h.b16 %v6021
          %v6113 = vunpack.c.l.b16 %v6022
          %v6114 = vunpack.c.h.b16 %v6022
          %v6115 = vunpack.c.l.b16 %v6023
          %v6116 = vunpack.c.h.b16 %v6023
          %v6117 = vunpack.c.l.b16 %v6024
          %v6118 = vunpack.c.h.b16 %v6024
          %v6119 = vunpack.c.l.b16 %v6025
          %v6120 = vunpack.c.h.b16 %v6025
          %v6121 = vunpack.c.l.b16 %v6026
          %v6122 = vunpack.c.h.b16 %v6026
          %v6123 = vunpack.c.l.b16 %v6027
          %v6124 = vunpack.c.h.b16 %v6027
          %v6125 = vunpack.c.l.b16 %v6028
          %v6126 = vunpack.c.h.b16 %v6028
          %v6127 = vunpack.c.l.b16 %v6029
          %v6128 = vunpack.c.h.b16 %v6029
          %v6129 = vunpack.c.l.b16 %v6030
          %v6130 = vunpack.c.h.b16 %v6030
          %v6131 = vunpack.c.l.b16 %v6031
          %v6132 = vunpack.c.h.b16 %v6031
          %v6133 = vunpack.c.l.b16 %v6032
          %v6134 = vunpack.c.h.b16 %v6032
          %v6135 = vpack.c.b16 %v6073, %v6071
          %v6136 = vpack.c.b16 %v6074, %v6072
          %v6137 = vpack.c.b16 %v6077, %v6075
          %v6138 = vpack.c.b16 %v6078, %v6076
          %v6139 = vpack.c.b16 %v6081, %v6079
          %v6140 = vpack.c.b16 %v6082, %v6080
          %v6141 = vpack.c.b16 %v6085, %v6083
          %v6142 = vpack.c.b16 %v6086, %v6084
          %v6143 = vpack.c.b16 %v6089, %v6087
          %v6144 = vpack.c.b16 %v6090, %v6088
          %v6145 = vpack.c.b16 %v6093, %v6091
          %v6146 = vpack.c.b16 %v6094, %v6092
          %v6147 = vpack.c.b16 %v6097, %v6095
          %v6148 = vpack.c.b16 %v6098, %v6096
          %v6149 = vpack.c.b16 %v6101, %v6099
          %v6150 = vpack.c.b16 %v6102, %v6100
          %v6151 = vpack.c.b16 %v6105, %v6103
          %v6152 = vpack.c.b16 %v6106, %v6104
          %v6153 = vpack.c.b16 %v6109, %v6107
          %v6154 = vpack.c.b16 %v6110, %v6108
          %v6155 = vpack.c.b16 %v6113, %v6111
          %v6156 = vpack.c.b16 %v6114, %v6112
          %v6157 = vpack.c.b16 %v6117, %v6115
          %v6158 = vpack.c.b16 %v6118, %v6116
          %v6159 = vpack.c.b16 %v6121, %v6119
          %v6160 = vpack.c.b16 %v6122, %v6120
          %v6161 = vpack.c.b16 %v6125, %v6123
          %v6162 = vpack.c.b16 %v6126, %v6124
          %v6163 = vpack.c.b16 %v6129, %v6127
          %v6164 = vpack.c.b16 %v6130, %v6128
          %v6165 = vpack.c.b16 %v6133, %v6131
          %v6166 = vpack.c.b16 %v6134, %v6132
          %6199 = vmatpush.bf16.msra.mxu0 %v6149
          %6200 = vmatpush.bf16.msra.mxu0 %v6147
          %6201 = vmatpush.bf16.msra.mxu0 %v6145
          %6202 = vmatpush.bf16.msra.mxu0 %v6143
          %6203 = vmatpush.bf16.msra.mxu0 %v6141
          %6204 = vmatpush.bf16.msra.mxu0 %v6139
          %6205 = vmatpush.bf16.msra.mxu0 %v6137
          %6206 = vmatpush.bf16.msra.mxu0 %v6135
          %6207 = vmatmul.bf16.gmra.mxu0 %v5993
          %v6208 = vpop.f32.mrf.mxu0
          %v6209 = vadd.f32 %v6035, %v6208
          %v6210 = vpop.f32.mrf.mxu0
          %v6211 = vadd.f32 %v6035, %v6210
          %6212 = vmatmul.bf16.gmra.mxu0 %v5995
          %v6213 = vpop.f32.mrf.mxu0
          %v6214 = vadd.f32 %v6035, %v6213
          %v6215 = vpop.f32.mrf.mxu0
          %v6216 = vadd.f32 %v6035, %v6215
          %6217 = vmatmul.bf16.gmra.mxu0 %v5997
          %v6218 = vpop.f32.mrf.mxu0
          %v6219 = vadd.f32 %v6035, %v6218
          %v6220 = vpop.f32.mrf.mxu0
          %v6221 = vadd.f32 %v6035, %v6220
          %6222 = vmatmul.bf16.gmra.mxu0 %v5999
          %v6223 = vpop.f32.mrf.mxu0
          %v6224 = vadd.f32 %v6035, %v6223
          %v6225 = vpop.f32.mrf.mxu0
          %v6226 = vadd.f32 %v6035, %v6225
          %6227 = vdwg.mxu0
          %6228 = vmatpush.bf16.msra.mxu0 %v6165
          %6229 = vmatpush.bf16.msra.mxu0 %v6163
          %6230 = vmatpush.bf16.msra.mxu0 %v6161
          %6231 = vmatpush.bf16.msra.mxu0 %v6159
          %6232 = vmatpush.bf16.msra.mxu0 %v6157
          %6233 = vmatpush.bf16.msra.mxu0 %v6155
          %6234 = vmatpush.bf16.msra.mxu0 %v6153
          %6235 = vmatpush.bf16.msra.mxu0 %v6151
          %6236 = vmatmul.bf16.gmra.mxu0 %v5994
          %v6237 = vpop.f32.mrf.mxu0
          %v6238 = vadd.f32 %v6209, %v6237
          %v6239 = vpop.f32.mrf.mxu0
          %v6240 = vadd.f32 %v6211, %v6239
          %6241 = vmatmul.bf16.gmra.mxu0 %v5996
          %v6242 = vpop.f32.mrf.mxu0
          %v6243 = vadd.f32 %v6214, %v6242
          %v6244 = vpop.f32.mrf.mxu0
          %v6245 = vadd.f32 %v6216, %v6244
          %6246 = vmatmul.bf16.gmra.mxu0 %v5998
          %v6247 = vpop.f32.mrf.mxu0
          %v6248 = vadd.f32 %v6219, %v6247
          %v6249 = vpop.f32.mrf.mxu0
          %v6250 = vadd.f32 %v6221, %v6249
          %6251 = vmatmul.bf16.gmra.mxu0 %v6000
          %v6252 = vpop.f32.mrf.mxu0
          %v6253 = vadd.f32 %v6224, %v6252
          %v6254 = vpop.f32.mrf.mxu0
          %v6255 = vadd.f32 %v6226, %v6254
          %6256 = vdwg.mxu0
          %6257 = vmatpush.bf16.msra.mxu0 %v6150
          %6258 = vmatpush.bf16.msra.mxu0 %v6148
          %6259 = vmatpush.bf16.msra.mxu0 %v6146
          %6260 = vmatpush.bf16.msra.mxu0 %v6144
          %6261 = vmatpush.bf16.msra.mxu0 %v6142
          %6262 = vmatpush.bf16.msra.mxu0 %v6140
          %6263 = vmatpush.bf16.msra.mxu0 %v6138
          %6264 = vmatpush.bf16.msra.mxu0 %v6136
          %6265 = vmatmul.bf16.gmra.mxu0 %v5993
          %v6266 = vpop.f32.mrf.mxu0
          %v6267 = vadd.f32 %v6036, %v6266
          %v6268 = vpop.f32.mrf.mxu0
          %v6269 = vadd.f32 %v6036, %v6268
          %6270 = vmatmul.bf16.gmra.mxu0 %v5995
          %v6271 = vpop.f32.mrf.mxu0
          %v6272 = vadd.f32 %v6036, %v6271
          %v6273 = vpop.f32.mrf.mxu0
          %v6274 = vadd.f32 %v6036, %v6273
          %6275 = vmatmul.bf16.gmra.mxu0 %v5997
          %v6276 = vpop.f32.mrf.mxu0
          %v6277 = vadd.f32 %v6036, %v6276
          %v6278 = vpop.f32.mrf.mxu0
          %v6279 = vadd.f32 %v6036, %v6278
          %6280 = vmatmul.bf16.gmra.mxu0 %v5999
          %v6281 = vpop.f32.mrf.mxu0
          %v6282 = vadd.f32 %v6036, %v6281
          %v6283 = vpop.f32.mrf.mxu0
          %v6284 = vadd.f32 %v6036, %v6283
          %6285 = vdwg.mxu0
          %6286 = vmatpush.bf16.msra.mxu0 %v6166
          %6287 = vmatpush.bf16.msra.mxu0 %v6164
          %6288 = vmatpush.bf16.msra.mxu0 %v6162
          %6289 = vmatpush.bf16.msra.mxu0 %v6160
          %6290 = vmatpush.bf16.msra.mxu0 %v6158
          %6291 = vmatpush.bf16.msra.mxu0 %v6156
          %6292 = vmatpush.bf16.msra.mxu0 %v6154
          %6293 = vmatpush.bf16.msra.mxu0 %v6152
          %6294 = vmatmul.bf16.gmra.mxu0 %v5994
          %v6295 = vpop.f32.mrf.mxu0
          %v6296 = vadd.f32 %v6267, %v6295
          %v6297 = vpop.f32.mrf.mxu0
          %v6298 = vadd.f32 %v6269, %v6297
          %6299 = vmatmul.bf16.gmra.mxu0 %v5996
          %v6300 = vpop.f32.mrf.mxu0
          %v6301 = vadd.f32 %v6272, %v6300
          %v6302 = vpop.f32.mrf.mxu0
          %v6303 = vadd.f32 %v6274, %v6302
          %6304 = vmatmul.bf16.gmra.mxu0 %v5998
          %v6305 = vpop.f32.mrf.mxu0
          %v6306 = vadd.f32 %v6277, %v6305
          %v6307 = vpop.f32.mrf.mxu0
          %v6308 = vadd.f32 %v6279, %v6307
          %6309 = vmatmul.bf16.gmra.mxu0 %v6000
          %v6310 = vpop.f32.mrf.mxu0
          %v6311 = vadd.f32 %v6282, %v6310
          %v6312 = vpop.f32.mrf.mxu0
          %v6313 = vadd.f32 %v6284, %v6312
          %6314 = vdwg.mxu0
          %6315 = vst [vmem:[#allocation4] sm:$0xff] %v6238
          %6316 = vst [vmem:[#allocation4 + $0x8] sm:$0xff] %v6296
          %6317 = vst [vmem:[#allocation4 + $0x10] sm:$0xff] %v6240
          %6318 = vst [vmem:[#allocation4 + $0x18] sm:$0xff] %v6298
          %6319 = vst [vmem:[#allocation4 + $0x20] sm:$0xff] %v6243
          %6320 = vst [vmem:[#allocation4 + $0x28] sm:$0xff] %v6301
          %6321 = vst [vmem:[#allocation4 + $0x30] sm:$0xff] %v6245
          %6322 = vst [vmem:[#allocation4 + $0x38] sm:$0xff] %v6303
          %6323 = vst [vmem:[#allocation4 + $0x40] sm:$0xff] %v6248
          %6324 = vst [vmem:[#allocation4 + $0x48] sm:$0xff] %v6306
          %6325 = vst [vmem:[#allocation4 + $0x50] sm:$0xff] %v6250
          %6326 = vst [vmem:[#allocation4 + $0x58] sm:$0xff] %v6308
          %6327 = vst [vmem:[#allocation4 + $0x60] sm:$0xff] %v6253
          %6328 = vst [vmem:[#allocation4 + $0x68] sm:$0xff] %v6311
          %6329 = vst [vmem:[#allocation4 + $0x70] sm:$0xff] %v6255
          %6330 = vst [vmem:[#allocation4 + $0x78] sm:$0xff] %v6313
        $region128: #{tpu_custom_call.1} parent=71 // pred_fallthru
          _
        // Predicated region
        $region129: #{tpu_custom_call.1} parent=71 // pred_check
          %p6331 = pneg %p5987
        $region130: #{tpu_custom_call.1} parent=71 // pred_check_branch
          %6333 = sbr.rel (%p6331) target = $region132
        $region131: #{tpu_custom_call.1} parent=71 // pred_region
          %v6334 = vld [vmem:[#allocation4] sm:$0xff]
          %v6335 = vld [vmem:[#allocation4 + $0x8] sm:$0xff]
          %v6336 = vld [vmem:[#allocation4 + $0x10] sm:$0xff]
          %v6337 = vld [vmem:[#allocation4 + $0x18] sm:$0xff]
          %v6338 = vld [vmem:[#allocation4 + $0x20] sm:$0xff]
          %v6339 = vld [vmem:[#allocation4 + $0x28] sm:$0xff]
          %v6340 = vld [vmem:[#allocation4 + $0x30] sm:$0xff]
          %v6341 = vld [vmem:[#allocation4 + $0x38] sm:$0xff]
          %v6342 = vld [vmem:[#allocation4 + $0x40] sm:$0xff]
          %v6343 = vld [vmem:[#allocation4 + $0x48] sm:$0xff]
          %v6344 = vld [vmem:[#allocation4 + $0x50] sm:$0xff]
          %v6345 = vld [vmem:[#allocation4 + $0x58] sm:$0xff]
          %v6346 = vld [vmem:[#allocation4 + $0x60] sm:$0xff]
          %v6347 = vld [vmem:[#allocation4 + $0x68] sm:$0xff]
          %v6348 = vld [vmem:[#allocation4 + $0x70] sm:$0xff]
          %v6349 = vld [vmem:[#allocation4 + $0x78] sm:$0xff]
          %6350 = vst [vmem:[%s683] sm:$0xff] %v6334
          %6351 = vst [vmem:[%s683 + $0x8] sm:$0xff] %v6335
          %6352 = vst [vmem:[%s683 + $0x10] sm:$0xff] %v6336
          %6353 = vst [vmem:[%s683 + $0x18] sm:$0xff] %v6337
          %6354 = vst [vmem:[%s683 + $0x20] sm:$0xff] %v6338
          %6355 = vst [vmem:[%s683 + $0x28] sm:$0xff] %v6339
          %6356 = vst [vmem:[%s683 + $0x30] sm:$0xff] %v6340
          %6357 = vst [vmem:[%s683 + $0x38] sm:$0xff] %v6341
          %6358 = vst [vmem:[%s683 + $0x40] sm:$0xff] %v6342
          %6359 = vst [vmem:[%s683 + $0x48] sm:$0xff] %v6343
          %6360 = vst [vmem:[%s683 + $0x50] sm:$0xff] %v6344
          %6361 = vst [vmem:[%s683 + $0x58] sm:$0xff] %v6345
          %6362 = vst [vmem:[%s683 + $0x60] sm:$0xff] %v6346
          %6363 = vst [vmem:[%s683 + $0x68] sm:$0xff] %v6347
          %6364 = vst [vmem:[%s683 + $0x70] sm:$0xff] %v6348
          %6365 = vst [vmem:[%s683 + $0x78] sm:$0xff] %v6349
        $region132: #{tpu_custom_call.1} parent=71 // pred_fallthru
          _
        // Predicated region
        $region133: #{tpu_custom_call.1} parent=71 // pred_check
          %p6366 = pneg %p5988
        $region134: #{tpu_custom_call.1} parent=71 // pred_check_branch
          %6368 = sbr.rel (%p6366) target = $region136
        $region135: #{tpu_custom_call.1} parent=71 // pred_region
          %6369 = vst [vmem:[#allocation22] sm:$0xff] %v5927
          %6370 = vst [vmem:[#allocation22 + $0x8] sm:$0xff] %v5928
          %6371 = vst [vmem:[#allocation22 + $0x10] sm:$0xff] %v5929
          %6372 = vst [vmem:[#allocation22 + $0x18] sm:$0xff] %v5930
          %6373 = vst [vmem:[#allocation22 + $0x20] sm:$0xff] %v5931
          %6374 = vst [vmem:[#allocation22 + $0x28] sm:$0xff] %v5932
          %6375 = vst [vmem:[#allocation22 + $0x30] sm:$0xff] %v5933
          %6376 = vst [vmem:[#allocation22 + $0x38] sm:$0xff] %v5934
          %6377 = vst [vmem:[#allocation22 + $0x40] sm:$0xff] %v5935
          %6378 = vst [vmem:[#allocation22 + $0x48] sm:$0xff] %v5936
          %6379 = vst [vmem:[#allocation22 + $0x50] sm:$0xff] %v5937
          %6380 = vst [vmem:[#allocation22 + $0x58] sm:$0xff] %v5938
          %6381 = vst [vmem:[#allocation22 + $0x60] sm:$0xff] %v5939
          %6382 = vst [vmem:[#allocation22 + $0x68] sm:$0xff] %v5940
          %6383 = vst [vmem:[#allocation22 + $0x70] sm:$0xff] %v5941
          %6384 = vst [vmem:[#allocation22 + $0x78] sm:$0xff] %v5942
          %6385 = vst [vmem:[#allocation24] sm:$0xff] %v5895
          %6386 = vst [vmem:[#allocation24 + $0x8] sm:$0xff] %v5896
          %6387 = vst [vmem:[#allocation24 + $0x10] sm:$0xff] %v5897
          %6388 = vst [vmem:[#allocation24 + $0x18] sm:$0xff] %v5898
          %6389 = vst [vmem:[#allocation24 + $0x20] sm:$0xff] %v5899
          %6390 = vst [vmem:[#allocation24 + $0x28] sm:$0xff] %v5900
          %6391 = vst [vmem:[#allocation24 + $0x30] sm:$0xff] %v5901
          %6392 = vst [vmem:[#allocation24 + $0x38] sm:$0xff] %v5902
          %6393 = vst [vmem:[#allocation24 + $0x40] sm:$0xff] %v5903
          %6394 = vst [vmem:[#allocation24 + $0x48] sm:$0xff] %v5904
          %6395 = vst [vmem:[#allocation24 + $0x50] sm:$0xff] %v5905
          %6396 = vst [vmem:[#allocation24 + $0x58] sm:$0xff] %v5906
          %6397 = vst [vmem:[#allocation24 + $0x60] sm:$0xff] %v5907
          %6398 = vst [vmem:[#allocation24 + $0x68] sm:$0xff] %v5908
          %6399 = vst [vmem:[#allocation24 + $0x70] sm:$0xff] %v5909
          %6400 = vst [vmem:[#allocation24 + $0x78] sm:$0xff] %v5910
          %v6401 = vld [vmem:[#allocation4] sm:$0xff]
          %v6402 = vld [vmem:[#allocation4 + $0x8] sm:$0xff]
          %v6403 = vld [vmem:[#allocation4 + $0x10] sm:$0xff]
          %v6404 = vld [vmem:[#allocation4 + $0x18] sm:$0xff]
          %v6405 = vld [vmem:[#allocation4 + $0x20] sm:$0xff]
          %v6406 = vld [vmem:[#allocation4 + $0x28] sm:$0xff]
          %v6407 = vld [vmem:[#allocation4 + $0x30] sm:$0xff]
          %v6408 = vld [vmem:[#allocation4 + $0x38] sm:$0xff]
          %v6409 = vld [vmem:[#allocation4 + $0x40] sm:$0xff]
          %v6410 = vld [vmem:[#allocation4 + $0x48] sm:$0xff]
          %v6411 = vld [vmem:[#allocation4 + $0x50] sm:$0xff]
          %v6412 = vld [vmem:[#allocation4 + $0x58] sm:$0xff]
          %v6413 = vld [vmem:[#allocation4 + $0x60] sm:$0xff]
          %v6414 = vld [vmem:[#allocation4 + $0x68] sm:$0xff]
          %v6415 = vld [vmem:[#allocation4 + $0x70] sm:$0xff]
          %v6416 = vld [vmem:[#allocation4 + $0x78] sm:$0xff]
          %6417 = vst [vmem:[#allocation25] sm:$0xff] %v6401
          %6418 = vst [vmem:[#allocation25 + $0x8] sm:$0xff] %v6402
          %6419 = vst [vmem:[#allocation25 + $0x10] sm:$0xff] %v6403
          %6420 = vst [vmem:[#allocation25 + $0x18] sm:$0xff] %v6404
          %6421 = vst [vmem:[#allocation25 + $0x20] sm:$0xff] %v6405
          %6422 = vst [vmem:[#allocation25 + $0x28] sm:$0xff] %v6406
          %6423 = vst [vmem:[#allocation25 + $0x30] sm:$0xff] %v6407
          %6424 = vst [vmem:[#allocation25 + $0x38] sm:$0xff] %v6408
          %6425 = vst [vmem:[#allocation25 + $0x40] sm:$0xff] %v6409
          %6426 = vst [vmem:[#allocation25 + $0x48] sm:$0xff] %v6410
          %6427 = vst [vmem:[#allocation25 + $0x50] sm:$0xff] %v6411
          %6428 = vst [vmem:[#allocation25 + $0x58] sm:$0xff] %v6412
          %6429 = vst [vmem:[#allocation25 + $0x60] sm:$0xff] %v6413
          %6430 = vst [vmem:[#allocation25 + $0x68] sm:$0xff] %v6414
          %6431 = vst [vmem:[#allocation25 + $0x70] sm:$0xff] %v6415
          %6432 = vst [vmem:[#allocation25 + $0x78] sm:$0xff] %v6416
        $region136: #{tpu_custom_call.1} parent=71 // pred_fallthru
          _
        %s6433 = sand.u32 %s336, 1
        %s6434 = scalar_lea.sflag [#allocation9], %s6433
        %s6435 = sand.u32 %s336, 1
        %s6436 = smul.addr %s6435, 128
        %s6437 = scalar_lea.vmem [#allocation21], %s6436
        %p6438 = scmp.lt.s32.totalorder %s46, 1
        %s6439 = scalar_select %p6438, %s46, 1
        %p6440 = scmp.lt.s32.totalorder %s6439, 1
        %s6441 = scalar_select %p6440, %s6439, 1
        %s6442 = smul.addr %s6441, 8
        %s6443 = smul.addr %s6442, 8
        %s6444 = scalar_lea.vmem %s17, %s6443
        // Predicated region
        $region137: #{tpu_custom_call.1} parent=71 // pred_check
          %p6445 = pneg %p346
        $region138: #{tpu_custom_call.1} parent=71 // pred_check_branch
          %6447 = sbr.rel (%p6445) target = $region140
        $region139: #{tpu_custom_call.1} parent=71 // pred_region
          %p6448 = scmp.lt.s32.totalorder %s46, 2
          %s6449 = scalar_select %p6448, %s46, 2
          %6451 = vsyncadd %s6434, 0
          %s6452 = smul.addr %s6449, 16
          %s6453 = smul.addr %s6452, 8
          %s6454 = scalar_lea.hbm %s16, %s6453
          %s6455 = sshll.u32 %s6437, 4
          %s6456 = int_to_ptr.vmem [resolvable:$true] %s6455
          %s6457 = sshll.u32 %s6454, 4
          %s6458 = int_to_ptr.hbm [resolvable:$true] %s6457
          %6463 = dma.vmem_to_hbm [thread:$0]  %s6456, 2048, %s6458, %s6434, 256, 256, 16
        $region140: #{tpu_custom_call.1} parent=71 // pred_fallthru
          _
        // Predicated region
        $region141: #{tpu_custom_call.1} parent=71 // pred_check
          %p6464 = pneg %p376
        $region142: #{tpu_custom_call.1} parent=71 // pred_check_branch
          %6466 = sbr.rel (%p6464) target = $region144
        $region143: #{tpu_custom_call.1} parent=71 // pred_region
          %p6467 = scmp.lt.s32.totalorder %s46, 1
          %s6468 = scalar_select %p6467, %s46, 1
        $region144: #{tpu_custom_call.1} parent=71 // pred_fallthru
          _
        // Predicated region
        $region145: #{tpu_custom_call.1} parent=71 // pred_check
          %p6469 = pneg %p397
        $region146: #{tpu_custom_call.1} parent=71 // pred_check_branch
          %6471 = sbr.rel (%p6469) target = $region148
        $region147: #{tpu_custom_call.1} parent=71 // pred_region
          %6473 = vsyncadd [#allocation23], 0
          %s6474 = sshll.u32 [#allocation22], 4
          %s6475 = int_to_ptr.vmem [resolvable:$true] %s6474
          %s6476 = sshll.u32 %s18, 4
          %s6477 = int_to_ptr.hbm [resolvable:$true] %s6476
          %6482 = dma.vmem_to_hbm [thread:$0]  %s6475, 2048, %s6477, [#allocation23], 256, 256, 16
        $region148: #{tpu_custom_call.1} parent=71 // pred_fallthru
          _
        // Predicated region
        $region149: #{tpu_custom_call.1} parent=71 // pred_check
          %p6483 = pneg %p418
        $region150: #{tpu_custom_call.1} parent=71 // pred_check_branch
          %6485 = sbr.rel (%p6483) target = $region152
        $region151: #{tpu_custom_call.1} parent=71 // pred_region
          %6487 = vsyncadd [#allocation23], 0
          %s6488 = sshll.u32 [#allocation24], 4
          %s6489 = int_to_ptr.vmem [resolvable:$true] %s6488
          %s6490 = sshll.u32 %s19, 4
          %s6491 = int_to_ptr.hbm [resolvable:$true] %s6490
          %6496 = dma.vmem_to_hbm [thread:$0]  %s6489, 2048, %s6491, [#allocation23], 256, 256, 16
        $region152: #{tpu_custom_call.1} parent=71 // pred_fallthru
          _
        // Predicated region
        $region153: #{tpu_custom_call.1} parent=71 // pred_check
          %p6497 = pneg %p439
        $region154: #{tpu_custom_call.1} parent=71 // pred_check_branch
          %6499 = sbr.rel (%p6497) target = $region156
        $region155: #{tpu_custom_call.1} parent=71 // pred_region
          %6501 = vsyncadd [#allocation26], 0
          %s6502 = sshll.u32 [#allocation25], 4
          %s6503 = int_to_ptr.vmem [resolvable:$true] %s6502
          %s6504 = sshll.u32 %s20, 4
          %s6505 = int_to_ptr.hbm [resolvable:$true] %s6504
          %6510 = dma.vmem_to_hbm [thread:$0]  %s6503, 2048, %s6505, [#allocation26], 256, 256, 16
        $region156: #{tpu_custom_call.1} parent=71 // pred_fallthru
          _
        // Predicated region
        $region157: #{tpu_custom_call.1} parent=71 // pred_check
          %p6511 = pneg %p397
        $region158: #{tpu_custom_call.1} parent=71 // pred_check_branch
          %6513 = sbr.rel (%p6511) target = $region160
        $region159: #{tpu_custom_call.1} parent=71 // pred_region
          %6515 = dma.done [#allocation23], 2048
        $region160: #{tpu_custom_call.1} parent=71 // pred_fallthru
          _
        // Predicated region
        $region161: #{tpu_custom_call.1} parent=71 // pred_check
          %p6516 = pneg %p418
        $region162: #{tpu_custom_call.1} parent=71 // pred_check_branch
          %6518 = sbr.rel (%p6516) target = $region164
        $region163: #{tpu_custom_call.1} parent=71 // pred_region
          %6520 = dma.done [#allocation23], 2048
        $region164: #{tpu_custom_call.1} parent=71 // pred_fallthru
          _
        // Predicated region
        $region165: #{tpu_custom_call.1} parent=71 // pred_check
          %p6521 = pneg %p439
        $region166: #{tpu_custom_call.1} parent=71 // pred_check_branch
          %6523 = sbr.rel (%p6521) target = $region168
        $region167: #{tpu_custom_call.1} parent=71 // pred_region
          %6525 = dma.done [#allocation26], 2048
        $region168: #{tpu_custom_call.1} parent=71 // pred_fallthru
          _
      $region72: #{tpu_custom_call.1} parent=5 // pred_fallthru
        _
      %p6526 = scmp.le.s32.totalorder 2, %s41
      // Predicated region
      $region169: #{tpu_custom_call.1} parent=5 // pred_check
        %p6527 = pneg %p6526
      $region170: #{tpu_custom_call.1} parent=5 // pred_check_branch
        %6529 = sbr.rel (%p6527) target = $region172
      $region171: #{tpu_custom_call.1} parent=5 // pred_region
        %s6530 = ssub.s32 %s41, 2
        // Predicated region
        $region173: #{tpu_custom_call.1} parent=171 // pred_check
          %p6531 = pneg %p352
        $region174: #{tpu_custom_call.1} parent=171 // pred_check_branch
          %6533 = sbr.rel (%p6531) target = $region176
        $region175: #{tpu_custom_call.1} parent=171 // pred_region
          %s6534 = sand.u32 %s337, 1
          %s6535 = scalar_lea.sflag [#allocation9], %s6534
          %s6536 = sand.u32 %s337, 1
          %s6537 = smul.addr %s6536, 128
          %s6538 = scalar_lea.vmem [#allocation21], %s6537
          %6540 = dma.done %s6535, 2048
        $region176: #{tpu_custom_call.1} parent=171 // pred_fallthru
          _
        // Predicated region
        $region177: #{tpu_custom_call.1} parent=171 // pred_check
          %p6541 = pneg %p382
        $region178: #{tpu_custom_call.1} parent=171 // pred_check_branch
          %6543 = sbr.rel (%p6541) target = $region180
        $region179: #{tpu_custom_call.1} parent=171 // pred_region
          %p6544 = scmp.lt.s32.totalorder %s47, 1
          %s6545 = scalar_select %p6544, %s47, 1
          %p6546 = scmp.lt.s32.totalorder %s6545, 1
          %s6547 = scalar_select %p6546, %s6545, 1
          %s6548 = smul.addr %s6547, 8
          %s6549 = smul.addr %s6548, 8
          %s6550 = scalar_lea.vmem %s17, %s6549
        $region180: #{tpu_custom_call.1} parent=171 // pred_fallthru
          _
      $region172: #{tpu_custom_call.1} parent=5 // pred_fallthru
        _
    $region6: #{tpu_custom_call.1} parent=1 // loop_footer
      %s45 = sadd.s32 1, %s41
    $region7: #{tpu_custom_call.1} parent=1 // loop_footer_branch
      %40 = sbr.rel target = $region3
    $region8: #{tpu_custom_call.1} parent=1 // loop_exit
      _
    %6551 = vsyncpa [#allocation8], 1
    %s6552 = scalar_lea.sflag [#allocation8], 1
    %6553 = vsyncpa %s6552, 1
    %6554 = vsyncpa [#allocation11], 1
    %6555 = vsyncpa [#allocation14], 1
    %6556 = vsyncpa [#allocation17], 1
    %6557 = vsyncpa [#allocation20], 1
    %6558 = vsyncpa [#allocation9], 1
    %s6559 = scalar_lea.sflag [#allocation9], 1
    %6560 = vsyncpa %s6559, 1
    %6561 = vsyncpa [#allocation23], 1
    %6562 = vsyncpa [#allocation26], 1
  %6563 = vsyncmov [#allocation5]
  %s6564 = vpop.sfrf %6563
  %p6565 = scmp.eq.s32.totalorder %s6564, 0
  %p6566 = pneg %p6565
  %6568 = shalt.err (%p6566)
  %s6569 = scalar_lea.sflag [#allocation5], 1
  %6570 = vsyncmov %s6569
  %s6571 = vpop.sfrf %6570
  %p6572 = scmp.eq.s32.totalorder %s6571, 0
  %p6573 = pneg %p6572
  %6575 = shalt.err (%p6573)
  %s6576 = scalar_lea.sflag [#allocation5], 2
  %6577 = vsyncmov %s6576
  %s6578 = vpop.sfrf %6577
  %p6579 = scmp.eq.s32.totalorder %s6578, 0
  %p6580 = pneg %p6579
  %6582 = shalt.err (%p6580)

</llo_original>
